<compile_context>
chip_gen: v7x
topology: tpu7x:2x2x1
jax: 0.10.0
libtpu: 0.0.40
codegen_flags: <defaults>
</compile_context>

<pallas_src>
import functools

import jax
import jax.numpy as jnp
from jax import lax
from jax.experimental import pallas as pl
from jax.experimental.pallas import tpu as pltpu


def _round_up(a, b):
    return (a + b - 1) // b * b


def _cdiv(a, b):
    return (a + b - 1) // b


def _chunking(rows_needed, max_chunk=128):
    """Split `rows_needed` flat rows into equal chunks (multiple of 8)."""
    n_chunks = max(1, _cdiv(rows_needed, max_chunk))
    chunk = _round_up(_cdiv(rows_needed, n_chunks), 8)
    return chunk, n_chunks


# ----------------------------------------------------------------------------
# In-kernel building blocks.  Activations use a flat-row layout:
#   row index = h * wa + w (wa = padded width rounded up to 8), channels on
#   the lane axis.  Conv output row r = h*wa + w reads input rows r + kh*wa + kw.
# ----------------------------------------------------------------------------
def _conv_stage(in_ref, w_ref, scale, bias, out_ref, *, wa, cin, cout,
                chunk, n_chunks):
    """3x3 same-conv + folded-BN affine + ReLU over the flat-row layout."""

    def body(ci, carry):
        row0 = pl.multiple_of(ci * chunk, 8)
        acc = jnp.zeros((chunk, cout), jnp.float32)
        for kh in range(3):
            for kw in range(3):
                k = kh * 3 + kw
                lhs = in_ref[pl.ds(row0 + kh * wa + kw, chunk), :]   # (chunk, cin)
                wk = w_ref[pl.ds(k * cin, cin), :]                   # (cin, cout) bf16
                acc = acc + jnp.dot(lhs.astype(jnp.bfloat16), wk,
                                    preferred_element_type=jnp.float32)
        out_ref[pl.ds(row0, chunk), :] = jnp.maximum(acc * scale + bias, 0.0)
        return carry

    lax.fori_loop(0, n_chunks, body, 0)


def _pool_into(src_ref, dst_ref, *, wa_s, h_d, w_d, wa_d):
    """2x2 stride-2 max-pool of a conv-output buffer, written to the interior
    (offset (1, 1)) of the next stage's zero-padded flat input buffer."""
    for r in range(h_d):
        taps = []
        for dh in range(2):
            base = (2 * r + dh) * wa_s
            for dw in range(2):
                taps.append(src_ref[pl.ds(base + dw, w_d, 2), :])
        m = jnp.maximum(jnp.maximum(taps[0], taps[1]),
                        jnp.maximum(taps[2], taps[3]))
        dst_ref[pl.ds((r + 1) * wa_d + 1, w_d), :] = m


def _cnn_kernel(x1_ref,
                w1_ref, s1_ref, b1_ref,
                w2_ref, s2_ref, b2_ref,
                w3_ref, s3_ref, b3_ref,
                wf1_ref, bf1_ref, wf2_ref, bf2_ref,
                out_ref,
                c1_ref, in2_ref, c2_ref, in3_ref, c3_ref,
                *, cfg):
    # ---- Stage 1: conv1 + BN1 + ReLU as chunked MXU matmuls over host im2col.
    s1 = s1_ref[...]
    b1 = b1_ref[...]

    def s1_body(ci, carry):
        row0 = pl.multiple_of(ci * cfg["chunk1"], 8)
        lhs = x1_ref[pl.ds(row0, cfg["chunk1"]), :]            # (chunk, 9*Cin) bf16
        acc = jnp.dot(lhs, w1_ref[...], preferred_element_type=jnp.float32)
        c1_ref[pl.ds(row0, cfg["chunk1"]), :] = jnp.maximum(acc * s1 + b1, 0.0)
        return carry

    lax.fori_loop(0, cfg["n_chunks1"], s1_body, 0)

    # ---- Pool 1 -> zero-padded flat input of stage 2.
    in2_ref[...] = jnp.zeros(in2_ref.shape, in2_ref.dtype)
    _pool_into(c1_ref, in2_ref, wa_s=cfg["wa1"],
               h_d=cfg["h2"], w_d=cfg["w2"], wa_d=cfg["wa2"])

    # ---- Stage 2: conv2 + BN2 + ReLU.
    _conv_stage(in2_ref, w2_ref, s2_ref[...], b2_ref[...], c2_ref,
                wa=cfg["wa2"], cin=32, cout=64,
                chunk=cfg["chunk2"], n_chunks=cfg["n_chunks2"])
    in3_ref[...] = jnp.zeros(in3_ref.shape, in3_ref.dtype)
    _pool_into(c2_ref, in3_ref, wa_s=cfg["wa2"],
               h_d=cfg["h3"], w_d=cfg["w3"], wa_d=cfg["wa3"])

    # ---- Stage 3: conv3 + BN3 + ReLU.
    _conv_stage(in3_ref, w3_ref, s3_ref[...], b3_ref[...], c3_ref,
                wa=cfg["wa3"], cin=64, cout=128,
                chunk=cfg["chunk3"], n_chunks=cfg["n_chunks3"])

    # ---- Pool 3 + flatten + fc1 fused: one accumulated dot per pooled position.
    acc = jnp.zeros((1, 256), jnp.float32)
    for r in range(cfg["hf"]):
        for c in range(cfg["wf"]):
            taps = [c3_ref[pl.ds((2 * r + dh) * cfg["wa3"] + 2 * c + dw, 1), :]
                    for dh in range(2) for dw in range(2)]
            m = jnp.maximum(jnp.maximum(taps[0], taps[1]),
                            jnp.maximum(taps[2], taps[3]))       # (1, 128)
            pos = r * cfg["wf"] + c
            wblk = wf1_ref[pl.ds(pos * 128, 128), :]             # (128, 256) bf16
            acc = acc + jnp.dot(m.astype(jnp.bfloat16), wblk,
                                preferred_element_type=jnp.float32)

    z1 = jnp.maximum(acc + bf1_ref[...], 0.0)
    # TODO(synk): Dropout is eval-mode (identity); training-mode masking not implemented.
    z2 = jnp.dot(z1.astype(jnp.bfloat16), wf2_ref[...],
                 preferred_element_type=jnp.float32) + bf2_ref[...]
    out_ref[...] = z2.astype(out_ref.dtype)


# ----------------------------------------------------------------------------
# One-time parameter preparation (hoisted out of the forward pass).
# ----------------------------------------------------------------------------
def _prep_conv_w(w_oihw, dtype):
    cout, cin = w_oihw.shape[0], w_oihw.shape[1]
    # (Cout, Cin, 3, 3) -> (3, 3, Cin, Cout) -> (9*Cin, Cout), tap-major rows.
    return jnp.transpose(w_oihw, (2, 3, 1, 0)).reshape(9 * cin, cout).astype(dtype)


def _bn_fold(conv_b, gamma, beta, mean, var, eps=1e-5):
    scale = gamma / jnp.sqrt(var + eps)
    bias = (conv_b - mean) * scale + beta
    return (scale.reshape(1, -1).astype(jnp.float32),
            bias.reshape(1, -1).astype(jnp.float32))


def _prep_fc1_w(fc1_w, hf, wf, cout):
    """Permute fc1's input columns from torch CHW-flatten order to our
    HWC-flatten order and transpose to (in_features, out_features)."""
    p = jnp.arange(hf * wf * cout)
    h = p // (wf * cout)
    w = (p // cout) % wf
    c = p % cout
    j = c * (hf * wf) + h * wf + w
    return fc1_w[:, j].T.astype(jnp.bfloat16)          # (hf*wf*cout, 256)


# ----------------------------------------------------------------------------
# Parameter construction (deterministic, synthetic, torch-default BN, eval).
# ----------------------------------------------------------------------------
def init_params(key, input_channels, n_classes):
    ks = jax.random.split(key, 10)

    def conv_w(k, cout, cin):
        return 0.1 * jax.random.normal(k, (cout, cin, 3, 3), jnp.float32)

    def lin_w(k, out_f, in_f):
        return 0.05 * jax.random.normal(k, (out_f, in_f), jnp.float32)

    params = {
        "conv1_w": conv_w(ks[0], 32, input_channels),
        "conv1_b": 0.01 * jax.random.normal(ks[1], (32,), jnp.float32),
        "conv2_w": conv_w(ks[2], 64, 32),
        "conv2_b": 0.01 * jax.random.normal(ks[3], (64,), jnp.float32),
        "conv3_w": conv_w(ks[4], 128, 64),
        "conv3_b": 0.01 * jax.random.normal(ks[5], (128,), jnp.float32),
        "fc1_w": lin_w(ks[6], 256, 128 * 3 * 3),
        "fc1_b": 0.01 * jax.random.normal(ks[7], (256,), jnp.float32),
        "fc2_w": lin_w(ks[8], n_classes, 256),
        "fc2_b": 0.01 * jax.random.normal(ks[9], (n_classes,), jnp.float32),
    }
    # BatchNorm params: torch defaults (gamma=1, beta=0, running stats 0/1).
    for name, c in (("bn1", 32), ("bn2", 64), ("bn3", 128)):
        params[f"{name}_gamma"] = jnp.ones((c,), jnp.float32)
        params[f"{name}_beta"] = jnp.zeros((c,), jnp.float32)
        params[f"{name}_mean"] = jnp.zeros((c,), jnp.float32)
        params[f"{name}_var"] = jnp.ones((c,), jnp.float32)
    return params


# ----------------------------------------------------------------------------
# Forward builder: one fused pallas_call, grid over the batch.
# ----------------------------------------------------------------------------
def build_forward(params, input_channels, n_classes, n_batch, hw=28):
    assert hw == 28, "fc1 expects a 128*3*3 flatten, i.e. 28x28 inputs."
    H = W = hw
    H2, W2 = H // 2, W // 2            # 14
    H3, W3 = H2 // 2, W2 // 2          # 7
    HF, WF = H3 // 2, W3 // 2          # 3
    k1 = 9 * input_channels

    # Stage geometry (per image).
    WA1 = _round_up(W, 8)                                   # 32
    chunk1, n_chunks1 = _chunking((H - 1) * WA1 + W)        # 128 x 7
    rows1 = chunk1 * n_chunks1                              # 896
    x1_rows = max(rows1, H * WA1)

    WA2 = _round_up(W2 + 2, 8)                              # 16
    chunk2, n_chunks2 = _chunking((H2 - 1) * WA2 + W2)      # 112 x 2
    rows2 = chunk2 * n_chunks2                              # 224
    in2_rows = rows2 + 3 * WA2                              # 272

    WA3 = _round_up(W3 + 2, 8)                              # 16
    chunk3, n_chunks3 = _chunking((H3 - 1) * WA3 + W3)      # 104 x 1
    rows3 = chunk3 * n_chunks3                              # 104
    in3_rows = rows3 + 3 * WA3                              # 152

    cfg = dict(chunk1=chunk1, n_chunks1=n_chunks1, wa1=WA1,
               chunk2=chunk2, n_chunks2=n_chunks2, wa2=WA2,
               chunk3=chunk3, n_chunks3=n_chunks3, wa3=WA3,
               h2=H2, w2=W2, h3=H3, w3=W3, hf=HF, wf=WF)

    # Weight preparation (once).
    w1 = _prep_conv_w(params["conv1_w"], jnp.bfloat16)      # (9*Cin, 32)
    s1, b1 = _bn_fold(params["conv1_b"], params["bn1_gamma"], params["bn1_beta"],
                      params["bn1_mean"], params["bn1_var"])
    w2 = _prep_conv_w(params["conv2_w"], jnp.bfloat16)      # (288, 64)
    s2, b2 = _bn_fold(params["conv2_b"], params["bn2_gamma"], params["bn2_beta"],
                      params["bn2_mean"], params["bn2_var"])
    w3 = _prep_conv_w(params["conv3_w"], jnp.bfloat16)      # (576, 128)
    s3, b3 = _bn_fold(params["conv3_b"], params["bn3_gamma"], params["bn3_beta"],
                      params["bn3_mean"], params["bn3_var"])
    wf1 = _prep_fc1_w(params["fc1_w"], HF, WF, 128)         # (1152, 256)
    bf1 = params["fc1_b"].reshape(1, -1).astype(jnp.float32)
    wf2 = params["fc2_w"].T.astype(jnp.bfloat16)            # (256, n_classes)
    bf2 = params["fc2_b"].reshape(1, -1).astype(jnp.float32)
    weights = (w1, s1, b1, w2, s2, b2, w3, s3, b3, wf1, bf1, wf2, bf2)

    kernel = functools.partial(_cnn_kernel, cfg=cfg)

    def _const_spec(shape):
        nd = len(shape)
        return pl.BlockSpec(shape, lambda i, _nd=nd: (0,) * _nd)

    in_specs = ([pl.BlockSpec((None, x1_rows, k1), lambda i: (i, 0, 0))] +
                [_const_spec(tuple(w.shape)) for w in weights])
    out_specs = pl.BlockSpec((None, 1, n_classes), lambda i: (i, 0, 0))

    grid_spec = pltpu.PrefetchScalarGridSpec(
        num_scalar_prefetch=0,
        grid=(n_batch,),
        in_specs=in_specs,
        out_specs=out_specs,
        scratch_shapes=[
            pltpu.VMEM((rows1, 32), jnp.float32),      # conv1 output
            pltpu.VMEM((in2_rows, 32), jnp.float32),   # zero-padded stage-2 input
            pltpu.VMEM((rows2, 64), jnp.float32),      # conv2 output
            pltpu.VMEM((in3_rows, 64), jnp.float32),   # zero-padded stage-3 input
            pltpu.VMEM((rows3, 128), jnp.float32),     # conv3 output
        ],
    )

    call = pl.pallas_call(
        kernel,
        out_shape=jax.ShapeDtypeStruct((n_batch, 1, n_classes), jnp.float32),
        grid_spec=grid_spec,
        compiler_params=pltpu.CompilerParams(
            dimension_semantics=("parallel",),
            vmem_limit_bytes=32 * 1024 * 1024,
        ),
    )

    def pack_input(x):
        # Host/XLA-side im2col for stage 1 (Cin is tiny, so this is ~tens of KiB
        # and turns the Cin=1 conv into a proper MXU matmul inside the kernel).
        xh = jnp.transpose(x, (0, 2, 3, 1)).astype(jnp.float32)   # (N,H,W,Cin)
        xp = jnp.pad(xh, ((0, 0), (1, 1), (1, 1), (0, 0)))        # (N,H+2,W+2,Cin)
        cols = [xp[:, kh:kh + H, kw:kw + W, :]
                for kh in range(3) for kw in range(3)]
        pat = jnp.concatenate(cols, axis=-1)                      # (N,H,W,9*Cin)
        pat = jnp.pad(pat, ((0, 0), (0, 0), (0, WA1 - W), (0, 0)))
        pat = pat.reshape(n_batch, H * WA1, k1)
        if x1_rows > H * WA1:
            pat = jnp.pad(pat, ((0, 0), (0, x1_rows - H * WA1), (0, 0)))
        return pat.astype(jnp.bfloat16)

    @jax.jit
    def _forward(x, wts):
        logits3 = call(pack_input(x), *wts)
        return logits3[:, 0, :]

    return lambda x: _forward(x, weights)


if __name__ == "__main__":
    key = jax.random.PRNGKey(0)
    k_param, k_input = jax.random.split(key)

    batch, in_ch, n_classes = 2, 1, 10
    H = W = 28  # 28 -> 14 -> 7 -> 3, matching the module's 128*3*3 flatten size.

    params = init_params(k_param, in_ch, n_classes)
    forward = build_forward(params, in_ch, n_classes, batch, H)

    x = jax.random.normal(k_input, (batch, in_ch, H, W), jnp.float32)
    logits = forward(x)
    jax.block_until_ready(logits)

    assert logits.shape == (batch, n_classes), logits.shape
    assert bool(jnp.all(jnp.isfinite(logits)))
    print("KERNEL_OK")
</pallas_src>

<mosaic_0001>
module attributes {stable_mosaic.version = 11 : i64} {
  func.func @_cnn_kernel(%arg0: i32, %arg1: memref<1x896x9xbf16, #tpu.memory_space<vmem>>, %arg2: memref<9x32xbf16, #tpu.memory_space<vmem>>, %arg3: memref<1x32xf32, #tpu.memory_space<vmem>>, %arg4: memref<1x32xf32, #tpu.memory_space<vmem>>, %arg5: memref<288x64xbf16, #tpu.memory_space<vmem>>, %arg6: memref<1x64xf32, #tpu.memory_space<vmem>>, %arg7: memref<1x64xf32, #tpu.memory_space<vmem>>, %arg8: memref<576x128xbf16, #tpu.memory_space<vmem>>, %arg9: memref<1x128xf32, #tpu.memory_space<vmem>>, %arg10: memref<1x128xf32, #tpu.memory_space<vmem>>, %arg11: memref<1152x256xbf16, #tpu.memory_space<vmem>>, %arg12: memref<1x256xf32, #tpu.memory_space<vmem>>, %arg13: memref<256x10xbf16, #tpu.memory_space<vmem>>, %arg14: memref<1x10xf32, #tpu.memory_space<vmem>>, %arg15: memref<1x1x10xf32, #tpu.memory_space<vmem>>, %arg16: memref<896x32xf32, #tpu.memory_space<vmem>>, %arg17: memref<272x32xf32, #tpu.memory_space<vmem>>, %arg18: memref<224x64xf32, #tpu.memory_space<vmem>>, %arg19: memref<152x64xf32, #tpu.memory_space<vmem>>, %arg20: memref<104x128xf32, #tpu.memory_space<vmem>>) attributes {dimension_semantics = [#tpu.dimension_semantics<parallel>], iteration_bounds = array<i64: 2>, scalar_prefetch = 0 : i64, scratch_operands = 5 : i64, tpu.core_type = #tpu.core_type<tc>, window_params = [{transform_indices = @transform_0, window_bounds = array<i64: 1, 896, 9>}, {pipeline_mode = #tpu.pipeline_mode<synchronous>, transform_indices = @transform_1, window_bounds = array<i64: 9, 32>}, {pipeline_mode = #tpu.pipeline_mode<synchronous>, transform_indices = @transform_2, window_bounds = array<i64: 1, 32>}, {pipeline_mode = #tpu.pipeline_mode<synchronous>, transform_indices = @transform_3, window_bounds = array<i64: 1, 32>}, {pipeline_mode = #tpu.pipeline_mode<synchronous>, transform_indices = @transform_4, window_bounds = array<i64: 288, 64>}, {pipeline_mode = #tpu.pipeline_mode<synchronous>, transform_indices = @transform_5, window_bounds = array<i64: 1, 64>}, {pipeline_mode = #tpu.pipeline_mode<synchronous>, transform_indices = @transform_6, window_bounds = array<i64: 1, 64>}, {pipeline_mode = #tpu.pipeline_mode<synchronous>, transform_indices = @transform_7, window_bounds = array<i64: 576, 128>}, {pipeline_mode = #tpu.pipeline_mode<synchronous>, transform_indices = @transform_8, window_bounds = array<i64: 1, 128>}, {pipeline_mode = #tpu.pipeline_mode<synchronous>, transform_indices = @transform_9, window_bounds = array<i64: 1, 128>}, {pipeline_mode = #tpu.pipeline_mode<synchronous>, transform_indices = @transform_10, window_bounds = array<i64: 1152, 256>}, {pipeline_mode = #tpu.pipeline_mode<synchronous>, transform_indices = @transform_11, window_bounds = array<i64: 1, 256>}, {pipeline_mode = #tpu.pipeline_mode<synchronous>, transform_indices = @transform_12, window_bounds = array<i64: 256, 10>}, {pipeline_mode = #tpu.pipeline_mode<synchronous>, transform_indices = @transform_13, window_bounds = array<i64: 1, 10>}, {transform_indices = @transform_14, window_bounds = array<i64: 1, 1, 10>}]} {
    %c0 = arith.constant 0 : index
    %c0_0 = arith.constant 0 : index
    %0 = vector.load %arg3[%c0, %c0_0] : memref<1x32xf32, #tpu.memory_space<vmem>>, vector<1x32xf32>
    %c0_1 = arith.constant 0 : index
    %c0_2 = arith.constant 0 : index
    %1 = vector.load %arg4[%c0_1, %c0_2] : memref<1x32xf32, #tpu.memory_space<vmem>>, vector<1x32xf32>
    %c0_i32 = arith.constant 0 : i32
    %c7_i32 = arith.constant 7 : i32
    %2 = arith.addi %c0_i32, %c7_i32 : i32
    %c1_i32 = arith.constant 1 : i32
    scf.for %arg21 = %c0_i32 to %2 step %c1_i32  : i32 {
      %c128_i32 = arith.constant 128 : i32
      %375 = arith.muli %arg21, %c128_i32 : i32
      %376 = tpu.assume_multiple %375, 8 : i32
      %c0_303 = arith.constant 0 : index
      %377 = arith.index_cast %376 : i32 to index
      %c0_304 = arith.constant 0 : index
      %378 = vector.load %arg1[%c0_303, %377, %c0_304] : memref<1x896x9xbf16, #tpu.memory_space<vmem>>, vector<1x128x9xbf16>
      %379 = vector.shape_cast %378 : vector<1x128x9xbf16> to vector<128x9xbf16>
      %c0_305 = arith.constant 0 : index
      %c0_306 = arith.constant 0 : index
      %380 = vector.load %arg2[%c0_305, %c0_306] : memref<9x32xbf16, #tpu.memory_space<vmem>>, vector<9x32xbf16>
      %cst_307 = arith.constant dense<0.000000e+00> : vector<128x32xf32>
      %381 = tpu.matmul %379, %380, %cst_307 {dimension_numbers = #tpu.dot_dimension_numbers<[1], [0], [0], [1], [0, 0, 1, 1], [], []>} : vector<128x9xbf16>, vector<9x32xbf16>, vector<128x32xf32> -> vector<128x32xf32>
      %382 = vector.broadcast %0 : vector<1x32xf32> to vector<128x32xf32>
      %383 = arith.mulf %381, %382 : vector<128x32xf32>
      %384 = vector.broadcast %1 : vector<1x32xf32> to vector<128x32xf32>
      %385 = arith.addf %383, %384 : vector<128x32xf32>
      %cst_308 = arith.constant 0.000000e+00 : f32
      %386 = vector.broadcast %cst_308 : f32 to vector<128x32xf32>
      %387 = arith.maximumf %385, %386 : vector<128x32xf32>
      %388 = arith.index_cast %376 : i32 to index
      %c0_309 = arith.constant 0 : index
      %389 = vector.load %arg16[%388, %c0_309] : memref<896x32xf32, #tpu.memory_space<vmem>>, vector<128x32xf32>
      tpu.vector_store %arg16[%388, %c0_309], %387 {strides = array<i32>} : memref<896x32xf32, #tpu.memory_space<vmem>>, vector<128x32xf32>,
    }
    %c7_i32_3 = arith.constant 7 : i32
    %cst = arith.constant 0.000000e+00 : f32
    %3 = vector.broadcast %cst : f32 to vector<272x32xf32>
    %c0_4 = arith.constant 0 : index
    %c0_5 = arith.constant 0 : index
    %4 = vector.load %arg17[%c0_4, %c0_5] : memref<272x32xf32, #tpu.memory_space<vmem>>, vector<272x32xf32>
    tpu.vector_store %arg17[%c0_4, %c0_5], %3 {strides = array<i32>} : memref<272x32xf32, #tpu.memory_space<vmem>>, vector<272x32xf32>,
    %c0_6 = arith.constant 0 : index
    %c0_7 = arith.constant 0 : index
    %5 = tpu.strided_load %arg16[%c0_6, %c0_7] {strides = array<i32: 2, 1>} : memref<896x32xf32, #tpu.memory_space<vmem>>, vector<14x32xf32>
    %c1 = arith.constant 1 : index
    %c0_8 = arith.constant 0 : index
    %6 = tpu.strided_load %arg16[%c1, %c0_8] {strides = array<i32: 2, 1>} : memref<896x32xf32, #tpu.memory_space<vmem>>, vector<14x32xf32>
    %c32 = arith.constant 32 : index
    %c0_9 = arith.constant 0 : index
    %7 = tpu.strided_load %arg16[%c32, %c0_9] {strides = array<i32: 2, 1>} : memref<896x32xf32, #tpu.memory_space<vmem>>, vector<14x32xf32>
    %c33 = arith.constant 33 : index
    %c0_10 = arith.constant 0 : index
    %8 = tpu.strided_load %arg16[%c33, %c0_10] {strides = array<i32: 2, 1>} : memref<896x32xf32, #tpu.memory_space<vmem>>, vector<14x32xf32>
    %9 = arith.maximumf %5, %6 : vector<14x32xf32>
    %10 = arith.maximumf %7, %8 : vector<14x32xf32>
    %11 = arith.maximumf %9, %10 : vector<14x32xf32>
    %c17 = arith.constant 17 : index
    %c0_11 = arith.constant 0 : index
    %12 = vector.load %arg17[%c17, %c0_11] : memref<272x32xf32, #tpu.memory_space<vmem>>, vector<14x32xf32>
    tpu.vector_store %arg17[%c17, %c0_11], %11 {strides = array<i32>} : memref<272x32xf32, #tpu.memory_space<vmem>>, vector<14x32xf32>,
    %c64 = arith.constant 64 : index
    %c0_12 = arith.constant 0 : index
    %13 = tpu.strided_load %arg16[%c64, %c0_12] {strides = array<i32: 2, 1>} : memref<896x32xf32, #tpu.memory_space<vmem>>, vector<14x32xf32>
    %c65 = arith.constant 65 : index
    %c0_13 = arith.constant 0 : index
    %14 = tpu.strided_load %arg16[%c65, %c0_13] {strides = array<i32: 2, 1>} : memref<896x32xf32, #tpu.memory_space<vmem>>, vector<14x32xf32>
    %c96 = arith.constant 96 : index
    %c0_14 = arith.constant 0 : index
    %15 = tpu.strided_load %arg16[%c96, %c0_14] {strides = array<i32: 2, 1>} : memref<896x32xf32, #tpu.memory_space<vmem>>, vector<14x32xf32>
    %c97 = arith.constant 97 : index
    %c0_15 = arith.constant 0 : index
    %16 = tpu.strided_load %arg16[%c97, %c0_15] {strides = array<i32: 2, 1>} : memref<896x32xf32, #tpu.memory_space<vmem>>, vector<14x32xf32>
    %17 = arith.maximumf %13, %14 : vector<14x32xf32>
    %18 = arith.maximumf %15, %16 : vector<14x32xf32>
    %19 = arith.maximumf %17, %18 : vector<14x32xf32>
    %c33_16 = arith.constant 33 : index
    %c0_17 = arith.constant 0 : index
    %20 = vector.load %arg17[%c33_16, %c0_17] : memref<272x32xf32, #tpu.memory_space<vmem>>, vector<14x32xf32>
    tpu.vector_store %arg17[%c33_16, %c0_17], %19 {strides = array<i32>} : memref<272x32xf32, #tpu.memory_space<vmem>>, vector<14x32xf32>,
    %c128 = arith.constant 128 : index
    %c0_18 = arith.constant 0 : index
    %21 = tpu.strided_load %arg16[%c128, %c0_18] {strides = array<i32: 2, 1>} : memref<896x32xf32, #tpu.memory_space<vmem>>, vector<14x32xf32>
    %c129 = arith.constant 129 : index
    %c0_19 = arith.constant 0 : index
    %22 = tpu.strided_load %arg16[%c129, %c0_19] {strides = array<i32: 2, 1>} : memref<896x32xf32, #tpu.memory_space<vmem>>, vector<14x32xf32>
    %c160 = arith.constant 160 : index
    %c0_20 = arith.constant 0 : index
    %23 = tpu.strided_load %arg16[%c160, %c0_20] {strides = array<i32: 2, 1>} : memref<896x32xf32, #tpu.memory_space<vmem>>, vector<14x32xf32>
    %c161 = arith.constant 161 : index
    %c0_21 = arith.constant 0 : index
    %24 = tpu.strided_load %arg16[%c161, %c0_21] {strides = array<i32: 2, 1>} : memref<896x32xf32, #tpu.memory_space<vmem>>, vector<14x32xf32>
    %25 = arith.maximumf %21, %22 : vector<14x32xf32>
    %26 = arith.maximumf %23, %24 : vector<14x32xf32>
    %27 = arith.maximumf %25, %26 : vector<14x32xf32>
    %c49 = arith.constant 49 : index
    %c0_22 = arith.constant 0 : index
    %28 = vector.load %arg17[%c49, %c0_22] : memref<272x32xf32, #tpu.memory_space<vmem>>, vector<14x32xf32>
    tpu.vector_store %arg17[%c49, %c0_22], %27 {strides = array<i32>} : memref<272x32xf32, #tpu.memory_space<vmem>>, vector<14x32xf32>,
    %c192 = arith.constant 192 : index
    %c0_23 = arith.constant 0 : index
    %29 = tpu.strided_load %arg16[%c192, %c0_23] {strides = array<i32: 2, 1>} : memref<896x32xf32, #tpu.memory_space<vmem>>, vector<14x32xf32>
    %c193 = arith.constant 193 : index
    %c0_24 = arith.constant 0 : index
    %30 = tpu.strided_load %arg16[%c193, %c0_24] {strides = array<i32: 2, 1>} : memref<896x32xf32, #tpu.memory_space<vmem>>, vector<14x32xf32>
    %c224 = arith.constant 224 : index
    %c0_25 = arith.constant 0 : index
    %31 = tpu.strided_load %arg16[%c224, %c0_25] {strides = array<i32: 2, 1>} : memref<896x32xf32, #tpu.memory_space<vmem>>, vector<14x32xf32>
    %c225 = arith.constant 225 : index
    %c0_26 = arith.constant 0 : index
    %32 = tpu.strided_load %arg16[%c225, %c0_26] {strides = array<i32: 2, 1>} : memref<896x32xf32, #tpu.memory_space<vmem>>, vector<14x32xf32>
    %33 = arith.maximumf %29, %30 : vector<14x32xf32>
    %34 = arith.maximumf %31, %32 : vector<14x32xf32>
    %35 = arith.maximumf %33, %34 : vector<14x32xf32>
    %c65_27 = arith.constant 65 : index
    %c0_28 = arith.constant 0 : index
    %36 = vector.load %arg17[%c65_27, %c0_28] : memref<272x32xf32, #tpu.memory_space<vmem>>, vector<14x32xf32>
    tpu.vector_store %arg17[%c65_27, %c0_28], %35 {strides = array<i32>} : memref<272x32xf32, #tpu.memory_space<vmem>>, vector<14x32xf32>,
    %c256 = arith.constant 256 : index
    %c0_29 = arith.constant 0 : index
    %37 = tpu.strided_load %arg16[%c256, %c0_29] {strides = array<i32: 2, 1>} : memref<896x32xf32, #tpu.memory_space<vmem>>, vector<14x32xf32>
    %c257 = arith.constant 257 : index
    %c0_30 = arith.constant 0 : index
    %38 = tpu.strided_load %arg16[%c257, %c0_30] {strides = array<i32: 2, 1>} : memref<896x32xf32, #tpu.memory_space<vmem>>, vector<14x32xf32>
    %c288 = arith.constant 288 : index
    %c0_31 = arith.constant 0 : index
    %39 = tpu.strided_load %arg16[%c288, %c0_31] {strides = array<i32: 2, 1>} : memref<896x32xf32, #tpu.memory_space<vmem>>, vector<14x32xf32>
    %c289 = arith.constant 289 : index
    %c0_32 = arith.constant 0 : index
    %40 = tpu.strided_load %arg16[%c289, %c0_32] {strides = array<i32: 2, 1>} : memref<896x32xf32, #tpu.memory_space<vmem>>, vector<14x32xf32>
    %41 = arith.maximumf %37, %38 : vector<14x32xf32>
    %42 = arith.maximumf %39, %40 : vector<14x32xf32>
    %43 = arith.maximumf %41, %42 : vector<14x32xf32>
    %c81 = arith.constant 81 : index
    %c0_33 = arith.constant 0 : index
    %44 = vector.load %arg17[%c81, %c0_33] : memref<272x32xf32, #tpu.memory_space<vmem>>, vector<14x32xf32>
    tpu.vector_store %arg17[%c81, %c0_33], %43 {strides = array<i32>} : memref<272x32xf32, #tpu.memory_space<vmem>>, vector<14x32xf32>,
    %c320 = arith.constant 320 : index
    %c0_34 = arith.constant 0 : index
    %45 = tpu.strided_load %arg16[%c320, %c0_34] {strides = array<i32: 2, 1>} : memref<896x32xf32, #tpu.memory_space<vmem>>, vector<14x32xf32>
    %c321 = arith.constant 321 : index
    %c0_35 = arith.constant 0 : index
    %46 = tpu.strided_load %arg16[%c321, %c0_35] {strides = array<i32: 2, 1>} : memref<896x32xf32, #tpu.memory_space<vmem>>, vector<14x32xf32>
    %c352 = arith.constant 352 : index
    %c0_36 = arith.constant 0 : index
    %47 = tpu.strided_load %arg16[%c352, %c0_36] {strides = array<i32: 2, 1>} : memref<896x32xf32, #tpu.memory_space<vmem>>, vector<14x32xf32>
    %c353 = arith.constant 353 : index
    %c0_37 = arith.constant 0 : index
    %48 = tpu.strided_load %arg16[%c353, %c0_37] {strides = array<i32: 2, 1>} : memref<896x32xf32, #tpu.memory_space<vmem>>, vector<14x32xf32>
    %49 = arith.maximumf %45, %46 : vector<14x32xf32>
    %50 = arith.maximumf %47, %48 : vector<14x32xf32>
    %51 = arith.maximumf %49, %50 : vector<14x32xf32>
    %c97_38 = arith.constant 97 : index
    %c0_39 = arith.constant 0 : index
    %52 = vector.load %arg17[%c97_38, %c0_39] : memref<272x32xf32, #tpu.memory_space<vmem>>, vector<14x32xf32>
    tpu.vector_store %arg17[%c97_38, %c0_39], %51 {strides = array<i32>} : memref<272x32xf32, #tpu.memory_space<vmem>>, vector<14x32xf32>,
    %c384 = arith.constant 384 : index
    %c0_40 = arith.constant 0 : index
    %53 = tpu.strided_load %arg16[%c384, %c0_40] {strides = array<i32: 2, 1>} : memref<896x32xf32, #tpu.memory_space<vmem>>, vector<14x32xf32>
    %c385 = arith.constant 385 : index
    %c0_41 = arith.constant 0 : index
    %54 = tpu.strided_load %arg16[%c385, %c0_41] {strides = array<i32: 2, 1>} : memref<896x32xf32, #tpu.memory_space<vmem>>, vector<14x32xf32>
    %c416 = arith.constant 416 : index
    %c0_42 = arith.constant 0 : index
    %55 = tpu.strided_load %arg16[%c416, %c0_42] {strides = array<i32: 2, 1>} : memref<896x32xf32, #tpu.memory_space<vmem>>, vector<14x32xf32>
    %c417 = arith.constant 417 : index
    %c0_43 = arith.constant 0 : index
    %56 = tpu.strided_load %arg16[%c417, %c0_43] {strides = array<i32: 2, 1>} : memref<896x32xf32, #tpu.memory_space<vmem>>, vector<14x32xf32>
    %57 = arith.maximumf %53, %54 : vector<14x32xf32>
    %58 = arith.maximumf %55, %56 : vector<14x32xf32>
    %59 = arith.maximumf %57, %58 : vector<14x32xf32>
    %c113 = arith.constant 113 : index
    %c0_44 = arith.constant 0 : index
    %60 = vector.load %arg17[%c113, %c0_44] : memref<272x32xf32, #tpu.memory_space<vmem>>, vector<14x32xf32>
    tpu.vector_store %arg17[%c113, %c0_44], %59 {strides = array<i32>} : memref<272x32xf32, #tpu.memory_space<vmem>>, vector<14x32xf32>,
    %c448 = arith.constant 448 : index
    %c0_45 = arith.constant 0 : index
    %61 = tpu.strided_load %arg16[%c448, %c0_45] {strides = array<i32: 2, 1>} : memref<896x32xf32, #tpu.memory_space<vmem>>, vector<14x32xf32>
    %c449 = arith.constant 449 : index
    %c0_46 = arith.constant 0 : index
    %62 = tpu.strided_load %arg16[%c449, %c0_46] {strides = array<i32: 2, 1>} : memref<896x32xf32, #tpu.memory_space<vmem>>, vector<14x32xf32>
    %c480 = arith.constant 480 : index
    %c0_47 = arith.constant 0 : index
    %63 = tpu.strided_load %arg16[%c480, %c0_47] {strides = array<i32: 2, 1>} : memref<896x32xf32, #tpu.memory_space<vmem>>, vector<14x32xf32>
    %c481 = arith.constant 481 : index
    %c0_48 = arith.constant 0 : index
    %64 = tpu.strided_load %arg16[%c481, %c0_48] {strides = array<i32: 2, 1>} : memref<896x32xf32, #tpu.memory_space<vmem>>, vector<14x32xf32>
    %65 = arith.maximumf %61, %62 : vector<14x32xf32>
    %66 = arith.maximumf %63, %64 : vector<14x32xf32>
    %67 = arith.maximumf %65, %66 : vector<14x32xf32>
    %c129_49 = arith.constant 129 : index
    %c0_50 = arith.constant 0 : index
    %68 = vector.load %arg17[%c129_49, %c0_50] : memref<272x32xf32, #tpu.memory_space<vmem>>, vector<14x32xf32>
    tpu.vector_store %arg17[%c129_49, %c0_50], %67 {strides = array<i32>} : memref<272x32xf32, #tpu.memory_space<vmem>>, vector<14x32xf32>,
    %c512 = arith.constant 512 : index
    %c0_51 = arith.constant 0 : index
    %69 = tpu.strided_load %arg16[%c512, %c0_51] {strides = array<i32: 2, 1>} : memref<896x32xf32, #tpu.memory_space<vmem>>, vector<14x32xf32>
    %c513 = arith.constant 513 : index
    %c0_52 = arith.constant 0 : index
    %70 = tpu.strided_load %arg16[%c513, %c0_52] {strides = array<i32: 2, 1>} : memref<896x32xf32, #tpu.memory_space<vmem>>, vector<14x32xf32>
    %c544 = arith.constant 544 : index
    %c0_53 = arith.constant 0 : index
    %71 = tpu.strided_load %arg16[%c544, %c0_53] {strides = array<i32: 2, 1>} : memref<896x32xf32, #tpu.memory_space<vmem>>, vector<14x32xf32>
    %c545 = arith.constant 545 : index
    %c0_54 = arith.constant 0 : index
    %72 = tpu.strided_load %arg16[%c545, %c0_54] {strides = array<i32: 2, 1>} : memref<896x32xf32, #tpu.memory_space<vmem>>, vector<14x32xf32>
    %73 = arith.maximumf %69, %70 : vector<14x32xf32>
    %74 = arith.maximumf %71, %72 : vector<14x32xf32>
    %75 = arith.maximumf %73, %74 : vector<14x32xf32>
    %c145 = arith.constant 145 : index
    %c0_55 = arith.constant 0 : index
    %76 = vector.load %arg17[%c145, %c0_55] : memref<272x32xf32, #tpu.memory_space<vmem>>, vector<14x32xf32>
    tpu.vector_store %arg17[%c145, %c0_55], %75 {strides = array<i32>} : memref<272x32xf32, #tpu.memory_space<vmem>>, vector<14x32xf32>,
    %c576 = arith.constant 576 : index
    %c0_56 = arith.constant 0 : index
    %77 = tpu.strided_load %arg16[%c576, %c0_56] {strides = array<i32: 2, 1>} : memref<896x32xf32, #tpu.memory_space<vmem>>, vector<14x32xf32>
    %c577 = arith.constant 577 : index
    %c0_57 = arith.constant 0 : index
    %78 = tpu.strided_load %arg16[%c577, %c0_57] {strides = array<i32: 2, 1>} : memref<896x32xf32, #tpu.memory_space<vmem>>, vector<14x32xf32>
    %c608 = arith.constant 608 : index
    %c0_58 = arith.constant 0 : index
    %79 = tpu.strided_load %arg16[%c608, %c0_58] {strides = array<i32: 2, 1>} : memref<896x32xf32, #tpu.memory_space<vmem>>, vector<14x32xf32>
    %c609 = arith.constant 609 : index
    %c0_59 = arith.constant 0 : index
    %80 = tpu.strided_load %arg16[%c609, %c0_59] {strides = array<i32: 2, 1>} : memref<896x32xf32, #tpu.memory_space<vmem>>, vector<14x32xf32>
    %81 = arith.maximumf %77, %78 : vector<14x32xf32>
    %82 = arith.maximumf %79, %80 : vector<14x32xf32>
    %83 = arith.maximumf %81, %82 : vector<14x32xf32>
    %c161_60 = arith.constant 161 : index
    %c0_61 = arith.constant 0 : index
    %84 = vector.load %arg17[%c161_60, %c0_61] : memref<272x32xf32, #tpu.memory_space<vmem>>, vector<14x32xf32>
    tpu.vector_store %arg17[%c161_60, %c0_61], %83 {strides = array<i32>} : memref<272x32xf32, #tpu.memory_space<vmem>>, vector<14x32xf32>,
    %c640 = arith.constant 640 : index
    %c0_62 = arith.constant 0 : index
    %85 = tpu.strided_load %arg16[%c640, %c0_62] {strides = array<i32: 2, 1>} : memref<896x32xf32, #tpu.memory_space<vmem>>, vector<14x32xf32>
    %c641 = arith.constant 641 : index
    %c0_63 = arith.constant 0 : index
    %86 = tpu.strided_load %arg16[%c641, %c0_63] {strides = array<i32: 2, 1>} : memref<896x32xf32, #tpu.memory_space<vmem>>, vector<14x32xf32>
    %c672 = arith.constant 672 : index
    %c0_64 = arith.constant 0 : index
    %87 = tpu.strided_load %arg16[%c672, %c0_64] {strides = array<i32: 2, 1>} : memref<896x32xf32, #tpu.memory_space<vmem>>, vector<14x32xf32>
    %c673 = arith.constant 673 : index
    %c0_65 = arith.constant 0 : index
    %88 = tpu.strided_load %arg16[%c673, %c0_65] {strides = array<i32: 2, 1>} : memref<896x32xf32, #tpu.memory_space<vmem>>, vector<14x32xf32>
    %89 = arith.maximumf %85, %86 : vector<14x32xf32>
    %90 = arith.maximumf %87, %88 : vector<14x32xf32>
    %91 = arith.maximumf %89, %90 : vector<14x32xf32>
    %c177 = arith.constant 177 : index
    %c0_66 = arith.constant 0 : index
    %92 = vector.load %arg17[%c177, %c0_66] : memref<272x32xf32, #tpu.memory_space<vmem>>, vector<14x32xf32>
    tpu.vector_store %arg17[%c177, %c0_66], %91 {strides = array<i32>} : memref<272x32xf32, #tpu.memory_space<vmem>>, vector<14x32xf32>,
    %c704 = arith.constant 704 : index
    %c0_67 = arith.constant 0 : index
    %93 = tpu.strided_load %arg16[%c704, %c0_67] {strides = array<i32: 2, 1>} : memref<896x32xf32, #tpu.memory_space<vmem>>, vector<14x32xf32>
    %c705 = arith.constant 705 : index
    %c0_68 = arith.constant 0 : index
    %94 = tpu.strided_load %arg16[%c705, %c0_68] {strides = array<i32: 2, 1>} : memref<896x32xf32, #tpu.memory_space<vmem>>, vector<14x32xf32>
    %c736 = arith.constant 736 : index
    %c0_69 = arith.constant 0 : index
    %95 = tpu.strided_load %arg16[%c736, %c0_69] {strides = array<i32: 2, 1>} : memref<896x32xf32, #tpu.memory_space<vmem>>, vector<14x32xf32>
    %c737 = arith.constant 737 : index
    %c0_70 = arith.constant 0 : index
    %96 = tpu.strided_load %arg16[%c737, %c0_70] {strides = array<i32: 2, 1>} : memref<896x32xf32, #tpu.memory_space<vmem>>, vector<14x32xf32>
    %97 = arith.maximumf %93, %94 : vector<14x32xf32>
    %98 = arith.maximumf %95, %96 : vector<14x32xf32>
    %99 = arith.maximumf %97, %98 : vector<14x32xf32>
    %c193_71 = arith.constant 193 : index
    %c0_72 = arith.constant 0 : index
    %100 = vector.load %arg17[%c193_71, %c0_72] : memref<272x32xf32, #tpu.memory_space<vmem>>, vector<14x32xf32>
    tpu.vector_store %arg17[%c193_71, %c0_72], %99 {strides = array<i32>} : memref<272x32xf32, #tpu.memory_space<vmem>>, vector<14x32xf32>,
    %c768 = arith.constant 768 : index
    %c0_73 = arith.constant 0 : index
    %101 = tpu.strided_load %arg16[%c768, %c0_73] {strides = array<i32: 2, 1>} : memref<896x32xf32, #tpu.memory_space<vmem>>, vector<14x32xf32>
    %c769 = arith.constant 769 : index
    %c0_74 = arith.constant 0 : index
    %102 = tpu.strided_load %arg16[%c769, %c0_74] {strides = array<i32: 2, 1>} : memref<896x32xf32, #tpu.memory_space<vmem>>, vector<14x32xf32>
    %c800 = arith.constant 800 : index
    %c0_75 = arith.constant 0 : index
    %103 = tpu.strided_load %arg16[%c800, %c0_75] {strides = array<i32: 2, 1>} : memref<896x32xf32, #tpu.memory_space<vmem>>, vector<14x32xf32>
    %c801 = arith.constant 801 : index
    %c0_76 = arith.constant 0 : index
    %104 = tpu.strided_load %arg16[%c801, %c0_76] {strides = array<i32: 2, 1>} : memref<896x32xf32, #tpu.memory_space<vmem>>, vector<14x32xf32>
    %105 = arith.maximumf %101, %102 : vector<14x32xf32>
    %106 = arith.maximumf %103, %104 : vector<14x32xf32>
    %107 = arith.maximumf %105, %106 : vector<14x32xf32>
    %c209 = arith.constant 209 : index
    %c0_77 = arith.constant 0 : index
    %108 = vector.load %arg17[%c209, %c0_77] : memref<272x32xf32, #tpu.memory_space<vmem>>, vector<14x32xf32>
    tpu.vector_store %arg17[%c209, %c0_77], %107 {strides = array<i32>} : memref<272x32xf32, #tpu.memory_space<vmem>>, vector<14x32xf32>,
    %c832 = arith.constant 832 : index
    %c0_78 = arith.constant 0 : index
    %109 = tpu.strided_load %arg16[%c832, %c0_78] {strides = array<i32: 2, 1>} : memref<896x32xf32, #tpu.memory_space<vmem>>, vector<14x32xf32>
    %c833 = arith.constant 833 : index
    %c0_79 = arith.constant 0 : index
    %110 = tpu.strided_load %arg16[%c833, %c0_79] {strides = array<i32: 2, 1>} : memref<896x32xf32, #tpu.memory_space<vmem>>, vector<14x32xf32>
    %c864 = arith.constant 864 : index
    %c0_80 = arith.constant 0 : index
    %111 = tpu.strided_load %arg16[%c864, %c0_80] {strides = array<i32: 2, 1>} : memref<896x32xf32, #tpu.memory_space<vmem>>, vector<14x32xf32>
    %c865 = arith.constant 865 : index
    %c0_81 = arith.constant 0 : index
    %112 = tpu.strided_load %arg16[%c865, %c0_81] {strides = array<i32: 2, 1>} : memref<896x32xf32, #tpu.memory_space<vmem>>, vector<14x32xf32>
    %113 = arith.maximumf %109, %110 : vector<14x32xf32>
    %114 = arith.maximumf %111, %112 : vector<14x32xf32>
    %115 = arith.maximumf %113, %114 : vector<14x32xf32>
    %c225_82 = arith.constant 225 : index
    %c0_83 = arith.constant 0 : index
    %116 = vector.load %arg17[%c225_82, %c0_83] : memref<272x32xf32, #tpu.memory_space<vmem>>, vector<14x32xf32>
    tpu.vector_store %arg17[%c225_82, %c0_83], %115 {strides = array<i32>} : memref<272x32xf32, #tpu.memory_space<vmem>>, vector<14x32xf32>,
    %c0_84 = arith.constant 0 : index
    %c0_85 = arith.constant 0 : index
    %117 = vector.load %arg6[%c0_84, %c0_85] : memref<1x64xf32, #tpu.memory_space<vmem>>, vector<1x64xf32>
    %c0_86 = arith.constant 0 : index
    %c0_87 = arith.constant 0 : index
    %118 = vector.load %arg7[%c0_86, %c0_87] : memref<1x64xf32, #tpu.memory_space<vmem>>, vector<1x64xf32>
    %c0_i32_88 = arith.constant 0 : i32
    %c2_i32 = arith.constant 2 : i32
    %119 = arith.addi %c0_i32_88, %c2_i32 : i32
    %c1_i32_89 = arith.constant 1 : i32
    scf.for %arg21 = %c0_i32_88 to %119 step %c1_i32_89  : i32 {
      %c112_i32 = arith.constant 112 : i32
      %375 = arith.muli %arg21, %c112_i32 : i32
      %376 = tpu.assume_multiple %375, 8 : i32
      %cst_303 = arith.constant 0.000000e+00 : f32
      %377 = vector.broadcast %cst_303 : f32 to vector<112x64xf32>
      %c0_i32_304 = arith.constant 0 : i32
      %378 = arith.addi %376, %c0_i32_304 : i32
      %c0_i32_305 = arith.constant 0 : i32
      %379 = arith.addi %378, %c0_i32_305 : i32
      %380 = arith.index_cast %379 : i32 to index
      %c0_306 = arith.constant 0 : index
      %381 = vector.load %arg17[%380, %c0_306] : memref<272x32xf32, #tpu.memory_space<vmem>>, vector<112x32xf32>
      %c0_307 = arith.constant 0 : index
      %c0_308 = arith.constant 0 : index
      %382 = vector.load %arg5[%c0_307, %c0_308] : memref<288x64xbf16, #tpu.memory_space<vmem>>, vector<32x64xbf16>
      %383 = arith.truncf %381 : vector<112x32xf32> to vector<112x32xbf16>
      %cst_309 = arith.constant dense<0.000000e+00> : vector<112x64xf32>
      %384 = tpu.matmul %383, %382, %cst_309 {dimension_numbers = #tpu.dot_dimension_numbers<[1], [0], [0], [1], [0, 0, 1, 1], [], []>} : vector<112x32xbf16>, vector<32x64xbf16>, vector<112x64xf32> -> vector<112x64xf32>
      %385 = arith.addf %377, %384 : vector<112x64xf32>
      %c0_i32_310 = arith.constant 0 : i32
      %386 = arith.addi %376, %c0_i32_310 : i32
      %c1_i32_311 = arith.constant 1 : i32
      %387 = arith.addi %386, %c1_i32_311 : i32
      %388 = arith.index_cast %387 : i32 to index
      %c0_312 = arith.constant 0 : index
      %389 = vector.load %arg17[%388, %c0_312] : memref<272x32xf32, #tpu.memory_space<vmem>>, vector<112x32xf32>
      %c32_313 = arith.constant 32 : index
      %c0_314 = arith.constant 0 : index
      %390 = vector.load %arg5[%c32_313, %c0_314] : memref<288x64xbf16, #tpu.memory_space<vmem>>, vector<32x64xbf16>
      %391 = arith.truncf %389 : vector<112x32xf32> to vector<112x32xbf16>
      %cst_315 = arith.constant dense<0.000000e+00> : vector<112x64xf32>
      %392 = tpu.matmul %391, %390, %cst_315 {dimension_numbers = #tpu.dot_dimension_numbers<[1], [0], [0], [1], [0, 0, 1, 1], [], []>} : vector<112x32xbf16>, vector<32x64xbf16>, vector<112x64xf32> -> vector<112x64xf32>
      %393 = arith.addf %385, %392 : vector<112x64xf32>
      %c0_i32_316 = arith.constant 0 : i32
      %394 = arith.addi %376, %c0_i32_316 : i32
      %c2_i32_317 = arith.constant 2 : i32
      %395 = arith.addi %394, %c2_i32_317 : i32
      %396 = arith.index_cast %395 : i32 to index
      %c0_318 = arith.constant 0 : index
      %397 = vector.load %arg17[%396, %c0_318] : memref<272x32xf32, #tpu.memory_space<vmem>>, vector<112x32xf32>
      %c64_319 = arith.constant 64 : index
      %c0_320 = arith.constant 0 : index
      %398 = vector.load %arg5[%c64_319, %c0_320] : memref<288x64xbf16, #tpu.memory_space<vmem>>, vector<32x64xbf16>
      %399 = arith.truncf %397 : vector<112x32xf32> to vector<112x32xbf16>
      %cst_321 = arith.constant dense<0.000000e+00> : vector<112x64xf32>
      %400 = tpu.matmul %399, %398, %cst_321 {dimension_numbers = #tpu.dot_dimension_numbers<[1], [0], [0], [1], [0, 0, 1, 1], [], []>} : vector<112x32xbf16>, vector<32x64xbf16>, vector<112x64xf32> -> vector<112x64xf32>
      %401 = arith.addf %393, %400 : vector<112x64xf32>
      %c16_i32_322 = arith.constant 16 : i32
      %402 = arith.addi %376, %c16_i32_322 : i32
      %c0_i32_323 = arith.constant 0 : i32
      %403 = arith.addi %402, %c0_i32_323 : i32
      %404 = arith.index_cast %403 : i32 to index
      %c0_324 = arith.constant 0 : index
      %405 = vector.load %arg17[%404, %c0_324] : memref<272x32xf32, #tpu.memory_space<vmem>>, vector<112x32xf32>
      %c96_325 = arith.constant 96 : index
      %c0_326 = arith.constant 0 : index
      %406 = vector.load %arg5[%c96_325, %c0_326] : memref<288x64xbf16, #tpu.memory_space<vmem>>, vector<32x64xbf16>
      %407 = arith.truncf %405 : vector<112x32xf32> to vector<112x32xbf16>
      %cst_327 = arith.constant dense<0.000000e+00> : vector<112x64xf32>
      %408 = tpu.matmul %407, %406, %cst_327 {dimension_numbers = #tpu.dot_dimension_numbers<[1], [0], [0], [1], [0, 0, 1, 1], [], []>} : vector<112x32xbf16>, vector<32x64xbf16>, vector<112x64xf32> -> vector<112x64xf32>
      %409 = arith.addf %401, %408 : vector<112x64xf32>
      %c16_i32_328 = arith.constant 16 : i32
      %410 = arith.addi %376, %c16_i32_328 : i32
      %c1_i32_329 = arith.constant 1 : i32
      %411 = arith.addi %410, %c1_i32_329 : i32
      %412 = arith.index_cast %411 : i32 to index
      %c0_330 = arith.constant 0 : index
      %413 = vector.load %arg17[%412, %c0_330] : memref<272x32xf32, #tpu.memory_space<vmem>>, vector<112x32xf32>
      %c128_331 = arith.constant 128 : index
      %c0_332 = arith.constant 0 : index
      %414 = vector.load %arg5[%c128_331, %c0_332] : memref<288x64xbf16, #tpu.memory_space<vmem>>, vector<32x64xbf16>
      %415 = arith.truncf %413 : vector<112x32xf32> to vector<112x32xbf16>
      %cst_333 = arith.constant dense<0.000000e+00> : vector<112x64xf32>
      %416 = tpu.matmul %415, %414, %cst_333 {dimension_numbers = #tpu.dot_dimension_numbers<[1], [0], [0], [1], [0, 0, 1, 1], [], []>} : vector<112x32xbf16>, vector<32x64xbf16>, vector<112x64xf32> -> vector<112x64xf32>
      %417 = arith.addf %409, %416 : vector<112x64xf32>
      %c16_i32_334 = arith.constant 16 : i32
      %418 = arith.addi %376, %c16_i32_334 : i32
      %c2_i32_335 = arith.constant 2 : i32
      %419 = arith.addi %418, %c2_i32_335 : i32
      %420 = arith.index_cast %419 : i32 to index
      %c0_336 = arith.constant 0 : index
      %421 = vector.load %arg17[%420, %c0_336] : memref<272x32xf32, #tpu.memory_space<vmem>>, vector<112x32xf32>
      %c160_337 = arith.constant 160 : index
      %c0_338 = arith.constant 0 : index
      %422 = vector.load %arg5[%c160_337, %c0_338] : memref<288x64xbf16, #tpu.memory_space<vmem>>, vector<32x64xbf16>
      %423 = arith.truncf %421 : vector<112x32xf32> to vector<112x32xbf16>
      %cst_339 = arith.constant dense<0.000000e+00> : vector<112x64xf32>
      %424 = tpu.matmul %423, %422, %cst_339 {dimension_numbers = #tpu.dot_dimension_numbers<[1], [0], [0], [1], [0, 0, 1, 1], [], []>} : vector<112x32xbf16>, vector<32x64xbf16>, vector<112x64xf32> -> vector<112x64xf32>
      %425 = arith.addf %417, %424 : vector<112x64xf32>
      %c32_i32_340 = arith.constant 32 : i32
      %426 = arith.addi %376, %c32_i32_340 : i32
      %c0_i32_341 = arith.constant 0 : i32
      %427 = arith.addi %426, %c0_i32_341 : i32
      %428 = arith.index_cast %427 : i32 to index
      %c0_342 = arith.constant 0 : index
      %429 = vector.load %arg17[%428, %c0_342] : memref<272x32xf32, #tpu.memory_space<vmem>>, vector<112x32xf32>
      %c192_343 = arith.constant 192 : index
      %c0_344 = arith.constant 0 : index
      %430 = vector.load %arg5[%c192_343, %c0_344] : memref<288x64xbf16, #tpu.memory_space<vmem>>, vector<32x64xbf16>
      %431 = arith.truncf %429 : vector<112x32xf32> to vector<112x32xbf16>
      %cst_345 = arith.constant dense<0.000000e+00> : vector<112x64xf32>
      %432 = tpu.matmul %431, %430, %cst_345 {dimension_numbers = #tpu.dot_dimension_numbers<[1], [0], [0], [1], [0, 0, 1, 1], [], []>} : vector<112x32xbf16>, vector<32x64xbf16>, vector<112x64xf32> -> vector<112x64xf32>
      %433 = arith.addf %425, %432 : vector<112x64xf32>
      %c32_i32_346 = arith.constant 32 : i32
      %434 = arith.addi %376, %c32_i32_346 : i32
      %c1_i32_347 = arith.constant 1 : i32
      %435 = arith.addi %434, %c1_i32_347 : i32
      %436 = arith.index_cast %435 : i32 to index
      %c0_348 = arith.constant 0 : index
      %437 = vector.load %arg17[%436, %c0_348] : memref<272x32xf32, #tpu.memory_space<vmem>>, vector<112x32xf32>
      %c224_349 = arith.constant 224 : index
      %c0_350 = arith.constant 0 : index
      %438 = vector.load %arg5[%c224_349, %c0_350] : memref<288x64xbf16, #tpu.memory_space<vmem>>, vector<32x64xbf16>
      %439 = arith.truncf %437 : vector<112x32xf32> to vector<112x32xbf16>
      %cst_351 = arith.constant dense<0.000000e+00> : vector<112x64xf32>
      %440 = tpu.matmul %439, %438, %cst_351 {dimension_numbers = #tpu.dot_dimension_numbers<[1], [0], [0], [1], [0, 0, 1, 1], [], []>} : vector<112x32xbf16>, vector<32x64xbf16>, vector<112x64xf32> -> vector<112x64xf32>
      %441 = arith.addf %433, %440 : vector<112x64xf32>
      %c32_i32_352 = arith.constant 32 : i32
      %442 = arith.addi %376, %c32_i32_352 : i32
      %c2_i32_353 = arith.constant 2 : i32
      %443 = arith.addi %442, %c2_i32_353 : i32
      %444 = arith.index_cast %443 : i32 to index
      %c0_354 = arith.constant 0 : index
      %445 = vector.load %arg17[%444, %c0_354] : memref<272x32xf32, #tpu.memory_space<vmem>>, vector<112x32xf32>
      %c256_355 = arith.constant 256 : index
      %c0_356 = arith.constant 0 : index
      %446 = vector.load %arg5[%c256_355, %c0_356] : memref<288x64xbf16, #tpu.memory_space<vmem>>, vector<32x64xbf16>
      %447 = arith.truncf %445 : vector<112x32xf32> to vector<112x32xbf16>
      %cst_357 = arith.constant dense<0.000000e+00> : vector<112x64xf32>
      %448 = tpu.matmul %447, %446, %cst_357 {dimension_numbers = #tpu.dot_dimension_numbers<[1], [0], [0], [1], [0, 0, 1, 1], [], []>} : vector<112x32xbf16>, vector<32x64xbf16>, vector<112x64xf32> -> vector<112x64xf32>
      %449 = arith.addf %441, %448 : vector<112x64xf32>
      %450 = vector.broadcast %117 : vector<1x64xf32> to vector<112x64xf32>
      %451 = arith.mulf %449, %450 : vector<112x64xf32>
      %452 = vector.broadcast %118 : vector<1x64xf32> to vector<112x64xf32>
      %453 = arith.addf %451, %452 : vector<112x64xf32>
      %cst_358 = arith.constant 0.000000e+00 : f32
      %454 = vector.broadcast %cst_358 : f32 to vector<112x64xf32>
      %455 = arith.maximumf %453, %454 : vector<112x64xf32>
      %456 = arith.index_cast %376 : i32 to index
      %c0_359 = arith.constant 0 : index
      %457 = vector.load %arg18[%456, %c0_359] : memref<224x64xf32, #tpu.memory_space<vmem>>, vector<112x64xf32>
      tpu.vector_store %arg18[%456, %c0_359], %455 {strides = array<i32>} : memref<224x64xf32, #tpu.memory_space<vmem>>, vector<112x64xf32>,
    }
    %c2_i32_90 = arith.constant 2 : i32
    %cst_91 = arith.constant 0.000000e+00 : f32
    %120 = vector.broadcast %cst_91 : f32 to vector<152x64xf32>
    %c0_92 = arith.constant 0 : index
    %c0_93 = arith.constant 0 : index
    %121 = vector.load %arg19[%c0_92, %c0_93] : memref<152x64xf32, #tpu.memory_space<vmem>>, vector<152x64xf32>
    tpu.vector_store %arg19[%c0_92, %c0_93], %120 {strides = array<i32>} : memref<152x64xf32, #tpu.memory_space<vmem>>, vector<152x64xf32>,
    %c0_94 = arith.constant 0 : index
    %c0_95 = arith.constant 0 : index
    %122 = tpu.strided_load %arg18[%c0_94, %c0_95] {strides = array<i32: 2, 1>} : memref<224x64xf32, #tpu.memory_space<vmem>>, vector<7x64xf32>
    %c1_96 = arith.constant 1 : index
    %c0_97 = arith.constant 0 : index
    %123 = tpu.strided_load %arg18[%c1_96, %c0_97] {strides = array<i32: 2, 1>} : memref<224x64xf32, #tpu.memory_space<vmem>>, vector<7x64xf32>
    %c16 = arith.constant 16 : index
    %c0_98 = arith.constant 0 : index
    %124 = tpu.strided_load %arg18[%c16, %c0_98] {strides = array<i32: 2, 1>} : memref<224x64xf32, #tpu.memory_space<vmem>>, vector<7x64xf32>
    %c17_99 = arith.constant 17 : index
    %c0_100 = arith.constant 0 : index
    %125 = tpu.strided_load %arg18[%c17_99, %c0_100] {strides = array<i32: 2, 1>} : memref<224x64xf32, #tpu.memory_space<vmem>>, vector<7x64xf32>
    %126 = arith.maximumf %122, %123 : vector<7x64xf32>
    %127 = arith.maximumf %124, %125 : vector<7x64xf32>
    %128 = arith.maximumf %126, %127 : vector<7x64xf32>
    %c17_101 = arith.constant 17 : index
    %c0_102 = arith.constant 0 : index
    %129 = vector.load %arg19[%c17_101, %c0_102] : memref<152x64xf32, #tpu.memory_space<vmem>>, vector<7x64xf32>
    tpu.vector_store %arg19[%c17_101, %c0_102], %128 {strides = array<i32>} : memref<152x64xf32, #tpu.memory_space<vmem>>, vector<7x64xf32>,
    %c32_103 = arith.constant 32 : index
    %c0_104 = arith.constant 0 : index
    %130 = tpu.strided_load %arg18[%c32_103, %c0_104] {strides = array<i32: 2, 1>} : memref<224x64xf32, #tpu.memory_space<vmem>>, vector<7x64xf32>
    %c33_105 = arith.constant 33 : index
    %c0_106 = arith.constant 0 : index
    %131 = tpu.strided_load %arg18[%c33_105, %c0_106] {strides = array<i32: 2, 1>} : memref<224x64xf32, #tpu.memory_space<vmem>>, vector<7x64xf32>
    %c48 = arith.constant 48 : index
    %c0_107 = arith.constant 0 : index
    %132 = tpu.strided_load %arg18[%c48, %c0_107] {strides = array<i32: 2, 1>} : memref<224x64xf32, #tpu.memory_space<vmem>>, vector<7x64xf32>
    %c49_108 = arith.constant 49 : index
    %c0_109 = arith.constant 0 : index
    %133 = tpu.strided_load %arg18[%c49_108, %c0_109] {strides = array<i32: 2, 1>} : memref<224x64xf32, #tpu.memory_space<vmem>>, vector<7x64xf32>
    %134 = arith.maximumf %130, %131 : vector<7x64xf32>
    %135 = arith.maximumf %132, %133 : vector<7x64xf32>
    %136 = arith.maximumf %134, %135 : vector<7x64xf32>
    %c33_110 = arith.constant 33 : index
    %c0_111 = arith.constant 0 : index
    %137 = vector.load %arg19[%c33_110, %c0_111] : memref<152x64xf32, #tpu.memory_space<vmem>>, vector<7x64xf32>
    tpu.vector_store %arg19[%c33_110, %c0_111], %136 {strides = array<i32>} : memref<152x64xf32, #tpu.memory_space<vmem>>, vector<7x64xf32>,
    %c64_112 = arith.constant 64 : index
    %c0_113 = arith.constant 0 : index
    %138 = tpu.strided_load %arg18[%c64_112, %c0_113] {strides = array<i32: 2, 1>} : memref<224x64xf32, #tpu.memory_space<vmem>>, vector<7x64xf32>
    %c65_114 = arith.constant 65 : index
    %c0_115 = arith.constant 0 : index
    %139 = tpu.strided_load %arg18[%c65_114, %c0_115] {strides = array<i32: 2, 1>} : memref<224x64xf32, #tpu.memory_space<vmem>>, vector<7x64xf32>
    %c80 = arith.constant 80 : index
    %c0_116 = arith.constant 0 : index
    %140 = tpu.strided_load %arg18[%c80, %c0_116] {strides = array<i32: 2, 1>} : memref<224x64xf32, #tpu.memory_space<vmem>>, vector<7x64xf32>
    %c81_117 = arith.constant 81 : index
    %c0_118 = arith.constant 0 : index
    %141 = tpu.strided_load %arg18[%c81_117, %c0_118] {strides = array<i32: 2, 1>} : memref<224x64xf32, #tpu.memory_space<vmem>>, vector<7x64xf32>
    %142 = arith.maximumf %138, %139 : vector<7x64xf32>
    %143 = arith.maximumf %140, %141 : vector<7x64xf32>
    %144 = arith.maximumf %142, %143 : vector<7x64xf32>
    %c49_119 = arith.constant 49 : index
    %c0_120 = arith.constant 0 : index
    %145 = vector.load %arg19[%c49_119, %c0_120] : memref<152x64xf32, #tpu.memory_space<vmem>>, vector<7x64xf32>
    tpu.vector_store %arg19[%c49_119, %c0_120], %144 {strides = array<i32>} : memref<152x64xf32, #tpu.memory_space<vmem>>, vector<7x64xf32>,
    %c96_121 = arith.constant 96 : index
    %c0_122 = arith.constant 0 : index
    %146 = tpu.strided_load %arg18[%c96_121, %c0_122] {strides = array<i32: 2, 1>} : memref<224x64xf32, #tpu.memory_space<vmem>>, vector<7x64xf32>
    %c97_123 = arith.constant 97 : index
    %c0_124 = arith.constant 0 : index
    %147 = tpu.strided_load %arg18[%c97_123, %c0_124] {strides = array<i32: 2, 1>} : memref<224x64xf32, #tpu.memory_space<vmem>>, vector<7x64xf32>
    %c112 = arith.constant 112 : index
    %c0_125 = arith.constant 0 : index
    %148 = tpu.strided_load %arg18[%c112, %c0_125] {strides = array<i32: 2, 1>} : memref<224x64xf32, #tpu.memory_space<vmem>>, vector<7x64xf32>
    %c113_126 = arith.constant 113 : index
    %c0_127 = arith.constant 0 : index
    %149 = tpu.strided_load %arg18[%c113_126, %c0_127] {strides = array<i32: 2, 1>} : memref<224x64xf32, #tpu.memory_space<vmem>>, vector<7x64xf32>
    %150 = arith.maximumf %146, %147 : vector<7x64xf32>
    %151 = arith.maximumf %148, %149 : vector<7x64xf32>
    %152 = arith.maximumf %150, %151 : vector<7x64xf32>
    %c65_128 = arith.constant 65 : index
    %c0_129 = arith.constant 0 : index
    %153 = vector.load %arg19[%c65_128, %c0_129] : memref<152x64xf32, #tpu.memory_space<vmem>>, vector<7x64xf32>
    tpu.vector_store %arg19[%c65_128, %c0_129], %152 {strides = array<i32>} : memref<152x64xf32, #tpu.memory_space<vmem>>, vector<7x64xf32>,
    %c128_130 = arith.constant 128 : index
    %c0_131 = arith.constant 0 : index
    %154 = tpu.strided_load %arg18[%c128_130, %c0_131] {strides = array<i32: 2, 1>} : memref<224x64xf32, #tpu.memory_space<vmem>>, vector<7x64xf32>
    %c129_132 = arith.constant 129 : index
    %c0_133 = arith.constant 0 : index
    %155 = tpu.strided_load %arg18[%c129_132, %c0_133] {strides = array<i32: 2, 1>} : memref<224x64xf32, #tpu.memory_space<vmem>>, vector<7x64xf32>
    %c144 = arith.constant 144 : index
    %c0_134 = arith.constant 0 : index
    %156 = tpu.strided_load %arg18[%c144, %c0_134] {strides = array<i32: 2, 1>} : memref<224x64xf32, #tpu.memory_space<vmem>>, vector<7x64xf32>
    %c145_135 = arith.constant 145 : index
    %c0_136 = arith.constant 0 : index
    %157 = tpu.strided_load %arg18[%c145_135, %c0_136] {strides = array<i32: 2, 1>} : memref<224x64xf32, #tpu.memory_space<vmem>>, vector<7x64xf32>
    %158 = arith.maximumf %154, %155 : vector<7x64xf32>
    %159 = arith.maximumf %156, %157 : vector<7x64xf32>
    %160 = arith.maximumf %158, %159 : vector<7x64xf32>
    %c81_137 = arith.constant 81 : index
    %c0_138 = arith.constant 0 : index
    %161 = vector.load %arg19[%c81_137, %c0_138] : memref<152x64xf32, #tpu.memory_space<vmem>>, vector<7x64xf32>
    tpu.vector_store %arg19[%c81_137, %c0_138], %160 {strides = array<i32>} : memref<152x64xf32, #tpu.memory_space<vmem>>, vector<7x64xf32>,
    %c160_139 = arith.constant 160 : index
    %c0_140 = arith.constant 0 : index
    %162 = tpu.strided_load %arg18[%c160_139, %c0_140] {strides = array<i32: 2, 1>} : memref<224x64xf32, #tpu.memory_space<vmem>>, vector<7x64xf32>
    %c161_141 = arith.constant 161 : index
    %c0_142 = arith.constant 0 : index
    %163 = tpu.strided_load %arg18[%c161_141, %c0_142] {strides = array<i32: 2, 1>} : memref<224x64xf32, #tpu.memory_space<vmem>>, vector<7x64xf32>
    %c176 = arith.constant 176 : index
    %c0_143 = arith.constant 0 : index
    %164 = tpu.strided_load %arg18[%c176, %c0_143] {strides = array<i32: 2, 1>} : memref<224x64xf32, #tpu.memory_space<vmem>>, vector<7x64xf32>
    %c177_144 = arith.constant 177 : index
    %c0_145 = arith.constant 0 : index
    %165 = tpu.strided_load %arg18[%c177_144, %c0_145] {strides = array<i32: 2, 1>} : memref<224x64xf32, #tpu.memory_space<vmem>>, vector<7x64xf32>
    %166 = arith.maximumf %162, %163 : vector<7x64xf32>
    %167 = arith.maximumf %164, %165 : vector<7x64xf32>
    %168 = arith.maximumf %166, %167 : vector<7x64xf32>
    %c97_146 = arith.constant 97 : index
    %c0_147 = arith.constant 0 : index
    %169 = vector.load %arg19[%c97_146, %c0_147] : memref<152x64xf32, #tpu.memory_space<vmem>>, vector<7x64xf32>
    tpu.vector_store %arg19[%c97_146, %c0_147], %168 {strides = array<i32>} : memref<152x64xf32, #tpu.memory_space<vmem>>, vector<7x64xf32>,
    %c192_148 = arith.constant 192 : index
    %c0_149 = arith.constant 0 : index
    %170 = tpu.strided_load %arg18[%c192_148, %c0_149] {strides = array<i32: 2, 1>} : memref<224x64xf32, #tpu.memory_space<vmem>>, vector<7x64xf32>
    %c193_150 = arith.constant 193 : index
    %c0_151 = arith.constant 0 : index
    %171 = tpu.strided_load %arg18[%c193_150, %c0_151] {strides = array<i32: 2, 1>} : memref<224x64xf32, #tpu.memory_space<vmem>>, vector<7x64xf32>
    %c208 = arith.constant 208 : index
    %c0_152 = arith.constant 0 : index
    %172 = tpu.strided_load %arg18[%c208, %c0_152] {strides = array<i32: 2, 1>} : memref<224x64xf32, #tpu.memory_space<vmem>>, vector<7x64xf32>
    %c209_153 = arith.constant 209 : index
    %c0_154 = arith.constant 0 : index
    %173 = tpu.strided_load %arg18[%c209_153, %c0_154] {strides = array<i32: 2, 1>} : memref<224x64xf32, #tpu.memory_space<vmem>>, vector<7x64xf32>
    %174 = arith.maximumf %170, %171 : vector<7x64xf32>
    %175 = arith.maximumf %172, %173 : vector<7x64xf32>
    %176 = arith.maximumf %174, %175 : vector<7x64xf32>
    %c113_155 = arith.constant 113 : index
    %c0_156 = arith.constant 0 : index
    %177 = vector.load %arg19[%c113_155, %c0_156] : memref<152x64xf32, #tpu.memory_space<vmem>>, vector<7x64xf32>
    tpu.vector_store %arg19[%c113_155, %c0_156], %176 {strides = array<i32>} : memref<152x64xf32, #tpu.memory_space<vmem>>, vector<7x64xf32>,
    %c0_157 = arith.constant 0 : index
    %c0_158 = arith.constant 0 : index
    %178 = vector.load %arg9[%c0_157, %c0_158] : memref<1x128xf32, #tpu.memory_space<vmem>>, vector<1x128xf32>
    %c0_159 = arith.constant 0 : index
    %c0_160 = arith.constant 0 : index
    %179 = vector.load %arg10[%c0_159, %c0_160] : memref<1x128xf32, #tpu.memory_space<vmem>>, vector<1x128xf32>
    %c0_i32_161 = arith.constant 0 : i32
    %c104_i32 = arith.constant 104 : i32
    %180 = arith.muli %c0_i32_161, %c104_i32 : i32
    %181 = tpu.assume_multiple %180, 8 : i32
    %cst_162 = arith.constant 0.000000e+00 : f32
    %182 = vector.broadcast %cst_162 : f32 to vector<104x128xf32>
    %c0_i32_163 = arith.constant 0 : i32
    %183 = arith.addi %181, %c0_i32_163 : i32
    %c0_i32_164 = arith.constant 0 : i32
    %184 = arith.addi %183, %c0_i32_164 : i32
    %185 = arith.index_cast %184 : i32 to index
    %c0_165 = arith.constant 0 : index
    %186 = vector.load %arg19[%185, %c0_165] : memref<152x64xf32, #tpu.memory_space<vmem>>, vector<104x64xf32>
    %c0_166 = arith.constant 0 : index
    %c0_167 = arith.constant 0 : index
    %187 = vector.load %arg8[%c0_166, %c0_167] : memref<576x128xbf16, #tpu.memory_space<vmem>>, vector<64x128xbf16>
    %188 = arith.truncf %186 : vector<104x64xf32> to vector<104x64xbf16>
    %cst_168 = arith.constant dense<0.000000e+00> : vector<104x128xf32>
    %189 = tpu.matmul %188, %187, %cst_168 {dimension_numbers = #tpu.dot_dimension_numbers<[1], [0], [0], [1], [0, 0, 1, 1], [], []>} : vector<104x64xbf16>, vector<64x128xbf16>, vector<104x128xf32> -> vector<104x128xf32>
    %190 = arith.addf %182, %189 : vector<104x128xf32>
    %c0_i32_169 = arith.constant 0 : i32
    %191 = arith.addi %181, %c0_i32_169 : i32
    %c1_i32_170 = arith.constant 1 : i32
    %192 = arith.addi %191, %c1_i32_170 : i32
    %193 = arith.index_cast %192 : i32 to index
    %c0_171 = arith.constant 0 : index
    %194 = vector.load %arg19[%193, %c0_171] : memref<152x64xf32, #tpu.memory_space<vmem>>, vector<104x64xf32>
    %c64_172 = arith.constant 64 : index
    %c0_173 = arith.constant 0 : index
    %195 = vector.load %arg8[%c64_172, %c0_173] : memref<576x128xbf16, #tpu.memory_space<vmem>>, vector<64x128xbf16>
    %196 = arith.truncf %194 : vector<104x64xf32> to vector<104x64xbf16>
    %cst_174 = arith.constant dense<0.000000e+00> : vector<104x128xf32>
    %197 = tpu.matmul %196, %195, %cst_174 {dimension_numbers = #tpu.dot_dimension_numbers<[1], [0], [0], [1], [0, 0, 1, 1], [], []>} : vector<104x64xbf16>, vector<64x128xbf16>, vector<104x128xf32> -> vector<104x128xf32>
    %198 = arith.addf %190, %197 : vector<104x128xf32>
    %c0_i32_175 = arith.constant 0 : i32
    %199 = arith.addi %181, %c0_i32_175 : i32
    %c2_i32_176 = arith.constant 2 : i32
    %200 = arith.addi %199, %c2_i32_176 : i32
    %201 = arith.index_cast %200 : i32 to index
    %c0_177 = arith.constant 0 : index
    %202 = vector.load %arg19[%201, %c0_177] : memref<152x64xf32, #tpu.memory_space<vmem>>, vector<104x64xf32>
    %c128_178 = arith.constant 128 : index
    %c0_179 = arith.constant 0 : index
    %203 = vector.load %arg8[%c128_178, %c0_179] : memref<576x128xbf16, #tpu.memory_space<vmem>>, vector<64x128xbf16>
    %204 = arith.truncf %202 : vector<104x64xf32> to vector<104x64xbf16>
    %cst_180 = arith.constant dense<0.000000e+00> : vector<104x128xf32>
    %205 = tpu.matmul %204, %203, %cst_180 {dimension_numbers = #tpu.dot_dimension_numbers<[1], [0], [0], [1], [0, 0, 1, 1], [], []>} : vector<104x64xbf16>, vector<64x128xbf16>, vector<104x128xf32> -> vector<104x128xf32>
    %206 = arith.addf %198, %205 : vector<104x128xf32>
    %c16_i32 = arith.constant 16 : i32
    %207 = arith.addi %181, %c16_i32 : i32
    %c0_i32_181 = arith.constant 0 : i32
    %208 = arith.addi %207, %c0_i32_181 : i32
    %209 = arith.index_cast %208 : i32 to index
    %c0_182 = arith.constant 0 : index
    %210 = vector.load %arg19[%209, %c0_182] : memref<152x64xf32, #tpu.memory_space<vmem>>, vector<104x64xf32>
    %c192_183 = arith.constant 192 : index
    %c0_184 = arith.constant 0 : index
    %211 = vector.load %arg8[%c192_183, %c0_184] : memref<576x128xbf16, #tpu.memory_space<vmem>>, vector<64x128xbf16>
    %212 = arith.truncf %210 : vector<104x64xf32> to vector<104x64xbf16>
    %cst_185 = arith.constant dense<0.000000e+00> : vector<104x128xf32>
    %213 = tpu.matmul %212, %211, %cst_185 {dimension_numbers = #tpu.dot_dimension_numbers<[1], [0], [0], [1], [0, 0, 1, 1], [], []>} : vector<104x64xbf16>, vector<64x128xbf16>, vector<104x128xf32> -> vector<104x128xf32>
    %214 = arith.addf %206, %213 : vector<104x128xf32>
    %c16_i32_186 = arith.constant 16 : i32
    %215 = arith.addi %181, %c16_i32_186 : i32
    %c1_i32_187 = arith.constant 1 : i32
    %216 = arith.addi %215, %c1_i32_187 : i32
    %217 = arith.index_cast %216 : i32 to index
    %c0_188 = arith.constant 0 : index
    %218 = vector.load %arg19[%217, %c0_188] : memref<152x64xf32, #tpu.memory_space<vmem>>, vector<104x64xf32>
    %c256_189 = arith.constant 256 : index
    %c0_190 = arith.constant 0 : index
    %219 = vector.load %arg8[%c256_189, %c0_190] : memref<576x128xbf16, #tpu.memory_space<vmem>>, vector<64x128xbf16>
    %220 = arith.truncf %218 : vector<104x64xf32> to vector<104x64xbf16>
    %cst_191 = arith.constant dense<0.000000e+00> : vector<104x128xf32>
    %221 = tpu.matmul %220, %219, %cst_191 {dimension_numbers = #tpu.dot_dimension_numbers<[1], [0], [0], [1], [0, 0, 1, 1], [], []>} : vector<104x64xbf16>, vector<64x128xbf16>, vector<104x128xf32> -> vector<104x128xf32>
    %222 = arith.addf %214, %221 : vector<104x128xf32>
    %c16_i32_192 = arith.constant 16 : i32
    %223 = arith.addi %181, %c16_i32_192 : i32
    %c2_i32_193 = arith.constant 2 : i32
    %224 = arith.addi %223, %c2_i32_193 : i32
    %225 = arith.index_cast %224 : i32 to index
    %c0_194 = arith.constant 0 : index
    %226 = vector.load %arg19[%225, %c0_194] : memref<152x64xf32, #tpu.memory_space<vmem>>, vector<104x64xf32>
    %c320_195 = arith.constant 320 : index
    %c0_196 = arith.constant 0 : index
    %227 = vector.load %arg8[%c320_195, %c0_196] : memref<576x128xbf16, #tpu.memory_space<vmem>>, vector<64x128xbf16>
    %228 = arith.truncf %226 : vector<104x64xf32> to vector<104x64xbf16>
    %cst_197 = arith.constant dense<0.000000e+00> : vector<104x128xf32>
    %229 = tpu.matmul %228, %227, %cst_197 {dimension_numbers = #tpu.dot_dimension_numbers<[1], [0], [0], [1], [0, 0, 1, 1], [], []>} : vector<104x64xbf16>, vector<64x128xbf16>, vector<104x128xf32> -> vector<104x128xf32>
    %230 = arith.addf %222, %229 : vector<104x128xf32>
    %c32_i32 = arith.constant 32 : i32
    %231 = arith.addi %181, %c32_i32 : i32
    %c0_i32_198 = arith.constant 0 : i32
    %232 = arith.addi %231, %c0_i32_198 : i32
    %233 = arith.index_cast %232 : i32 to index
    %c0_199 = arith.constant 0 : index
    %234 = vector.load %arg19[%233, %c0_199] : memref<152x64xf32, #tpu.memory_space<vmem>>, vector<104x64xf32>
    %c384_200 = arith.constant 384 : index
    %c0_201 = arith.constant 0 : index
    %235 = vector.load %arg8[%c384_200, %c0_201] : memref<576x128xbf16, #tpu.memory_space<vmem>>, vector<64x128xbf16>
    %236 = arith.truncf %234 : vector<104x64xf32> to vector<104x64xbf16>
    %cst_202 = arith.constant dense<0.000000e+00> : vector<104x128xf32>
    %237 = tpu.matmul %236, %235, %cst_202 {dimension_numbers = #tpu.dot_dimension_numbers<[1], [0], [0], [1], [0, 0, 1, 1], [], []>} : vector<104x64xbf16>, vector<64x128xbf16>, vector<104x128xf32> -> vector<104x128xf32>
    %238 = arith.addf %230, %237 : vector<104x128xf32>
    %c32_i32_203 = arith.constant 32 : i32
    %239 = arith.addi %181, %c32_i32_203 : i32
    %c1_i32_204 = arith.constant 1 : i32
    %240 = arith.addi %239, %c1_i32_204 : i32
    %241 = arith.index_cast %240 : i32 to index
    %c0_205 = arith.constant 0 : index
    %242 = vector.load %arg19[%241, %c0_205] : memref<152x64xf32, #tpu.memory_space<vmem>>, vector<104x64xf32>
    %c448_206 = arith.constant 448 : index
    %c0_207 = arith.constant 0 : index
    %243 = vector.load %arg8[%c448_206, %c0_207] : memref<576x128xbf16, #tpu.memory_space<vmem>>, vector<64x128xbf16>
    %244 = arith.truncf %242 : vector<104x64xf32> to vector<104x64xbf16>
    %cst_208 = arith.constant dense<0.000000e+00> : vector<104x128xf32>
    %245 = tpu.matmul %244, %243, %cst_208 {dimension_numbers = #tpu.dot_dimension_numbers<[1], [0], [0], [1], [0, 0, 1, 1], [], []>} : vector<104x64xbf16>, vector<64x128xbf16>, vector<104x128xf32> -> vector<104x128xf32>
    %246 = arith.addf %238, %245 : vector<104x128xf32>
    %c32_i32_209 = arith.constant 32 : i32
    %247 = arith.addi %181, %c32_i32_209 : i32
    %c2_i32_210 = arith.constant 2 : i32
    %248 = arith.addi %247, %c2_i32_210 : i32
    %249 = arith.index_cast %248 : i32 to index
    %c0_211 = arith.constant 0 : index
    %250 = vector.load %arg19[%249, %c0_211] : memref<152x64xf32, #tpu.memory_space<vmem>>, vector<104x64xf32>
    %c512_212 = arith.constant 512 : index
    %c0_213 = arith.constant 0 : index
    %251 = vector.load %arg8[%c512_212, %c0_213] : memref<576x128xbf16, #tpu.memory_space<vmem>>, vector<64x128xbf16>
    %252 = arith.truncf %250 : vector<104x64xf32> to vector<104x64xbf16>
    %cst_214 = arith.constant dense<0.000000e+00> : vector<104x128xf32>
    %253 = tpu.matmul %252, %251, %cst_214 {dimension_numbers = #tpu.dot_dimension_numbers<[1], [0], [0], [1], [0, 0, 1, 1], [], []>} : vector<104x64xbf16>, vector<64x128xbf16>, vector<104x128xf32> -> vector<104x128xf32>
    %254 = arith.addf %246, %253 : vector<104x128xf32>
    %255 = vector.broadcast %178 : vector<1x128xf32> to vector<104x128xf32>
    %256 = arith.mulf %254, %255 : vector<104x128xf32>
    %257 = vector.broadcast %179 : vector<1x128xf32> to vector<104x128xf32>
    %258 = arith.addf %256, %257 : vector<104x128xf32>
    %cst_215 = arith.constant 0.000000e+00 : f32
    %259 = vector.broadcast %cst_215 : f32 to vector<104x128xf32>
    %260 = arith.maximumf %258, %259 : vector<104x128xf32>
    %261 = arith.index_cast %181 : i32 to index
    %c0_216 = arith.constant 0 : index
    %262 = vector.load %arg20[%261, %c0_216] : memref<104x128xf32, #tpu.memory_space<vmem>>, vector<104x128xf32>
    tpu.vector_store %arg20[%261, %c0_216], %260 {strides = array<i32>} : memref<104x128xf32, #tpu.memory_space<vmem>>, vector<104x128xf32>,
    %c1_i32_217 = arith.constant 1 : i32
    %cst_218 = arith.constant 0.000000e+00 : f32
    %263 = vector.broadcast %cst_218 : f32 to vector<1x256xf32>
    %c0_219 = arith.constant 0 : index
    %c0_220 = arith.constant 0 : index
    %264 = vector.load %arg20[%c0_219, %c0_220] : memref<104x128xf32, #tpu.memory_space<vmem>>, vector<1x128xf32>
    %c1_221 = arith.constant 1 : index
    %c0_222 = arith.constant 0 : index
    %265 = vector.load %arg20[%c1_221, %c0_222] : memref<104x128xf32, #tpu.memory_space<vmem>>, vector<1x128xf32>
    %c16_223 = arith.constant 16 : index
    %c0_224 = arith.constant 0 : index
    %266 = vector.load %arg20[%c16_223, %c0_224] : memref<104x128xf32, #tpu.memory_space<vmem>>, vector<1x128xf32>
    %c17_225 = arith.constant 17 : index
    %c0_226 = arith.constant 0 : index
    %267 = vector.load %arg20[%c17_225, %c0_226] : memref<104x128xf32, #tpu.memory_space<vmem>>, vector<1x128xf32>
    %268 = arith.maximumf %264, %265 : vector<1x128xf32>
    %269 = arith.maximumf %266, %267 : vector<1x128xf32>
    %270 = arith.maximumf %268, %269 : vector<1x128xf32>
    %c0_227 = arith.constant 0 : index
    %c0_228 = arith.constant 0 : index
    %271 = vector.load %arg11[%c0_227, %c0_228] : memref<1152x256xbf16, #tpu.memory_space<vmem>>, vector<128x256xbf16>
    %272 = arith.truncf %270 : vector<1x128xf32> to vector<1x128xbf16>
    %cst_229 = arith.constant dense<0.000000e+00> : vector<1x256xf32>
    %273 = tpu.matmul %272, %271, %cst_229 {dimension_numbers = #tpu.dot_dimension_numbers<[1], [0], [0], [1], [0, 0, 1, 1], [], []>} : vector<1x128xbf16>, vector<128x256xbf16>, vector<1x256xf32> -> vector<1x256xf32>
    %274 = arith.addf %263, %273 : vector<1x256xf32>
    %c2 = arith.constant 2 : index
    %c0_230 = arith.constant 0 : index
    %275 = vector.load %arg20[%c2, %c0_230] : memref<104x128xf32, #tpu.memory_space<vmem>>, vector<1x128xf32>
    %c3 = arith.constant 3 : index
    %c0_231 = arith.constant 0 : index
    %276 = vector.load %arg20[%c3, %c0_231] : memref<104x128xf32, #tpu.memory_space<vmem>>, vector<1x128xf32>
    %c18 = arith.constant 18 : index
    %c0_232 = arith.constant 0 : index
    %277 = vector.load %arg20[%c18, %c0_232] : memref<104x128xf32, #tpu.memory_space<vmem>>, vector<1x128xf32>
    %c19 = arith.constant 19 : index
    %c0_233 = arith.constant 0 : index
    %278 = vector.load %arg20[%c19, %c0_233] : memref<104x128xf32, #tpu.memory_space<vmem>>, vector<1x128xf32>
    %279 = arith.maximumf %275, %276 : vector<1x128xf32>
    %280 = arith.maximumf %277, %278 : vector<1x128xf32>
    %281 = arith.maximumf %279, %280 : vector<1x128xf32>
    %c128_234 = arith.constant 128 : index
    %c0_235 = arith.constant 0 : index
    %282 = vector.load %arg11[%c128_234, %c0_235] : memref<1152x256xbf16, #tpu.memory_space<vmem>>, vector<128x256xbf16>
    %283 = arith.truncf %281 : vector<1x128xf32> to vector<1x128xbf16>
    %cst_236 = arith.constant dense<0.000000e+00> : vector<1x256xf32>
    %284 = tpu.matmul %283, %282, %cst_236 {dimension_numbers = #tpu.dot_dimension_numbers<[1], [0], [0], [1], [0, 0, 1, 1], [], []>} : vector<1x128xbf16>, vector<128x256xbf16>, vector<1x256xf32> -> vector<1x256xf32>
    %285 = arith.addf %274, %284 : vector<1x256xf32>
    %c4 = arith.constant 4 : index
    %c0_237 = arith.constant 0 : index
    %286 = vector.load %arg20[%c4, %c0_237] : memref<104x128xf32, #tpu.memory_space<vmem>>, vector<1x128xf32>
    %c5 = arith.constant 5 : index
    %c0_238 = arith.constant 0 : index
    %287 = vector.load %arg20[%c5, %c0_238] : memref<104x128xf32, #tpu.memory_space<vmem>>, vector<1x128xf32>
    %c20 = arith.constant 20 : index
    %c0_239 = arith.constant 0 : index
    %288 = vector.load %arg20[%c20, %c0_239] : memref<104x128xf32, #tpu.memory_space<vmem>>, vector<1x128xf32>
    %c21 = arith.constant 21 : index
    %c0_240 = arith.constant 0 : index
    %289 = vector.load %arg20[%c21, %c0_240] : memref<104x128xf32, #tpu.memory_space<vmem>>, vector<1x128xf32>
    %290 = arith.maximumf %286, %287 : vector<1x128xf32>
    %291 = arith.maximumf %288, %289 : vector<1x128xf32>
    %292 = arith.maximumf %290, %291 : vector<1x128xf32>
    %c256_241 = arith.constant 256 : index
    %c0_242 = arith.constant 0 : index
    %293 = vector.load %arg11[%c256_241, %c0_242] : memref<1152x256xbf16, #tpu.memory_space<vmem>>, vector<128x256xbf16>
    %294 = arith.truncf %292 : vector<1x128xf32> to vector<1x128xbf16>
    %cst_243 = arith.constant dense<0.000000e+00> : vector<1x256xf32>
    %295 = tpu.matmul %294, %293, %cst_243 {dimension_numbers = #tpu.dot_dimension_numbers<[1], [0], [0], [1], [0, 0, 1, 1], [], []>} : vector<1x128xbf16>, vector<128x256xbf16>, vector<1x256xf32> -> vector<1x256xf32>
    %296 = arith.addf %285, %295 : vector<1x256xf32>
    %c32_244 = arith.constant 32 : index
    %c0_245 = arith.constant 0 : index
    %297 = vector.load %arg20[%c32_244, %c0_245] : memref<104x128xf32, #tpu.memory_space<vmem>>, vector<1x128xf32>
    %c33_246 = arith.constant 33 : index
    %c0_247 = arith.constant 0 : index
    %298 = vector.load %arg20[%c33_246, %c0_247] : memref<104x128xf32, #tpu.memory_space<vmem>>, vector<1x128xf32>
    %c48_248 = arith.constant 48 : index
    %c0_249 = arith.constant 0 : index
    %299 = vector.load %arg20[%c48_248, %c0_249] : memref<104x128xf32, #tpu.memory_space<vmem>>, vector<1x128xf32>
    %c49_250 = arith.constant 49 : index
    %c0_251 = arith.constant 0 : index
    %300 = vector.load %arg20[%c49_250, %c0_251] : memref<104x128xf32, #tpu.memory_space<vmem>>, vector<1x128xf32>
    %301 = arith.maximumf %297, %298 : vector<1x128xf32>
    %302 = arith.maximumf %299, %300 : vector<1x128xf32>
    %303 = arith.maximumf %301, %302 : vector<1x128xf32>
    %c384_252 = arith.constant 384 : index
    %c0_253 = arith.constant 0 : index
    %304 = vector.load %arg11[%c384_252, %c0_253] : memref<1152x256xbf16, #tpu.memory_space<vmem>>, vector<128x256xbf16>
    %305 = arith.truncf %303 : vector<1x128xf32> to vector<1x128xbf16>
    %cst_254 = arith.constant dense<0.000000e+00> : vector<1x256xf32>
    %306 = tpu.matmul %305, %304, %cst_254 {dimension_numbers = #tpu.dot_dimension_numbers<[1], [0], [0], [1], [0, 0, 1, 1], [], []>} : vector<1x128xbf16>, vector<128x256xbf16>, vector<1x256xf32> -> vector<1x256xf32>
    %307 = arith.addf %296, %306 : vector<1x256xf32>
    %c34 = arith.constant 34 : index
    %c0_255 = arith.constant 0 : index
    %308 = vector.load %arg20[%c34, %c0_255] : memref<104x128xf32, #tpu.memory_space<vmem>>, vector<1x128xf32>
    %c35 = arith.constant 35 : index
    %c0_256 = arith.constant 0 : index
    %309 = vector.load %arg20[%c35, %c0_256] : memref<104x128xf32, #tpu.memory_space<vmem>>, vector<1x128xf32>
    %c50 = arith.constant 50 : index
    %c0_257 = arith.constant 0 : index
    %310 = vector.load %arg20[%c50, %c0_257] : memref<104x128xf32, #tpu.memory_space<vmem>>, vector<1x128xf32>
    %c51 = arith.constant 51 : index
    %c0_258 = arith.constant 0 : index
    %311 = vector.load %arg20[%c51, %c0_258] : memref<104x128xf32, #tpu.memory_space<vmem>>, vector<1x128xf32>
    %312 = arith.maximumf %308, %309 : vector<1x128xf32>
    %313 = arith.maximumf %310, %311 : vector<1x128xf32>
    %314 = arith.maximumf %312, %313 : vector<1x128xf32>
    %c512_259 = arith.constant 512 : index
    %c0_260 = arith.constant 0 : index
    %315 = vector.load %arg11[%c512_259, %c0_260] : memref<1152x256xbf16, #tpu.memory_space<vmem>>, vector<128x256xbf16>
    %316 = arith.truncf %314 : vector<1x128xf32> to vector<1x128xbf16>
    %cst_261 = arith.constant dense<0.000000e+00> : vector<1x256xf32>
    %317 = tpu.matmul %316, %315, %cst_261 {dimension_numbers = #tpu.dot_dimension_numbers<[1], [0], [0], [1], [0, 0, 1, 1], [], []>} : vector<1x128xbf16>, vector<128x256xbf16>, vector<1x256xf32> -> vector<1x256xf32>
    %318 = arith.addf %307, %317 : vector<1x256xf32>
    %c36 = arith.constant 36 : index
    %c0_262 = arith.constant 0 : index
    %319 = vector.load %arg20[%c36, %c0_262] : memref<104x128xf32, #tpu.memory_space<vmem>>, vector<1x128xf32>
    %c37 = arith.constant 37 : index
    %c0_263 = arith.constant 0 : index
    %320 = vector.load %arg20[%c37, %c0_263] : memref<104x128xf32, #tpu.memory_space<vmem>>, vector<1x128xf32>
    %c52 = arith.constant 52 : index
    %c0_264 = arith.constant 0 : index
    %321 = vector.load %arg20[%c52, %c0_264] : memref<104x128xf32, #tpu.memory_space<vmem>>, vector<1x128xf32>
    %c53 = arith.constant 53 : index
    %c0_265 = arith.constant 0 : index
    %322 = vector.load %arg20[%c53, %c0_265] : memref<104x128xf32, #tpu.memory_space<vmem>>, vector<1x128xf32>
    %323 = arith.maximumf %319, %320 : vector<1x128xf32>
    %324 = arith.maximumf %321, %322 : vector<1x128xf32>
    %325 = arith.maximumf %323, %324 : vector<1x128xf32>
    %c640_266 = arith.constant 640 : index
    %c0_267 = arith.constant 0 : index
    %326 = vector.load %arg11[%c640_266, %c0_267] : memref<1152x256xbf16, #tpu.memory_space<vmem>>, vector<128x256xbf16>
    %327 = arith.truncf %325 : vector<1x128xf32> to vector<1x128xbf16>
    %cst_268 = arith.constant dense<0.000000e+00> : vector<1x256xf32>
    %328 = tpu.matmul %327, %326, %cst_268 {dimension_numbers = #tpu.dot_dimension_numbers<[1], [0], [0], [1], [0, 0, 1, 1], [], []>} : vector<1x128xbf16>, vector<128x256xbf16>, vector<1x256xf32> -> vector<1x256xf32>
    %329 = arith.addf %318, %328 : vector<1x256xf32>
    %c64_269 = arith.constant 64 : index
    %c0_270 = arith.constant 0 : index
    %330 = vector.load %arg20[%c64_269, %c0_270] : memref<104x128xf32, #tpu.memory_space<vmem>>, vector<1x128xf32>
    %c65_271 = arith.constant 65 : index
    %c0_272 = arith.constant 0 : index
    %331 = vector.load %arg20[%c65_271, %c0_272] : memref<104x128xf32, #tpu.memory_space<vmem>>, vector<1x128xf32>
    %c80_273 = arith.constant 80 : index
    %c0_274 = arith.constant 0 : index
    %332 = vector.load %arg20[%c80_273, %c0_274] : memref<104x128xf32, #tpu.memory_space<vmem>>, vector<1x128xf32>
    %c81_275 = arith.constant 81 : index
    %c0_276 = arith.constant 0 : index
    %333 = vector.load %arg20[%c81_275, %c0_276] : memref<104x128xf32, #tpu.memory_space<vmem>>, vector<1x128xf32>
    %334 = arith.maximumf %330, %331 : vector<1x128xf32>
    %335 = arith.maximumf %332, %333 : vector<1x128xf32>
    %336 = arith.maximumf %334, %335 : vector<1x128xf32>
    %c768_277 = arith.constant 768 : index
    %c0_278 = arith.constant 0 : index
    %337 = vector.load %arg11[%c768_277, %c0_278] : memref<1152x256xbf16, #tpu.memory_space<vmem>>, vector<128x256xbf16>
    %338 = arith.truncf %336 : vector<1x128xf32> to vector<1x128xbf16>
    %cst_279 = arith.constant dense<0.000000e+00> : vector<1x256xf32>
    %339 = tpu.matmul %338, %337, %cst_279 {dimension_numbers = #tpu.dot_dimension_numbers<[1], [0], [0], [1], [0, 0, 1, 1], [], []>} : vector<1x128xbf16>, vector<128x256xbf16>, vector<1x256xf32> -> vector<1x256xf32>
    %340 = arith.addf %329, %339 : vector<1x256xf32>
    %c66 = arith.constant 66 : index
    %c0_280 = arith.constant 0 : index
    %341 = vector.load %arg20[%c66, %c0_280] : memref<104x128xf32, #tpu.memory_space<vmem>>, vector<1x128xf32>
    %c67 = arith.constant 67 : index
    %c0_281 = arith.constant 0 : index
    %342 = vector.load %arg20[%c67, %c0_281] : memref<104x128xf32, #tpu.memory_space<vmem>>, vector<1x128xf32>
    %c82 = arith.constant 82 : index
    %c0_282 = arith.constant 0 : index
    %343 = vector.load %arg20[%c82, %c0_282] : memref<104x128xf32, #tpu.memory_space<vmem>>, vector<1x128xf32>
    %c83 = arith.constant 83 : index
    %c0_283 = arith.constant 0 : index
    %344 = vector.load %arg20[%c83, %c0_283] : memref<104x128xf32, #tpu.memory_space<vmem>>, vector<1x128xf32>
    %345 = arith.maximumf %341, %342 : vector<1x128xf32>
    %346 = arith.maximumf %343, %344 : vector<1x128xf32>
    %347 = arith.maximumf %345, %346 : vector<1x128xf32>
    %c896 = arith.constant 896 : index
    %c0_284 = arith.constant 0 : index
    %348 = vector.load %arg11[%c896, %c0_284] : memref<1152x256xbf16, #tpu.memory_space<vmem>>, vector<128x256xbf16>
    %349 = arith.truncf %347 : vector<1x128xf32> to vector<1x128xbf16>
    %cst_285 = arith.constant dense<0.000000e+00> : vector<1x256xf32>
    %350 = tpu.matmul %349, %348, %cst_285 {dimension_numbers = #tpu.dot_dimension_numbers<[1], [0], [0], [1], [0, 0, 1, 1], [], []>} : vector<1x128xbf16>, vector<128x256xbf16>, vector<1x256xf32> -> vector<1x256xf32>
    %351 = arith.addf %340, %350 : vector<1x256xf32>
    %c68 = arith.constant 68 : index
    %c0_286 = arith.constant 0 : index
    %352 = vector.load %arg20[%c68, %c0_286] : memref<104x128xf32, #tpu.memory_space<vmem>>, vector<1x128xf32>
    %c69 = arith.constant 69 : index
    %c0_287 = arith.constant 0 : index
    %353 = vector.load %arg20[%c69, %c0_287] : memref<104x128xf32, #tpu.memory_space<vmem>>, vector<1x128xf32>
    %c84 = arith.constant 84 : index
    %c0_288 = arith.constant 0 : index
    %354 = vector.load %arg20[%c84, %c0_288] : memref<104x128xf32, #tpu.memory_space<vmem>>, vector<1x128xf32>
    %c85 = arith.constant 85 : index
    %c0_289 = arith.constant 0 : index
    %355 = vector.load %arg20[%c85, %c0_289] : memref<104x128xf32, #tpu.memory_space<vmem>>, vector<1x128xf32>
    %356 = arith.maximumf %352, %353 : vector<1x128xf32>
    %357 = arith.maximumf %354, %355 : vector<1x128xf32>
    %358 = arith.maximumf %356, %357 : vector<1x128xf32>
    %c1024 = arith.constant 1024 : index
    %c0_290 = arith.constant 0 : index
    %359 = vector.load %arg11[%c1024, %c0_290] : memref<1152x256xbf16, #tpu.memory_space<vmem>>, vector<128x256xbf16>
    %360 = arith.truncf %358 : vector<1x128xf32> to vector<1x128xbf16>
    %cst_291 = arith.constant dense<0.000000e+00> : vector<1x256xf32>
    %361 = tpu.matmul %360, %359, %cst_291 {dimension_numbers = #tpu.dot_dimension_numbers<[1], [0], [0], [1], [0, 0, 1, 1], [], []>} : vector<1x128xbf16>, vector<128x256xbf16>, vector<1x256xf32> -> vector<1x256xf32>
    %362 = arith.addf %351, %361 : vector<1x256xf32>
    %c0_292 = arith.constant 0 : index
    %c0_293 = arith.constant 0 : index
    %363 = vector.load %arg12[%c0_292, %c0_293] : memref<1x256xf32, #tpu.memory_space<vmem>>, vector<1x256xf32>
    %364 = arith.addf %362, %363 : vector<1x256xf32>
    %cst_294 = arith.constant 0.000000e+00 : f32
    %365 = vector.broadcast %cst_294 : f32 to vector<1x256xf32>
    %366 = arith.maximumf %364, %365 : vector<1x256xf32>
    %367 = arith.truncf %366 : vector<1x256xf32> to vector<1x256xbf16>
    %c0_295 = arith.constant 0 : index
    %c0_296 = arith.constant 0 : index
    %368 = vector.load %arg13[%c0_295, %c0_296] : memref<256x10xbf16, #tpu.memory_space<vmem>>, vector<256x10xbf16>
    %cst_297 = arith.constant dense<0.000000e+00> : vector<1x10xf32>
    %369 = tpu.matmul %367, %368, %cst_297 {dimension_numbers = #tpu.dot_dimension_numbers<[1], [0], [0], [1], [0, 0, 1, 1], [], []>} : vector<1x256xbf16>, vector<256x10xbf16>, vector<1x10xf32> -> vector<1x10xf32>
    %c0_298 = arith.constant 0 : index
    %c0_299 = arith.constant 0 : index
    %370 = vector.load %arg14[%c0_298, %c0_299] : memref<1x10xf32, #tpu.memory_space<vmem>>, vector<1x10xf32>
    %371 = arith.addf %369, %370 : vector<1x10xf32>
    %c0_300 = arith.constant 0 : index
    %c0_301 = arith.constant 0 : index
    %c0_302 = arith.constant 0 : index
    %372 = vector.load %arg15[%c0_300, %c0_301, %c0_302] : memref<1x1x10xf32, #tpu.memory_space<vmem>>, vector<1x1x10xf32>
    %373 = vector.shape_cast %372 : vector<1x1x10xf32> to vector<1x10xf32>
    %374 = vector.shape_cast %371 : vector<1x10xf32> to vector<1x1x10xf32>
    tpu.vector_store %arg15[%c0_300, %c0_301, %c0_302], %374 {strides = array<i32>} : memref<1x1x10xf32, #tpu.memory_space<vmem>>, vector<1x1x10xf32>,
    return
  }
  func.func @transform_0(%arg0: i32) -> (i32, i32, i32) {
    %c0_i32 = arith.constant 0 : i32
    %c0_i32_0 = arith.constant 0 : i32
    %c0_i32_1 = arith.constant 0 : i32
    return %arg0, %c0_i32, %c0_i32_0 : i32, i32, i32
  }
  func.func @transform_1(%arg0: i32) -> (i32, i32) {
    %c0_i32 = arith.constant 0 : i32
    %c0_i32_0 = arith.constant 0 : i32
    %c0_i32_1 = arith.constant 0 : i32
    return %c0_i32, %c0_i32_0 : i32, i32
  }
  func.func @transform_2(%arg0: i32) -> (i32, i32) {
    %c0_i32 = arith.constant 0 : i32
    %c0_i32_0 = arith.constant 0 : i32
    %c0_i32_1 = arith.constant 0 : i32
    return %c0_i32, %c0_i32_0 : i32, i32
  }
  func.func @transform_3(%arg0: i32) -> (i32, i32) {
    %c0_i32 = arith.constant 0 : i32
    %c0_i32_0 = arith.constant 0 : i32
    %c0_i32_1 = arith.constant 0 : i32
    return %c0_i32, %c0_i32_0 : i32, i32
  }
  func.func @transform_4(%arg0: i32) -> (i32, i32) {
    %c0_i32 = arith.constant 0 : i32
    %c0_i32_0 = arith.constant 0 : i32
    %c0_i32_1 = arith.constant 0 : i32
    return %c0_i32, %c0_i32_0 : i32, i32
  }
  func.func @transform_5(%arg0: i32) -> (i32, i32) {
    %c0_i32 = arith.constant 0 : i32
    %c0_i32_0 = arith.constant 0 : i32
    %c0_i32_1 = arith.constant 0 : i32
    return %c0_i32, %c0_i32_0 : i32, i32
  }
  func.func @transform_6(%arg0: i32) -> (i32, i32) {
    %c0_i32 = arith.constant 0 : i32
    %c0_i32_0 = arith.constant 0 : i32
    %c0_i32_1 = arith.constant 0 : i32
    return %c0_i32, %c0_i32_0 : i32, i32
  }
  func.func @transform_7(%arg0: i32) -> (i32, i32) {
    %c0_i32 = arith.constant 0 : i32
    %c0_i32_0 = arith.constant 0 : i32
    %c0_i32_1 = arith.constant 0 : i32
    return %c0_i32, %c0_i32_0 : i32, i32
  }
  func.func @transform_8(%arg0: i32) -> (i32, i32) {
    %c0_i32 = arith.constant 0 : i32
    %c0_i32_0 = arith.constant 0 : i32
    %c0_i32_1 = arith.constant 0 : i32
    return %c0_i32, %c0_i32_0 : i32, i32
  }
  func.func @transform_9(%arg0: i32) -> (i32, i32) {
    %c0_i32 = arith.constant 0 : i32
    %c0_i32_0 = arith.constant 0 : i32
    %c0_i32_1 = arith.constant 0 : i32
    return %c0_i32, %c0_i32_0 : i32, i32
  }
  func.func @transform_10(%arg0: i32) -> (i32, i32) {
    %c0_i32 = arith.constant 0 : i32
    %c0_i32_0 = arith.constant 0 : i32
    %c0_i32_1 = arith.constant 0 : i32
    return %c0_i32, %c0_i32_0 : i32, i32
  }
  func.func @transform_11(%arg0: i32) -> (i32, i32) {
    %c0_i32 = arith.constant 0 : i32
    %c0_i32_0 = arith.constant 0 : i32
    %c0_i32_1 = arith.constant 0 : i32
    return %c0_i32, %c0_i32_0 : i32, i32
  }
  func.func @transform_12(%arg0: i32) -> (i32, i32) {
    %c0_i32 = arith.constant 0 : i32
    %c0_i32_0 = arith.constant 0 : i32
    %c0_i32_1 = arith.constant 0 : i32
    return %c0_i32, %c0_i32_0 : i32, i32
  }
  func.func @transform_13(%arg0: i32) -> (i32, i32) {
    %c0_i32 = arith.constant 0 : i32
    %c0_i32_0 = arith.constant 0 : i32
    %c0_i32_1 = arith.constant 0 : i32
    return %c0_i32, %c0_i32_0 : i32, i32
  }
  func.func @transform_14(%arg0: i32) -> (i32, i32, i32) {
    %c0_i32 = arith.constant 0 : i32
    %c0_i32_0 = arith.constant 0 : i32
    %c0_i32_1 = arith.constant 0 : i32
    return %arg0, %c0_i32, %c0_i32_0 : i32, i32, i32
  }
}

</mosaic_0001>

<llo_original>
// kernel: _forward.1
$region0: #{_forward.1}
  #allocation0 [shape = 'u32[]', space=smem, size = 0x4, offset = 0x4, fixed_abs, tag = 'smem constant byte address 0x4 - core index']
  #allocation1 [shape = 'u32[144,128]{1,0:T(1,128)}', space=vmem, size = 0x12000, scoped, tag = 'internal scratch']
  #allocation2 [shape = 'f32[896,32]{1,0:T(8,128)}', space=vmem, size = 0x70000, scoped, tag = 'scratch operand']
  #allocation3 [shape = 'f32[272,32]{1,0:T(8,128)}', space=vmem, size = 0x22000, scoped, tag = 'scratch operand']
  #allocation4 [shape = 'f32[224,64]{1,0:T(8,128)}', space=vmem, size = 0x1c000, scoped, tag = 'scratch operand']
  #allocation5 [shape = 'f32[152,64]{1,0:T(8,128)}', space=vmem, size = 0x13000, scoped, tag = 'scratch operand']
  #allocation6 [shape = 'f32[104,128]{1,0:T(8,128)}', space=vmem, size = 0xd000, scoped, tag = 'scratch operand']
  %s0 = inlined_call_operand.vmem [shape: bf16[2,896,9], index: 0, kind: input, shape index: {}]
  %s1 = inlined_call_operand.vmem [shape: bf16[9,32], index: 1, kind: input, shape index: {}]
  %s2 = inlined_call_operand.vmem [shape: f32[1,32], index: 2, kind: input, shape index: {}]
  %s3 = inlined_call_operand.vmem [shape: f32[1,32], index: 3, kind: input, shape index: {}]
  %s4 = inlined_call_operand.vmem [shape: bf16[288,64], index: 4, kind: input, shape index: {}]
  %s5 = inlined_call_operand.vmem [shape: f32[1,64], index: 5, kind: input, shape index: {}]
  %s6 = inlined_call_operand.vmem [shape: f32[1,64], index: 6, kind: input, shape index: {}]
  %s7 = inlined_call_operand.vmem [shape: bf16[576,128], index: 7, kind: input, shape index: {}]
  %s8 = inlined_call_operand.vmem [shape: f32[1,128], index: 8, kind: input, shape index: {}]
  %s9 = inlined_call_operand.vmem [shape: f32[1,128], index: 9, kind: input, shape index: {}]
  %s10 = inlined_call_operand.vmem [shape: bf16[1152,256], index: 10, kind: input, shape index: {}]
  %s11 = inlined_call_operand.vmem [shape: f32[1,256], index: 11, kind: input, shape index: {}]
  %s12 = inlined_call_operand.vmem [shape: bf16[256,10], index: 12, kind: input, shape index: {}]
  %s13 = inlined_call_operand.vmem [shape: f32[1,10], index: 13, kind: input, shape index: {}]
  %s14 = inlined_call_operand.hbm [shape: f32[2,1,10], index: 14, kind: output, shape index: {}]
  %s15 = sld [smem:[#allocation0]]
  $region103: #{_forward.1} parent=0
    _
  %s17 = ssub.s32 1, %s15
  %s18 = scalar_select 0, %s17, %s15
  $region1: #{_forward.1} parent=0
    #allocation7 [shape = 'u8[1024]{0}', space=vmem, size = 0x400, scoped, tag = 'output window, operand 0']
    #allocation8 [shape = 's32[2]{0}', space=sflag, size = 0x8, scoped, tag = 'scoped memory for _forward.1']
    %19 = vsyncpa [#allocation8], 0
    %s20 = scalar_lea.sflag [#allocation8], 1
    %21 = vsyncpa %s20, 0
    loop: start=0, step=1, limit=4
    $region2: #{_forward.1} parent=1 // loop_pre_header
      _
    $region3: #{_forward.1} parent=1 // loop_header
      %s23 = sphi 0, %s27
      %p24 = scmp.ge.s32.totalorder %s23, 4
      %s33 = sphi 0, %s35
      %s36 = sphi 0, %s33
      %s37 = sphi 0, %s36
      %s53 = sphi 0, %s37
      %s57 = sphi 0, %s57
      %s59 = sphi 0, %s57
      %s60 = sphi 0, %s59
      %s74 = sphi 0, %s60
      %s78 = sphi 0, %s78
      %s80 = sphi 0, %s78
      %s81 = sphi 0, %s80
      %s95 = sphi 0, %s81
      %s99 = sphi 0, %s99
      %s101 = sphi 0, %s99
      %s102 = sphi 0, %s101
      %s116 = sphi 0, %s102
      %s120 = sphi 0, %s120
      %s122 = sphi 0, %s120
      %s123 = sphi 0, %s122
      %s137 = sphi 0, %s123
      %s141 = sphi 0, %s141
      %s143 = sphi 0, %s141
      %s144 = sphi 0, %s143
      %s158 = sphi 0, %s144
      %s162 = sphi 0, %s162
      %s164 = sphi 0, %s162
      %s165 = sphi 0, %s164
      %s179 = sphi 0, %s165
      %s183 = sphi 0, %s183
      %s185 = sphi 0, %s183
      %s186 = sphi 0, %s185
      %s200 = sphi 0, %s186
      %s204 = sphi 0, %s204
      %s206 = sphi 0, %s204
      %s207 = sphi 0, %s206
      %s221 = sphi 0, %s207
      %s225 = sphi 0, %s225
      %s227 = sphi 0, %s225
      %s228 = sphi 0, %s227
      %s242 = sphi 0, %s228
      %s246 = sphi 0, %s246
      %s248 = sphi 0, %s246
      %s249 = sphi 0, %s248
      %s263 = sphi 0, %s249
      %s267 = sphi 0, %s267
      %s269 = sphi 0, %s267
      %s270 = sphi 0, %s269
      %s284 = sphi 0, %s270
      %s288 = sphi 0, %s288
      %s290 = sphi 0, %s288
      %s291 = sphi 0, %s290
      %s305 = sphi 0, %s291
      %s309 = sphi 0, %s309
      %s311 = sphi 0, %s309
      %s312 = sphi 0, %s311
      %s326 = sphi 0, %s312
      %s332 = sphi 0, %s334
      %s335 = sphi 0, %s332
      %s336 = sphi 0, %s335
      %s352 = sphi 0, %s336
    $region4: #{_forward.1} parent=1 // loop_header_branch
      %26 = sbr.rel (%p24) target = $region8
    $region5: #{_forward.1} parent=1 // loop_body
      %s28 = ssub.s32 %s23, 1
      %s29 = ssub.s32 %s23, 2
      %s30 = sadd.s32 %s23, 1
      %s31 = ssub.s32 %s23, %s30
      %p32 = scmp.eq.s32.totalorder %s31, 0
      %s34 = sadd.s32 %s33, 1
      %s35 = scalar_select %p32, %s33, %s34
      %p38 = pneg %p32
      %p39 = scmp.eq.s32.totalorder %s23, 1
      %p40 = por %p38, %p39
      %p41 = scmp.ne.s32.totalorder %s33, %s36
      %p42 = scmp.eq.s32.totalorder %s23, 0
      %p43 = por %p41, %p42
      %p44 = scmp.ne.s32.totalorder %s33, %s36
      %p45 = scmp.eq.s32.totalorder %s28, 1
      %p46 = por %p44, %p45
      %p47 = scmp.ne.s32.totalorder %s36, %s37
      %p48 = scmp.eq.s32.totalorder %s28, 0
      %p49 = por %p47, %p48
      %p50 = scmp.ne.s32.totalorder %s36, %s37
      %p51 = scmp.eq.s32.totalorder %s29, 1
      %p52 = por %p50, %p51
      %p54 = scmp.ne.s32.totalorder %s37, %s53
      %p55 = scmp.eq.s32.totalorder %s29, 0
      %p56 = por %p54, %p55
      %s58 = sadd.s32 %s57, 1
      %p61 = scmp.eq.s32.totalorder %s23, 1
      %p62 = scmp.ne.s32.totalorder %s57, %s59
      %p63 = scmp.eq.s32.totalorder %s23, 0
      %p64 = por %p62, %p63
      %p65 = scmp.ne.s32.totalorder %s57, %s59
      %p66 = scmp.eq.s32.totalorder %s28, 1
      %p67 = por %p65, %p66
      %p68 = scmp.ne.s32.totalorder %s59, %s60
      %p69 = scmp.eq.s32.totalorder %s28, 0
      %p70 = por %p68, %p69
      %p71 = scmp.ne.s32.totalorder %s59, %s60
      %p72 = scmp.eq.s32.totalorder %s29, 1
      %p73 = por %p71, %p72
      %p75 = scmp.ne.s32.totalorder %s60, %s74
      %p76 = scmp.eq.s32.totalorder %s29, 0
      %p77 = por %p75, %p76
      %s79 = sadd.s32 %s78, 1
      %p82 = scmp.eq.s32.totalorder %s23, 1
      %p83 = scmp.ne.s32.totalorder %s78, %s80
      %p84 = scmp.eq.s32.totalorder %s23, 0
      %p85 = por %p83, %p84
      %p86 = scmp.ne.s32.totalorder %s78, %s80
      %p87 = scmp.eq.s32.totalorder %s28, 1
      %p88 = por %p86, %p87
      %p89 = scmp.ne.s32.totalorder %s80, %s81
      %p90 = scmp.eq.s32.totalorder %s28, 0
      %p91 = por %p89, %p90
      %p92 = scmp.ne.s32.totalorder %s80, %s81
      %p93 = scmp.eq.s32.totalorder %s29, 1
      %p94 = por %p92, %p93
      %p96 = scmp.ne.s32.totalorder %s81, %s95
      %p97 = scmp.eq.s32.totalorder %s29, 0
      %p98 = por %p96, %p97
      %s100 = sadd.s32 %s99, 1
      %p103 = scmp.eq.s32.totalorder %s23, 1
      %p104 = scmp.ne.s32.totalorder %s99, %s101
      %p105 = scmp.eq.s32.totalorder %s23, 0
      %p106 = por %p104, %p105
      %p107 = scmp.ne.s32.totalorder %s99, %s101
      %p108 = scmp.eq.s32.totalorder %s28, 1
      %p109 = por %p107, %p108
      %p110 = scmp.ne.s32.totalorder %s101, %s102
      %p111 = scmp.eq.s32.totalorder %s28, 0
      %p112 = por %p110, %p111
      %p113 = scmp.ne.s32.totalorder %s101, %s102
      %p114 = scmp.eq.s32.totalorder %s29, 1
      %p115 = por %p113, %p114
      %p117 = scmp.ne.s32.totalorder %s102, %s116
      %p118 = scmp.eq.s32.totalorder %s29, 0
      %p119 = por %p117, %p118
      %s121 = sadd.s32 %s120, 1
      %p124 = scmp.eq.s32.totalorder %s23, 1
      %p125 = scmp.ne.s32.totalorder %s120, %s122
      %p126 = scmp.eq.s32.totalorder %s23, 0
      %p127 = por %p125, %p126
      %p128 = scmp.ne.s32.totalorder %s120, %s122
      %p129 = scmp.eq.s32.totalorder %s28, 1
      %p130 = por %p128, %p129
      %p131 = scmp.ne.s32.totalorder %s122, %s123
      %p132 = scmp.eq.s32.totalorder %s28, 0
      %p133 = por %p131, %p132
      %p134 = scmp.ne.s32.totalorder %s122, %s123
      %p135 = scmp.eq.s32.totalorder %s29, 1
      %p136 = por %p134, %p135
      %p138 = scmp.ne.s32.totalorder %s123, %s137
      %p139 = scmp.eq.s32.totalorder %s29, 0
      %p140 = por %p138, %p139
      %s142 = sadd.s32 %s141, 1
      %p145 = scmp.eq.s32.totalorder %s23, 1
      %p146 = scmp.ne.s32.totalorder %s141, %s143
      %p147 = scmp.eq.s32.totalorder %s23, 0
      %p148 = por %p146, %p147
      %p149 = scmp.ne.s32.totalorder %s141, %s143
      %p150 = scmp.eq.s32.totalorder %s28, 1
      %p151 = por %p149, %p150
      %p152 = scmp.ne.s32.totalorder %s143, %s144
      %p153 = scmp.eq.s32.totalorder %s28, 0
      %p154 = por %p152, %p153
      %p155 = scmp.ne.s32.totalorder %s143, %s144
      %p156 = scmp.eq.s32.totalorder %s29, 1
      %p157 = por %p155, %p156
      %p159 = scmp.ne.s32.totalorder %s144, %s158
      %p160 = scmp.eq.s32.totalorder %s29, 0
      %p161 = por %p159, %p160
      %s163 = sadd.s32 %s162, 1
      %p166 = scmp.eq.s32.totalorder %s23, 1
      %p167 = scmp.ne.s32.totalorder %s162, %s164
      %p168 = scmp.eq.s32.totalorder %s23, 0
      %p169 = por %p167, %p168
      %p170 = scmp.ne.s32.totalorder %s162, %s164
      %p171 = scmp.eq.s32.totalorder %s28, 1
      %p172 = por %p170, %p171
      %p173 = scmp.ne.s32.totalorder %s164, %s165
      %p174 = scmp.eq.s32.totalorder %s28, 0
      %p175 = por %p173, %p174
      %p176 = scmp.ne.s32.totalorder %s164, %s165
      %p177 = scmp.eq.s32.totalorder %s29, 1
      %p178 = por %p176, %p177
      %p180 = scmp.ne.s32.totalorder %s165, %s179
      %p181 = scmp.eq.s32.totalorder %s29, 0
      %p182 = por %p180, %p181
      %s184 = sadd.s32 %s183, 1
      %p187 = scmp.eq.s32.totalorder %s23, 1
      %p188 = scmp.ne.s32.totalorder %s183, %s185
      %p189 = scmp.eq.s32.totalorder %s23, 0
      %p190 = por %p188, %p189
      %p191 = scmp.ne.s32.totalorder %s183, %s185
      %p192 = scmp.eq.s32.totalorder %s28, 1
      %p193 = por %p191, %p192
      %p194 = scmp.ne.s32.totalorder %s185, %s186
      %p195 = scmp.eq.s32.totalorder %s28, 0
      %p196 = por %p194, %p195
      %p197 = scmp.ne.s32.totalorder %s185, %s186
      %p198 = scmp.eq.s32.totalorder %s29, 1
      %p199 = por %p197, %p198
      %p201 = scmp.ne.s32.totalorder %s186, %s200
      %p202 = scmp.eq.s32.totalorder %s29, 0
      %p203 = por %p201, %p202
      %s205 = sadd.s32 %s204, 1
      %p208 = scmp.eq.s32.totalorder %s23, 1
      %p209 = scmp.ne.s32.totalorder %s204, %s206
      %p210 = scmp.eq.s32.totalorder %s23, 0
      %p211 = por %p209, %p210
      %p212 = scmp.ne.s32.totalorder %s204, %s206
      %p213 = scmp.eq.s32.totalorder %s28, 1
      %p214 = por %p212, %p213
      %p215 = scmp.ne.s32.totalorder %s206, %s207
      %p216 = scmp.eq.s32.totalorder %s28, 0
      %p217 = por %p215, %p216
      %p218 = scmp.ne.s32.totalorder %s206, %s207
      %p219 = scmp.eq.s32.totalorder %s29, 1
      %p220 = por %p218, %p219
      %p222 = scmp.ne.s32.totalorder %s207, %s221
      %p223 = scmp.eq.s32.totalorder %s29, 0
      %p224 = por %p222, %p223
      %s226 = sadd.s32 %s225, 1
      %p229 = scmp.eq.s32.totalorder %s23, 1
      %p230 = scmp.ne.s32.totalorder %s225, %s227
      %p231 = scmp.eq.s32.totalorder %s23, 0
      %p232 = por %p230, %p231
      %p233 = scmp.ne.s32.totalorder %s225, %s227
      %p234 = scmp.eq.s32.totalorder %s28, 1
      %p235 = por %p233, %p234
      %p236 = scmp.ne.s32.totalorder %s227, %s228
      %p237 = scmp.eq.s32.totalorder %s28, 0
      %p238 = por %p236, %p237
      %p239 = scmp.ne.s32.totalorder %s227, %s228
      %p240 = scmp.eq.s32.totalorder %s29, 1
      %p241 = por %p239, %p240
      %p243 = scmp.ne.s32.totalorder %s228, %s242
      %p244 = scmp.eq.s32.totalorder %s29, 0
      %p245 = por %p243, %p244
      %s247 = sadd.s32 %s246, 1
      %p250 = scmp.eq.s32.totalorder %s23, 1
      %p251 = scmp.ne.s32.totalorder %s246, %s248
      %p252 = scmp.eq.s32.totalorder %s23, 0
      %p253 = por %p251, %p252
      %p254 = scmp.ne.s32.totalorder %s246, %s248
      %p255 = scmp.eq.s32.totalorder %s28, 1
      %p256 = por %p254, %p255
      %p257 = scmp.ne.s32.totalorder %s248, %s249
      %p258 = scmp.eq.s32.totalorder %s28, 0
      %p259 = por %p257, %p258
      %p260 = scmp.ne.s32.totalorder %s248, %s249
      %p261 = scmp.eq.s32.totalorder %s29, 1
      %p262 = por %p260, %p261
      %p264 = scmp.ne.s32.totalorder %s249, %s263
      %p265 = scmp.eq.s32.totalorder %s29, 0
      %p266 = por %p264, %p265
      %s268 = sadd.s32 %s267, 1
      %p271 = scmp.eq.s32.totalorder %s23, 1
      %p272 = scmp.ne.s32.totalorder %s267, %s269
      %p273 = scmp.eq.s32.totalorder %s23, 0
      %p274 = por %p272, %p273
      %p275 = scmp.ne.s32.totalorder %s267, %s269
      %p276 = scmp.eq.s32.totalorder %s28, 1
      %p277 = por %p275, %p276
      %p278 = scmp.ne.s32.totalorder %s269, %s270
      %p279 = scmp.eq.s32.totalorder %s28, 0
      %p280 = por %p278, %p279
      %p281 = scmp.ne.s32.totalorder %s269, %s270
      %p282 = scmp.eq.s32.totalorder %s29, 1
      %p283 = por %p281, %p282
      %p285 = scmp.ne.s32.totalorder %s270, %s284
      %p286 = scmp.eq.s32.totalorder %s29, 0
      %p287 = por %p285, %p286
      %s289 = sadd.s32 %s288, 1
      %p292 = scmp.eq.s32.totalorder %s23, 1
      %p293 = scmp.ne.s32.totalorder %s288, %s290
      %p294 = scmp.eq.s32.totalorder %s23, 0
      %p295 = por %p293, %p294
      %p296 = scmp.ne.s32.totalorder %s288, %s290
      %p297 = scmp.eq.s32.totalorder %s28, 1
      %p298 = por %p296, %p297
      %p299 = scmp.ne.s32.totalorder %s290, %s291
      %p300 = scmp.eq.s32.totalorder %s28, 0
      %p301 = por %p299, %p300
      %p302 = scmp.ne.s32.totalorder %s290, %s291
      %p303 = scmp.eq.s32.totalorder %s29, 1
      %p304 = por %p302, %p303
      %p306 = scmp.ne.s32.totalorder %s291, %s305
      %p307 = scmp.eq.s32.totalorder %s29, 0
      %p308 = por %p306, %p307
      %s310 = sadd.s32 %s309, 1
      %p313 = scmp.eq.s32.totalorder %s23, 1
      %p314 = scmp.ne.s32.totalorder %s309, %s311
      %p315 = scmp.eq.s32.totalorder %s23, 0
      %p316 = por %p314, %p315
      %p317 = scmp.ne.s32.totalorder %s309, %s311
      %p318 = scmp.eq.s32.totalorder %s28, 1
      %p319 = por %p317, %p318
      %p320 = scmp.ne.s32.totalorder %s311, %s312
      %p321 = scmp.eq.s32.totalorder %s28, 0
      %p322 = por %p320, %p321
      %p323 = scmp.ne.s32.totalorder %s311, %s312
      %p324 = scmp.eq.s32.totalorder %s29, 1
      %p325 = por %p323, %p324
      %p327 = scmp.ne.s32.totalorder %s312, %s326
      %p328 = scmp.eq.s32.totalorder %s29, 0
      %p329 = por %p327, %p328
      %s330 = ssub.s32 %s23, %s30
      %p331 = scmp.eq.s32.totalorder %s330, 0
      %s333 = sadd.s32 %s332, 1
      %s334 = scalar_select %p331, %s332, %s333
      %p337 = pneg %p331
      %p338 = scmp.eq.s32.totalorder %s23, 1
      %p339 = por %p337, %p338
      %p340 = scmp.ne.s32.totalorder %s332, %s335
      %p341 = scmp.eq.s32.totalorder %s23, 0
      %p342 = por %p340, %p341
      %p343 = scmp.ne.s32.totalorder %s332, %s335
      %p344 = scmp.eq.s32.totalorder %s28, 1
      %p345 = por %p343, %p344
      %p346 = scmp.ne.s32.totalorder %s335, %s336
      %p347 = scmp.eq.s32.totalorder %s28, 0
      %p348 = por %p346, %p347
      %p349 = scmp.ne.s32.totalorder %s335, %s336
      %p350 = scmp.eq.s32.totalorder %s29, 1
      %p351 = por %p349, %p350
      %p353 = scmp.ne.s32.totalorder %s336, %s352
      %p354 = scmp.eq.s32.totalorder %s29, 0
      %p355 = por %p353, %p354
      %p356 = scmp.le.s32.totalorder 1, %s23
      %p357 = scmp.lt.s32.totalorder %s23, 3
      %p358 = pnand %p356, %p357
      %p359 = pneg %p358
      // Predicated region
      $region9: #{_forward.1} parent=5 // pred_check
        _
      $region10: #{_forward.1} parent=5 // pred_check_branch
        %361 = sbr.rel (%p358) target = $region12
      $region11: #{_forward.1} parent=5 // pred_region
        %s362 = ssub.s32 %s23, 1
        // Predicated region
        $region13: #{_forward.1} parent=11 // pred_check
          %p363 = pneg %p70
        $region14: #{_forward.1} parent=11 // pred_check_branch
          %365 = sbr.rel (%p363) target = $region16
        $region15: #{_forward.1} parent=11 // pred_region
          _
        $region16: #{_forward.1} parent=11 // pred_fallthru
          _
        // Predicated region
        $region17: #{_forward.1} parent=11 // pred_check
          %p366 = pneg %p91
        $region18: #{_forward.1} parent=11 // pred_check_branch
          %368 = sbr.rel (%p366) target = $region20
        $region19: #{_forward.1} parent=11 // pred_region
          _
        $region20: #{_forward.1} parent=11 // pred_fallthru
          _
        // Predicated region
        $region21: #{_forward.1} parent=11 // pred_check
          %p369 = pneg %p112
        $region22: #{_forward.1} parent=11 // pred_check_branch
          %371 = sbr.rel (%p369) target = $region24
        $region23: #{_forward.1} parent=11 // pred_region
          _
        $region24: #{_forward.1} parent=11 // pred_fallthru
          _
        // Predicated region
        $region25: #{_forward.1} parent=11 // pred_check
          %p372 = pneg %p133
        $region26: #{_forward.1} parent=11 // pred_check_branch
          %374 = sbr.rel (%p372) target = $region28
        $region27: #{_forward.1} parent=11 // pred_region
          _
        $region28: #{_forward.1} parent=11 // pred_fallthru
          _
        // Predicated region
        $region29: #{_forward.1} parent=11 // pred_check
          %p375 = pneg %p154
        $region30: #{_forward.1} parent=11 // pred_check_branch
          %377 = sbr.rel (%p375) target = $region32
        $region31: #{_forward.1} parent=11 // pred_region
          _
        $region32: #{_forward.1} parent=11 // pred_fallthru
          _
        // Predicated region
        $region33: #{_forward.1} parent=11 // pred_check
          %p378 = pneg %p175
        $region34: #{_forward.1} parent=11 // pred_check_branch
          %380 = sbr.rel (%p378) target = $region36
        $region35: #{_forward.1} parent=11 // pred_region
          _
        $region36: #{_forward.1} parent=11 // pred_fallthru
          _
        // Predicated region
        $region37: #{_forward.1} parent=11 // pred_check
          %p381 = pneg %p196
        $region38: #{_forward.1} parent=11 // pred_check_branch
          %383 = sbr.rel (%p381) target = $region40
        $region39: #{_forward.1} parent=11 // pred_region
          _
        $region40: #{_forward.1} parent=11 // pred_fallthru
          _
        // Predicated region
        $region41: #{_forward.1} parent=11 // pred_check
          %p384 = pneg %p217
        $region42: #{_forward.1} parent=11 // pred_check_branch
          %386 = sbr.rel (%p384) target = $region44
        $region43: #{_forward.1} parent=11 // pred_region
          _
        $region44: #{_forward.1} parent=11 // pred_fallthru
          _
        // Predicated region
        $region45: #{_forward.1} parent=11 // pred_check
          %p387 = pneg %p238
        $region46: #{_forward.1} parent=11 // pred_check_branch
          %389 = sbr.rel (%p387) target = $region48
        $region47: #{_forward.1} parent=11 // pred_region
          _
        $region48: #{_forward.1} parent=11 // pred_fallthru
          _
        // Predicated region
        $region49: #{_forward.1} parent=11 // pred_check
          %p390 = pneg %p259
        $region50: #{_forward.1} parent=11 // pred_check_branch
          %392 = sbr.rel (%p390) target = $region52
        $region51: #{_forward.1} parent=11 // pred_region
          _
        $region52: #{_forward.1} parent=11 // pred_fallthru
          _
        // Predicated region
        $region53: #{_forward.1} parent=11 // pred_check
          %p393 = pneg %p280
        $region54: #{_forward.1} parent=11 // pred_check_branch
          %395 = sbr.rel (%p393) target = $region56
        $region55: #{_forward.1} parent=11 // pred_region
          _
        $region56: #{_forward.1} parent=11 // pred_fallthru
          _
        // Predicated region
        $region57: #{_forward.1} parent=11 // pred_check
          %p396 = pneg %p301
        $region58: #{_forward.1} parent=11 // pred_check_branch
          %398 = sbr.rel (%p396) target = $region60
        $region59: #{_forward.1} parent=11 // pred_region
          _
        $region60: #{_forward.1} parent=11 // pred_fallthru
          _
        // Predicated region
        $region61: #{_forward.1} parent=11 // pred_check
          %p399 = pneg %p322
        $region62: #{_forward.1} parent=11 // pred_check_branch
          %401 = sbr.rel (%p399) target = $region64
        $region63: #{_forward.1} parent=11 // pred_region
          _
        $region64: #{_forward.1} parent=11 // pred_fallthru
          _
      $region12: #{_forward.1} parent=5 // pred_fallthru
        _
      %p402 = scmp.lt.s32.totalorder %s23, 2
      // Predicated region
      $region65: #{_forward.1} parent=5 // pred_check
        %p403 = pneg %p402
      $region66: #{_forward.1} parent=5 // pred_check_branch
        %405 = sbr.rel (%p403) target = $region68
      $region67: #{_forward.1} parent=5 // pred_region
        // Predicated region
        $region69: #{_forward.1} parent=67 // pred_check
          %p406 = pneg %p43
        $region70: #{_forward.1} parent=67 // pred_check_branch
          %408 = sbr.rel (%p406) target = $region72
        $region71: #{_forward.1} parent=67 // pred_region
          %p409 = scmp.lt.s32.totalorder %s23, 1
          %s410 = scalar_select %p409, %s23, 1
          %s411 = smul.addr %s410, 112
          %s412 = smul.addr %s411, 4
          %s413 = scalar_lea.vmem %s0, %s412
        $region72: #{_forward.1} parent=67 // pred_fallthru
          _
      $region68: #{_forward.1} parent=5 // pred_fallthru
        _
      %p414 = scmp.le.s32.totalorder 1, %s23
      %p415 = scmp.lt.s32.totalorder %s23, 3
      %p416 = pnand %p414, %p415
      %p417 = pneg %p416
      // Predicated region
      $region73: #{_forward.1} parent=5 // pred_check
        _
      $region74: #{_forward.1} parent=5 // pred_check_branch
        %419 = sbr.rel (%p416) target = $region76
      $region75: #{_forward.1} parent=5 // pred_region
        %s420 = ssub.s32 %s23, 1
        %p421 = scmp.lt.s32.totalorder %s28, 1
        %s422 = scalar_select %p421, %s28, 1
        %s423 = smul.addr %s422, 112
        %s424 = smul.addr %s423, 4
        %s425 = scalar_lea.vmem %s0, %s424
        %p426 = pneg %p49
        %p427 = pneg %p46
        %p428 = pneg %p70
        %p429 = pneg %p67
        %p430 = pneg %p91
        %p431 = pneg %p88
        %p432 = pneg %p112
        %p433 = pneg %p109
        %p434 = pneg %p133
        %p435 = pneg %p130
        %p436 = pneg %p154
        %p437 = pneg %p151
        %p438 = pneg %p175
        %p439 = pneg %p172
        %p440 = pneg %p196
        %p441 = pneg %p193
        %p442 = pneg %p217
        %p443 = pneg %p214
        %p444 = pneg %p238
        %p445 = pneg %p235
        %p446 = pneg %p259
        %p447 = pneg %p256
        %p448 = pneg %p280
        %p449 = pneg %p277
        %p450 = pneg %p301
        %p451 = pneg %p298
        %p452 = pneg %p322
        %p453 = pneg %p319
        %p454 = pneg %p348
        %p455 = pneg %p345
        %s456 = sand.u32 %s335, 1
        %s457 = scalar_lea.sflag [#allocation8], %s456
        %s458 = sand.u32 %s335, 1
        %s459 = scalar_lea.vmem [#allocation7], %s458
        %p460 = scmp.lt.s32.totalorder %s28, 1
        %s461 = scalar_select %p460, %s28, 1
        %s462 = smul.addr %s461, 112
        %s463 = smul.addr %s462, 4
        %s464 = scalar_lea.vmem %s0, %s463
        %v466 = vld [vmem:[%s2] sm:$0x1]
        %v467 = vld [vmem:[%s3] sm:$0x1]
        loop: start=0, step=1, limit=7
        $region77: #{_forward.1} parent=75 // loop_pre_header
          _
        $region78: #{_forward.1} parent=75 // loop_header
          %s469 = sphi 0, %s473
          %p470 = scmp.ge.s32.totalorder %s469, 7
        $region79: #{_forward.1} parent=75 // loop_header_branch
          %472 = sbr.rel (%p470) target = $region83
        $region80: #{_forward.1} parent=75 // loop_body
          %s474 = smul.u32 %s469, 128
          %s475 = sshra.s32 %s474, 3
          %s476 = sand.u32 %s474, 7
          %s477 = smul.addr %s475, 4
          %s478 = scalar_lea.vmem %s464, %s477
          %v479 = vld [vmem:[%s478] sm:$0xf]
          %v480 = vld [vmem:[%s478 + $0x4] sm:$0xf]
          %v481 = vld [vmem:[%s478 + $0x8] sm:$0xf]
          %v482 = vld [vmem:[%s478 + $0xc] sm:$0xf]
          %v483 = vld [vmem:[%s478 + $0x10] sm:$0xf]
          %v484 = vld [vmem:[%s478 + $0x14] sm:$0xf]
          %v485 = vld [vmem:[%s478 + $0x18] sm:$0xf]
          %v486 = vld [vmem:[%s478 + $0x1c] sm:$0xf]
          %v487 = vld [vmem:[%s478 + $0x20] sm:$0xf]
          %v488 = vld [vmem:[%s478 + $0x24] sm:$0xf]
          %v489 = vld [vmem:[%s478 + $0x28] sm:$0xf]
          %v490 = vld [vmem:[%s478 + $0x2c] sm:$0xf]
          %v491 = vld [vmem:[%s478 + $0x30] sm:$0xf]
          %v492 = vld [vmem:[%s478 + $0x34] sm:$0xf]
          %v493 = vld [vmem:[%s478 + $0x38] sm:$0xf]
          %v494 = vld [vmem:[%s478 + $0x3c] sm:$0xf]
          %v495 = vld [vmem:[%s1] sm:$0xf]
          %v496 = vld [vmem:[%s1 + $0x4] sm:$0x1]
          %v513 = vunpack.c.l.b16 %v479
          %v514 = vunpack.c.l.b16 %v480
          %v515 = vunpack.c.l.b16 %v481
          %v516 = vunpack.c.l.b16 %v482
          %v517 = vunpack.c.l.b16 %v483
          %v518 = vunpack.c.l.b16 %v484
          %v519 = vunpack.c.l.b16 %v485
          %v520 = vunpack.c.l.b16 %v486
          %v521 = vunpack.c.l.b16 %v487
          %v522 = vunpack.c.l.b16 %v488
          %v523 = vunpack.c.l.b16 %v489
          %v524 = vunpack.c.l.b16 %v490
          %v525 = vunpack.c.l.b16 %v491
          %v526 = vunpack.c.l.b16 %v492
          %v527 = vunpack.c.l.b16 %v493
          %v528 = vunpack.c.l.b16 %v494
          %v529 = vpack.c.b16 %v514, %v513
          %v530 = vpack.c.b16 %v516, %v515
          %v531 = vpack.c.b16 %v518, %v517
          %v532 = vpack.c.b16 %v520, %v519
          %v533 = vpack.c.b16 %v522, %v521
          %v534 = vpack.c.b16 %v524, %v523
          %v535 = vpack.c.b16 %v526, %v525
          %v536 = vpack.c.b16 %v528, %v527
          %v539 = vunpack.c.l.b16 %v495
          %v540 = vunpack.c.l.b16 %v496
          %v541 = vpack.c.b16 %v540, %v539
          %vm542 = vcmask 72704
          %v544 = vsel %vm542, %v529, 0
          %v547 = vsel %vm542, %v530, 0
          %v550 = vsel %vm542, %v531, 0
          %v553 = vsel %vm542, %v532, 0
          %v556 = vsel %vm542, %v533, 0
          %v559 = vsel %vm542, %v534, 0
          %v562 = vsel %vm542, %v535, 0
          %v565 = vsel %vm542, %v536, 0
          %vm567 = vcmask 1043456
          %vm568 = vcmask 1044480
          %v569 = vsel %vm567, 4294967295, 65535
          %v570 = vsel %vm568, %v569, 0
          %v572 = vand.u32 %v541, %v570
          %574 = vmatprep.subr.bf16.mxu0 0
          %575 = vmatpush1.bf16.msra.mxu0 %v572
          %576 = vmatprep.subr.bf16.mxu0 0
          %577 = vmatpush1.bf16.msra.mxu0 0
          %578 = vmatprep.subr.bf16.mxu0 0
          %579 = vmatpush1.bf16.msra.mxu0 0
          %580 = vmatprep.subr.bf16.mxu0 0
          %581 = vmatpush1.bf16.msra.mxu0 0
          %582 = vmatprep.subr.bf16.mxu0 0
          %583 = vmatpush1.bf16.msra.mxu0 0
          %584 = vmatprep.subr.bf16.mxu0 0
          %585 = vmatpush1.bf16.msra.mxu0 0
          %586 = vmatprep.subr.bf16.mxu0 0
          %587 = vmatpush1.bf16.msra.mxu0 0
          %588 = vmatprep.subr.bf16.mxu0 0
          %589 = vmatpush1.bf16.msra.mxu0 0
          %590 = vmatprep.subr.bf16.mxu0 0
          %591 = vmatpush1.bf16.msra.mxu0 0
          %592 = vmatprep.subr.bf16.mxu0 0
          %593 = vmatpush1.bf16.msra.mxu0 0
          %594 = vmatprep.subr.bf16.mxu0 0
          %595 = vmatpush1.bf16.msra.mxu0 0
          %596 = vmatprep.subr.bf16.mxu0 0
          %597 = vmatpush1.bf16.msra.mxu0 0
          %598 = vmatprep.subr.bf16.mxu0 0
          %599 = vmatpush1.bf16.msra.mxu0 0
          %600 = vmatprep.subr.bf16.mxu0 0
          %601 = vmatpush1.bf16.msra.mxu0 0
          %602 = vmatprep.subr.bf16.mxu0 0
          %603 = vmatpush1.bf16.msra.mxu0 0
          %604 = vmatprep.subr.bf16.mxu0 0
          %605 = vmatpush1.bf16.msra.mxu0 0
          %606 = vmatprep.mubr.bf16.mxu0 0
          %607 = vmatmul.mubr.bf16.gmra.mrb[0].mxu0 %v544
          %v608 = vpop.f32.mrb[0].mxu0
          %v609 = vadd.f32 0.0, %v608
          %v610 = vpop.f32.mrb[0].mxu0
          %v611 = vpop.f32.mrb[0].mxu0
          %v612 = vadd.f32 0.0, %v611
          %v613 = vpop.f32.mrb[0].mxu0
          %614 = vmatprep.mubr.bf16.mxu0 0
          %615 = vmatmul.mubr.bf16.gmra.mrb[0].mxu0 %v547
          %v616 = vpop.f32.mrb[0].mxu0
          %v617 = vadd.f32 0.0, %v616
          %v618 = vpop.f32.mrb[0].mxu0
          %v619 = vpop.f32.mrb[0].mxu0
          %v620 = vadd.f32 0.0, %v619
          %v621 = vpop.f32.mrb[0].mxu0
          %622 = vmatprep.mubr.bf16.mxu0 0
          %623 = vmatmul.mubr.bf16.gmra.mrb[0].mxu0 %v550
          %v624 = vpop.f32.mrb[0].mxu0
          %v625 = vadd.f32 0.0, %v624
          %v626 = vpop.f32.mrb[0].mxu0
          %v627 = vpop.f32.mrb[0].mxu0
          %v628 = vadd.f32 0.0, %v627
          %v629 = vpop.f32.mrb[0].mxu0
          %630 = vmatprep.mubr.bf16.mxu0 0
          %631 = vmatmul.mubr.bf16.gmra.mrb[0].mxu0 %v553
          %v632 = vpop.f32.mrb[0].mxu0
          %v633 = vadd.f32 0.0, %v632
          %v634 = vpop.f32.mrb[0].mxu0
          %v635 = vpop.f32.mrb[0].mxu0
          %v636 = vadd.f32 0.0, %v635
          %v637 = vpop.f32.mrb[0].mxu0
          %638 = vmatprep.mubr.bf16.mxu0 0
          %639 = vmatmul.mubr.bf16.gmra.mrb[0].mxu0 %v556
          %v640 = vpop.f32.mrb[0].mxu0
          %v641 = vadd.f32 0.0, %v640
          %v642 = vpop.f32.mrb[0].mxu0
          %v643 = vpop.f32.mrb[0].mxu0
          %v644 = vadd.f32 0.0, %v643
          %v645 = vpop.f32.mrb[0].mxu0
          %646 = vmatprep.mubr.bf16.mxu0 0
          %647 = vmatmul.mubr.bf16.gmra.mrb[0].mxu0 %v559
          %v648 = vpop.f32.mrb[0].mxu0
          %v649 = vadd.f32 0.0, %v648
          %v650 = vpop.f32.mrb[0].mxu0
          %v651 = vpop.f32.mrb[0].mxu0
          %v652 = vadd.f32 0.0, %v651
          %v653 = vpop.f32.mrb[0].mxu0
          %654 = vmatprep.mubr.bf16.mxu0 0
          %655 = vmatmul.mubr.bf16.gmra.mrb[0].mxu0 %v562
          %v656 = vpop.f32.mrb[0].mxu0
          %v657 = vadd.f32 0.0, %v656
          %v658 = vpop.f32.mrb[0].mxu0
          %v659 = vpop.f32.mrb[0].mxu0
          %v660 = vadd.f32 0.0, %v659
          %v661 = vpop.f32.mrb[0].mxu0
          %662 = vmatprep.mubr.bf16.mxu0 0
          %663 = vmatmul.mubr.bf16.gmra.mrb[0].mxu0 %v565
          %v664 = vpop.f32.mrb[0].mxu0
          %v665 = vadd.f32 0.0, %v664
          %v666 = vpop.f32.mrb[0].mxu0
          %v667 = vpop.f32.mrb[0].mxu0
          %v668 = vadd.f32 0.0, %v667
          %v669 = vpop.f32.mrb[0].mxu0
          %670 = vdwg.mxu0
          %v672 = vlaneseq
          %v673 = vshrl.u32 %v672, 7
          %v674 = vsub.s32 0, %v673
          %v675 = vrot.slane %v466, %v674
          %v677 = vmul.f32 %v609, %v675
          %v678 = vmul.f32 %v612, %v675
          %v679 = vmul.f32 %v617, %v675
          %v680 = vmul.f32 %v620, %v675
          %v681 = vmul.f32 %v625, %v675
          %v682 = vmul.f32 %v628, %v675
          %v683 = vmul.f32 %v633, %v675
          %v684 = vmul.f32 %v636, %v675
          %v685 = vmul.f32 %v641, %v675
          %v686 = vmul.f32 %v644, %v675
          %v687 = vmul.f32 %v649, %v675
          %v688 = vmul.f32 %v652, %v675
          %v689 = vmul.f32 %v657, %v675
          %v690 = vmul.f32 %v660, %v675
          %v691 = vmul.f32 %v665, %v675
          %v692 = vmul.f32 %v668, %v675
          %v694 = vlaneseq
          %v695 = vshrl.u32 %v694, 7
          %v696 = vsub.s32 0, %v695
          %v697 = vrot.slane %v467, %v696
          %v699 = vadd.f32 %v677, %v697
          %v700 = vadd.f32 %v678, %v697
          %v701 = vadd.f32 %v679, %v697
          %v702 = vadd.f32 %v680, %v697
          %v703 = vadd.f32 %v681, %v697
          %v704 = vadd.f32 %v682, %v697
          %v705 = vadd.f32 %v683, %v697
          %v706 = vadd.f32 %v684, %v697
          %v707 = vadd.f32 %v685, %v697
          %v708 = vadd.f32 %v686, %v697
          %v709 = vadd.f32 %v687, %v697
          %v710 = vadd.f32 %v688, %v697
          %v711 = vadd.f32 %v689, %v697
          %v712 = vadd.f32 %v690, %v697
          %v713 = vadd.f32 %v691, %v697
          %v714 = vadd.f32 %v692, %v697
          %v715 = vmax.f32 %v699, 0.0
          %v716 = vmax.f32 %v700, 0.0
          %v717 = vmax.f32 %v701, 0.0
          %v718 = vmax.f32 %v702, 0.0
          %v719 = vmax.f32 %v703, 0.0
          %v720 = vmax.f32 %v704, 0.0
          %v721 = vmax.f32 %v705, 0.0
          %v722 = vmax.f32 %v706, 0.0
          %v723 = vmax.f32 %v707, 0.0
          %v724 = vmax.f32 %v708, 0.0
          %v725 = vmax.f32 %v709, 0.0
          %v726 = vmax.f32 %v710, 0.0
          %v727 = vmax.f32 %v711, 0.0
          %v728 = vmax.f32 %v712, 0.0
          %v729 = vmax.f32 %v713, 0.0
          %v730 = vmax.f32 %v714, 0.0
          %s731 = scalar_lea.vmem [#allocation2], %s474
          %vm732 = vcmask 261120
          %733 = vst.msk [vmem:[%s731] sm:$0xff] %vm732, %v715
          %734 = vst.msk [vmem:[%s731 + $0x8] sm:$0xff] %vm732, %v716
          %735 = vst.msk [vmem:[%s731 + $0x10] sm:$0xff] %vm732, %v717
          %736 = vst.msk [vmem:[%s731 + $0x18] sm:$0xff] %vm732, %v718
          %737 = vst.msk [vmem:[%s731 + $0x20] sm:$0xff] %vm732, %v719
          %738 = vst.msk [vmem:[%s731 + $0x28] sm:$0xff] %vm732, %v720
          %739 = vst.msk [vmem:[%s731 + $0x30] sm:$0xff] %vm732, %v721
          %740 = vst.msk [vmem:[%s731 + $0x38] sm:$0xff] %vm732, %v722
          %741 = vst.msk [vmem:[%s731 + $0x40] sm:$0xff] %vm732, %v723
          %742 = vst.msk [vmem:[%s731 + $0x48] sm:$0xff] %vm732, %v724
          %743 = vst.msk [vmem:[%s731 + $0x50] sm:$0xff] %vm732, %v725
          %744 = vst.msk [vmem:[%s731 + $0x58] sm:$0xff] %vm732, %v726
          %745 = vst.msk [vmem:[%s731 + $0x60] sm:$0xff] %vm732, %v727
          %746 = vst.msk [vmem:[%s731 + $0x68] sm:$0xff] %vm732, %v728
          %747 = vst.msk [vmem:[%s731 + $0x70] sm:$0xff] %vm732, %v729
          %748 = vst.msk [vmem:[%s731 + $0x78] sm:$0xff] %vm732, %v730
        $region81: #{_forward.1} parent=75 // loop_footer
          %s473 = sadd.s32 1, %s469
        $region82: #{_forward.1} parent=75 // loop_footer_branch
          %468 = sbr.rel target = $region78
        $region83: #{_forward.1} parent=75 // loop_exit
          _
        %vm749 = vcmask 261120
        %750 = vst.msk [vmem:[#allocation3] sm:$0xff] %vm749, 0.0
        %751 = vst.msk [vmem:[#allocation3 + $0x8] sm:$0xff] %vm749, 0.0
        %752 = vst.msk [vmem:[#allocation3 + $0x10] sm:$0xff] %vm749, 0.0
        %753 = vst.msk [vmem:[#allocation3 + $0x18] sm:$0xff] %vm749, 0.0
        %754 = vst.msk [vmem:[#allocation3 + $0x20] sm:$0xff] %vm749, 0.0
        %755 = vst.msk [vmem:[#allocation3 + $0x28] sm:$0xff] %vm749, 0.0
        %756 = vst.msk [vmem:[#allocation3 + $0x30] sm:$0xff] %vm749, 0.0
        %757 = vst.msk [vmem:[#allocation3 + $0x38] sm:$0xff] %vm749, 0.0
        %758 = vst.msk [vmem:[#allocation3 + $0x40] sm:$0xff] %vm749, 0.0
        %759 = vst.msk [vmem:[#allocation3 + $0x48] sm:$0xff] %vm749, 0.0
        %760 = vst.msk [vmem:[#allocation3 + $0x50] sm:$0xff] %vm749, 0.0
        %761 = vst.msk [vmem:[#allocation3 + $0x58] sm:$0xff] %vm749, 0.0
        %762 = vst.msk [vmem:[#allocation3 + $0x60] sm:$0xff] %vm749, 0.0
        %763 = vst.msk [vmem:[#allocation3 + $0x68] sm:$0xff] %vm749, 0.0
        %764 = vst.msk [vmem:[#allocation3 + $0x70] sm:$0xff] %vm749, 0.0
        %765 = vst.msk [vmem:[#allocation3 + $0x78] sm:$0xff] %vm749, 0.0
        %766 = vst.msk [vmem:[#allocation3 + $0x80] sm:$0xff] %vm749, 0.0
        %767 = vst.msk [vmem:[#allocation3 + $0x88] sm:$0xff] %vm749, 0.0
        %768 = vst.msk [vmem:[#allocation3 + $0x90] sm:$0xff] %vm749, 0.0
        %769 = vst.msk [vmem:[#allocation3 + $0x98] sm:$0xff] %vm749, 0.0
        %770 = vst.msk [vmem:[#allocation3 + $0xa0] sm:$0xff] %vm749, 0.0
        %771 = vst.msk [vmem:[#allocation3 + $0xa8] sm:$0xff] %vm749, 0.0
        %772 = vst.msk [vmem:[#allocation3 + $0xb0] sm:$0xff] %vm749, 0.0
        %773 = vst.msk [vmem:[#allocation3 + $0xb8] sm:$0xff] %vm749, 0.0
        %774 = vst.msk [vmem:[#allocation3 + $0xc0] sm:$0xff] %vm749, 0.0
        %775 = vst.msk [vmem:[#allocation3 + $0xc8] sm:$0xff] %vm749, 0.0
        %776 = vst.msk [vmem:[#allocation3 + $0xd0] sm:$0xff] %vm749, 0.0
        %777 = vst.msk [vmem:[#allocation3 + $0xd8] sm:$0xff] %vm749, 0.0
        %778 = vst.msk [vmem:[#allocation3 + $0xe0] sm:$0xff] %vm749, 0.0
        %779 = vst.msk [vmem:[#allocation3 + $0xe8] sm:$0xff] %vm749, 0.0
        %780 = vst.msk [vmem:[#allocation3 + $0xf0] sm:$0xff] %vm749, 0.0
        %781 = vst.msk [vmem:[#allocation3 + $0xf8] sm:$0xff] %vm749, 0.0
        %782 = vst.msk [vmem:[#allocation3 + $0x100] sm:$0xff] %vm749, 0.0
        %783 = vst.msk [vmem:[#allocation3 + $0x108] sm:$0xff] %vm749, 0.0
        %v784 = vld [vmem:[#allocation2] ss:$2 sm:$0xff]
        %s785 = scalar_lea.vmem [#allocation2], 16
        %v786 = vld [vmem:[%s785] ss:$2 sm:$0x3f]
        %s787 = scalar_lea.vmem [#allocation2], 1
        %v788 = vld [vmem:[%s787] ss:$2 sm:$0xff]
        %s789 = scalar_lea.vmem [#allocation2], 17
        %v790 = vld [vmem:[%s789] ss:$2 sm:$0x3f]
        %s791 = scalar_lea.vmem [#allocation2], 32
        %v792 = vld [vmem:[%s791] ss:$2 sm:$0xff]
        %s793 = scalar_lea.vmem [#allocation2], 48
        %v794 = vld [vmem:[%s793] ss:$2 sm:$0x3f]
        %s795 = scalar_lea.vmem [#allocation2], 33
        %v796 = vld [vmem:[%s795] ss:$2 sm:$0xff]
        %s797 = scalar_lea.vmem [#allocation2], 49
        %v798 = vld [vmem:[%s797] ss:$2 sm:$0x3f]
        %v799 = vmax.f32 %v784, %v788
        %v800 = vmax.f32 %v786, %v790
        %v801 = vmax.f32 %v792, %v796
        %v802 = vmax.f32 %v794, %v798
        %v803 = vmax.f32 %v799, %v801
        %v804 = vmax.f32 %v800, %v802
        %805 = vst.msk [vmem:[#allocation3 + $0x11] sm:$0xff] %vm749, %v803
        %vm806 = vcmask 259072
        %807 = vst.msk [vmem:[#allocation3 + $0x19] sm:$0x3f] %vm806, %v804
        %s808 = scalar_lea.vmem [#allocation2], 64
        %v809 = vld [vmem:[%s808] ss:$2 sm:$0xff]
        %s810 = scalar_lea.vmem [#allocation2], 80
        %v811 = vld [vmem:[%s810] ss:$2 sm:$0x3f]
        %s812 = scalar_lea.vmem [#allocation2], 65
        %v813 = vld [vmem:[%s812] ss:$2 sm:$0xff]
        %s814 = scalar_lea.vmem [#allocation2], 81
        %v815 = vld [vmem:[%s814] ss:$2 sm:$0x3f]
        %s816 = scalar_lea.vmem [#allocation2], 96
        %v817 = vld [vmem:[%s816] ss:$2 sm:$0xff]
        %s818 = scalar_lea.vmem [#allocation2], 112
        %v819 = vld [vmem:[%s818] ss:$2 sm:$0x3f]
        %s820 = scalar_lea.vmem [#allocation2], 97
        %v821 = vld [vmem:[%s820] ss:$2 sm:$0xff]
        %s822 = scalar_lea.vmem [#allocation2], 113
        %v823 = vld [vmem:[%s822] ss:$2 sm:$0x3f]
        %v824 = vmax.f32 %v809, %v813
        %v825 = vmax.f32 %v811, %v815
        %v826 = vmax.f32 %v817, %v821
        %v827 = vmax.f32 %v819, %v823
        %v828 = vmax.f32 %v824, %v826
        %v829 = vmax.f32 %v825, %v827
        %830 = vst.msk [vmem:[#allocation3 + $0x21] sm:$0xff] %vm749, %v828
        %831 = vst.msk [vmem:[#allocation3 + $0x29] sm:$0x3f] %vm806, %v829
        %s832 = scalar_lea.vmem [#allocation2], 128
        %v833 = vld [vmem:[%s832] ss:$2 sm:$0xff]
        %s834 = scalar_lea.vmem [#allocation2], 144
        %v835 = vld [vmem:[%s834] ss:$2 sm:$0x3f]
        %s836 = scalar_lea.vmem [#allocation2], 129
        %v837 = vld [vmem:[%s836] ss:$2 sm:$0xff]
        %s838 = scalar_lea.vmem [#allocation2], 145
        %v839 = vld [vmem:[%s838] ss:$2 sm:$0x3f]
        %s840 = scalar_lea.vmem [#allocation2], 160
        %v841 = vld [vmem:[%s840] ss:$2 sm:$0xff]
        %s842 = scalar_lea.vmem [#allocation2], 176
        %v843 = vld [vmem:[%s842] ss:$2 sm:$0x3f]
        %s844 = scalar_lea.vmem [#allocation2], 161
        %v845 = vld [vmem:[%s844] ss:$2 sm:$0xff]
        %s846 = scalar_lea.vmem [#allocation2], 177
        %v847 = vld [vmem:[%s846] ss:$2 sm:$0x3f]
        %v848 = vmax.f32 %v833, %v837
        %v849 = vmax.f32 %v835, %v839
        %v850 = vmax.f32 %v841, %v845
        %v851 = vmax.f32 %v843, %v847
        %v852 = vmax.f32 %v848, %v850
        %v853 = vmax.f32 %v849, %v851
        %854 = vst.msk [vmem:[#allocation3 + $0x31] sm:$0xff] %vm749, %v852
        %855 = vst.msk [vmem:[#allocation3 + $0x39] sm:$0x3f] %vm806, %v853
        %s856 = scalar_lea.vmem [#allocation2], 192
        %v857 = vld [vmem:[%s856] ss:$2 sm:$0xff]
        %s858 = scalar_lea.vmem [#allocation2], 208
        %v859 = vld [vmem:[%s858] ss:$2 sm:$0x3f]
        %s860 = scalar_lea.vmem [#allocation2], 193
        %v861 = vld [vmem:[%s860] ss:$2 sm:$0xff]
        %s862 = scalar_lea.vmem [#allocation2], 209
        %v863 = vld [vmem:[%s862] ss:$2 sm:$0x3f]
        %s864 = scalar_lea.vmem [#allocation2], 224
        %v865 = vld [vmem:[%s864] ss:$2 sm:$0xff]
        %s866 = scalar_lea.vmem [#allocation2], 240
        %v867 = vld [vmem:[%s866] ss:$2 sm:$0x3f]
        %s868 = scalar_lea.vmem [#allocation2], 225
        %v869 = vld [vmem:[%s868] ss:$2 sm:$0xff]
        %s870 = scalar_lea.vmem [#allocation2], 241
        %v871 = vld [vmem:[%s870] ss:$2 sm:$0x3f]
        %v872 = vmax.f32 %v857, %v861
        %v873 = vmax.f32 %v859, %v863
        %v874 = vmax.f32 %v865, %v869
        %v875 = vmax.f32 %v867, %v871
        %v876 = vmax.f32 %v872, %v874
        %v877 = vmax.f32 %v873, %v875
        %878 = vst.msk [vmem:[#allocation3 + $0x41] sm:$0xff] %vm749, %v876
        %879 = vst.msk [vmem:[#allocation3 + $0x49] sm:$0x3f] %vm806, %v877
        %s880 = scalar_lea.vmem [#allocation2], 256
        %v881 = vld [vmem:[%s880] ss:$2 sm:$0xff]
        %s882 = scalar_lea.vmem [#allocation2], 272
        %v883 = vld [vmem:[%s882] ss:$2 sm:$0x3f]
        %s884 = scalar_lea.vmem [#allocation2], 257
        %v885 = vld [vmem:[%s884] ss:$2 sm:$0xff]
        %s886 = scalar_lea.vmem [#allocation2], 273
        %v887 = vld [vmem:[%s886] ss:$2 sm:$0x3f]
        %s888 = scalar_lea.vmem [#allocation2], 288
        %v889 = vld [vmem:[%s888] ss:$2 sm:$0xff]
        %s890 = scalar_lea.vmem [#allocation2], 304
        %v891 = vld [vmem:[%s890] ss:$2 sm:$0x3f]
        %s892 = scalar_lea.vmem [#allocation2], 289
        %v893 = vld [vmem:[%s892] ss:$2 sm:$0xff]
        %s894 = scalar_lea.vmem [#allocation2], 305
        %v895 = vld [vmem:[%s894] ss:$2 sm:$0x3f]
        %v896 = vmax.f32 %v881, %v885
        %v897 = vmax.f32 %v883, %v887
        %v898 = vmax.f32 %v889, %v893
        %v899 = vmax.f32 %v891, %v895
        %v900 = vmax.f32 %v896, %v898
        %v901 = vmax.f32 %v897, %v899
        %902 = vst.msk [vmem:[#allocation3 + $0x51] sm:$0xff] %vm749, %v900
        %903 = vst.msk [vmem:[#allocation3 + $0x59] sm:$0x3f] %vm806, %v901
        %s904 = scalar_lea.vmem [#allocation2], 320
        %v905 = vld [vmem:[%s904] ss:$2 sm:$0xff]
        %s906 = scalar_lea.vmem [#allocation2], 336
        %v907 = vld [vmem:[%s906] ss:$2 sm:$0x3f]
        %s908 = scalar_lea.vmem [#allocation2], 321
        %v909 = vld [vmem:[%s908] ss:$2 sm:$0xff]
        %s910 = scalar_lea.vmem [#allocation2], 337
        %v911 = vld [vmem:[%s910] ss:$2 sm:$0x3f]
        %s912 = scalar_lea.vmem [#allocation2], 352
        %v913 = vld [vmem:[%s912] ss:$2 sm:$0xff]
        %s914 = scalar_lea.vmem [#allocation2], 368
        %v915 = vld [vmem:[%s914] ss:$2 sm:$0x3f]
        %s916 = scalar_lea.vmem [#allocation2], 353
        %v917 = vld [vmem:[%s916] ss:$2 sm:$0xff]
        %s918 = scalar_lea.vmem [#allocation2], 369
        %v919 = vld [vmem:[%s918] ss:$2 sm:$0x3f]
        %v920 = vmax.f32 %v905, %v909
        %v921 = vmax.f32 %v907, %v911
        %v922 = vmax.f32 %v913, %v917
        %v923 = vmax.f32 %v915, %v919
        %v924 = vmax.f32 %v920, %v922
        %v925 = vmax.f32 %v921, %v923
        %926 = vst.msk [vmem:[#allocation3 + $0x61] sm:$0xff] %vm749, %v924
        %927 = vst.msk [vmem:[#allocation3 + $0x69] sm:$0x3f] %vm806, %v925
        %s928 = scalar_lea.vmem [#allocation2], 384
        %v929 = vld [vmem:[%s928] ss:$2 sm:$0xff]
        %s930 = scalar_lea.vmem [#allocation2], 400
        %v931 = vld [vmem:[%s930] ss:$2 sm:$0x3f]
        %s932 = scalar_lea.vmem [#allocation2], 385
        %v933 = vld [vmem:[%s932] ss:$2 sm:$0xff]
        %s934 = scalar_lea.vmem [#allocation2], 401
        %v935 = vld [vmem:[%s934] ss:$2 sm:$0x3f]
        %s936 = scalar_lea.vmem [#allocation2], 416
        %v937 = vld [vmem:[%s936] ss:$2 sm:$0xff]
        %s938 = scalar_lea.vmem [#allocation2], 432
        %v939 = vld [vmem:[%s938] ss:$2 sm:$0x3f]
        %s940 = scalar_lea.vmem [#allocation2], 417
        %v941 = vld [vmem:[%s940] ss:$2 sm:$0xff]
        %s942 = scalar_lea.vmem [#allocation2], 433
        %v943 = vld [vmem:[%s942] ss:$2 sm:$0x3f]
        %v944 = vmax.f32 %v929, %v933
        %v945 = vmax.f32 %v931, %v935
        %v946 = vmax.f32 %v937, %v941
        %v947 = vmax.f32 %v939, %v943
        %v948 = vmax.f32 %v944, %v946
        %v949 = vmax.f32 %v945, %v947
        %950 = vst.msk [vmem:[#allocation3 + $0x71] sm:$0xff] %vm749, %v948
        %951 = vst.msk [vmem:[#allocation3 + $0x79] sm:$0x3f] %vm806, %v949
        %s952 = scalar_lea.vmem [#allocation2], 448
        %v953 = vld [vmem:[%s952] ss:$2 sm:$0xff]
        %s954 = scalar_lea.vmem [#allocation2], 464
        %v955 = vld [vmem:[%s954] ss:$2 sm:$0x3f]
        %s956 = scalar_lea.vmem [#allocation2], 449
        %v957 = vld [vmem:[%s956] ss:$2 sm:$0xff]
        %s958 = scalar_lea.vmem [#allocation2], 465
        %v959 = vld [vmem:[%s958] ss:$2 sm:$0x3f]
        %s960 = scalar_lea.vmem [#allocation2], 480
        %v961 = vld [vmem:[%s960] ss:$2 sm:$0xff]
        %s962 = scalar_lea.vmem [#allocation2], 496
        %v963 = vld [vmem:[%s962] ss:$2 sm:$0x3f]
        %s964 = scalar_lea.vmem [#allocation2], 481
        %v965 = vld [vmem:[%s964] ss:$2 sm:$0xff]
        %s966 = scalar_lea.vmem [#allocation2], 497
        %v967 = vld [vmem:[%s966] ss:$2 sm:$0x3f]
        %v968 = vmax.f32 %v953, %v957
        %v969 = vmax.f32 %v955, %v959
        %v970 = vmax.f32 %v961, %v965
        %v971 = vmax.f32 %v963, %v967
        %v972 = vmax.f32 %v968, %v970
        %v973 = vmax.f32 %v969, %v971
        %974 = vst.msk [vmem:[#allocation3 + $0x81] sm:$0xff] %vm749, %v972
        %975 = vst.msk [vmem:[#allocation3 + $0x89] sm:$0x3f] %vm806, %v973
        %s976 = scalar_lea.vmem [#allocation2], 512
        %v977 = vld [vmem:[%s976] ss:$2 sm:$0xff]
        %s978 = scalar_lea.vmem [#allocation2], 528
        %v979 = vld [vmem:[%s978] ss:$2 sm:$0x3f]
        %s980 = scalar_lea.vmem [#allocation2], 513
        %v981 = vld [vmem:[%s980] ss:$2 sm:$0xff]
        %s982 = scalar_lea.vmem [#allocation2], 529
        %v983 = vld [vmem:[%s982] ss:$2 sm:$0x3f]
        %s984 = scalar_lea.vmem [#allocation2], 544
        %v985 = vld [vmem:[%s984] ss:$2 sm:$0xff]
        %s986 = scalar_lea.vmem [#allocation2], 560
        %v987 = vld [vmem:[%s986] ss:$2 sm:$0x3f]
        %s988 = scalar_lea.vmem [#allocation2], 545
        %v989 = vld [vmem:[%s988] ss:$2 sm:$0xff]
        %s990 = scalar_lea.vmem [#allocation2], 561
        %v991 = vld [vmem:[%s990] ss:$2 sm:$0x3f]
        %v992 = vmax.f32 %v977, %v981
        %v993 = vmax.f32 %v979, %v983
        %v994 = vmax.f32 %v985, %v989
        %v995 = vmax.f32 %v987, %v991
        %v996 = vmax.f32 %v992, %v994
        %v997 = vmax.f32 %v993, %v995
        %998 = vst.msk [vmem:[#allocation3 + $0x91] sm:$0xff] %vm749, %v996
        %999 = vst.msk [vmem:[#allocation3 + $0x99] sm:$0x3f] %vm806, %v997
        %s1000 = scalar_lea.vmem [#allocation2], 576
        %v1001 = vld [vmem:[%s1000] ss:$2 sm:$0xff]
        %s1002 = scalar_lea.vmem [#allocation2], 592
        %v1003 = vld [vmem:[%s1002] ss:$2 sm:$0x3f]
        %s1004 = scalar_lea.vmem [#allocation2], 577
        %v1005 = vld [vmem:[%s1004] ss:$2 sm:$0xff]
        %s1006 = scalar_lea.vmem [#allocation2], 593
        %v1007 = vld [vmem:[%s1006] ss:$2 sm:$0x3f]
        %s1008 = scalar_lea.vmem [#allocation2], 608
        %v1009 = vld [vmem:[%s1008] ss:$2 sm:$0xff]
        %s1010 = scalar_lea.vmem [#allocation2], 624
        %v1011 = vld [vmem:[%s1010] ss:$2 sm:$0x3f]
        %s1012 = scalar_lea.vmem [#allocation2], 609
        %v1013 = vld [vmem:[%s1012] ss:$2 sm:$0xff]
        %s1014 = scalar_lea.vmem [#allocation2], 625
        %v1015 = vld [vmem:[%s1014] ss:$2 sm:$0x3f]
        %v1016 = vmax.f32 %v1001, %v1005
        %v1017 = vmax.f32 %v1003, %v1007
        %v1018 = vmax.f32 %v1009, %v1013
        %v1019 = vmax.f32 %v1011, %v1015
        %v1020 = vmax.f32 %v1016, %v1018
        %v1021 = vmax.f32 %v1017, %v1019
        %1022 = vst.msk [vmem:[#allocation3 + $0xa1] sm:$0xff] %vm749, %v1020
        %1023 = vst.msk [vmem:[#allocation3 + $0xa9] sm:$0x3f] %vm806, %v1021
        %s1024 = scalar_lea.vmem [#allocation2], 640
        %v1025 = vld [vmem:[%s1024] ss:$2 sm:$0xff]
        %s1026 = scalar_lea.vmem [#allocation2], 656
        %v1027 = vld [vmem:[%s1026] ss:$2 sm:$0x3f]
        %s1028 = scalar_lea.vmem [#allocation2], 641
        %v1029 = vld [vmem:[%s1028] ss:$2 sm:$0xff]
        %s1030 = scalar_lea.vmem [#allocation2], 657
        %v1031 = vld [vmem:[%s1030] ss:$2 sm:$0x3f]
        %s1032 = scalar_lea.vmem [#allocation2], 672
        %v1033 = vld [vmem:[%s1032] ss:$2 sm:$0xff]
        %s1034 = scalar_lea.vmem [#allocation2], 688
        %v1035 = vld [vmem:[%s1034] ss:$2 sm:$0x3f]
        %s1036 = scalar_lea.vmem [#allocation2], 673
        %v1037 = vld [vmem:[%s1036] ss:$2 sm:$0xff]
        %s1038 = scalar_lea.vmem [#allocation2], 689
        %v1039 = vld [vmem:[%s1038] ss:$2 sm:$0x3f]
        %v1040 = vmax.f32 %v1025, %v1029
        %v1041 = vmax.f32 %v1027, %v1031
        %v1042 = vmax.f32 %v1033, %v1037
        %v1043 = vmax.f32 %v1035, %v1039
        %v1044 = vmax.f32 %v1040, %v1042
        %v1045 = vmax.f32 %v1041, %v1043
        %1046 = vst.msk [vmem:[#allocation3 + $0xb1] sm:$0xff] %vm749, %v1044
        %1047 = vst.msk [vmem:[#allocation3 + $0xb9] sm:$0x3f] %vm806, %v1045
        %s1048 = scalar_lea.vmem [#allocation2], 704
        %v1049 = vld [vmem:[%s1048] ss:$2 sm:$0xff]
        %s1050 = scalar_lea.vmem [#allocation2], 720
        %v1051 = vld [vmem:[%s1050] ss:$2 sm:$0x3f]
        %s1052 = scalar_lea.vmem [#allocation2], 705
        %v1053 = vld [vmem:[%s1052] ss:$2 sm:$0xff]
        %s1054 = scalar_lea.vmem [#allocation2], 721
        %v1055 = vld [vmem:[%s1054] ss:$2 sm:$0x3f]
        %s1056 = scalar_lea.vmem [#allocation2], 736
        %v1057 = vld [vmem:[%s1056] ss:$2 sm:$0xff]
        %s1058 = scalar_lea.vmem [#allocation2], 752
        %v1059 = vld [vmem:[%s1058] ss:$2 sm:$0x3f]
        %s1060 = scalar_lea.vmem [#allocation2], 737
        %v1061 = vld [vmem:[%s1060] ss:$2 sm:$0xff]
        %s1062 = scalar_lea.vmem [#allocation2], 753
        %v1063 = vld [vmem:[%s1062] ss:$2 sm:$0x3f]
        %v1064 = vmax.f32 %v1049, %v1053
        %v1065 = vmax.f32 %v1051, %v1055
        %v1066 = vmax.f32 %v1057, %v1061
        %v1067 = vmax.f32 %v1059, %v1063
        %v1068 = vmax.f32 %v1064, %v1066
        %v1069 = vmax.f32 %v1065, %v1067
        %1070 = vst.msk [vmem:[#allocation3 + $0xc1] sm:$0xff] %vm749, %v1068
        %1071 = vst.msk [vmem:[#allocation3 + $0xc9] sm:$0x3f] %vm806, %v1069
        %s1072 = scalar_lea.vmem [#allocation2], 768
        %v1073 = vld [vmem:[%s1072] ss:$2 sm:$0xff]
        %s1074 = scalar_lea.vmem [#allocation2], 784
        %v1075 = vld [vmem:[%s1074] ss:$2 sm:$0x3f]
        %s1076 = scalar_lea.vmem [#allocation2], 769
        %v1077 = vld [vmem:[%s1076] ss:$2 sm:$0xff]
        %s1078 = scalar_lea.vmem [#allocation2], 785
        %v1079 = vld [vmem:[%s1078] ss:$2 sm:$0x3f]
        %s1080 = scalar_lea.vmem [#allocation2], 800
        %v1081 = vld [vmem:[%s1080] ss:$2 sm:$0xff]
        %s1082 = scalar_lea.vmem [#allocation2], 816
        %v1083 = vld [vmem:[%s1082] ss:$2 sm:$0x3f]
        %s1084 = scalar_lea.vmem [#allocation2], 801
        %v1085 = vld [vmem:[%s1084] ss:$2 sm:$0xff]
        %s1086 = scalar_lea.vmem [#allocation2], 817
        %v1087 = vld [vmem:[%s1086] ss:$2 sm:$0x3f]
        %v1088 = vmax.f32 %v1073, %v1077
        %v1089 = vmax.f32 %v1075, %v1079
        %v1090 = vmax.f32 %v1081, %v1085
        %v1091 = vmax.f32 %v1083, %v1087
        %v1092 = vmax.f32 %v1088, %v1090
        %v1093 = vmax.f32 %v1089, %v1091
        %1094 = vst.msk [vmem:[#allocation3 + $0xd1] sm:$0xff] %vm749, %v1092
        %1095 = vst.msk [vmem:[#allocation3 + $0xd9] sm:$0x3f] %vm806, %v1093
        %s1096 = scalar_lea.vmem [#allocation2], 832
        %v1097 = vld [vmem:[%s1096] ss:$2 sm:$0xff]
        %s1098 = scalar_lea.vmem [#allocation2], 848
        %v1099 = vld [vmem:[%s1098] ss:$2 sm:$0x3f]
        %s1100 = scalar_lea.vmem [#allocation2], 833
        %v1101 = vld [vmem:[%s1100] ss:$2 sm:$0xff]
        %s1102 = scalar_lea.vmem [#allocation2], 849
        %v1103 = vld [vmem:[%s1102] ss:$2 sm:$0x3f]
        %s1104 = scalar_lea.vmem [#allocation2], 864
        %v1105 = vld [vmem:[%s1104] ss:$2 sm:$0xff]
        %s1106 = scalar_lea.vmem [#allocation2], 880
        %v1107 = vld [vmem:[%s1106] ss:$2 sm:$0x3f]
        %s1108 = scalar_lea.vmem [#allocation2], 865
        %v1109 = vld [vmem:[%s1108] ss:$2 sm:$0xff]
        %s1110 = scalar_lea.vmem [#allocation2], 881
        %v1111 = vld [vmem:[%s1110] ss:$2 sm:$0x3f]
        %v1112 = vmax.f32 %v1097, %v1101
        %v1113 = vmax.f32 %v1099, %v1103
        %v1114 = vmax.f32 %v1105, %v1109
        %v1115 = vmax.f32 %v1107, %v1111
        %v1116 = vmax.f32 %v1112, %v1114
        %v1117 = vmax.f32 %v1113, %v1115
        %1118 = vst.msk [vmem:[#allocation3 + $0xe1] sm:$0xff] %vm749, %v1116
        %1119 = vst.msk [vmem:[#allocation3 + $0xe9] sm:$0x3f] %vm806, %v1117
        %v1120 = vld [vmem:[%s5] sm:$0x1]
        %v1121 = vld [vmem:[%s6] sm:$0x1]
        loop: start=0, step=1, limit=2
        $region84: #{_forward.1} parent=75 // loop_pre_header
          _
        $region85: #{_forward.1} parent=75 // loop_header
          %s1123 = sphi 0, %s1127
          %p1124 = scmp.ge.s32.totalorder %s1123, 2
        $region86: #{_forward.1} parent=75 // loop_header_branch
          %1126 = sbr.rel (%p1124) target = $region90
        $region87: #{_forward.1} parent=75 // loop_body
          %s1128 = smul.u32 %s1123, 112
          %s1129 = scalar_lea.vmem [#allocation3], %s1128
          %v1130 = vld [vmem:[%s1129] sm:$0xff]
          %v1131 = vld [vmem:[%s1129 + $0x8] sm:$0xff]
          %v1132 = vld [vmem:[%s1129 + $0x10] sm:$0xff]
          %v1133 = vld [vmem:[%s1129 + $0x18] sm:$0xff]
          %v1134 = vld [vmem:[%s1129 + $0x20] sm:$0xff]
          %v1135 = vld [vmem:[%s1129 + $0x28] sm:$0xff]
          %v1136 = vld [vmem:[%s1129 + $0x30] sm:$0xff]
          %v1137 = vld [vmem:[%s1129 + $0x38] sm:$0xff]
          %v1138 = vld [vmem:[%s1129 + $0x40] sm:$0xff]
          %v1139 = vld [vmem:[%s1129 + $0x48] sm:$0xff]
          %v1140 = vld [vmem:[%s1129 + $0x50] sm:$0xff]
          %v1141 = vld [vmem:[%s1129 + $0x58] sm:$0xff]
          %v1142 = vld [vmem:[%s1129 + $0x60] sm:$0xff]
          %v1143 = vld [vmem:[%s1129 + $0x68] sm:$0xff]
          %v1144 = vld [vmem:[%s4] sm:$0xf]
          %v1145 = vld [vmem:[%s4 + $0x4] sm:$0xf]
          %v1146 = vld [vmem:[%s4 + $0x8] sm:$0xf]
          %v1147 = vld [vmem:[%s4 + $0xc] sm:$0xf]
          %v1148 = vpack.c.bf16 %v1131, %v1130
          %v1149 = vpack.c.bf16 %v1133, %v1132
          %v1150 = vpack.c.bf16 %v1135, %v1134
          %v1151 = vpack.c.bf16 %v1137, %v1136
          %v1152 = vpack.c.bf16 %v1139, %v1138
          %v1153 = vpack.c.bf16 %v1141, %v1140
          %v1154 = vpack.c.bf16 %v1143, %v1142
          %s1155 = sadd.s32 %s1128, 1
          %s1156 = scalar_lea.vmem [#allocation3], %s1155
          %v1157 = vld [vmem:[%s1156] sm:$0xff]
          %v1158 = vld [vmem:[%s1156 + $0x8] sm:$0xff]
          %v1159 = vld [vmem:[%s1156 + $0x10] sm:$0xff]
          %v1160 = vld [vmem:[%s1156 + $0x18] sm:$0xff]
          %v1161 = vld [vmem:[%s1156 + $0x20] sm:$0xff]
          %v1162 = vld [vmem:[%s1156 + $0x28] sm:$0xff]
          %v1163 = vld [vmem:[%s1156 + $0x30] sm:$0xff]
          %v1164 = vld [vmem:[%s1156 + $0x38] sm:$0xff]
          %v1165 = vld [vmem:[%s1156 + $0x40] sm:$0xff]
          %v1166 = vld [vmem:[%s1156 + $0x48] sm:$0xff]
          %v1167 = vld [vmem:[%s1156 + $0x50] sm:$0xff]
          %v1168 = vld [vmem:[%s1156 + $0x58] sm:$0xff]
          %v1169 = vld [vmem:[%s1156 + $0x60] sm:$0xff]
          %v1170 = vld [vmem:[%s1156 + $0x68] sm:$0xff]
          %v1171 = vld [vmem:[%s4 + $0x10] sm:$0xf]
          %v1172 = vld [vmem:[%s4 + $0x14] sm:$0xf]
          %v1173 = vld [vmem:[%s4 + $0x18] sm:$0xf]
          %v1174 = vld [vmem:[%s4 + $0x1c] sm:$0xf]
          %v1175 = vpack.c.bf16 %v1158, %v1157
          %v1176 = vpack.c.bf16 %v1160, %v1159
          %v1177 = vpack.c.bf16 %v1162, %v1161
          %v1178 = vpack.c.bf16 %v1164, %v1163
          %v1179 = vpack.c.bf16 %v1166, %v1165
          %v1180 = vpack.c.bf16 %v1168, %v1167
          %v1181 = vpack.c.bf16 %v1170, %v1169
          %v1186 = vunpack.c.l.b16 %v1171
          %v1187 = vunpack.c.l.b16 %v1172
          %v1188 = vunpack.c.l.b16 %v1173
          %v1189 = vunpack.c.l.b16 %v1174
          %v1190 = vpack.c.b16 %v1187, %v1186
          %v1191 = vpack.c.b16 %v1189, %v1188
          %v1195 = vsel %vm749, %v1175, 0
          %v1198 = vsel %vm749, %v1176, 0
          %v1201 = vsel %vm749, %v1177, 0
          %v1204 = vsel %vm749, %v1178, 0
          %v1207 = vsel %vm749, %v1179, 0
          %v1210 = vsel %vm749, %v1180, 0
          %v1213 = vsel %vm749, %v1181, 0
          %1215 = vmatprep.subr.bf16.mxu0 0
          %1216 = vmatpush1.bf16.msra.mxu0 %v1190
          %1217 = vmatprep.subr.bf16.mxu0 0
          %1218 = vmatpush1.bf16.msra.mxu0 %v1191
          %1219 = vmatprep.subr.bf16.mxu0 0
          %1220 = vmatpush1.bf16.msra.mxu0 0
          %1221 = vmatprep.subr.bf16.mxu0 0
          %1222 = vmatpush1.bf16.msra.mxu0 0
          %1223 = vmatprep.subr.bf16.mxu0 0
          %1224 = vmatpush1.bf16.msra.mxu0 0
          %1225 = vmatprep.subr.bf16.mxu0 0
          %1226 = vmatpush1.bf16.msra.mxu0 0
          %1227 = vmatprep.subr.bf16.mxu0 0
          %1228 = vmatpush1.bf16.msra.mxu0 0
          %1229 = vmatprep.subr.bf16.mxu0 0
          %1230 = vmatpush1.bf16.msra.mxu0 0
          %1231 = vmatprep.subr.bf16.mxu0 0
          %1232 = vmatpush1.bf16.msra.mxu0 0
          %1233 = vmatprep.subr.bf16.mxu0 0
          %1234 = vmatpush1.bf16.msra.mxu0 0
          %1235 = vmatprep.subr.bf16.mxu0 0
          %1236 = vmatpush1.bf16.msra.mxu0 0
          %1237 = vmatprep.subr.bf16.mxu0 0
          %1238 = vmatpush1.bf16.msra.mxu0 0
          %1239 = vmatprep.subr.bf16.mxu0 0
          %1240 = vmatpush1.bf16.msra.mxu0 0
          %1241 = vmatprep.subr.bf16.mxu0 0
          %1242 = vmatpush1.bf16.msra.mxu0 0
          %1243 = vmatprep.subr.bf16.mxu0 0
          %1244 = vmatpush1.bf16.msra.mxu0 0
          %1245 = vmatprep.subr.bf16.mxu0 0
          %1246 = vmatpush1.bf16.msra.mxu0 0
          %1247 = vmatprep.mubr.bf16.mxu0 0
          %1248 = vmatmul.mubr.bf16.gmra.mrb[0].mxu0 %v1195
          %v1249 = vpop.f32.mrb[0].mxu0
          %v1250 = vadd.f32 0.0, %v1249
          %v1251 = vpop.f32.mrb[0].mxu0
          %v1252 = vpop.f32.mrb[0].mxu0
          %v1253 = vadd.f32 0.0, %v1252
          %v1254 = vpop.f32.mrb[0].mxu0
          %1255 = vmatprep.mubr.bf16.mxu0 0
          %1256 = vmatmul.mubr.bf16.gmra.mrb[0].mxu0 %v1198
          %v1257 = vpop.f32.mrb[0].mxu0
          %v1258 = vadd.f32 0.0, %v1257
          %v1259 = vpop.f32.mrb[0].mxu0
          %v1260 = vpop.f32.mrb[0].mxu0
          %v1261 = vadd.f32 0.0, %v1260
          %v1262 = vpop.f32.mrb[0].mxu0
          %1263 = vmatprep.mubr.bf16.mxu0 0
          %1264 = vmatmul.mubr.bf16.gmra.mrb[0].mxu0 %v1201
          %v1265 = vpop.f32.mrb[0].mxu0
          %v1266 = vadd.f32 0.0, %v1265
          %v1267 = vpop.f32.mrb[0].mxu0
          %v1268 = vpop.f32.mrb[0].mxu0
          %v1269 = vadd.f32 0.0, %v1268
          %v1270 = vpop.f32.mrb[0].mxu0
          %1271 = vmatprep.mubr.bf16.mxu0 0
          %1272 = vmatmul.mubr.bf16.gmra.mrb[0].mxu0 %v1204
          %v1273 = vpop.f32.mrb[0].mxu0
          %v1274 = vadd.f32 0.0, %v1273
          %v1275 = vpop.f32.mrb[0].mxu0
          %v1276 = vpop.f32.mrb[0].mxu0
          %v1277 = vadd.f32 0.0, %v1276
          %v1278 = vpop.f32.mrb[0].mxu0
          %1279 = vmatprep.mubr.bf16.mxu0 0
          %1280 = vmatmul.mubr.bf16.gmra.mrb[0].mxu0 %v1207
          %v1281 = vpop.f32.mrb[0].mxu0
          %v1282 = vadd.f32 0.0, %v1281
          %v1283 = vpop.f32.mrb[0].mxu0
          %v1284 = vpop.f32.mrb[0].mxu0
          %v1285 = vadd.f32 0.0, %v1284
          %v1286 = vpop.f32.mrb[0].mxu0
          %1287 = vmatprep.mubr.bf16.mxu0 0
          %1288 = vmatmul.mubr.bf16.gmra.mrb[0].mxu0 %v1210
          %v1289 = vpop.f32.mrb[0].mxu0
          %v1290 = vadd.f32 0.0, %v1289
          %v1291 = vpop.f32.mrb[0].mxu0
          %v1292 = vpop.f32.mrb[0].mxu0
          %v1293 = vadd.f32 0.0, %v1292
          %v1294 = vpop.f32.mrb[0].mxu0
          %1295 = vmatprep.mubr.bf16.mxu0 0
          %1296 = vmatmul.mubr.bf16.gmra.mrb[0].mxu0 %v1213
          %v1297 = vpop.f32.mrb[0].mxu0
          %v1298 = vadd.f32 0.0, %v1297
          %v1299 = vpop.f32.mrb[0].mxu0
          %v1300 = vpop.f32.mrb[0].mxu0
          %v1301 = vadd.f32 0.0, %v1300
          %v1302 = vpop.f32.mrb[0].mxu0
          %1303 = vdwg.mxu0
          %v1308 = vunpack.c.l.b16 %v1144
          %v1309 = vunpack.c.l.b16 %v1145
          %v1310 = vunpack.c.l.b16 %v1146
          %v1311 = vunpack.c.l.b16 %v1147
          %v1312 = vpack.c.b16 %v1309, %v1308
          %v1313 = vpack.c.b16 %v1311, %v1310
          %v1317 = vsel %vm749, %v1148, 0
          %v1320 = vsel %vm749, %v1149, 0
          %v1323 = vsel %vm749, %v1150, 0
          %v1326 = vsel %vm749, %v1151, 0
          %v1329 = vsel %vm749, %v1152, 0
          %v1332 = vsel %vm749, %v1153, 0
          %v1335 = vsel %vm749, %v1154, 0
          %1337 = vmatprep.subr.bf16.mxu0 0
          %1338 = vmatpush1.bf16.msra.mxu0 %v1312
          %1339 = vmatprep.subr.bf16.mxu0 0
          %1340 = vmatpush1.bf16.msra.mxu0 %v1313
          %1341 = vmatprep.subr.bf16.mxu0 0
          %1342 = vmatpush1.bf16.msra.mxu0 0
          %1343 = vmatprep.subr.bf16.mxu0 0
          %1344 = vmatpush1.bf16.msra.mxu0 0
          %1345 = vmatprep.subr.bf16.mxu0 0
          %1346 = vmatpush1.bf16.msra.mxu0 0
          %1347 = vmatprep.subr.bf16.mxu0 0
          %1348 = vmatpush1.bf16.msra.mxu0 0
          %1349 = vmatprep.subr.bf16.mxu0 0
          %1350 = vmatpush1.bf16.msra.mxu0 0
          %1351 = vmatprep.subr.bf16.mxu0 0
          %1352 = vmatpush1.bf16.msra.mxu0 0
          %1353 = vmatprep.subr.bf16.mxu0 0
          %1354 = vmatpush1.bf16.msra.mxu0 0
          %1355 = vmatprep.subr.bf16.mxu0 0
          %1356 = vmatpush1.bf16.msra.mxu0 0
          %1357 = vmatprep.subr.bf16.mxu0 0
          %1358 = vmatpush1.bf16.msra.mxu0 0
          %1359 = vmatprep.subr.bf16.mxu0 0
          %1360 = vmatpush1.bf16.msra.mxu0 0
          %1361 = vmatprep.subr.bf16.mxu0 0
          %1362 = vmatpush1.bf16.msra.mxu0 0
          %1363 = vmatprep.subr.bf16.mxu0 0
          %1364 = vmatpush1.bf16.msra.mxu0 0
          %1365 = vmatprep.subr.bf16.mxu0 0
          %1366 = vmatpush1.bf16.msra.mxu0 0
          %1367 = vmatprep.subr.bf16.mxu0 0
          %1368 = vmatpush1.bf16.msra.mxu0 0
          %1369 = vmatprep.mubr.bf16.mxu0 0
          %1370 = vmatmul.mubr.bf16.gmra.mrb[0].mxu0 %v1317
          %v1371 = vpop.f32.mrb[0].mxu0
          %v1372 = vadd.f32 %v1250, %v1371
          %v1373 = vpop.f32.mrb[0].mxu0
          %v1374 = vpop.f32.mrb[0].mxu0
          %v1375 = vadd.f32 %v1253, %v1374
          %v1376 = vpop.f32.mrb[0].mxu0
          %1377 = vmatprep.mubr.bf16.mxu0 0
          %1378 = vmatmul.mubr.bf16.gmra.mrb[0].mxu0 %v1320
          %v1379 = vpop.f32.mrb[0].mxu0
          %v1380 = vadd.f32 %v1258, %v1379
          %v1381 = vpop.f32.mrb[0].mxu0
          %v1382 = vpop.f32.mrb[0].mxu0
          %v1383 = vadd.f32 %v1261, %v1382
          %v1384 = vpop.f32.mrb[0].mxu0
          %1385 = vmatprep.mubr.bf16.mxu0 0
          %1386 = vmatmul.mubr.bf16.gmra.mrb[0].mxu0 %v1323
          %v1387 = vpop.f32.mrb[0].mxu0
          %v1388 = vadd.f32 %v1266, %v1387
          %v1389 = vpop.f32.mrb[0].mxu0
          %v1390 = vpop.f32.mrb[0].mxu0
          %v1391 = vadd.f32 %v1269, %v1390
          %v1392 = vpop.f32.mrb[0].mxu0
          %1393 = vmatprep.mubr.bf16.mxu0 0
          %1394 = vmatmul.mubr.bf16.gmra.mrb[0].mxu0 %v1326
          %v1395 = vpop.f32.mrb[0].mxu0
          %v1396 = vadd.f32 %v1274, %v1395
          %v1397 = vpop.f32.mrb[0].mxu0
          %v1398 = vpop.f32.mrb[0].mxu0
          %v1399 = vadd.f32 %v1277, %v1398
          %v1400 = vpop.f32.mrb[0].mxu0
          %1401 = vmatprep.mubr.bf16.mxu0 0
          %1402 = vmatmul.mubr.bf16.gmra.mrb[0].mxu0 %v1329
          %v1403 = vpop.f32.mrb[0].mxu0
          %v1404 = vadd.f32 %v1282, %v1403
          %v1405 = vpop.f32.mrb[0].mxu0
          %v1406 = vpop.f32.mrb[0].mxu0
          %v1407 = vadd.f32 %v1285, %v1406
          %v1408 = vpop.f32.mrb[0].mxu0
          %1409 = vmatprep.mubr.bf16.mxu0 0
          %1410 = vmatmul.mubr.bf16.gmra.mrb[0].mxu0 %v1332
          %v1411 = vpop.f32.mrb[0].mxu0
          %v1412 = vadd.f32 %v1290, %v1411
          %v1413 = vpop.f32.mrb[0].mxu0
          %v1414 = vpop.f32.mrb[0].mxu0
          %v1415 = vadd.f32 %v1293, %v1414
          %v1416 = vpop.f32.mrb[0].mxu0
          %1417 = vmatprep.mubr.bf16.mxu0 0
          %1418 = vmatmul.mubr.bf16.gmra.mrb[0].mxu0 %v1335
          %v1419 = vpop.f32.mrb[0].mxu0
          %v1420 = vadd.f32 %v1298, %v1419
          %v1421 = vpop.f32.mrb[0].mxu0
          %v1422 = vpop.f32.mrb[0].mxu0
          %v1423 = vadd.f32 %v1301, %v1422
          %v1424 = vpop.f32.mrb[0].mxu0
          %1425 = vdwg.mxu0
          %s1426 = sadd.s32 %s1128, 2
          %s1427 = scalar_lea.vmem [#allocation3], %s1426
          %v1428 = vld [vmem:[%s1427] sm:$0xff]
          %v1429 = vld [vmem:[%s1427 + $0x8] sm:$0xff]
          %v1430 = vld [vmem:[%s1427 + $0x10] sm:$0xff]
          %v1431 = vld [vmem:[%s1427 + $0x18] sm:$0xff]
          %v1432 = vld [vmem:[%s1427 + $0x20] sm:$0xff]
          %v1433 = vld [vmem:[%s1427 + $0x28] sm:$0xff]
          %v1434 = vld [vmem:[%s1427 + $0x30] sm:$0xff]
          %v1435 = vld [vmem:[%s1427 + $0x38] sm:$0xff]
          %v1436 = vld [vmem:[%s1427 + $0x40] sm:$0xff]
          %v1437 = vld [vmem:[%s1427 + $0x48] sm:$0xff]
          %v1438 = vld [vmem:[%s1427 + $0x50] sm:$0xff]
          %v1439 = vld [vmem:[%s1427 + $0x58] sm:$0xff]
          %v1440 = vld [vmem:[%s1427 + $0x60] sm:$0xff]
          %v1441 = vld [vmem:[%s1427 + $0x68] sm:$0xff]
          %v1442 = vld [vmem:[%s4 + $0x20] sm:$0xf]
          %v1443 = vld [vmem:[%s4 + $0x24] sm:$0xf]
          %v1444 = vld [vmem:[%s4 + $0x28] sm:$0xf]
          %v1445 = vld [vmem:[%s4 + $0x2c] sm:$0xf]
          %v1446 = vpack.c.bf16 %v1429, %v1428
          %v1447 = vpack.c.bf16 %v1431, %v1430
          %v1448 = vpack.c.bf16 %v1433, %v1432
          %v1449 = vpack.c.bf16 %v1435, %v1434
          %v1450 = vpack.c.bf16 %v1437, %v1436
          %v1451 = vpack.c.bf16 %v1439, %v1438
          %v1452 = vpack.c.bf16 %v1441, %v1440
          %v1457 = vunpack.c.l.b16 %v1442
          %v1458 = vunpack.c.l.b16 %v1443
          %v1459 = vunpack.c.l.b16 %v1444
          %v1460 = vunpack.c.l.b16 %v1445
          %v1461 = vpack.c.b16 %v1458, %v1457
          %v1462 = vpack.c.b16 %v1460, %v1459
          %v1466 = vsel %vm749, %v1446, 0
          %v1469 = vsel %vm749, %v1447, 0
          %v1472 = vsel %vm749, %v1448, 0
          %v1475 = vsel %vm749, %v1449, 0
          %v1478 = vsel %vm749, %v1450, 0
          %v1481 = vsel %vm749, %v1451, 0
          %v1484 = vsel %vm749, %v1452, 0
          %1486 = vmatprep.subr.bf16.mxu0 0
          %1487 = vmatpush1.bf16.msra.mxu0 %v1461
          %1488 = vmatprep.subr.bf16.mxu0 0
          %1489 = vmatpush1.bf16.msra.mxu0 %v1462
          %1490 = vmatprep.subr.bf16.mxu0 0
          %1491 = vmatpush1.bf16.msra.mxu0 0
          %1492 = vmatprep.subr.bf16.mxu0 0
          %1493 = vmatpush1.bf16.msra.mxu0 0
          %1494 = vmatprep.subr.bf16.mxu0 0
          %1495 = vmatpush1.bf16.msra.mxu0 0
          %1496 = vmatprep.subr.bf16.mxu0 0
          %1497 = vmatpush1.bf16.msra.mxu0 0
          %1498 = vmatprep.subr.bf16.mxu0 0
          %1499 = vmatpush1.bf16.msra.mxu0 0
          %1500 = vmatprep.subr.bf16.mxu0 0
          %1501 = vmatpush1.bf16.msra.mxu0 0
          %1502 = vmatprep.subr.bf16.mxu0 0
          %1503 = vmatpush1.bf16.msra.mxu0 0
          %1504 = vmatprep.subr.bf16.mxu0 0
          %1505 = vmatpush1.bf16.msra.mxu0 0
          %1506 = vmatprep.subr.bf16.mxu0 0
          %1507 = vmatpush1.bf16.msra.mxu0 0
          %1508 = vmatprep.subr.bf16.mxu0 0
          %1509 = vmatpush1.bf16.msra.mxu0 0
          %1510 = vmatprep.subr.bf16.mxu0 0
          %1511 = vmatpush1.bf16.msra.mxu0 0
          %1512 = vmatprep.subr.bf16.mxu0 0
          %1513 = vmatpush1.bf16.msra.mxu0 0
          %1514 = vmatprep.subr.bf16.mxu0 0
          %1515 = vmatpush1.bf16.msra.mxu0 0
          %1516 = vmatprep.subr.bf16.mxu0 0
          %1517 = vmatpush1.bf16.msra.mxu0 0
          %1518 = vmatprep.mubr.bf16.mxu0 0
          %1519 = vmatmul.mubr.bf16.gmra.mrb[0].mxu0 %v1466
          %v1520 = vpop.f32.mrb[0].mxu0
          %v1521 = vadd.f32 0.0, %v1520
          %v1522 = vpop.f32.mrb[0].mxu0
          %v1523 = vpop.f32.mrb[0].mxu0
          %v1524 = vadd.f32 0.0, %v1523
          %v1525 = vpop.f32.mrb[0].mxu0
          %1526 = vmatprep.mubr.bf16.mxu0 0
          %1527 = vmatmul.mubr.bf16.gmra.mrb[0].mxu0 %v1469
          %v1528 = vpop.f32.mrb[0].mxu0
          %v1529 = vadd.f32 0.0, %v1528
          %v1530 = vpop.f32.mrb[0].mxu0
          %v1531 = vpop.f32.mrb[0].mxu0
          %v1532 = vadd.f32 0.0, %v1531
          %v1533 = vpop.f32.mrb[0].mxu0
          %1534 = vmatprep.mubr.bf16.mxu0 0
          %1535 = vmatmul.mubr.bf16.gmra.mrb[0].mxu0 %v1472
          %v1536 = vpop.f32.mrb[0].mxu0
          %v1537 = vadd.f32 0.0, %v1536
          %v1538 = vpop.f32.mrb[0].mxu0
          %v1539 = vpop.f32.mrb[0].mxu0
          %v1540 = vadd.f32 0.0, %v1539
          %v1541 = vpop.f32.mrb[0].mxu0
          %1542 = vmatprep.mubr.bf16.mxu0 0
          %1543 = vmatmul.mubr.bf16.gmra.mrb[0].mxu0 %v1475
          %v1544 = vpop.f32.mrb[0].mxu0
          %v1545 = vadd.f32 0.0, %v1544
          %v1546 = vpop.f32.mrb[0].mxu0
          %v1547 = vpop.f32.mrb[0].mxu0
          %v1548 = vadd.f32 0.0, %v1547
          %v1549 = vpop.f32.mrb[0].mxu0
          %1550 = vmatprep.mubr.bf16.mxu0 0
          %1551 = vmatmul.mubr.bf16.gmra.mrb[0].mxu0 %v1478
          %v1552 = vpop.f32.mrb[0].mxu0
          %v1553 = vadd.f32 0.0, %v1552
          %v1554 = vpop.f32.mrb[0].mxu0
          %v1555 = vpop.f32.mrb[0].mxu0
          %v1556 = vadd.f32 0.0, %v1555
          %v1557 = vpop.f32.mrb[0].mxu0
          %1558 = vmatprep.mubr.bf16.mxu0 0
          %1559 = vmatmul.mubr.bf16.gmra.mrb[0].mxu0 %v1481
          %v1560 = vpop.f32.mrb[0].mxu0
          %v1561 = vadd.f32 0.0, %v1560
          %v1562 = vpop.f32.mrb[0].mxu0
          %v1563 = vpop.f32.mrb[0].mxu0
          %v1564 = vadd.f32 0.0, %v1563
          %v1565 = vpop.f32.mrb[0].mxu0
          %1566 = vmatprep.mubr.bf16.mxu0 0
          %1567 = vmatmul.mubr.bf16.gmra.mrb[0].mxu0 %v1484
          %v1568 = vpop.f32.mrb[0].mxu0
          %v1569 = vadd.f32 0.0, %v1568
          %v1570 = vpop.f32.mrb[0].mxu0
          %v1571 = vpop.f32.mrb[0].mxu0
          %v1572 = vadd.f32 0.0, %v1571
          %v1573 = vpop.f32.mrb[0].mxu0
          %1574 = vdwg.mxu0
          %v1575 = vadd.f32 %v1372, %v1521
          %v1576 = vadd.f32 %v1375, %v1524
          %v1577 = vadd.f32 %v1380, %v1529
          %v1578 = vadd.f32 %v1383, %v1532
          %v1579 = vadd.f32 %v1388, %v1537
          %v1580 = vadd.f32 %v1391, %v1540
          %v1581 = vadd.f32 %v1396, %v1545
          %v1582 = vadd.f32 %v1399, %v1548
          %v1583 = vadd.f32 %v1404, %v1553
          %v1584 = vadd.f32 %v1407, %v1556
          %v1585 = vadd.f32 %v1412, %v1561
          %v1586 = vadd.f32 %v1415, %v1564
          %v1587 = vadd.f32 %v1420, %v1569
          %v1588 = vadd.f32 %v1423, %v1572
          %s1589 = sadd.s32 %s1128, 16
          %s1590 = scalar_lea.vmem [#allocation3], %s1589
          %v1591 = vld [vmem:[%s1590] sm:$0xff]
          %v1592 = vld [vmem:[%s1590 + $0x8] sm:$0xff]
          %v1593 = vld [vmem:[%s1590 + $0x10] sm:$0xff]
          %v1594 = vld [vmem:[%s1590 + $0x18] sm:$0xff]
          %v1595 = vld [vmem:[%s1590 + $0x20] sm:$0xff]
          %v1596 = vld [vmem:[%s1590 + $0x28] sm:$0xff]
          %v1597 = vld [vmem:[%s1590 + $0x30] sm:$0xff]
          %v1598 = vld [vmem:[%s1590 + $0x38] sm:$0xff]
          %v1599 = vld [vmem:[%s1590 + $0x40] sm:$0xff]
          %v1600 = vld [vmem:[%s1590 + $0x48] sm:$0xff]
          %v1601 = vld [vmem:[%s1590 + $0x50] sm:$0xff]
          %v1602 = vld [vmem:[%s1590 + $0x58] sm:$0xff]
          %v1603 = vld [vmem:[%s1590 + $0x60] sm:$0xff]
          %v1604 = vld [vmem:[%s1590 + $0x68] sm:$0xff]
          %v1605 = vld [vmem:[%s4 + $0x30] sm:$0xf]
          %v1606 = vld [vmem:[%s4 + $0x34] sm:$0xf]
          %v1607 = vld [vmem:[%s4 + $0x38] sm:$0xf]
          %v1608 = vld [vmem:[%s4 + $0x3c] sm:$0xf]
          %v1609 = vpack.c.bf16 %v1592, %v1591
          %v1610 = vpack.c.bf16 %v1594, %v1593
          %v1611 = vpack.c.bf16 %v1596, %v1595
          %v1612 = vpack.c.bf16 %v1598, %v1597
          %v1613 = vpack.c.bf16 %v1600, %v1599
          %v1614 = vpack.c.bf16 %v1602, %v1601
          %v1615 = vpack.c.bf16 %v1604, %v1603
          %v1620 = vunpack.c.l.b16 %v1605
          %v1621 = vunpack.c.l.b16 %v1606
          %v1622 = vunpack.c.l.b16 %v1607
          %v1623 = vunpack.c.l.b16 %v1608
          %v1624 = vpack.c.b16 %v1621, %v1620
          %v1625 = vpack.c.b16 %v1623, %v1622
          %v1629 = vsel %vm749, %v1609, 0
          %v1632 = vsel %vm749, %v1610, 0
          %v1635 = vsel %vm749, %v1611, 0
          %v1638 = vsel %vm749, %v1612, 0
          %v1641 = vsel %vm749, %v1613, 0
          %v1644 = vsel %vm749, %v1614, 0
          %v1647 = vsel %vm749, %v1615, 0
          %1649 = vmatprep.subr.bf16.mxu0 0
          %1650 = vmatpush1.bf16.msra.mxu0 %v1624
          %1651 = vmatprep.subr.bf16.mxu0 0
          %1652 = vmatpush1.bf16.msra.mxu0 %v1625
          %1653 = vmatprep.subr.bf16.mxu0 0
          %1654 = vmatpush1.bf16.msra.mxu0 0
          %1655 = vmatprep.subr.bf16.mxu0 0
          %1656 = vmatpush1.bf16.msra.mxu0 0
          %1657 = vmatprep.subr.bf16.mxu0 0
          %1658 = vmatpush1.bf16.msra.mxu0 0
          %1659 = vmatprep.subr.bf16.mxu0 0
          %1660 = vmatpush1.bf16.msra.mxu0 0
          %1661 = vmatprep.subr.bf16.mxu0 0
          %1662 = vmatpush1.bf16.msra.mxu0 0
          %1663 = vmatprep.subr.bf16.mxu0 0
          %1664 = vmatpush1.bf16.msra.mxu0 0
          %1665 = vmatprep.subr.bf16.mxu0 0
          %1666 = vmatpush1.bf16.msra.mxu0 0
          %1667 = vmatprep.subr.bf16.mxu0 0
          %1668 = vmatpush1.bf16.msra.mxu0 0
          %1669 = vmatprep.subr.bf16.mxu0 0
          %1670 = vmatpush1.bf16.msra.mxu0 0
          %1671 = vmatprep.subr.bf16.mxu0 0
          %1672 = vmatpush1.bf16.msra.mxu0 0
          %1673 = vmatprep.subr.bf16.mxu0 0
          %1674 = vmatpush1.bf16.msra.mxu0 0
          %1675 = vmatprep.subr.bf16.mxu0 0
          %1676 = vmatpush1.bf16.msra.mxu0 0
          %1677 = vmatprep.subr.bf16.mxu0 0
          %1678 = vmatpush1.bf16.msra.mxu0 0
          %1679 = vmatprep.subr.bf16.mxu0 0
          %1680 = vmatpush1.bf16.msra.mxu0 0
          %1681 = vmatprep.mubr.bf16.mxu0 0
          %1682 = vmatmul.mubr.bf16.gmra.mrb[0].mxu0 %v1629
          %v1683 = vpop.f32.mrb[0].mxu0
          %v1684 = vadd.f32 0.0, %v1683
          %v1685 = vpop.f32.mrb[0].mxu0
          %v1686 = vpop.f32.mrb[0].mxu0
          %v1687 = vadd.f32 0.0, %v1686
          %v1688 = vpop.f32.mrb[0].mxu0
          %1689 = vmatprep.mubr.bf16.mxu0 0
          %1690 = vmatmul.mubr.bf16.gmra.mrb[0].mxu0 %v1632
          %v1691 = vpop.f32.mrb[0].mxu0
          %v1692 = vadd.f32 0.0, %v1691
          %v1693 = vpop.f32.mrb[0].mxu0
          %v1694 = vpop.f32.mrb[0].mxu0
          %v1695 = vadd.f32 0.0, %v1694
          %v1696 = vpop.f32.mrb[0].mxu0
          %1697 = vmatprep.mubr.bf16.mxu0 0
          %1698 = vmatmul.mubr.bf16.gmra.mrb[0].mxu0 %v1635
          %v1699 = vpop.f32.mrb[0].mxu0
          %v1700 = vadd.f32 0.0, %v1699
          %v1701 = vpop.f32.mrb[0].mxu0
          %v1702 = vpop.f32.mrb[0].mxu0
          %v1703 = vadd.f32 0.0, %v1702
          %v1704 = vpop.f32.mrb[0].mxu0
          %1705 = vmatprep.mubr.bf16.mxu0 0
          %1706 = vmatmul.mubr.bf16.gmra.mrb[0].mxu0 %v1638
          %v1707 = vpop.f32.mrb[0].mxu0
          %v1708 = vadd.f32 0.0, %v1707
          %v1709 = vpop.f32.mrb[0].mxu0
          %v1710 = vpop.f32.mrb[0].mxu0
          %v1711 = vadd.f32 0.0, %v1710
          %v1712 = vpop.f32.mrb[0].mxu0
          %1713 = vmatprep.mubr.bf16.mxu0 0
          %1714 = vmatmul.mubr.bf16.gmra.mrb[0].mxu0 %v1641
          %v1715 = vpop.f32.mrb[0].mxu0
          %v1716 = vadd.f32 0.0, %v1715
          %v1717 = vpop.f32.mrb[0].mxu0
          %v1718 = vpop.f32.mrb[0].mxu0
          %v1719 = vadd.f32 0.0, %v1718
          %v1720 = vpop.f32.mrb[0].mxu0
          %1721 = vmatprep.mubr.bf16.mxu0 0
          %1722 = vmatmul.mubr.bf16.gmra.mrb[0].mxu0 %v1644
          %v1723 = vpop.f32.mrb[0].mxu0
          %v1724 = vadd.f32 0.0, %v1723
          %v1725 = vpop.f32.mrb[0].mxu0
          %v1726 = vpop.f32.mrb[0].mxu0
          %v1727 = vadd.f32 0.0, %v1726
          %v1728 = vpop.f32.mrb[0].mxu0
          %1729 = vmatprep.mubr.bf16.mxu0 0
          %1730 = vmatmul.mubr.bf16.gmra.mrb[0].mxu0 %v1647
          %v1731 = vpop.f32.mrb[0].mxu0
          %v1732 = vadd.f32 0.0, %v1731
          %v1733 = vpop.f32.mrb[0].mxu0
          %v1734 = vpop.f32.mrb[0].mxu0
          %v1735 = vadd.f32 0.0, %v1734
          %v1736 = vpop.f32.mrb[0].mxu0
          %1737 = vdwg.mxu0
          %v1738 = vadd.f32 %v1575, %v1684
          %v1739 = vadd.f32 %v1576, %v1687
          %v1740 = vadd.f32 %v1577, %v1692
          %v1741 = vadd.f32 %v1578, %v1695
          %v1742 = vadd.f32 %v1579, %v1700
          %v1743 = vadd.f32 %v1580, %v1703
          %v1744 = vadd.f32 %v1581, %v1708
          %v1745 = vadd.f32 %v1582, %v1711
          %v1746 = vadd.f32 %v1583, %v1716
          %v1747 = vadd.f32 %v1584, %v1719
          %v1748 = vadd.f32 %v1585, %v1724
          %v1749 = vadd.f32 %v1586, %v1727
          %v1750 = vadd.f32 %v1587, %v1732
          %v1751 = vadd.f32 %v1588, %v1735
          %s1752 = sadd.s32 %s1128, 17
          %s1753 = scalar_lea.vmem [#allocation3], %s1752
          %v1754 = vld [vmem:[%s1753] sm:$0xff]
          %v1755 = vld [vmem:[%s1753 + $0x8] sm:$0xff]
          %v1756 = vld [vmem:[%s1753 + $0x10] sm:$0xff]
          %v1757 = vld [vmem:[%s1753 + $0x18] sm:$0xff]
          %v1758 = vld [vmem:[%s1753 + $0x20] sm:$0xff]
          %v1759 = vld [vmem:[%s1753 + $0x28] sm:$0xff]
          %v1760 = vld [vmem:[%s1753 + $0x30] sm:$0xff]
          %v1761 = vld [vmem:[%s1753 + $0x38] sm:$0xff]
          %v1762 = vld [vmem:[%s1753 + $0x40] sm:$0xff]
          %v1763 = vld [vmem:[%s1753 + $0x48] sm:$0xff]
          %v1764 = vld [vmem:[%s1753 + $0x50] sm:$0xff]
          %v1765 = vld [vmem:[%s1753 + $0x58] sm:$0xff]
          %v1766 = vld [vmem:[%s1753 + $0x60] sm:$0xff]
          %v1767 = vld [vmem:[%s1753 + $0x68] sm:$0xff]
          %v1768 = vld [vmem:[%s4 + $0x40] sm:$0xf]
          %v1769 = vld [vmem:[%s4 + $0x44] sm:$0xf]
          %v1770 = vld [vmem:[%s4 + $0x48] sm:$0xf]
          %v1771 = vld [vmem:[%s4 + $0x4c] sm:$0xf]
          %v1772 = vpack.c.bf16 %v1755, %v1754
          %v1773 = vpack.c.bf16 %v1757, %v1756
          %v1774 = vpack.c.bf16 %v1759, %v1758
          %v1775 = vpack.c.bf16 %v1761, %v1760
          %v1776 = vpack.c.bf16 %v1763, %v1762
          %v1777 = vpack.c.bf16 %v1765, %v1764
          %v1778 = vpack.c.bf16 %v1767, %v1766
          %v1783 = vunpack.c.l.b16 %v1768
          %v1784 = vunpack.c.l.b16 %v1769
          %v1785 = vunpack.c.l.b16 %v1770
          %v1786 = vunpack.c.l.b16 %v1771
          %v1787 = vpack.c.b16 %v1784, %v1783
          %v1788 = vpack.c.b16 %v1786, %v1785
          %v1792 = vsel %vm749, %v1772, 0
          %v1795 = vsel %vm749, %v1773, 0
          %v1798 = vsel %vm749, %v1774, 0
          %v1801 = vsel %vm749, %v1775, 0
          %v1804 = vsel %vm749, %v1776, 0
          %v1807 = vsel %vm749, %v1777, 0
          %v1810 = vsel %vm749, %v1778, 0
          %1812 = vmatprep.subr.bf16.mxu0 0
          %1813 = vmatpush1.bf16.msra.mxu0 %v1787
          %1814 = vmatprep.subr.bf16.mxu0 0
          %1815 = vmatpush1.bf16.msra.mxu0 %v1788
          %1816 = vmatprep.subr.bf16.mxu0 0
          %1817 = vmatpush1.bf16.msra.mxu0 0
          %1818 = vmatprep.subr.bf16.mxu0 0
          %1819 = vmatpush1.bf16.msra.mxu0 0
          %1820 = vmatprep.subr.bf16.mxu0 0
          %1821 = vmatpush1.bf16.msra.mxu0 0
          %1822 = vmatprep.subr.bf16.mxu0 0
          %1823 = vmatpush1.bf16.msra.mxu0 0
          %1824 = vmatprep.subr.bf16.mxu0 0
          %1825 = vmatpush1.bf16.msra.mxu0 0
          %1826 = vmatprep.subr.bf16.mxu0 0
          %1827 = vmatpush1.bf16.msra.mxu0 0
          %1828 = vmatprep.subr.bf16.mxu0 0
          %1829 = vmatpush1.bf16.msra.mxu0 0
          %1830 = vmatprep.subr.bf16.mxu0 0
          %1831 = vmatpush1.bf16.msra.mxu0 0
          %1832 = vmatprep.subr.bf16.mxu0 0
          %1833 = vmatpush1.bf16.msra.mxu0 0
          %1834 = vmatprep.subr.bf16.mxu0 0
          %1835 = vmatpush1.bf16.msra.mxu0 0
          %1836 = vmatprep.subr.bf16.mxu0 0
          %1837 = vmatpush1.bf16.msra.mxu0 0
          %1838 = vmatprep.subr.bf16.mxu0 0
          %1839 = vmatpush1.bf16.msra.mxu0 0
          %1840 = vmatprep.subr.bf16.mxu0 0
          %1841 = vmatpush1.bf16.msra.mxu0 0
          %1842 = vmatprep.subr.bf16.mxu0 0
          %1843 = vmatpush1.bf16.msra.mxu0 0
          %1844 = vmatprep.mubr.bf16.mxu0 0
          %1845 = vmatmul.mubr.bf16.gmra.mrb[0].mxu0 %v1792
          %v1846 = vpop.f32.mrb[0].mxu0
          %v1847 = vadd.f32 0.0, %v1846
          %v1848 = vpop.f32.mrb[0].mxu0
          %v1849 = vpop.f32.mrb[0].mxu0
          %v1850 = vadd.f32 0.0, %v1849
          %v1851 = vpop.f32.mrb[0].mxu0
          %1852 = vmatprep.mubr.bf16.mxu0 0
          %1853 = vmatmul.mubr.bf16.gmra.mrb[0].mxu0 %v1795
          %v1854 = vpop.f32.mrb[0].mxu0
          %v1855 = vadd.f32 0.0, %v1854
          %v1856 = vpop.f32.mrb[0].mxu0
          %v1857 = vpop.f32.mrb[0].mxu0
          %v1858 = vadd.f32 0.0, %v1857
          %v1859 = vpop.f32.mrb[0].mxu0
          %1860 = vmatprep.mubr.bf16.mxu0 0
          %1861 = vmatmul.mubr.bf16.gmra.mrb[0].mxu0 %v1798
          %v1862 = vpop.f32.mrb[0].mxu0
          %v1863 = vadd.f32 0.0, %v1862
          %v1864 = vpop.f32.mrb[0].mxu0
          %v1865 = vpop.f32.mrb[0].mxu0
          %v1866 = vadd.f32 0.0, %v1865
          %v1867 = vpop.f32.mrb[0].mxu0
          %1868 = vmatprep.mubr.bf16.mxu0 0
          %1869 = vmatmul.mubr.bf16.gmra.mrb[0].mxu0 %v1801
          %v1870 = vpop.f32.mrb[0].mxu0
          %v1871 = vadd.f32 0.0, %v1870
          %v1872 = vpop.f32.mrb[0].mxu0
          %v1873 = vpop.f32.mrb[0].mxu0
          %v1874 = vadd.f32 0.0, %v1873
          %v1875 = vpop.f32.mrb[0].mxu0
          %1876 = vmatprep.mubr.bf16.mxu0 0
          %1877 = vmatmul.mubr.bf16.gmra.mrb[0].mxu0 %v1804
          %v1878 = vpop.f32.mrb[0].mxu0
          %v1879 = vadd.f32 0.0, %v1878
          %v1880 = vpop.f32.mrb[0].mxu0
          %v1881 = vpop.f32.mrb[0].mxu0
          %v1882 = vadd.f32 0.0, %v1881
          %v1883 = vpop.f32.mrb[0].mxu0
          %1884 = vmatprep.mubr.bf16.mxu0 0
          %1885 = vmatmul.mubr.bf16.gmra.mrb[0].mxu0 %v1807
          %v1886 = vpop.f32.mrb[0].mxu0
          %v1887 = vadd.f32 0.0, %v1886
          %v1888 = vpop.f32.mrb[0].mxu0
          %v1889 = vpop.f32.mrb[0].mxu0
          %v1890 = vadd.f32 0.0, %v1889
          %v1891 = vpop.f32.mrb[0].mxu0
          %1892 = vmatprep.mubr.bf16.mxu0 0
          %1893 = vmatmul.mubr.bf16.gmra.mrb[0].mxu0 %v1810
          %v1894 = vpop.f32.mrb[0].mxu0
          %v1895 = vadd.f32 0.0, %v1894
          %v1896 = vpop.f32.mrb[0].mxu0
          %v1897 = vpop.f32.mrb[0].mxu0
          %v1898 = vadd.f32 0.0, %v1897
          %v1899 = vpop.f32.mrb[0].mxu0
          %1900 = vdwg.mxu0
          %v1901 = vadd.f32 %v1738, %v1847
          %v1902 = vadd.f32 %v1739, %v1850
          %v1903 = vadd.f32 %v1740, %v1855
          %v1904 = vadd.f32 %v1741, %v1858
          %v1905 = vadd.f32 %v1742, %v1863
          %v1906 = vadd.f32 %v1743, %v1866
          %v1907 = vadd.f32 %v1744, %v1871
          %v1908 = vadd.f32 %v1745, %v1874
          %v1909 = vadd.f32 %v1746, %v1879
          %v1910 = vadd.f32 %v1747, %v1882
          %v1911 = vadd.f32 %v1748, %v1887
          %v1912 = vadd.f32 %v1749, %v1890
          %v1913 = vadd.f32 %v1750, %v1895
          %v1914 = vadd.f32 %v1751, %v1898
          %s1915 = sadd.s32 %s1128, 18
          %s1916 = scalar_lea.vmem [#allocation3], %s1915
          %v1917 = vld [vmem:[%s1916] sm:$0xff]
          %v1918 = vld [vmem:[%s1916 + $0x8] sm:$0xff]
          %v1919 = vld [vmem:[%s1916 + $0x10] sm:$0xff]
          %v1920 = vld [vmem:[%s1916 + $0x18] sm:$0xff]
          %v1921 = vld [vmem:[%s1916 + $0x20] sm:$0xff]
          %v1922 = vld [vmem:[%s1916 + $0x28] sm:$0xff]
          %v1923 = vld [vmem:[%s1916 + $0x30] sm:$0xff]
          %v1924 = vld [vmem:[%s1916 + $0x38] sm:$0xff]
          %v1925 = vld [vmem:[%s1916 + $0x40] sm:$0xff]
          %v1926 = vld [vmem:[%s1916 + $0x48] sm:$0xff]
          %v1927 = vld [vmem:[%s1916 + $0x50] sm:$0xff]
          %v1928 = vld [vmem:[%s1916 + $0x58] sm:$0xff]
          %v1929 = vld [vmem:[%s1916 + $0x60] sm:$0xff]
          %v1930 = vld [vmem:[%s1916 + $0x68] sm:$0xff]
          %v1931 = vld [vmem:[%s4 + $0x50] sm:$0xf]
          %v1932 = vld [vmem:[%s4 + $0x54] sm:$0xf]
          %v1933 = vld [vmem:[%s4 + $0x58] sm:$0xf]
          %v1934 = vld [vmem:[%s4 + $0x5c] sm:$0xf]
          %v1935 = vpack.c.bf16 %v1918, %v1917
          %v1936 = vpack.c.bf16 %v1920, %v1919
          %v1937 = vpack.c.bf16 %v1922, %v1921
          %v1938 = vpack.c.bf16 %v1924, %v1923
          %v1939 = vpack.c.bf16 %v1926, %v1925
          %v1940 = vpack.c.bf16 %v1928, %v1927
          %v1941 = vpack.c.bf16 %v1930, %v1929
          %v1946 = vunpack.c.l.b16 %v1931
          %v1947 = vunpack.c.l.b16 %v1932
          %v1948 = vunpack.c.l.b16 %v1933
          %v1949 = vunpack.c.l.b16 %v1934
          %v1950 = vpack.c.b16 %v1947, %v1946
          %v1951 = vpack.c.b16 %v1949, %v1948
          %v1955 = vsel %vm749, %v1935, 0
          %v1958 = vsel %vm749, %v1936, 0
          %v1961 = vsel %vm749, %v1937, 0
          %v1964 = vsel %vm749, %v1938, 0
          %v1967 = vsel %vm749, %v1939, 0
          %v1970 = vsel %vm749, %v1940, 0
          %v1973 = vsel %vm749, %v1941, 0
          %1975 = vmatprep.subr.bf16.mxu0 0
          %1976 = vmatpush1.bf16.msra.mxu0 %v1950
          %1977 = vmatprep.subr.bf16.mxu0 0
          %1978 = vmatpush1.bf16.msra.mxu0 %v1951
          %1979 = vmatprep.subr.bf16.mxu0 0
          %1980 = vmatpush1.bf16.msra.mxu0 0
          %1981 = vmatprep.subr.bf16.mxu0 0
          %1982 = vmatpush1.bf16.msra.mxu0 0
          %1983 = vmatprep.subr.bf16.mxu0 0
          %1984 = vmatpush1.bf16.msra.mxu0 0
          %1985 = vmatprep.subr.bf16.mxu0 0
          %1986 = vmatpush1.bf16.msra.mxu0 0
          %1987 = vmatprep.subr.bf16.mxu0 0
          %1988 = vmatpush1.bf16.msra.mxu0 0
          %1989 = vmatprep.subr.bf16.mxu0 0
          %1990 = vmatpush1.bf16.msra.mxu0 0
          %1991 = vmatprep.subr.bf16.mxu0 0
          %1992 = vmatpush1.bf16.msra.mxu0 0
          %1993 = vmatprep.subr.bf16.mxu0 0
          %1994 = vmatpush1.bf16.msra.mxu0 0
          %1995 = vmatprep.subr.bf16.mxu0 0
          %1996 = vmatpush1.bf16.msra.mxu0 0
          %1997 = vmatprep.subr.bf16.mxu0 0
          %1998 = vmatpush1.bf16.msra.mxu0 0
          %1999 = vmatprep.subr.bf16.mxu0 0
          %2000 = vmatpush1.bf16.msra.mxu0 0
          %2001 = vmatprep.subr.bf16.mxu0 0
          %2002 = vmatpush1.bf16.msra.mxu0 0
          %2003 = vmatprep.subr.bf16.mxu0 0
          %2004 = vmatpush1.bf16.msra.mxu0 0
          %2005 = vmatprep.subr.bf16.mxu0 0
          %2006 = vmatpush1.bf16.msra.mxu0 0
          %2007 = vmatprep.mubr.bf16.mxu0 0
          %2008 = vmatmul.mubr.bf16.gmra.mrb[0].mxu0 %v1955
          %v2009 = vpop.f32.mrb[0].mxu0
          %v2010 = vadd.f32 0.0, %v2009
          %v2011 = vpop.f32.mrb[0].mxu0
          %v2012 = vpop.f32.mrb[0].mxu0
          %v2013 = vadd.f32 0.0, %v2012
          %v2014 = vpop.f32.mrb[0].mxu0
          %2015 = vmatprep.mubr.bf16.mxu0 0
          %2016 = vmatmul.mubr.bf16.gmra.mrb[0].mxu0 %v1958
          %v2017 = vpop.f32.mrb[0].mxu0
          %v2018 = vadd.f32 0.0, %v2017
          %v2019 = vpop.f32.mrb[0].mxu0
          %v2020 = vpop.f32.mrb[0].mxu0
          %v2021 = vadd.f32 0.0, %v2020
          %v2022 = vpop.f32.mrb[0].mxu0
          %2023 = vmatprep.mubr.bf16.mxu0 0
          %2024 = vmatmul.mubr.bf16.gmra.mrb[0].mxu0 %v1961
          %v2025 = vpop.f32.mrb[0].mxu0
          %v2026 = vadd.f32 0.0, %v2025
          %v2027 = vpop.f32.mrb[0].mxu0
          %v2028 = vpop.f32.mrb[0].mxu0
          %v2029 = vadd.f32 0.0, %v2028
          %v2030 = vpop.f32.mrb[0].mxu0
          %2031 = vmatprep.mubr.bf16.mxu0 0
          %2032 = vmatmul.mubr.bf16.gmra.mrb[0].mxu0 %v1964
          %v2033 = vpop.f32.mrb[0].mxu0
          %v2034 = vadd.f32 0.0, %v2033
          %v2035 = vpop.f32.mrb[0].mxu0
          %v2036 = vpop.f32.mrb[0].mxu0
          %v2037 = vadd.f32 0.0, %v2036
          %v2038 = vpop.f32.mrb[0].mxu0
          %2039 = vmatprep.mubr.bf16.mxu0 0
          %2040 = vmatmul.mubr.bf16.gmra.mrb[0].mxu0 %v1967
          %v2041 = vpop.f32.mrb[0].mxu0
          %v2042 = vadd.f32 0.0, %v2041
          %v2043 = vpop.f32.mrb[0].mxu0
          %v2044 = vpop.f32.mrb[0].mxu0
          %v2045 = vadd.f32 0.0, %v2044
          %v2046 = vpop.f32.mrb[0].mxu0
          %2047 = vmatprep.mubr.bf16.mxu0 0
          %2048 = vmatmul.mubr.bf16.gmra.mrb[0].mxu0 %v1970
          %v2049 = vpop.f32.mrb[0].mxu0
          %v2050 = vadd.f32 0.0, %v2049
          %v2051 = vpop.f32.mrb[0].mxu0
          %v2052 = vpop.f32.mrb[0].mxu0
          %v2053 = vadd.f32 0.0, %v2052
          %v2054 = vpop.f32.mrb[0].mxu0
          %2055 = vmatprep.mubr.bf16.mxu0 0
          %2056 = vmatmul.mubr.bf16.gmra.mrb[0].mxu0 %v1973
          %v2057 = vpop.f32.mrb[0].mxu0
          %v2058 = vadd.f32 0.0, %v2057
          %v2059 = vpop.f32.mrb[0].mxu0
          %v2060 = vpop.f32.mrb[0].mxu0
          %v2061 = vadd.f32 0.0, %v2060
          %v2062 = vpop.f32.mrb[0].mxu0
          %2063 = vdwg.mxu0
          %v2064 = vadd.f32 %v1901, %v2010
          %v2065 = vadd.f32 %v1902, %v2013
          %v2066 = vadd.f32 %v1903, %v2018
          %v2067 = vadd.f32 %v1904, %v2021
          %v2068 = vadd.f32 %v1905, %v2026
          %v2069 = vadd.f32 %v1906, %v2029
          %v2070 = vadd.f32 %v1907, %v2034
          %v2071 = vadd.f32 %v1908, %v2037
          %v2072 = vadd.f32 %v1909, %v2042
          %v2073 = vadd.f32 %v1910, %v2045
          %v2074 = vadd.f32 %v1911, %v2050
          %v2075 = vadd.f32 %v1912, %v2053
          %v2076 = vadd.f32 %v1913, %v2058
          %v2077 = vadd.f32 %v1914, %v2061
          %s2078 = sadd.s32 %s1128, 32
          %s2079 = scalar_lea.vmem [#allocation3], %s2078
          %v2080 = vld [vmem:[%s2079] sm:$0xff]
          %v2081 = vld [vmem:[%s2079 + $0x8] sm:$0xff]
          %v2082 = vld [vmem:[%s2079 + $0x10] sm:$0xff]
          %v2083 = vld [vmem:[%s2079 + $0x18] sm:$0xff]
          %v2084 = vld [vmem:[%s2079 + $0x20] sm:$0xff]
          %v2085 = vld [vmem:[%s2079 + $0x28] sm:$0xff]
          %v2086 = vld [vmem:[%s2079 + $0x30] sm:$0xff]
          %v2087 = vld [vmem:[%s2079 + $0x38] sm:$0xff]
          %v2088 = vld [vmem:[%s2079 + $0x40] sm:$0xff]
          %v2089 = vld [vmem:[%s2079 + $0x48] sm:$0xff]
          %v2090 = vld [vmem:[%s2079 + $0x50] sm:$0xff]
          %v2091 = vld [vmem:[%s2079 + $0x58] sm:$0xff]
          %v2092 = vld [vmem:[%s2079 + $0x60] sm:$0xff]
          %v2093 = vld [vmem:[%s2079 + $0x68] sm:$0xff]
          %v2094 = vld [vmem:[%s4 + $0x60] sm:$0xf]
          %v2095 = vld [vmem:[%s4 + $0x64] sm:$0xf]
          %v2096 = vld [vmem:[%s4 + $0x68] sm:$0xf]
          %v2097 = vld [vmem:[%s4 + $0x6c] sm:$0xf]
          %v2098 = vpack.c.bf16 %v2081, %v2080
          %v2099 = vpack.c.bf16 %v2083, %v2082
          %v2100 = vpack.c.bf16 %v2085, %v2084
          %v2101 = vpack.c.bf16 %v2087, %v2086
          %v2102 = vpack.c.bf16 %v2089, %v2088
          %v2103 = vpack.c.bf16 %v2091, %v2090
          %v2104 = vpack.c.bf16 %v2093, %v2092
          %v2109 = vunpack.c.l.b16 %v2094
          %v2110 = vunpack.c.l.b16 %v2095
          %v2111 = vunpack.c.l.b16 %v2096
          %v2112 = vunpack.c.l.b16 %v2097
          %v2113 = vpack.c.b16 %v2110, %v2109
          %v2114 = vpack.c.b16 %v2112, %v2111
          %v2118 = vsel %vm749, %v2098, 0
          %v2121 = vsel %vm749, %v2099, 0
          %v2124 = vsel %vm749, %v2100, 0
          %v2127 = vsel %vm749, %v2101, 0
          %v2130 = vsel %vm749, %v2102, 0
          %v2133 = vsel %vm749, %v2103, 0
          %v2136 = vsel %vm749, %v2104, 0
          %2138 = vmatprep.subr.bf16.mxu0 0
          %2139 = vmatpush1.bf16.msra.mxu0 %v2113
          %2140 = vmatprep.subr.bf16.mxu0 0
          %2141 = vmatpush1.bf16.msra.mxu0 %v2114
          %2142 = vmatprep.subr.bf16.mxu0 0
          %2143 = vmatpush1.bf16.msra.mxu0 0
          %2144 = vmatprep.subr.bf16.mxu0 0
          %2145 = vmatpush1.bf16.msra.mxu0 0
          %2146 = vmatprep.subr.bf16.mxu0 0
          %2147 = vmatpush1.bf16.msra.mxu0 0
          %2148 = vmatprep.subr.bf16.mxu0 0
          %2149 = vmatpush1.bf16.msra.mxu0 0
          %2150 = vmatprep.subr.bf16.mxu0 0
          %2151 = vmatpush1.bf16.msra.mxu0 0
          %2152 = vmatprep.subr.bf16.mxu0 0
          %2153 = vmatpush1.bf16.msra.mxu0 0
          %2154 = vmatprep.subr.bf16.mxu0 0
          %2155 = vmatpush1.bf16.msra.mxu0 0
          %2156 = vmatprep.subr.bf16.mxu0 0
          %2157 = vmatpush1.bf16.msra.mxu0 0
          %2158 = vmatprep.subr.bf16.mxu0 0
          %2159 = vmatpush1.bf16.msra.mxu0 0
          %2160 = vmatprep.subr.bf16.mxu0 0
          %2161 = vmatpush1.bf16.msra.mxu0 0
          %2162 = vmatprep.subr.bf16.mxu0 0
          %2163 = vmatpush1.bf16.msra.mxu0 0
          %2164 = vmatprep.subr.bf16.mxu0 0
          %2165 = vmatpush1.bf16.msra.mxu0 0
          %2166 = vmatprep.subr.bf16.mxu0 0
          %2167 = vmatpush1.bf16.msra.mxu0 0
          %2168 = vmatprep.subr.bf16.mxu0 0
          %2169 = vmatpush1.bf16.msra.mxu0 0
          %2170 = vmatprep.mubr.bf16.mxu0 0
          %2171 = vmatmul.mubr.bf16.gmra.mrb[0].mxu0 %v2118
          %v2172 = vpop.f32.mrb[0].mxu0
          %v2173 = vadd.f32 0.0, %v2172
          %v2174 = vpop.f32.mrb[0].mxu0
          %v2175 = vpop.f32.mrb[0].mxu0
          %v2176 = vadd.f32 0.0, %v2175
          %v2177 = vpop.f32.mrb[0].mxu0
          %2178 = vmatprep.mubr.bf16.mxu0 0
          %2179 = vmatmul.mubr.bf16.gmra.mrb[0].mxu0 %v2121
          %v2180 = vpop.f32.mrb[0].mxu0
          %v2181 = vadd.f32 0.0, %v2180
          %v2182 = vpop.f32.mrb[0].mxu0
          %v2183 = vpop.f32.mrb[0].mxu0
          %v2184 = vadd.f32 0.0, %v2183
          %v2185 = vpop.f32.mrb[0].mxu0
          %2186 = vmatprep.mubr.bf16.mxu0 0
          %2187 = vmatmul.mubr.bf16.gmra.mrb[0].mxu0 %v2124
          %v2188 = vpop.f32.mrb[0].mxu0
          %v2189 = vadd.f32 0.0, %v2188
          %v2190 = vpop.f32.mrb[0].mxu0
          %v2191 = vpop.f32.mrb[0].mxu0
          %v2192 = vadd.f32 0.0, %v2191
          %v2193 = vpop.f32.mrb[0].mxu0
          %2194 = vmatprep.mubr.bf16.mxu0 0
          %2195 = vmatmul.mubr.bf16.gmra.mrb[0].mxu0 %v2127
          %v2196 = vpop.f32.mrb[0].mxu0
          %v2197 = vadd.f32 0.0, %v2196
          %v2198 = vpop.f32.mrb[0].mxu0
          %v2199 = vpop.f32.mrb[0].mxu0
          %v2200 = vadd.f32 0.0, %v2199
          %v2201 = vpop.f32.mrb[0].mxu0
          %2202 = vmatprep.mubr.bf16.mxu0 0
          %2203 = vmatmul.mubr.bf16.gmra.mrb[0].mxu0 %v2130
          %v2204 = vpop.f32.mrb[0].mxu0
          %v2205 = vadd.f32 0.0, %v2204
          %v2206 = vpop.f32.mrb[0].mxu0
          %v2207 = vpop.f32.mrb[0].mxu0
          %v2208 = vadd.f32 0.0, %v2207
          %v2209 = vpop.f32.mrb[0].mxu0
          %2210 = vmatprep.mubr.bf16.mxu0 0
          %2211 = vmatmul.mubr.bf16.gmra.mrb[0].mxu0 %v2133
          %v2212 = vpop.f32.mrb[0].mxu0
          %v2213 = vadd.f32 0.0, %v2212
          %v2214 = vpop.f32.mrb[0].mxu0
          %v2215 = vpop.f32.mrb[0].mxu0
          %v2216 = vadd.f32 0.0, %v2215
          %v2217 = vpop.f32.mrb[0].mxu0
          %2218 = vmatprep.mubr.bf16.mxu0 0
          %2219 = vmatmul.mubr.bf16.gmra.mrb[0].mxu0 %v2136
          %v2220 = vpop.f32.mrb[0].mxu0
          %v2221 = vadd.f32 0.0, %v2220
          %v2222 = vpop.f32.mrb[0].mxu0
          %v2223 = vpop.f32.mrb[0].mxu0
          %v2224 = vadd.f32 0.0, %v2223
          %v2225 = vpop.f32.mrb[0].mxu0
          %2226 = vdwg.mxu0
          %v2227 = vadd.f32 %v2064, %v2173
          %v2228 = vadd.f32 %v2065, %v2176
          %v2229 = vadd.f32 %v2066, %v2181
          %v2230 = vadd.f32 %v2067, %v2184
          %v2231 = vadd.f32 %v2068, %v2189
          %v2232 = vadd.f32 %v2069, %v2192
          %v2233 = vadd.f32 %v2070, %v2197
          %v2234 = vadd.f32 %v2071, %v2200
          %v2235 = vadd.f32 %v2072, %v2205
          %v2236 = vadd.f32 %v2073, %v2208
          %v2237 = vadd.f32 %v2074, %v2213
          %v2238 = vadd.f32 %v2075, %v2216
          %v2239 = vadd.f32 %v2076, %v2221
          %v2240 = vadd.f32 %v2077, %v2224
          %s2241 = sadd.s32 %s1128, 33
          %s2242 = scalar_lea.vmem [#allocation3], %s2241
          %v2243 = vld [vmem:[%s2242] sm:$0xff]
          %v2244 = vld [vmem:[%s2242 + $0x8] sm:$0xff]
          %v2245 = vld [vmem:[%s2242 + $0x10] sm:$0xff]
          %v2246 = vld [vmem:[%s2242 + $0x18] sm:$0xff]
          %v2247 = vld [vmem:[%s2242 + $0x20] sm:$0xff]
          %v2248 = vld [vmem:[%s2242 + $0x28] sm:$0xff]
          %v2249 = vld [vmem:[%s2242 + $0x30] sm:$0xff]
          %v2250 = vld [vmem:[%s2242 + $0x38] sm:$0xff]
          %v2251 = vld [vmem:[%s2242 + $0x40] sm:$0xff]
          %v2252 = vld [vmem:[%s2242 + $0x48] sm:$0xff]
          %v2253 = vld [vmem:[%s2242 + $0x50] sm:$0xff]
          %v2254 = vld [vmem:[%s2242 + $0x58] sm:$0xff]
          %v2255 = vld [vmem:[%s2242 + $0x60] sm:$0xff]
          %v2256 = vld [vmem:[%s2242 + $0x68] sm:$0xff]
          %v2257 = vld [vmem:[%s4 + $0x70] sm:$0xf]
          %v2258 = vld [vmem:[%s4 + $0x74] sm:$0xf]
          %v2259 = vld [vmem:[%s4 + $0x78] sm:$0xf]
          %v2260 = vld [vmem:[%s4 + $0x7c] sm:$0xf]
          %v2261 = vpack.c.bf16 %v2244, %v2243
          %v2262 = vpack.c.bf16 %v2246, %v2245
          %v2263 = vpack.c.bf16 %v2248, %v2247
          %v2264 = vpack.c.bf16 %v2250, %v2249
          %v2265 = vpack.c.bf16 %v2252, %v2251
          %v2266 = vpack.c.bf16 %v2254, %v2253
          %v2267 = vpack.c.bf16 %v2256, %v2255
          %v2272 = vunpack.c.l.b16 %v2257
          %v2273 = vunpack.c.l.b16 %v2258
          %v2274 = vunpack.c.l.b16 %v2259
          %v2275 = vunpack.c.l.b16 %v2260
          %v2276 = vpack.c.b16 %v2273, %v2272
          %v2277 = vpack.c.b16 %v2275, %v2274
          %v2281 = vsel %vm749, %v2261, 0
          %v2284 = vsel %vm749, %v2262, 0
          %v2287 = vsel %vm749, %v2263, 0
          %v2290 = vsel %vm749, %v2264, 0
          %v2293 = vsel %vm749, %v2265, 0
          %v2296 = vsel %vm749, %v2266, 0
          %v2299 = vsel %vm749, %v2267, 0
          %2301 = vmatprep.subr.bf16.mxu0 0
          %2302 = vmatpush1.bf16.msra.mxu0 %v2276
          %2303 = vmatprep.subr.bf16.mxu0 0
          %2304 = vmatpush1.bf16.msra.mxu0 %v2277
          %2305 = vmatprep.subr.bf16.mxu0 0
          %2306 = vmatpush1.bf16.msra.mxu0 0
          %2307 = vmatprep.subr.bf16.mxu0 0
          %2308 = vmatpush1.bf16.msra.mxu0 0
          %2309 = vmatprep.subr.bf16.mxu0 0
          %2310 = vmatpush1.bf16.msra.mxu0 0
          %2311 = vmatprep.subr.bf16.mxu0 0
          %2312 = vmatpush1.bf16.msra.mxu0 0
          %2313 = vmatprep.subr.bf16.mxu0 0
          %2314 = vmatpush1.bf16.msra.mxu0 0
          %2315 = vmatprep.subr.bf16.mxu0 0
          %2316 = vmatpush1.bf16.msra.mxu0 0
          %2317 = vmatprep.subr.bf16.mxu0 0
          %2318 = vmatpush1.bf16.msra.mxu0 0
          %2319 = vmatprep.subr.bf16.mxu0 0
          %2320 = vmatpush1.bf16.msra.mxu0 0
          %2321 = vmatprep.subr.bf16.mxu0 0
          %2322 = vmatpush1.bf16.msra.mxu0 0
          %2323 = vmatprep.subr.bf16.mxu0 0
          %2324 = vmatpush1.bf16.msra.mxu0 0
          %2325 = vmatprep.subr.bf16.mxu0 0
          %2326 = vmatpush1.bf16.msra.mxu0 0
          %2327 = vmatprep.subr.bf16.mxu0 0
          %2328 = vmatpush1.bf16.msra.mxu0 0
          %2329 = vmatprep.subr.bf16.mxu0 0
          %2330 = vmatpush1.bf16.msra.mxu0 0
          %2331 = vmatprep.subr.bf16.mxu0 0
          %2332 = vmatpush1.bf16.msra.mxu0 0
          %2333 = vmatprep.mubr.bf16.mxu0 0
          %2334 = vmatmul.mubr.bf16.gmra.mrb[0].mxu0 %v2281
          %v2335 = vpop.f32.mrb[0].mxu0
          %v2336 = vadd.f32 0.0, %v2335
          %v2337 = vpop.f32.mrb[0].mxu0
          %v2338 = vpop.f32.mrb[0].mxu0
          %v2339 = vadd.f32 0.0, %v2338
          %v2340 = vpop.f32.mrb[0].mxu0
          %2341 = vmatprep.mubr.bf16.mxu0 0
          %2342 = vmatmul.mubr.bf16.gmra.mrb[0].mxu0 %v2284
          %v2343 = vpop.f32.mrb[0].mxu0
          %v2344 = vadd.f32 0.0, %v2343
          %v2345 = vpop.f32.mrb[0].mxu0
          %v2346 = vpop.f32.mrb[0].mxu0
          %v2347 = vadd.f32 0.0, %v2346
          %v2348 = vpop.f32.mrb[0].mxu0
          %2349 = vmatprep.mubr.bf16.mxu0 0
          %2350 = vmatmul.mubr.bf16.gmra.mrb[0].mxu0 %v2287
          %v2351 = vpop.f32.mrb[0].mxu0
          %v2352 = vadd.f32 0.0, %v2351
          %v2353 = vpop.f32.mrb[0].mxu0
          %v2354 = vpop.f32.mrb[0].mxu0
          %v2355 = vadd.f32 0.0, %v2354
          %v2356 = vpop.f32.mrb[0].mxu0
          %2357 = vmatprep.mubr.bf16.mxu0 0
          %2358 = vmatmul.mubr.bf16.gmra.mrb[0].mxu0 %v2290
          %v2359 = vpop.f32.mrb[0].mxu0
          %v2360 = vadd.f32 0.0, %v2359
          %v2361 = vpop.f32.mrb[0].mxu0
          %v2362 = vpop.f32.mrb[0].mxu0
          %v2363 = vadd.f32 0.0, %v2362
          %v2364 = vpop.f32.mrb[0].mxu0
          %2365 = vmatprep.mubr.bf16.mxu0 0
          %2366 = vmatmul.mubr.bf16.gmra.mrb[0].mxu0 %v2293
          %v2367 = vpop.f32.mrb[0].mxu0
          %v2368 = vadd.f32 0.0, %v2367
          %v2369 = vpop.f32.mrb[0].mxu0
          %v2370 = vpop.f32.mrb[0].mxu0
          %v2371 = vadd.f32 0.0, %v2370
          %v2372 = vpop.f32.mrb[0].mxu0
          %2373 = vmatprep.mubr.bf16.mxu0 0
          %2374 = vmatmul.mubr.bf16.gmra.mrb[0].mxu0 %v2296
          %v2375 = vpop.f32.mrb[0].mxu0
          %v2376 = vadd.f32 0.0, %v2375
          %v2377 = vpop.f32.mrb[0].mxu0
          %v2378 = vpop.f32.mrb[0].mxu0
          %v2379 = vadd.f32 0.0, %v2378
          %v2380 = vpop.f32.mrb[0].mxu0
          %2381 = vmatprep.mubr.bf16.mxu0 0
          %2382 = vmatmul.mubr.bf16.gmra.mrb[0].mxu0 %v2299
          %v2383 = vpop.f32.mrb[0].mxu0
          %v2384 = vadd.f32 0.0, %v2383
          %v2385 = vpop.f32.mrb[0].mxu0
          %v2386 = vpop.f32.mrb[0].mxu0
          %v2387 = vadd.f32 0.0, %v2386
          %v2388 = vpop.f32.mrb[0].mxu0
          %2389 = vdwg.mxu0
          %v2390 = vadd.f32 %v2227, %v2336
          %v2391 = vadd.f32 %v2228, %v2339
          %v2392 = vadd.f32 %v2229, %v2344
          %v2393 = vadd.f32 %v2230, %v2347
          %v2394 = vadd.f32 %v2231, %v2352
          %v2395 = vadd.f32 %v2232, %v2355
          %v2396 = vadd.f32 %v2233, %v2360
          %v2397 = vadd.f32 %v2234, %v2363
          %v2398 = vadd.f32 %v2235, %v2368
          %v2399 = vadd.f32 %v2236, %v2371
          %v2400 = vadd.f32 %v2237, %v2376
          %v2401 = vadd.f32 %v2238, %v2379
          %v2402 = vadd.f32 %v2239, %v2384
          %v2403 = vadd.f32 %v2240, %v2387
          %s2404 = sadd.s32 %s1128, 34
          %s2405 = scalar_lea.vmem [#allocation3], %s2404
          %v2406 = vld [vmem:[%s2405] sm:$0xff]
          %v2407 = vld [vmem:[%s2405 + $0x8] sm:$0xff]
          %v2408 = vld [vmem:[%s2405 + $0x10] sm:$0xff]
          %v2409 = vld [vmem:[%s2405 + $0x18] sm:$0xff]
          %v2410 = vld [vmem:[%s2405 + $0x20] sm:$0xff]
          %v2411 = vld [vmem:[%s2405 + $0x28] sm:$0xff]
          %v2412 = vld [vmem:[%s2405 + $0x30] sm:$0xff]
          %v2413 = vld [vmem:[%s2405 + $0x38] sm:$0xff]
          %v2414 = vld [vmem:[%s2405 + $0x40] sm:$0xff]
          %v2415 = vld [vmem:[%s2405 + $0x48] sm:$0xff]
          %v2416 = vld [vmem:[%s2405 + $0x50] sm:$0xff]
          %v2417 = vld [vmem:[%s2405 + $0x58] sm:$0xff]
          %v2418 = vld [vmem:[%s2405 + $0x60] sm:$0xff]
          %v2419 = vld [vmem:[%s2405 + $0x68] sm:$0xff]
          %v2420 = vld [vmem:[%s4 + $0x80] sm:$0xf]
          %v2421 = vld [vmem:[%s4 + $0x84] sm:$0xf]
          %v2422 = vld [vmem:[%s4 + $0x88] sm:$0xf]
          %v2423 = vld [vmem:[%s4 + $0x8c] sm:$0xf]
          %v2424 = vpack.c.bf16 %v2407, %v2406
          %v2425 = vpack.c.bf16 %v2409, %v2408
          %v2426 = vpack.c.bf16 %v2411, %v2410
          %v2427 = vpack.c.bf16 %v2413, %v2412
          %v2428 = vpack.c.bf16 %v2415, %v2414
          %v2429 = vpack.c.bf16 %v2417, %v2416
          %v2430 = vpack.c.bf16 %v2419, %v2418
          %v2435 = vunpack.c.l.b16 %v2420
          %v2436 = vunpack.c.l.b16 %v2421
          %v2437 = vunpack.c.l.b16 %v2422
          %v2438 = vunpack.c.l.b16 %v2423
          %v2439 = vpack.c.b16 %v2436, %v2435
          %v2440 = vpack.c.b16 %v2438, %v2437
          %v2444 = vsel %vm749, %v2424, 0
          %v2447 = vsel %vm749, %v2425, 0
          %v2450 = vsel %vm749, %v2426, 0
          %v2453 = vsel %vm749, %v2427, 0
          %v2456 = vsel %vm749, %v2428, 0
          %v2459 = vsel %vm749, %v2429, 0
          %v2462 = vsel %vm749, %v2430, 0
          %2464 = vmatprep.subr.bf16.mxu0 0
          %2465 = vmatpush1.bf16.msra.mxu0 %v2439
          %2466 = vmatprep.subr.bf16.mxu0 0
          %2467 = vmatpush1.bf16.msra.mxu0 %v2440
          %2468 = vmatprep.subr.bf16.mxu0 0
          %2469 = vmatpush1.bf16.msra.mxu0 0
          %2470 = vmatprep.subr.bf16.mxu0 0
          %2471 = vmatpush1.bf16.msra.mxu0 0
          %2472 = vmatprep.subr.bf16.mxu0 0
          %2473 = vmatpush1.bf16.msra.mxu0 0
          %2474 = vmatprep.subr.bf16.mxu0 0
          %2475 = vmatpush1.bf16.msra.mxu0 0
          %2476 = vmatprep.subr.bf16.mxu0 0
          %2477 = vmatpush1.bf16.msra.mxu0 0
          %2478 = vmatprep.subr.bf16.mxu0 0
          %2479 = vmatpush1.bf16.msra.mxu0 0
          %2480 = vmatprep.subr.bf16.mxu0 0
          %2481 = vmatpush1.bf16.msra.mxu0 0
          %2482 = vmatprep.subr.bf16.mxu0 0
          %2483 = vmatpush1.bf16.msra.mxu0 0
          %2484 = vmatprep.subr.bf16.mxu0 0
          %2485 = vmatpush1.bf16.msra.mxu0 0
          %2486 = vmatprep.subr.bf16.mxu0 0
          %2487 = vmatpush1.bf16.msra.mxu0 0
          %2488 = vmatprep.subr.bf16.mxu0 0
          %2489 = vmatpush1.bf16.msra.mxu0 0
          %2490 = vmatprep.subr.bf16.mxu0 0
          %2491 = vmatpush1.bf16.msra.mxu0 0
          %2492 = vmatprep.subr.bf16.mxu0 0
          %2493 = vmatpush1.bf16.msra.mxu0 0
          %2494 = vmatprep.subr.bf16.mxu0 0
          %2495 = vmatpush1.bf16.msra.mxu0 0
          %2496 = vmatprep.mubr.bf16.mxu0 0
          %2497 = vmatmul.mubr.bf16.gmra.mrb[0].mxu0 %v2444
          %v2498 = vpop.f32.mrb[0].mxu0
          %v2499 = vadd.f32 0.0, %v2498
          %v2500 = vpop.f32.mrb[0].mxu0
          %v2501 = vpop.f32.mrb[0].mxu0
          %v2502 = vadd.f32 0.0, %v2501
          %v2503 = vpop.f32.mrb[0].mxu0
          %2504 = vmatprep.mubr.bf16.mxu0 0
          %2505 = vmatmul.mubr.bf16.gmra.mrb[0].mxu0 %v2447
          %v2506 = vpop.f32.mrb[0].mxu0
          %v2507 = vadd.f32 0.0, %v2506
          %v2508 = vpop.f32.mrb[0].mxu0
          %v2509 = vpop.f32.mrb[0].mxu0
          %v2510 = vadd.f32 0.0, %v2509
          %v2511 = vpop.f32.mrb[0].mxu0
          %2512 = vmatprep.mubr.bf16.mxu0 0
          %2513 = vmatmul.mubr.bf16.gmra.mrb[0].mxu0 %v2450
          %v2514 = vpop.f32.mrb[0].mxu0
          %v2515 = vadd.f32 0.0, %v2514
          %v2516 = vpop.f32.mrb[0].mxu0
          %v2517 = vpop.f32.mrb[0].mxu0
          %v2518 = vadd.f32 0.0, %v2517
          %v2519 = vpop.f32.mrb[0].mxu0
          %2520 = vmatprep.mubr.bf16.mxu0 0
          %2521 = vmatmul.mubr.bf16.gmra.mrb[0].mxu0 %v2453
          %v2522 = vpop.f32.mrb[0].mxu0
          %v2523 = vadd.f32 0.0, %v2522
          %v2524 = vpop.f32.mrb[0].mxu0
          %v2525 = vpop.f32.mrb[0].mxu0
          %v2526 = vadd.f32 0.0, %v2525
          %v2527 = vpop.f32.mrb[0].mxu0
          %2528 = vmatprep.mubr.bf16.mxu0 0
          %2529 = vmatmul.mubr.bf16.gmra.mrb[0].mxu0 %v2456
          %v2530 = vpop.f32.mrb[0].mxu0
          %v2531 = vadd.f32 0.0, %v2530
          %v2532 = vpop.f32.mrb[0].mxu0
          %v2533 = vpop.f32.mrb[0].mxu0
          %v2534 = vadd.f32 0.0, %v2533
          %v2535 = vpop.f32.mrb[0].mxu0
          %2536 = vmatprep.mubr.bf16.mxu0 0
          %2537 = vmatmul.mubr.bf16.gmra.mrb[0].mxu0 %v2459
          %v2538 = vpop.f32.mrb[0].mxu0
          %v2539 = vadd.f32 0.0, %v2538
          %v2540 = vpop.f32.mrb[0].mxu0
          %v2541 = vpop.f32.mrb[0].mxu0
          %v2542 = vadd.f32 0.0, %v2541
          %v2543 = vpop.f32.mrb[0].mxu0
          %2544 = vmatprep.mubr.bf16.mxu0 0
          %2545 = vmatmul.mubr.bf16.gmra.mrb[0].mxu0 %v2462
          %v2546 = vpop.f32.mrb[0].mxu0
          %v2547 = vadd.f32 0.0, %v2546
          %v2548 = vpop.f32.mrb[0].mxu0
          %v2549 = vpop.f32.mrb[0].mxu0
          %v2550 = vadd.f32 0.0, %v2549
          %v2551 = vpop.f32.mrb[0].mxu0
          %2552 = vdwg.mxu0
          %v2553 = vadd.f32 %v2390, %v2499
          %v2554 = vadd.f32 %v2391, %v2502
          %v2555 = vadd.f32 %v2392, %v2507
          %v2556 = vadd.f32 %v2393, %v2510
          %v2557 = vadd.f32 %v2394, %v2515
          %v2558 = vadd.f32 %v2395, %v2518
          %v2559 = vadd.f32 %v2396, %v2523
          %v2560 = vadd.f32 %v2397, %v2526
          %v2561 = vadd.f32 %v2398, %v2531
          %v2562 = vadd.f32 %v2399, %v2534
          %v2563 = vadd.f32 %v2400, %v2539
          %v2564 = vadd.f32 %v2401, %v2542
          %v2565 = vadd.f32 %v2402, %v2547
          %v2566 = vadd.f32 %v2403, %v2550
          %v2568 = vlaneseq
          %v2569 = vshrl.u32 %v2568, 7
          %v2570 = vsub.s32 0, %v2569
          %v2571 = vrot.slane %v1120, %v2570
          %v2573 = vmul.f32 %v2553, %v2571
          %v2574 = vmul.f32 %v2554, %v2571
          %v2575 = vmul.f32 %v2555, %v2571
          %v2576 = vmul.f32 %v2556, %v2571
          %v2577 = vmul.f32 %v2557, %v2571
          %v2578 = vmul.f32 %v2558, %v2571
          %v2579 = vmul.f32 %v2559, %v2571
          %v2580 = vmul.f32 %v2560, %v2571
          %v2581 = vmul.f32 %v2561, %v2571
          %v2582 = vmul.f32 %v2562, %v2571
          %v2583 = vmul.f32 %v2563, %v2571
          %v2584 = vmul.f32 %v2564, %v2571
          %v2585 = vmul.f32 %v2565, %v2571
          %v2586 = vmul.f32 %v2566, %v2571
          %v2588 = vlaneseq
          %v2589 = vshrl.u32 %v2588, 7
          %v2590 = vsub.s32 0, %v2589
          %v2591 = vrot.slane %v1121, %v2590
          %v2593 = vadd.f32 %v2573, %v2591
          %v2594 = vadd.f32 %v2574, %v2591
          %v2595 = vadd.f32 %v2575, %v2591
          %v2596 = vadd.f32 %v2576, %v2591
          %v2597 = vadd.f32 %v2577, %v2591
          %v2598 = vadd.f32 %v2578, %v2591
          %v2599 = vadd.f32 %v2579, %v2591
          %v2600 = vadd.f32 %v2580, %v2591
          %v2601 = vadd.f32 %v2581, %v2591
          %v2602 = vadd.f32 %v2582, %v2591
          %v2603 = vadd.f32 %v2583, %v2591
          %v2604 = vadd.f32 %v2584, %v2591
          %v2605 = vadd.f32 %v2585, %v2591
          %v2606 = vadd.f32 %v2586, %v2591
          %v2607 = vmax.f32 %v2593, 0.0
          %v2608 = vmax.f32 %v2594, 0.0
          %v2609 = vmax.f32 %v2595, 0.0
          %v2610 = vmax.f32 %v2596, 0.0
          %v2611 = vmax.f32 %v2597, 0.0
          %v2612 = vmax.f32 %v2598, 0.0
          %v2613 = vmax.f32 %v2599, 0.0
          %v2614 = vmax.f32 %v2600, 0.0
          %v2615 = vmax.f32 %v2601, 0.0
          %v2616 = vmax.f32 %v2602, 0.0
          %v2617 = vmax.f32 %v2603, 0.0
          %v2618 = vmax.f32 %v2604, 0.0
          %v2619 = vmax.f32 %v2605, 0.0
          %v2620 = vmax.f32 %v2606, 0.0
          %s2621 = scalar_lea.vmem [#allocation4], %s1128
          %vm2622 = vcmask 523264
          %2623 = vst.msk [vmem:[%s2621] sm:$0xff] %vm2622, %v2607
          %2624 = vst.msk [vmem:[%s2621 + $0x8] sm:$0xff] %vm2622, %v2608
          %2625 = vst.msk [vmem:[%s2621 + $0x10] sm:$0xff] %vm2622, %v2609
          %2626 = vst.msk [vmem:[%s2621 + $0x18] sm:$0xff] %vm2622, %v2610
          %2627 = vst.msk [vmem:[%s2621 + $0x20] sm:$0xff] %vm2622, %v2611
          %2628 = vst.msk [vmem:[%s2621 + $0x28] sm:$0xff] %vm2622, %v2612
          %2629 = vst.msk [vmem:[%s2621 + $0x30] sm:$0xff] %vm2622, %v2613
          %2630 = vst.msk [vmem:[%s2621 + $0x38] sm:$0xff] %vm2622, %v2614
          %2631 = vst.msk [vmem:[%s2621 + $0x40] sm:$0xff] %vm2622, %v2615
          %2632 = vst.msk [vmem:[%s2621 + $0x48] sm:$0xff] %vm2622, %v2616
          %2633 = vst.msk [vmem:[%s2621 + $0x50] sm:$0xff] %vm2622, %v2617
          %2634 = vst.msk [vmem:[%s2621 + $0x58] sm:$0xff] %vm2622, %v2618
          %2635 = vst.msk [vmem:[%s2621 + $0x60] sm:$0xff] %vm2622, %v2619
          %2636 = vst.msk [vmem:[%s2621 + $0x68] sm:$0xff] %vm2622, %v2620
        $region88: #{_forward.1} parent=75 // loop_footer
          %s1127 = sadd.s32 1, %s1123
        $region89: #{_forward.1} parent=75 // loop_footer_branch
          %1122 = sbr.rel target = $region85
        $region90: #{_forward.1} parent=75 // loop_exit
          _
        %vm2637 = vcmask 523264
        %2638 = vst.msk [vmem:[#allocation5] sm:$0xff] %vm2637, 0.0
        %2639 = vst.msk [vmem:[#allocation5 + $0x8] sm:$0xff] %vm2637, 0.0
        %2640 = vst.msk [vmem:[#allocation5 + $0x10] sm:$0xff] %vm2637, 0.0
        %2641 = vst.msk [vmem:[#allocation5 + $0x18] sm:$0xff] %vm2637, 0.0
        %2642 = vst.msk [vmem:[#allocation5 + $0x20] sm:$0xff] %vm2637, 0.0
        %2643 = vst.msk [vmem:[#allocation5 + $0x28] sm:$0xff] %vm2637, 0.0
        %2644 = vst.msk [vmem:[#allocation5 + $0x30] sm:$0xff] %vm2637, 0.0
        %2645 = vst.msk [vmem:[#allocation5 + $0x38] sm:$0xff] %vm2637, 0.0
        %2646 = vst.msk [vmem:[#allocation5 + $0x40] sm:$0xff] %vm2637, 0.0
        %2647 = vst.msk [vmem:[#allocation5 + $0x48] sm:$0xff] %vm2637, 0.0
        %2648 = vst.msk [vmem:[#allocation5 + $0x50] sm:$0xff] %vm2637, 0.0
        %2649 = vst.msk [vmem:[#allocation5 + $0x58] sm:$0xff] %vm2637, 0.0
        %2650 = vst.msk [vmem:[#allocation5 + $0x60] sm:$0xff] %vm2637, 0.0
        %2651 = vst.msk [vmem:[#allocation5 + $0x68] sm:$0xff] %vm2637, 0.0
        %2652 = vst.msk [vmem:[#allocation5 + $0x70] sm:$0xff] %vm2637, 0.0
        %2653 = vst.msk [vmem:[#allocation5 + $0x78] sm:$0xff] %vm2637, 0.0
        %2654 = vst.msk [vmem:[#allocation5 + $0x80] sm:$0xff] %vm2637, 0.0
        %2655 = vst.msk [vmem:[#allocation5 + $0x88] sm:$0xff] %vm2637, 0.0
        %2656 = vst.msk [vmem:[#allocation5 + $0x90] sm:$0xff] %vm2637, 0.0
        %v2657 = vld [vmem:[#allocation4] ss:$2 sm:$0x7f]
        %s2658 = scalar_lea.vmem [#allocation4], 1
        %v2659 = vld [vmem:[%s2658] ss:$2 sm:$0x7f]
        %s2660 = scalar_lea.vmem [#allocation4], 16
        %v2661 = vld [vmem:[%s2660] ss:$2 sm:$0x7f]
        %s2662 = scalar_lea.vmem [#allocation4], 17
        %v2663 = vld [vmem:[%s2662] ss:$2 sm:$0x7f]
        %v2664 = vmax.f32 %v2657, %v2659
        %v2665 = vmax.f32 %v2661, %v2663
        %v2666 = vmax.f32 %v2664, %v2665
        %vm2667 = vcmask 522240
        %2668 = vst.msk [vmem:[#allocation5 + $0x11] sm:$0x7f] %vm2667, %v2666
        %s2669 = scalar_lea.vmem [#allocation4], 32
        %v2670 = vld [vmem:[%s2669] ss:$2 sm:$0x7f]
        %s2671 = scalar_lea.vmem [#allocation4], 33
        %v2672 = vld [vmem:[%s2671] ss:$2 sm:$0x7f]
        %s2673 = scalar_lea.vmem [#allocation4], 48
        %v2674 = vld [vmem:[%s2673] ss:$2 sm:$0x7f]
        %s2675 = scalar_lea.vmem [#allocation4], 49
        %v2676 = vld [vmem:[%s2675] ss:$2 sm:$0x7f]
        %v2677 = vmax.f32 %v2670, %v2672
        %v2678 = vmax.f32 %v2674, %v2676
        %v2679 = vmax.f32 %v2677, %v2678
        %2680 = vst.msk [vmem:[#allocation5 + $0x21] sm:$0x7f] %vm2667, %v2679
        %s2681 = scalar_lea.vmem [#allocation4], 64
        %v2682 = vld [vmem:[%s2681] ss:$2 sm:$0x7f]
        %s2683 = scalar_lea.vmem [#allocation4], 65
        %v2684 = vld [vmem:[%s2683] ss:$2 sm:$0x7f]
        %s2685 = scalar_lea.vmem [#allocation4], 80
        %v2686 = vld [vmem:[%s2685] ss:$2 sm:$0x7f]
        %s2687 = scalar_lea.vmem [#allocation4], 81
        %v2688 = vld [vmem:[%s2687] ss:$2 sm:$0x7f]
        %v2689 = vmax.f32 %v2682, %v2684
        %v2690 = vmax.f32 %v2686, %v2688
        %v2691 = vmax.f32 %v2689, %v2690
        %2692 = vst.msk [vmem:[#allocation5 + $0x31] sm:$0x7f] %vm2667, %v2691
        %s2693 = scalar_lea.vmem [#allocation4], 96
        %v2694 = vld [vmem:[%s2693] ss:$2 sm:$0x7f]
        %s2695 = scalar_lea.vmem [#allocation4], 97
        %v2696 = vld [vmem:[%s2695] ss:$2 sm:$0x7f]
        %s2697 = scalar_lea.vmem [#allocation4], 112
        %v2698 = vld [vmem:[%s2697] ss:$2 sm:$0x7f]
        %s2699 = scalar_lea.vmem [#allocation4], 113
        %v2700 = vld [vmem:[%s2699] ss:$2 sm:$0x7f]
        %v2701 = vmax.f32 %v2694, %v2696
        %v2702 = vmax.f32 %v2698, %v2700
        %v2703 = vmax.f32 %v2701, %v2702
        %2704 = vst.msk [vmem:[#allocation5 + $0x41] sm:$0x7f] %vm2667, %v2703
        %s2705 = scalar_lea.vmem [#allocation4], 128
        %v2706 = vld [vmem:[%s2705] ss:$2 sm:$0x7f]
        %s2707 = scalar_lea.vmem [#allocation4], 129
        %v2708 = vld [vmem:[%s2707] ss:$2 sm:$0x7f]
        %s2709 = scalar_lea.vmem [#allocation4], 144
        %v2710 = vld [vmem:[%s2709] ss:$2 sm:$0x7f]
        %s2711 = scalar_lea.vmem [#allocation4], 145
        %v2712 = vld [vmem:[%s2711] ss:$2 sm:$0x7f]
        %v2713 = vmax.f32 %v2706, %v2708
        %v2714 = vmax.f32 %v2710, %v2712
        %v2715 = vmax.f32 %v2713, %v2714
        %2716 = vst.msk [vmem:[#allocation5 + $0x51] sm:$0x7f] %vm2667, %v2715
        %s2717 = scalar_lea.vmem [#allocation4], 160
        %v2718 = vld [vmem:[%s2717] ss:$2 sm:$0x7f]
        %s2719 = scalar_lea.vmem [#allocation4], 161
        %v2720 = vld [vmem:[%s2719] ss:$2 sm:$0x7f]
        %s2721 = scalar_lea.vmem [#allocation4], 176
        %v2722 = vld [vmem:[%s2721] ss:$2 sm:$0x7f]
        %s2723 = scalar_lea.vmem [#allocation4], 177
        %v2724 = vld [vmem:[%s2723] ss:$2 sm:$0x7f]
        %v2725 = vmax.f32 %v2718, %v2720
        %v2726 = vmax.f32 %v2722, %v2724
        %v2727 = vmax.f32 %v2725, %v2726
        %2728 = vst.msk [vmem:[#allocation5 + $0x61] sm:$0x7f] %vm2667, %v2727
        %s2729 = scalar_lea.vmem [#allocation4], 192
        %v2730 = vld [vmem:[%s2729] ss:$2 sm:$0x7f]
        %s2731 = scalar_lea.vmem [#allocation4], 193
        %v2732 = vld [vmem:[%s2731] ss:$2 sm:$0x7f]
        %s2733 = scalar_lea.vmem [#allocation4], 208
        %v2734 = vld [vmem:[%s2733] ss:$2 sm:$0x7f]
        %s2735 = scalar_lea.vmem [#allocation4], 209
        %v2736 = vld [vmem:[%s2735] ss:$2 sm:$0x7f]
        %v2737 = vmax.f32 %v2730, %v2732
        %v2738 = vmax.f32 %v2734, %v2736
        %v2739 = vmax.f32 %v2737, %v2738
        %2740 = vst.msk [vmem:[#allocation5 + $0x71] sm:$0x7f] %vm2667, %v2739
        %v2741 = vld [vmem:[%s8] sm:$0x1]
        %v2742 = vld [vmem:[%s9] sm:$0x1]
        %v2743 = vld [vmem:[#allocation5] sm:$0xff]
        %v2744 = vld [vmem:[#allocation5 + $0x8] sm:$0xff]
        %v2745 = vld [vmem:[#allocation5 + $0x10] sm:$0xff]
        %v2746 = vld [vmem:[#allocation5 + $0x18] sm:$0xff]
        %v2747 = vld [vmem:[#allocation5 + $0x20] sm:$0xff]
        %v2748 = vld [vmem:[#allocation5 + $0x28] sm:$0xff]
        %v2749 = vld [vmem:[#allocation5 + $0x30] sm:$0xff]
        %v2750 = vld [vmem:[#allocation5 + $0x38] sm:$0xff]
        %v2751 = vld [vmem:[#allocation5 + $0x40] sm:$0xff]
        %v2752 = vld [vmem:[#allocation5 + $0x48] sm:$0xff]
        %v2753 = vld [vmem:[#allocation5 + $0x50] sm:$0xff]
        %v2754 = vld [vmem:[#allocation5 + $0x58] sm:$0xff]
        %v2755 = vld [vmem:[#allocation5 + $0x60] sm:$0xff]
        %v2756 = vld [vmem:[%s7] sm:$0xf]
        %v2757 = vld [vmem:[%s7 + $0x4] sm:$0xf]
        %v2758 = vld [vmem:[%s7 + $0x8] sm:$0xf]
        %v2759 = vld [vmem:[%s7 + $0xc] sm:$0xf]
        %v2760 = vld [vmem:[%s7 + $0x10] sm:$0xf]
        %v2761 = vld [vmem:[%s7 + $0x14] sm:$0xf]
        %v2762 = vld [vmem:[%s7 + $0x18] sm:$0xf]
        %v2763 = vld [vmem:[%s7 + $0x1c] sm:$0xf]
        %v2764 = vpack.c.bf16 %v2744, %v2743
        %v2765 = vpack.c.bf16 %v2746, %v2745
        %v2766 = vpack.c.bf16 %v2748, %v2747
        %v2767 = vpack.c.bf16 %v2750, %v2749
        %v2768 = vpack.c.bf16 %v2752, %v2751
        %v2769 = vpack.c.bf16 %v2754, %v2753
        %v2770 = vpack.c.bf16 %v2755, %v2755
        %s2771 = sadd.s32 0, 1
        %s2772 = scalar_lea.vmem [#allocation5], %s2771
        %v2773 = vld [vmem:[%s2772] sm:$0xff]
        %v2774 = vld [vmem:[%s2772 + $0x8] sm:$0xff]
        %v2775 = vld [vmem:[%s2772 + $0x10] sm:$0xff]
        %v2776 = vld [vmem:[%s2772 + $0x18] sm:$0xff]
        %v2777 = vld [vmem:[%s2772 + $0x20] sm:$0xff]
        %v2778 = vld [vmem:[%s2772 + $0x28] sm:$0xff]
        %v2779 = vld [vmem:[%s2772 + $0x30] sm:$0xff]
        %v2780 = vld [vmem:[%s2772 + $0x38] sm:$0xff]
        %v2781 = vld [vmem:[%s2772 + $0x40] sm:$0xff]
        %v2782 = vld [vmem:[%s2772 + $0x48] sm:$0xff]
        %v2783 = vld [vmem:[%s2772 + $0x50] sm:$0xff]
        %v2784 = vld [vmem:[%s2772 + $0x58] sm:$0xff]
        %v2785 = vld [vmem:[%s2772 + $0x60] sm:$0xff]
        %v2786 = vld [vmem:[%s7 + $0x20] sm:$0xf]
        %v2787 = vld [vmem:[%s7 + $0x24] sm:$0xf]
        %v2788 = vld [vmem:[%s7 + $0x28] sm:$0xf]
        %v2789 = vld [vmem:[%s7 + $0x2c] sm:$0xf]
        %v2790 = vld [vmem:[%s7 + $0x30] sm:$0xf]
        %v2791 = vld [vmem:[%s7 + $0x34] sm:$0xf]
        %v2792 = vld [vmem:[%s7 + $0x38] sm:$0xf]
        %v2793 = vld [vmem:[%s7 + $0x3c] sm:$0xf]
        %v2794 = vpack.c.bf16 %v2774, %v2773
        %v2795 = vpack.c.bf16 %v2776, %v2775
        %v2796 = vpack.c.bf16 %v2778, %v2777
        %v2797 = vpack.c.bf16 %v2780, %v2779
        %v2798 = vpack.c.bf16 %v2782, %v2781
        %v2799 = vpack.c.bf16 %v2784, %v2783
        %v2800 = vpack.c.bf16 %v2785, %v2785
        %v2809 = vunpack.c.l.b16 %v2786
        %v2810 = vunpack.c.l.b16 %v2787
        %v2811 = vunpack.c.l.b16 %v2788
        %v2812 = vunpack.c.l.b16 %v2789
        %v2813 = vunpack.c.l.b16 %v2790
        %v2814 = vunpack.c.l.b16 %v2791
        %v2815 = vunpack.c.l.b16 %v2792
        %v2816 = vunpack.c.l.b16 %v2793
        %v2817 = vpack.c.b16 %v2810, %v2809
        %v2818 = vpack.c.b16 %v2812, %v2811
        %v2819 = vpack.c.b16 %v2814, %v2813
        %v2820 = vpack.c.b16 %v2816, %v2815
        %v2826 = vsel %vm2637, %v2794, 0
        %v2829 = vsel %vm2637, %v2795, 0
        %v2832 = vsel %vm2637, %v2796, 0
        %v2835 = vsel %vm2637, %v2797, 0
        %v2838 = vsel %vm2637, %v2798, 0
        %v2841 = vsel %vm2637, %v2799, 0
        %v2844 = vsel %vm2637, %v2800, 0
        %2846 = vmatprep.subr.bf16.mxu0 0
        %2847 = vmatpush1.bf16.msra.mxu0 %v2817
        %2848 = vmatprep.subr.bf16.mxu0 0
        %2849 = vmatpush1.bf16.msra.mxu0 %v2818
        %2850 = vmatprep.subr.bf16.mxu0 0
        %2851 = vmatpush1.bf16.msra.mxu0 %v2819
        %2852 = vmatprep.subr.bf16.mxu0 0
        %2853 = vmatpush1.bf16.msra.mxu0 %v2820
        %2854 = vmatprep.subr.bf16.mxu0 0
        %2855 = vmatpush1.bf16.msra.mxu0 0
        %2856 = vmatprep.subr.bf16.mxu0 0
        %2857 = vmatpush1.bf16.msra.mxu0 0
        %2858 = vmatprep.subr.bf16.mxu0 0
        %2859 = vmatpush1.bf16.msra.mxu0 0
        %2860 = vmatprep.subr.bf16.mxu0 0
        %2861 = vmatpush1.bf16.msra.mxu0 0
        %2862 = vmatprep.subr.bf16.mxu0 0
        %2863 = vmatpush1.bf16.msra.mxu0 0
        %2864 = vmatprep.subr.bf16.mxu0 0
        %2865 = vmatpush1.bf16.msra.mxu0 0
        %2866 = vmatprep.subr.bf16.mxu0 0
        %2867 = vmatpush1.bf16.msra.mxu0 0
        %2868 = vmatprep.subr.bf16.mxu0 0
        %2869 = vmatpush1.bf16.msra.mxu0 0
        %2870 = vmatprep.subr.bf16.mxu0 0
        %2871 = vmatpush1.bf16.msra.mxu0 0
        %2872 = vmatprep.subr.bf16.mxu0 0
        %2873 = vmatpush1.bf16.msra.mxu0 0
        %2874 = vmatprep.subr.bf16.mxu0 0
        %2875 = vmatpush1.bf16.msra.mxu0 0
        %2876 = vmatprep.subr.bf16.mxu0 0
        %2877 = vmatpush1.bf16.msra.mxu0 0
        %2878 = vmatprep.mubr.bf16.mxu0 0
        %2879 = vmatmul.mubr.bf16.gmra.mrb[0].mxu0 %v2826
        %v2880 = vpop.f32.mrb[0].mxu0
        %v2881 = vadd.f32 0.0, %v2880
        %v2882 = vpop.f32.mrb[0].mxu0
        %v2883 = vpop.f32.mrb[0].mxu0
        %v2884 = vadd.f32 0.0, %v2883
        %v2885 = vpop.f32.mrb[0].mxu0
        %2886 = vmatprep.mubr.bf16.mxu0 0
        %2887 = vmatmul.mubr.bf16.gmra.mrb[0].mxu0 %v2829
        %v2888 = vpop.f32.mrb[0].mxu0
        %v2889 = vadd.f32 0.0, %v2888
        %v2890 = vpop.f32.mrb[0].mxu0
        %v2891 = vpop.f32.mrb[0].mxu0
        %v2892 = vadd.f32 0.0, %v2891
        %v2893 = vpop.f32.mrb[0].mxu0
        %2894 = vmatprep.mubr.bf16.mxu0 0
        %2895 = vmatmul.mubr.bf16.gmra.mrb[0].mxu0 %v2832
        %v2896 = vpop.f32.mrb[0].mxu0
        %v2897 = vadd.f32 0.0, %v2896
        %v2898 = vpop.f32.mrb[0].mxu0
        %v2899 = vpop.f32.mrb[0].mxu0
        %v2900 = vadd.f32 0.0, %v2899
        %v2901 = vpop.f32.mrb[0].mxu0
        %2902 = vmatprep.mubr.bf16.mxu0 0
        %2903 = vmatmul.mubr.bf16.gmra.mrb[0].mxu0 %v2835
        %v2904 = vpop.f32.mrb[0].mxu0
        %v2905 = vadd.f32 0.0, %v2904
        %v2906 = vpop.f32.mrb[0].mxu0
        %v2907 = vpop.f32.mrb[0].mxu0
        %v2908 = vadd.f32 0.0, %v2907
        %v2909 = vpop.f32.mrb[0].mxu0
        %2910 = vmatprep.mubr.bf16.mxu0 0
        %2911 = vmatmul.mubr.bf16.gmra.mrb[0].mxu0 %v2838
        %v2912 = vpop.f32.mrb[0].mxu0
        %v2913 = vadd.f32 0.0, %v2912
        %v2914 = vpop.f32.mrb[0].mxu0
        %v2915 = vpop.f32.mrb[0].mxu0
        %v2916 = vadd.f32 0.0, %v2915
        %v2917 = vpop.f32.mrb[0].mxu0
        %2918 = vmatprep.mubr.bf16.mxu0 0
        %2919 = vmatmul.mubr.bf16.gmra.mrb[0].mxu0 %v2841
        %v2920 = vpop.f32.mrb[0].mxu0
        %v2921 = vadd.f32 0.0, %v2920
        %v2922 = vpop.f32.mrb[0].mxu0
        %v2923 = vpop.f32.mrb[0].mxu0
        %v2924 = vadd.f32 0.0, %v2923
        %v2925 = vpop.f32.mrb[0].mxu0
        %2926 = vmatprep.mubr.bf16.mxu0 0
        %2927 = vmatmul.mubr.bf16.gmra.mrb[0].mxu0 %v2844
        %v2928 = vpop.f32.mrb[0].mxu0
        %v2929 = vadd.f32 0.0, %v2928
        %v2930 = vpop.f32.mrb[0].mxu0
        %v2931 = vpop.f32.mrb[0].mxu0
        %v2932 = vpop.f32.mrb[0].mxu0
        %2933 = vdwg.mxu0
        %v2942 = vunpack.c.l.b16 %v2756
        %v2943 = vunpack.c.l.b16 %v2757
        %v2944 = vunpack.c.l.b16 %v2758
        %v2945 = vunpack.c.l.b16 %v2759
        %v2946 = vunpack.c.l.b16 %v2760
        %v2947 = vunpack.c.l.b16 %v2761
        %v2948 = vunpack.c.l.b16 %v2762
        %v2949 = vunpack.c.l.b16 %v2763
        %v2950 = vpack.c.b16 %v2943, %v2942
        %v2951 = vpack.c.b16 %v2945, %v2944
        %v2952 = vpack.c.b16 %v2947, %v2946
        %v2953 = vpack.c.b16 %v2949, %v2948
        %v2959 = vsel %vm2637, %v2764, 0
        %v2962 = vsel %vm2637, %v2765, 0
        %v2965 = vsel %vm2637, %v2766, 0
        %v2968 = vsel %vm2637, %v2767, 0
        %v2971 = vsel %vm2637, %v2768, 0
        %v2974 = vsel %vm2637, %v2769, 0
        %v2977 = vsel %vm2637, %v2770, 0
        %2979 = vmatprep.subr.bf16.mxu0 0
        %2980 = vmatpush1.bf16.msra.mxu0 %v2950
        %2981 = vmatprep.subr.bf16.mxu0 0
        %2982 = vmatpush1.bf16.msra.mxu0 %v2951
        %2983 = vmatprep.subr.bf16.mxu0 0
        %2984 = vmatpush1.bf16.msra.mxu0 %v2952
        %2985 = vmatprep.subr.bf16.mxu0 0
        %2986 = vmatpush1.bf16.msra.mxu0 %v2953
        %2987 = vmatprep.subr.bf16.mxu0 0
        %2988 = vmatpush1.bf16.msra.mxu0 0
        %2989 = vmatprep.subr.bf16.mxu0 0
        %2990 = vmatpush1.bf16.msra.mxu0 0
        %2991 = vmatprep.subr.bf16.mxu0 0
        %2992 = vmatpush1.bf16.msra.mxu0 0
        %2993 = vmatprep.subr.bf16.mxu0 0
        %2994 = vmatpush1.bf16.msra.mxu0 0
        %2995 = vmatprep.subr.bf16.mxu0 0
        %2996 = vmatpush1.bf16.msra.mxu0 0
        %2997 = vmatprep.subr.bf16.mxu0 0
        %2998 = vmatpush1.bf16.msra.mxu0 0
        %2999 = vmatprep.subr.bf16.mxu0 0
        %3000 = vmatpush1.bf16.msra.mxu0 0
        %3001 = vmatprep.subr.bf16.mxu0 0
        %3002 = vmatpush1.bf16.msra.mxu0 0
        %3003 = vmatprep.subr.bf16.mxu0 0
        %3004 = vmatpush1.bf16.msra.mxu0 0
        %3005 = vmatprep.subr.bf16.mxu0 0
        %3006 = vmatpush1.bf16.msra.mxu0 0
        %3007 = vmatprep.subr.bf16.mxu0 0
        %3008 = vmatpush1.bf16.msra.mxu0 0
        %3009 = vmatprep.subr.bf16.mxu0 0
        %3010 = vmatpush1.bf16.msra.mxu0 0
        %3011 = vmatprep.mubr.bf16.mxu0 0
        %3012 = vmatmul.mubr.bf16.gmra.mrb[0].mxu0 %v2959
        %v3013 = vpop.f32.mrb[0].mxu0
        %v3014 = vadd.f32 %v2881, %v3013
        %v3015 = vpop.f32.mrb[0].mxu0
        %v3016 = vpop.f32.mrb[0].mxu0
        %v3017 = vadd.f32 %v2884, %v3016
        %v3018 = vpop.f32.mrb[0].mxu0
        %3019 = vmatprep.mubr.bf16.mxu0 0
        %3020 = vmatmul.mubr.bf16.gmra.mrb[0].mxu0 %v2962
        %v3021 = vpop.f32.mrb[0].mxu0
        %v3022 = vadd.f32 %v2889, %v3021
        %v3023 = vpop.f32.mrb[0].mxu0
        %v3024 = vpop.f32.mrb[0].mxu0
        %v3025 = vadd.f32 %v2892, %v3024
        %v3026 = vpop.f32.mrb[0].mxu0
        %3027 = vmatprep.mubr.bf16.mxu0 0
        %3028 = vmatmul.mubr.bf16.gmra.mrb[0].mxu0 %v2965
        %v3029 = vpop.f32.mrb[0].mxu0
        %v3030 = vadd.f32 %v2897, %v3029
        %v3031 = vpop.f32.mrb[0].mxu0
        %v3032 = vpop.f32.mrb[0].mxu0
        %v3033 = vadd.f32 %v2900, %v3032
        %v3034 = vpop.f32.mrb[0].mxu0
        %3035 = vmatprep.mubr.bf16.mxu0 0
        %3036 = vmatmul.mubr.bf16.gmra.mrb[0].mxu0 %v2968
        %v3037 = vpop.f32.mrb[0].mxu0
        %v3038 = vadd.f32 %v2905, %v3037
        %v3039 = vpop.f32.mrb[0].mxu0
        %v3040 = vpop.f32.mrb[0].mxu0
        %v3041 = vadd.f32 %v2908, %v3040
        %v3042 = vpop.f32.mrb[0].mxu0
        %3043 = vmatprep.mubr.bf16.mxu0 0
        %3044 = vmatmul.mubr.bf16.gmra.mrb[0].mxu0 %v2971
        %v3045 = vpop.f32.mrb[0].mxu0
        %v3046 = vadd.f32 %v2913, %v3045
        %v3047 = vpop.f32.mrb[0].mxu0
        %v3048 = vpop.f32.mrb[0].mxu0
        %v3049 = vadd.f32 %v2916, %v3048
        %v3050 = vpop.f32.mrb[0].mxu0
        %3051 = vmatprep.mubr.bf16.mxu0 0
        %3052 = vmatmul.mubr.bf16.gmra.mrb[0].mxu0 %v2974
        %v3053 = vpop.f32.mrb[0].mxu0
        %v3054 = vadd.f32 %v2921, %v3053
        %v3055 = vpop.f32.mrb[0].mxu0
        %v3056 = vpop.f32.mrb[0].mxu0
        %v3057 = vadd.f32 %v2924, %v3056
        %v3058 = vpop.f32.mrb[0].mxu0
        %3059 = vmatprep.mubr.bf16.mxu0 0
        %3060 = vmatmul.mubr.bf16.gmra.mrb[0].mxu0 %v2977
        %v3061 = vpop.f32.mrb[0].mxu0
        %v3062 = vadd.f32 %v2929, %v3061
        %v3063 = vpop.f32.mrb[0].mxu0
        %v3064 = vpop.f32.mrb[0].mxu0
        %v3065 = vpop.f32.mrb[0].mxu0
        %3066 = vdwg.mxu0
        %s3067 = sadd.s32 0, 2
        %s3068 = scalar_lea.vmem [#allocation5], %s3067
        %v3069 = vld [vmem:[%s3068] sm:$0xff]
        %v3070 = vld [vmem:[%s3068 + $0x8] sm:$0xff]
        %v3071 = vld [vmem:[%s3068 + $0x10] sm:$0xff]
        %v3072 = vld [vmem:[%s3068 + $0x18] sm:$0xff]
        %v3073 = vld [vmem:[%s3068 + $0x20] sm:$0xff]
        %v3074 = vld [vmem:[%s3068 + $0x28] sm:$0xff]
        %v3075 = vld [vmem:[%s3068 + $0x30] sm:$0xff]
        %v3076 = vld [vmem:[%s3068 + $0x38] sm:$0xff]
        %v3077 = vld [vmem:[%s3068 + $0x40] sm:$0xff]
        %v3078 = vld [vmem:[%s3068 + $0x48] sm:$0xff]
        %v3079 = vld [vmem:[%s3068 + $0x50] sm:$0xff]
        %v3080 = vld [vmem:[%s3068 + $0x58] sm:$0xff]
        %v3081 = vld [vmem:[%s3068 + $0x60] sm:$0xff]
        %v3082 = vld [vmem:[%s7 + $0x40] sm:$0xf]
        %v3083 = vld [vmem:[%s7 + $0x44] sm:$0xf]
        %v3084 = vld [vmem:[%s7 + $0x48] sm:$0xf]
        %v3085 = vld [vmem:[%s7 + $0x4c] sm:$0xf]
        %v3086 = vld [vmem:[%s7 + $0x50] sm:$0xf]
        %v3087 = vld [vmem:[%s7 + $0x54] sm:$0xf]
        %v3088 = vld [vmem:[%s7 + $0x58] sm:$0xf]
        %v3089 = vld [vmem:[%s7 + $0x5c] sm:$0xf]
        %v3090 = vpack.c.bf16 %v3070, %v3069
        %v3091 = vpack.c.bf16 %v3072, %v3071
        %v3092 = vpack.c.bf16 %v3074, %v3073
        %v3093 = vpack.c.bf16 %v3076, %v3075
        %v3094 = vpack.c.bf16 %v3078, %v3077
        %v3095 = vpack.c.bf16 %v3080, %v3079
        %v3096 = vpack.c.bf16 %v3081, %v3081
        %v3105 = vunpack.c.l.b16 %v3082
        %v3106 = vunpack.c.l.b16 %v3083
        %v3107 = vunpack.c.l.b16 %v3084
        %v3108 = vunpack.c.l.b16 %v3085
        %v3109 = vunpack.c.l.b16 %v3086
        %v3110 = vunpack.c.l.b16 %v3087
        %v3111 = vunpack.c.l.b16 %v3088
        %v3112 = vunpack.c.l.b16 %v3089
        %v3113 = vpack.c.b16 %v3106, %v3105
        %v3114 = vpack.c.b16 %v3108, %v3107
        %v3115 = vpack.c.b16 %v3110, %v3109
        %v3116 = vpack.c.b16 %v3112, %v3111
        %v3122 = vsel %vm2637, %v3090, 0
        %v3125 = vsel %vm2637, %v3091, 0
        %v3128 = vsel %vm2637, %v3092, 0
        %v3131 = vsel %vm2637, %v3093, 0
        %v3134 = vsel %vm2637, %v3094, 0
        %v3137 = vsel %vm2637, %v3095, 0
        %v3140 = vsel %vm2637, %v3096, 0
        %3142 = vmatprep.subr.bf16.mxu0 0
        %3143 = vmatpush1.bf16.msra.mxu0 %v3113
        %3144 = vmatprep.subr.bf16.mxu0 0
        %3145 = vmatpush1.bf16.msra.mxu0 %v3114
        %3146 = vmatprep.subr.bf16.mxu0 0
        %3147 = vmatpush1.bf16.msra.mxu0 %v3115
        %3148 = vmatprep.subr.bf16.mxu0 0
        %3149 = vmatpush1.bf16.msra.mxu0 %v3116
        %3150 = vmatprep.subr.bf16.mxu0 0
        %3151 = vmatpush1.bf16.msra.mxu0 0
        %3152 = vmatprep.subr.bf16.mxu0 0
        %3153 = vmatpush1.bf16.msra.mxu0 0
        %3154 = vmatprep.subr.bf16.mxu0 0
        %3155 = vmatpush1.bf16.msra.mxu0 0
        %3156 = vmatprep.subr.bf16.mxu0 0
        %3157 = vmatpush1.bf16.msra.mxu0 0
        %3158 = vmatprep.subr.bf16.mxu0 0
        %3159 = vmatpush1.bf16.msra.mxu0 0
        %3160 = vmatprep.subr.bf16.mxu0 0
        %3161 = vmatpush1.bf16.msra.mxu0 0
        %3162 = vmatprep.subr.bf16.mxu0 0
        %3163 = vmatpush1.bf16.msra.mxu0 0
        %3164 = vmatprep.subr.bf16.mxu0 0
        %3165 = vmatpush1.bf16.msra.mxu0 0
        %3166 = vmatprep.subr.bf16.mxu0 0
        %3167 = vmatpush1.bf16.msra.mxu0 0
        %3168 = vmatprep.subr.bf16.mxu0 0
        %3169 = vmatpush1.bf16.msra.mxu0 0
        %3170 = vmatprep.subr.bf16.mxu0 0
        %3171 = vmatpush1.bf16.msra.mxu0 0
        %3172 = vmatprep.subr.bf16.mxu0 0
        %3173 = vmatpush1.bf16.msra.mxu0 0
        %3174 = vmatprep.mubr.bf16.mxu0 0
        %3175 = vmatmul.mubr.bf16.gmra.mrb[0].mxu0 %v3122
        %v3176 = vpop.f32.mrb[0].mxu0
        %v3177 = vadd.f32 0.0, %v3176
        %v3178 = vpop.f32.mrb[0].mxu0
        %v3179 = vpop.f32.mrb[0].mxu0
        %v3180 = vadd.f32 0.0, %v3179
        %v3181 = vpop.f32.mrb[0].mxu0
        %3182 = vmatprep.mubr.bf16.mxu0 0
        %3183 = vmatmul.mubr.bf16.gmra.mrb[0].mxu0 %v3125
        %v3184 = vpop.f32.mrb[0].mxu0
        %v3185 = vadd.f32 0.0, %v3184
        %v3186 = vpop.f32.mrb[0].mxu0
        %v3187 = vpop.f32.mrb[0].mxu0
        %v3188 = vadd.f32 0.0, %v3187
        %v3189 = vpop.f32.mrb[0].mxu0
        %3190 = vmatprep.mubr.bf16.mxu0 0
        %3191 = vmatmul.mubr.bf16.gmra.mrb[0].mxu0 %v3128
        %v3192 = vpop.f32.mrb[0].mxu0
        %v3193 = vadd.f32 0.0, %v3192
        %v3194 = vpop.f32.mrb[0].mxu0
        %v3195 = vpop.f32.mrb[0].mxu0
        %v3196 = vadd.f32 0.0, %v3195
        %v3197 = vpop.f32.mrb[0].mxu0
        %3198 = vmatprep.mubr.bf16.mxu0 0
        %3199 = vmatmul.mubr.bf16.gmra.mrb[0].mxu0 %v3131
        %v3200 = vpop.f32.mrb[0].mxu0
        %v3201 = vadd.f32 0.0, %v3200
        %v3202 = vpop.f32.mrb[0].mxu0
        %v3203 = vpop.f32.mrb[0].mxu0
        %v3204 = vadd.f32 0.0, %v3203
        %v3205 = vpop.f32.mrb[0].mxu0
        %3206 = vmatprep.mubr.bf16.mxu0 0
        %3207 = vmatmul.mubr.bf16.gmra.mrb[0].mxu0 %v3134
        %v3208 = vpop.f32.mrb[0].mxu0
        %v3209 = vadd.f32 0.0, %v3208
        %v3210 = vpop.f32.mrb[0].mxu0
        %v3211 = vpop.f32.mrb[0].mxu0
        %v3212 = vadd.f32 0.0, %v3211
        %v3213 = vpop.f32.mrb[0].mxu0
        %3214 = vmatprep.mubr.bf16.mxu0 0
        %3215 = vmatmul.mubr.bf16.gmra.mrb[0].mxu0 %v3137
        %v3216 = vpop.f32.mrb[0].mxu0
        %v3217 = vadd.f32 0.0, %v3216
        %v3218 = vpop.f32.mrb[0].mxu0
        %v3219 = vpop.f32.mrb[0].mxu0
        %v3220 = vadd.f32 0.0, %v3219
        %v3221 = vpop.f32.mrb[0].mxu0
        %3222 = vmatprep.mubr.bf16.mxu0 0
        %3223 = vmatmul.mubr.bf16.gmra.mrb[0].mxu0 %v3140
        %v3224 = vpop.f32.mrb[0].mxu0
        %v3225 = vadd.f32 0.0, %v3224
        %v3226 = vpop.f32.mrb[0].mxu0
        %v3227 = vpop.f32.mrb[0].mxu0
        %v3228 = vpop.f32.mrb[0].mxu0
        %3229 = vdwg.mxu0
        %v3230 = vadd.f32 %v3014, %v3177
        %v3231 = vadd.f32 %v3017, %v3180
        %v3232 = vadd.f32 %v3022, %v3185
        %v3233 = vadd.f32 %v3025, %v3188
        %v3234 = vadd.f32 %v3030, %v3193
        %v3235 = vadd.f32 %v3033, %v3196
        %v3236 = vadd.f32 %v3038, %v3201
        %v3237 = vadd.f32 %v3041, %v3204
        %v3238 = vadd.f32 %v3046, %v3209
        %v3239 = vadd.f32 %v3049, %v3212
        %v3240 = vadd.f32 %v3054, %v3217
        %v3241 = vadd.f32 %v3057, %v3220
        %v3242 = vadd.f32 %v3062, %v3225
        %s3243 = sadd.s32 0, 16
        %s3244 = scalar_lea.vmem [#allocation5], %s3243
        %v3245 = vld [vmem:[%s3244] sm:$0xff]
        %v3246 = vld [vmem:[%s3244 + $0x8] sm:$0xff]
        %v3247 = vld [vmem:[%s3244 + $0x10] sm:$0xff]
        %v3248 = vld [vmem:[%s3244 + $0x18] sm:$0xff]
        %v3249 = vld [vmem:[%s3244 + $0x20] sm:$0xff]
        %v3250 = vld [vmem:[%s3244 + $0x28] sm:$0xff]
        %v3251 = vld [vmem:[%s3244 + $0x30] sm:$0xff]
        %v3252 = vld [vmem:[%s3244 + $0x38] sm:$0xff]
        %v3253 = vld [vmem:[%s3244 + $0x40] sm:$0xff]
        %v3254 = vld [vmem:[%s3244 + $0x48] sm:$0xff]
        %v3255 = vld [vmem:[%s3244 + $0x50] sm:$0xff]
        %v3256 = vld [vmem:[%s3244 + $0x58] sm:$0xff]
        %v3257 = vld [vmem:[%s3244 + $0x60] sm:$0xff]
        %v3258 = vld [vmem:[%s7 + $0x60] sm:$0xf]
        %v3259 = vld [vmem:[%s7 + $0x64] sm:$0xf]
        %v3260 = vld [vmem:[%s7 + $0x68] sm:$0xf]
        %v3261 = vld [vmem:[%s7 + $0x6c] sm:$0xf]
        %v3262 = vld [vmem:[%s7 + $0x70] sm:$0xf]
        %v3263 = vld [vmem:[%s7 + $0x74] sm:$0xf]
        %v3264 = vld [vmem:[%s7 + $0x78] sm:$0xf]
        %v3265 = vld [vmem:[%s7 + $0x7c] sm:$0xf]
        %v3266 = vpack.c.bf16 %v3246, %v3245
        %v3267 = vpack.c.bf16 %v3248, %v3247
        %v3268 = vpack.c.bf16 %v3250, %v3249
        %v3269 = vpack.c.bf16 %v3252, %v3251
        %v3270 = vpack.c.bf16 %v3254, %v3253
        %v3271 = vpack.c.bf16 %v3256, %v3255
        %v3272 = vpack.c.bf16 %v3257, %v3257
        %v3281 = vunpack.c.l.b16 %v3258
        %v3282 = vunpack.c.l.b16 %v3259
        %v3283 = vunpack.c.l.b16 %v3260
        %v3284 = vunpack.c.l.b16 %v3261
        %v3285 = vunpack.c.l.b16 %v3262
        %v3286 = vunpack.c.l.b16 %v3263
        %v3287 = vunpack.c.l.b16 %v3264
        %v3288 = vunpack.c.l.b16 %v3265
        %v3289 = vpack.c.b16 %v3282, %v3281
        %v3290 = vpack.c.b16 %v3284, %v3283
        %v3291 = vpack.c.b16 %v3286, %v3285
        %v3292 = vpack.c.b16 %v3288, %v3287
        %v3298 = vsel %vm2637, %v3266, 0
        %v3301 = vsel %vm2637, %v3267, 0
        %v3304 = vsel %vm2637, %v3268, 0
        %v3307 = vsel %vm2637, %v3269, 0
        %v3310 = vsel %vm2637, %v3270, 0
        %v3313 = vsel %vm2637, %v3271, 0
        %v3316 = vsel %vm2637, %v3272, 0
        %3318 = vmatprep.subr.bf16.mxu0 0
        %3319 = vmatpush1.bf16.msra.mxu0 %v3289
        %3320 = vmatprep.subr.bf16.mxu0 0
        %3321 = vmatpush1.bf16.msra.mxu0 %v3290
        %3322 = vmatprep.subr.bf16.mxu0 0
        %3323 = vmatpush1.bf16.msra.mxu0 %v3291
        %3324 = vmatprep.subr.bf16.mxu0 0
        %3325 = vmatpush1.bf16.msra.mxu0 %v3292
        %3326 = vmatprep.subr.bf16.mxu0 0
        %3327 = vmatpush1.bf16.msra.mxu0 0
        %3328 = vmatprep.subr.bf16.mxu0 0
        %3329 = vmatpush1.bf16.msra.mxu0 0
        %3330 = vmatprep.subr.bf16.mxu0 0
        %3331 = vmatpush1.bf16.msra.mxu0 0
        %3332 = vmatprep.subr.bf16.mxu0 0
        %3333 = vmatpush1.bf16.msra.mxu0 0
        %3334 = vmatprep.subr.bf16.mxu0 0
        %3335 = vmatpush1.bf16.msra.mxu0 0
        %3336 = vmatprep.subr.bf16.mxu0 0
        %3337 = vmatpush1.bf16.msra.mxu0 0
        %3338 = vmatprep.subr.bf16.mxu0 0
        %3339 = vmatpush1.bf16.msra.mxu0 0
        %3340 = vmatprep.subr.bf16.mxu0 0
        %3341 = vmatpush1.bf16.msra.mxu0 0
        %3342 = vmatprep.subr.bf16.mxu0 0
        %3343 = vmatpush1.bf16.msra.mxu0 0
        %3344 = vmatprep.subr.bf16.mxu0 0
        %3345 = vmatpush1.bf16.msra.mxu0 0
        %3346 = vmatprep.subr.bf16.mxu0 0
        %3347 = vmatpush1.bf16.msra.mxu0 0
        %3348 = vmatprep.subr.bf16.mxu0 0
        %3349 = vmatpush1.bf16.msra.mxu0 0
        %3350 = vmatprep.mubr.bf16.mxu0 0
        %3351 = vmatmul.mubr.bf16.gmra.mrb[0].mxu0 %v3298
        %v3352 = vpop.f32.mrb[0].mxu0
        %v3353 = vadd.f32 0.0, %v3352
        %v3354 = vpop.f32.mrb[0].mxu0
        %v3355 = vpop.f32.mrb[0].mxu0
        %v3356 = vadd.f32 0.0, %v3355
        %v3357 = vpop.f32.mrb[0].mxu0
        %3358 = vmatprep.mubr.bf16.mxu0 0
        %3359 = vmatmul.mubr.bf16.gmra.mrb[0].mxu0 %v3301
        %v3360 = vpop.f32.mrb[0].mxu0
        %v3361 = vadd.f32 0.0, %v3360
        %v3362 = vpop.f32.mrb[0].mxu0
        %v3363 = vpop.f32.mrb[0].mxu0
        %v3364 = vadd.f32 0.0, %v3363
        %v3365 = vpop.f32.mrb[0].mxu0
        %3366 = vmatprep.mubr.bf16.mxu0 0
        %3367 = vmatmul.mubr.bf16.gmra.mrb[0].mxu0 %v3304
        %v3368 = vpop.f32.mrb[0].mxu0
        %v3369 = vadd.f32 0.0, %v3368
        %v3370 = vpop.f32.mrb[0].mxu0
        %v3371 = vpop.f32.mrb[0].mxu0
        %v3372 = vadd.f32 0.0, %v3371
        %v3373 = vpop.f32.mrb[0].mxu0
        %3374 = vmatprep.mubr.bf16.mxu0 0
        %3375 = vmatmul.mubr.bf16.gmra.mrb[0].mxu0 %v3307
        %v3376 = vpop.f32.mrb[0].mxu0
        %v3377 = vadd.f32 0.0, %v3376
        %v3378 = vpop.f32.mrb[0].mxu0
        %v3379 = vpop.f32.mrb[0].mxu0
        %v3380 = vadd.f32 0.0, %v3379
        %v3381 = vpop.f32.mrb[0].mxu0
        %3382 = vmatprep.mubr.bf16.mxu0 0
        %3383 = vmatmul.mubr.bf16.gmra.mrb[0].mxu0 %v3310
        %v3384 = vpop.f32.mrb[0].mxu0
        %v3385 = vadd.f32 0.0, %v3384
        %v3386 = vpop.f32.mrb[0].mxu0
        %v3387 = vpop.f32.mrb[0].mxu0
        %v3388 = vadd.f32 0.0, %v3387
        %v3389 = vpop.f32.mrb[0].mxu0
        %3390 = vmatprep.mubr.bf16.mxu0 0
        %3391 = vmatmul.mubr.bf16.gmra.mrb[0].mxu0 %v3313
        %v3392 = vpop.f32.mrb[0].mxu0
        %v3393 = vadd.f32 0.0, %v3392
        %v3394 = vpop.f32.mrb[0].mxu0
        %v3395 = vpop.f32.mrb[0].mxu0
        %v3396 = vadd.f32 0.0, %v3395
        %v3397 = vpop.f32.mrb[0].mxu0
        %3398 = vmatprep.mubr.bf16.mxu0 0
        %3399 = vmatmul.mubr.bf16.gmra.mrb[0].mxu0 %v3316
        %v3400 = vpop.f32.mrb[0].mxu0
        %v3401 = vadd.f32 0.0, %v3400
        %v3402 = vpop.f32.mrb[0].mxu0
        %v3403 = vpop.f32.mrb[0].mxu0
        %v3404 = vpop.f32.mrb[0].mxu0
        %3405 = vdwg.mxu0
        %v3406 = vadd.f32 %v3230, %v3353
        %v3407 = vadd.f32 %v3231, %v3356
        %v3408 = vadd.f32 %v3232, %v3361
        %v3409 = vadd.f32 %v3233, %v3364
        %v3410 = vadd.f32 %v3234, %v3369
        %v3411 = vadd.f32 %v3235, %v3372
        %v3412 = vadd.f32 %v3236, %v3377
        %v3413 = vadd.f32 %v3237, %v3380
        %v3414 = vadd.f32 %v3238, %v3385
        %v3415 = vadd.f32 %v3239, %v3388
        %v3416 = vadd.f32 %v3240, %v3393
        %v3417 = vadd.f32 %v3241, %v3396
        %v3418 = vadd.f32 %v3242, %v3401
        %s3419 = sadd.s32 0, 17
        %s3420 = scalar_lea.vmem [#allocation5], %s3419
        %v3421 = vld [vmem:[%s3420] sm:$0xff]
        %v3422 = vld [vmem:[%s3420 + $0x8] sm:$0xff]
        %v3423 = vld [vmem:[%s3420 + $0x10] sm:$0xff]
        %v3424 = vld [vmem:[%s3420 + $0x18] sm:$0xff]
        %v3425 = vld [vmem:[%s3420 + $0x20] sm:$0xff]
        %v3426 = vld [vmem:[%s3420 + $0x28] sm:$0xff]
        %v3427 = vld [vmem:[%s3420 + $0x30] sm:$0xff]
        %v3428 = vld [vmem:[%s3420 + $0x38] sm:$0xff]
        %v3429 = vld [vmem:[%s3420 + $0x40] sm:$0xff]
        %v3430 = vld [vmem:[%s3420 + $0x48] sm:$0xff]
        %v3431 = vld [vmem:[%s3420 + $0x50] sm:$0xff]
        %v3432 = vld [vmem:[%s3420 + $0x58] sm:$0xff]
        %v3433 = vld [vmem:[%s3420 + $0x60] sm:$0xff]
        %v3434 = vld [vmem:[%s7 + $0x80] sm:$0xf]
        %v3435 = vld [vmem:[%s7 + $0x84] sm:$0xf]
        %v3436 = vld [vmem:[%s7 + $0x88] sm:$0xf]
        %v3437 = vld [vmem:[%s7 + $0x8c] sm:$0xf]
        %v3438 = vld [vmem:[%s7 + $0x90] sm:$0xf]
        %v3439 = vld [vmem:[%s7 + $0x94] sm:$0xf]
        %v3440 = vld [vmem:[%s7 + $0x98] sm:$0xf]
        %v3441 = vld [vmem:[%s7 + $0x9c] sm:$0xf]
        %v3442 = vpack.c.bf16 %v3422, %v3421
        %v3443 = vpack.c.bf16 %v3424, %v3423
        %v3444 = vpack.c.bf16 %v3426, %v3425
        %v3445 = vpack.c.bf16 %v3428, %v3427
        %v3446 = vpack.c.bf16 %v3430, %v3429
        %v3447 = vpack.c.bf16 %v3432, %v3431
        %v3448 = vpack.c.bf16 %v3433, %v3433
        %v3457 = vunpack.c.l.b16 %v3434
        %v3458 = vunpack.c.l.b16 %v3435
        %v3459 = vunpack.c.l.b16 %v3436
        %v3460 = vunpack.c.l.b16 %v3437
        %v3461 = vunpack.c.l.b16 %v3438
        %v3462 = vunpack.c.l.b16 %v3439
        %v3463 = vunpack.c.l.b16 %v3440
        %v3464 = vunpack.c.l.b16 %v3441
        %v3465 = vpack.c.b16 %v3458, %v3457
        %v3466 = vpack.c.b16 %v3460, %v3459
        %v3467 = vpack.c.b16 %v3462, %v3461
        %v3468 = vpack.c.b16 %v3464, %v3463
        %v3474 = vsel %vm2637, %v3442, 0
        %v3477 = vsel %vm2637, %v3443, 0
        %v3480 = vsel %vm2637, %v3444, 0
        %v3483 = vsel %vm2637, %v3445, 0
        %v3486 = vsel %vm2637, %v3446, 0
        %v3489 = vsel %vm2637, %v3447, 0
        %v3492 = vsel %vm2637, %v3448, 0
        %3494 = vmatprep.subr.bf16.mxu0 0
        %3495 = vmatpush1.bf16.msra.mxu0 %v3465
        %3496 = vmatprep.subr.bf16.mxu0 0
        %3497 = vmatpush1.bf16.msra.mxu0 %v3466
        %3498 = vmatprep.subr.bf16.mxu0 0
        %3499 = vmatpush1.bf16.msra.mxu0 %v3467
        %3500 = vmatprep.subr.bf16.mxu0 0
        %3501 = vmatpush1.bf16.msra.mxu0 %v3468
        %3502 = vmatprep.subr.bf16.mxu0 0
        %3503 = vmatpush1.bf16.msra.mxu0 0
        %3504 = vmatprep.subr.bf16.mxu0 0
        %3505 = vmatpush1.bf16.msra.mxu0 0
        %3506 = vmatprep.subr.bf16.mxu0 0
        %3507 = vmatpush1.bf16.msra.mxu0 0
        %3508 = vmatprep.subr.bf16.mxu0 0
        %3509 = vmatpush1.bf16.msra.mxu0 0
        %3510 = vmatprep.subr.bf16.mxu0 0
        %3511 = vmatpush1.bf16.msra.mxu0 0
        %3512 = vmatprep.subr.bf16.mxu0 0
        %3513 = vmatpush1.bf16.msra.mxu0 0
        %3514 = vmatprep.subr.bf16.mxu0 0
        %3515 = vmatpush1.bf16.msra.mxu0 0
        %3516 = vmatprep.subr.bf16.mxu0 0
        %3517 = vmatpush1.bf16.msra.mxu0 0
        %3518 = vmatprep.subr.bf16.mxu0 0
        %3519 = vmatpush1.bf16.msra.mxu0 0
        %3520 = vmatprep.subr.bf16.mxu0 0
        %3521 = vmatpush1.bf16.msra.mxu0 0
        %3522 = vmatprep.subr.bf16.mxu0 0
        %3523 = vmatpush1.bf16.msra.mxu0 0
        %3524 = vmatprep.subr.bf16.mxu0 0
        %3525 = vmatpush1.bf16.msra.mxu0 0
        %3526 = vmatprep.mubr.bf16.mxu0 0
        %3527 = vmatmul.mubr.bf16.gmra.mrb[0].mxu0 %v3474
        %v3528 = vpop.f32.mrb[0].mxu0
        %v3529 = vadd.f32 0.0, %v3528
        %v3530 = vpop.f32.mrb[0].mxu0
        %v3531 = vpop.f32.mrb[0].mxu0
        %v3532 = vadd.f32 0.0, %v3531
        %v3533 = vpop.f32.mrb[0].mxu0
        %3534 = vmatprep.mubr.bf16.mxu0 0
        %3535 = vmatmul.mubr.bf16.gmra.mrb[0].mxu0 %v3477
        %v3536 = vpop.f32.mrb[0].mxu0
        %v3537 = vadd.f32 0.0, %v3536
        %v3538 = vpop.f32.mrb[0].mxu0
        %v3539 = vpop.f32.mrb[0].mxu0
        %v3540 = vadd.f32 0.0, %v3539
        %v3541 = vpop.f32.mrb[0].mxu0
        %3542 = vmatprep.mubr.bf16.mxu0 0
        %3543 = vmatmul.mubr.bf16.gmra.mrb[0].mxu0 %v3480
        %v3544 = vpop.f32.mrb[0].mxu0
        %v3545 = vadd.f32 0.0, %v3544
        %v3546 = vpop.f32.mrb[0].mxu0
        %v3547 = vpop.f32.mrb[0].mxu0
        %v3548 = vadd.f32 0.0, %v3547
        %v3549 = vpop.f32.mrb[0].mxu0
        %3550 = vmatprep.mubr.bf16.mxu0 0
        %3551 = vmatmul.mubr.bf16.gmra.mrb[0].mxu0 %v3483
        %v3552 = vpop.f32.mrb[0].mxu0
        %v3553 = vadd.f32 0.0, %v3552
        %v3554 = vpop.f32.mrb[0].mxu0
        %v3555 = vpop.f32.mrb[0].mxu0
        %v3556 = vadd.f32 0.0, %v3555
        %v3557 = vpop.f32.mrb[0].mxu0
        %3558 = vmatprep.mubr.bf16.mxu0 0
        %3559 = vmatmul.mubr.bf16.gmra.mrb[0].mxu0 %v3486
        %v3560 = vpop.f32.mrb[0].mxu0
        %v3561 = vadd.f32 0.0, %v3560
        %v3562 = vpop.f32.mrb[0].mxu0
        %v3563 = vpop.f32.mrb[0].mxu0
        %v3564 = vadd.f32 0.0, %v3563
        %v3565 = vpop.f32.mrb[0].mxu0
        %3566 = vmatprep.mubr.bf16.mxu0 0
        %3567 = vmatmul.mubr.bf16.gmra.mrb[0].mxu0 %v3489
        %v3568 = vpop.f32.mrb[0].mxu0
        %v3569 = vadd.f32 0.0, %v3568
        %v3570 = vpop.f32.mrb[0].mxu0
        %v3571 = vpop.f32.mrb[0].mxu0
        %v3572 = vadd.f32 0.0, %v3571
        %v3573 = vpop.f32.mrb[0].mxu0
        %3574 = vmatprep.mubr.bf16.mxu0 0
        %3575 = vmatmul.mubr.bf16.gmra.mrb[0].mxu0 %v3492
        %v3576 = vpop.f32.mrb[0].mxu0
        %v3577 = vadd.f32 0.0, %v3576
        %v3578 = vpop.f32.mrb[0].mxu0
        %v3579 = vpop.f32.mrb[0].mxu0
        %v3580 = vpop.f32.mrb[0].mxu0
        %3581 = vdwg.mxu0
        %v3582 = vadd.f32 %v3406, %v3529
        %v3583 = vadd.f32 %v3407, %v3532
        %v3584 = vadd.f32 %v3408, %v3537
        %v3585 = vadd.f32 %v3409, %v3540
        %v3586 = vadd.f32 %v3410, %v3545
        %v3587 = vadd.f32 %v3411, %v3548
        %v3588 = vadd.f32 %v3412, %v3553
        %v3589 = vadd.f32 %v3413, %v3556
        %v3590 = vadd.f32 %v3414, %v3561
        %v3591 = vadd.f32 %v3415, %v3564
        %v3592 = vadd.f32 %v3416, %v3569
        %v3593 = vadd.f32 %v3417, %v3572
        %v3594 = vadd.f32 %v3418, %v3577
        %s3595 = sadd.s32 0, 18
        %s3596 = scalar_lea.vmem [#allocation5], %s3595
        %v3597 = vld [vmem:[%s3596] sm:$0xff]
        %v3598 = vld [vmem:[%s3596 + $0x8] sm:$0xff]
        %v3599 = vld [vmem:[%s3596 + $0x10] sm:$0xff]
        %v3600 = vld [vmem:[%s3596 + $0x18] sm:$0xff]
        %v3601 = vld [vmem:[%s3596 + $0x20] sm:$0xff]
        %v3602 = vld [vmem:[%s3596 + $0x28] sm:$0xff]
        %v3603 = vld [vmem:[%s3596 + $0x30] sm:$0xff]
        %v3604 = vld [vmem:[%s3596 + $0x38] sm:$0xff]
        %v3605 = vld [vmem:[%s3596 + $0x40] sm:$0xff]
        %v3606 = vld [vmem:[%s3596 + $0x48] sm:$0xff]
        %v3607 = vld [vmem:[%s3596 + $0x50] sm:$0xff]
        %v3608 = vld [vmem:[%s3596 + $0x58] sm:$0xff]
        %v3609 = vld [vmem:[%s3596 + $0x60] sm:$0xff]
        %v3610 = vld [vmem:[%s7 + $0xa0] sm:$0xf]
        %v3611 = vld [vmem:[%s7 + $0xa4] sm:$0xf]
        %v3612 = vld [vmem:[%s7 + $0xa8] sm:$0xf]
        %v3613 = vld [vmem:[%s7 + $0xac] sm:$0xf]
        %v3614 = vld [vmem:[%s7 + $0xb0] sm:$0xf]
        %v3615 = vld [vmem:[%s7 + $0xb4] sm:$0xf]
        %v3616 = vld [vmem:[%s7 + $0xb8] sm:$0xf]
        %v3617 = vld [vmem:[%s7 + $0xbc] sm:$0xf]
        %v3618 = vpack.c.bf16 %v3598, %v3597
        %v3619 = vpack.c.bf16 %v3600, %v3599
        %v3620 = vpack.c.bf16 %v3602, %v3601
        %v3621 = vpack.c.bf16 %v3604, %v3603
        %v3622 = vpack.c.bf16 %v3606, %v3605
        %v3623 = vpack.c.bf16 %v3608, %v3607
        %v3624 = vpack.c.bf16 %v3609, %v3609
        %v3633 = vunpack.c.l.b16 %v3610
        %v3634 = vunpack.c.l.b16 %v3611
        %v3635 = vunpack.c.l.b16 %v3612
        %v3636 = vunpack.c.l.b16 %v3613
        %v3637 = vunpack.c.l.b16 %v3614
        %v3638 = vunpack.c.l.b16 %v3615
        %v3639 = vunpack.c.l.b16 %v3616
        %v3640 = vunpack.c.l.b16 %v3617
        %v3641 = vpack.c.b16 %v3634, %v3633
        %v3642 = vpack.c.b16 %v3636, %v3635
        %v3643 = vpack.c.b16 %v3638, %v3637
        %v3644 = vpack.c.b16 %v3640, %v3639
        %v3650 = vsel %vm2637, %v3618, 0
        %v3653 = vsel %vm2637, %v3619, 0
        %v3656 = vsel %vm2637, %v3620, 0
        %v3659 = vsel %vm2637, %v3621, 0
        %v3662 = vsel %vm2637, %v3622, 0
        %v3665 = vsel %vm2637, %v3623, 0
        %v3668 = vsel %vm2637, %v3624, 0
        %3670 = vmatprep.subr.bf16.mxu0 0
        %3671 = vmatpush1.bf16.msra.mxu0 %v3641
        %3672 = vmatprep.subr.bf16.mxu0 0
        %3673 = vmatpush1.bf16.msra.mxu0 %v3642
        %3674 = vmatprep.subr.bf16.mxu0 0
        %3675 = vmatpush1.bf16.msra.mxu0 %v3643
        %3676 = vmatprep.subr.bf16.mxu0 0
        %3677 = vmatpush1.bf16.msra.mxu0 %v3644
        %3678 = vmatprep.subr.bf16.mxu0 0
        %3679 = vmatpush1.bf16.msra.mxu0 0
        %3680 = vmatprep.subr.bf16.mxu0 0
        %3681 = vmatpush1.bf16.msra.mxu0 0
        %3682 = vmatprep.subr.bf16.mxu0 0
        %3683 = vmatpush1.bf16.msra.mxu0 0
        %3684 = vmatprep.subr.bf16.mxu0 0
        %3685 = vmatpush1.bf16.msra.mxu0 0
        %3686 = vmatprep.subr.bf16.mxu0 0
        %3687 = vmatpush1.bf16.msra.mxu0 0
        %3688 = vmatprep.subr.bf16.mxu0 0
        %3689 = vmatpush1.bf16.msra.mxu0 0
        %3690 = vmatprep.subr.bf16.mxu0 0
        %3691 = vmatpush1.bf16.msra.mxu0 0
        %3692 = vmatprep.subr.bf16.mxu0 0
        %3693 = vmatpush1.bf16.msra.mxu0 0
        %3694 = vmatprep.subr.bf16.mxu0 0
        %3695 = vmatpush1.bf16.msra.mxu0 0
        %3696 = vmatprep.subr.bf16.mxu0 0
        %3697 = vmatpush1.bf16.msra.mxu0 0
        %3698 = vmatprep.subr.bf16.mxu0 0
        %3699 = vmatpush1.bf16.msra.mxu0 0
        %3700 = vmatprep.subr.bf16.mxu0 0
        %3701 = vmatpush1.bf16.msra.mxu0 0
        %3702 = vmatprep.mubr.bf16.mxu0 0
        %3703 = vmatmul.mubr.bf16.gmra.mrb[0].mxu0 %v3650
        %v3704 = vpop.f32.mrb[0].mxu0
        %v3705 = vadd.f32 0.0, %v3704
        %v3706 = vpop.f32.mrb[0].mxu0
        %v3707 = vpop.f32.mrb[0].mxu0
        %v3708 = vadd.f32 0.0, %v3707
        %v3709 = vpop.f32.mrb[0].mxu0
        %3710 = vmatprep.mubr.bf16.mxu0 0
        %3711 = vmatmul.mubr.bf16.gmra.mrb[0].mxu0 %v3653
        %v3712 = vpop.f32.mrb[0].mxu0
        %v3713 = vadd.f32 0.0, %v3712
        %v3714 = vpop.f32.mrb[0].mxu0
        %v3715 = vpop.f32.mrb[0].mxu0
        %v3716 = vadd.f32 0.0, %v3715
        %v3717 = vpop.f32.mrb[0].mxu0
        %3718 = vmatprep.mubr.bf16.mxu0 0
        %3719 = vmatmul.mubr.bf16.gmra.mrb[0].mxu0 %v3656
        %v3720 = vpop.f32.mrb[0].mxu0
        %v3721 = vadd.f32 0.0, %v3720
        %v3722 = vpop.f32.mrb[0].mxu0
        %v3723 = vpop.f32.mrb[0].mxu0
        %v3724 = vadd.f32 0.0, %v3723
        %v3725 = vpop.f32.mrb[0].mxu0
        %3726 = vmatprep.mubr.bf16.mxu0 0
        %3727 = vmatmul.mubr.bf16.gmra.mrb[0].mxu0 %v3659
        %v3728 = vpop.f32.mrb[0].mxu0
        %v3729 = vadd.f32 0.0, %v3728
        %v3730 = vpop.f32.mrb[0].mxu0
        %v3731 = vpop.f32.mrb[0].mxu0
        %v3732 = vadd.f32 0.0, %v3731
        %v3733 = vpop.f32.mrb[0].mxu0
        %3734 = vmatprep.mubr.bf16.mxu0 0
        %3735 = vmatmul.mubr.bf16.gmra.mrb[0].mxu0 %v3662
        %v3736 = vpop.f32.mrb[0].mxu0
        %v3737 = vadd.f32 0.0, %v3736
        %v3738 = vpop.f32.mrb[0].mxu0
        %v3739 = vpop.f32.mrb[0].mxu0
        %v3740 = vadd.f32 0.0, %v3739
        %v3741 = vpop.f32.mrb[0].mxu0
        %3742 = vmatprep.mubr.bf16.mxu0 0
        %3743 = vmatmul.mubr.bf16.gmra.mrb[0].mxu0 %v3665
        %v3744 = vpop.f32.mrb[0].mxu0
        %v3745 = vadd.f32 0.0, %v3744
        %v3746 = vpop.f32.mrb[0].mxu0
        %v3747 = vpop.f32.mrb[0].mxu0
        %v3748 = vadd.f32 0.0, %v3747
        %v3749 = vpop.f32.mrb[0].mxu0
        %3750 = vmatprep.mubr.bf16.mxu0 0
        %3751 = vmatmul.mubr.bf16.gmra.mrb[0].mxu0 %v3668
        %v3752 = vpop.f32.mrb[0].mxu0
        %v3753 = vadd.f32 0.0, %v3752
        %v3754 = vpop.f32.mrb[0].mxu0
        %v3755 = vpop.f32.mrb[0].mxu0
        %v3756 = vpop.f32.mrb[0].mxu0
        %3757 = vdwg.mxu0
        %v3758 = vadd.f32 %v3582, %v3705
        %v3759 = vadd.f32 %v3583, %v3708
        %v3760 = vadd.f32 %v3584, %v3713
        %v3761 = vadd.f32 %v3585, %v3716
        %v3762 = vadd.f32 %v3586, %v3721
        %v3763 = vadd.f32 %v3587, %v3724
        %v3764 = vadd.f32 %v3588, %v3729
        %v3765 = vadd.f32 %v3589, %v3732
        %v3766 = vadd.f32 %v3590, %v3737
        %v3767 = vadd.f32 %v3591, %v3740
        %v3768 = vadd.f32 %v3592, %v3745
        %v3769 = vadd.f32 %v3593, %v3748
        %v3770 = vadd.f32 %v3594, %v3753
        %s3771 = sadd.s32 0, 32
        %s3772 = scalar_lea.vmem [#allocation5], %s3771
        %v3773 = vld [vmem:[%s3772] sm:$0xff]
        %v3774 = vld [vmem:[%s3772 + $0x8] sm:$0xff]
        %v3775 = vld [vmem:[%s3772 + $0x10] sm:$0xff]
        %v3776 = vld [vmem:[%s3772 + $0x18] sm:$0xff]
        %v3777 = vld [vmem:[%s3772 + $0x20] sm:$0xff]
        %v3778 = vld [vmem:[%s3772 + $0x28] sm:$0xff]
        %v3779 = vld [vmem:[%s3772 + $0x30] sm:$0xff]
        %v3780 = vld [vmem:[%s3772 + $0x38] sm:$0xff]
        %v3781 = vld [vmem:[%s3772 + $0x40] sm:$0xff]
        %v3782 = vld [vmem:[%s3772 + $0x48] sm:$0xff]
        %v3783 = vld [vmem:[%s3772 + $0x50] sm:$0xff]
        %v3784 = vld [vmem:[%s3772 + $0x58] sm:$0xff]
        %v3785 = vld [vmem:[%s3772 + $0x60] sm:$0xff]
        %v3786 = vld [vmem:[%s7 + $0xc0] sm:$0xf]
        %v3787 = vld [vmem:[%s7 + $0xc4] sm:$0xf]
        %v3788 = vld [vmem:[%s7 + $0xc8] sm:$0xf]
        %v3789 = vld [vmem:[%s7 + $0xcc] sm:$0xf]
        %v3790 = vld [vmem:[%s7 + $0xd0] sm:$0xf]
        %v3791 = vld [vmem:[%s7 + $0xd4] sm:$0xf]
        %v3792 = vld [vmem:[%s7 + $0xd8] sm:$0xf]
        %v3793 = vld [vmem:[%s7 + $0xdc] sm:$0xf]
        %v3794 = vpack.c.bf16 %v3774, %v3773
        %v3795 = vpack.c.bf16 %v3776, %v3775
        %v3796 = vpack.c.bf16 %v3778, %v3777
        %v3797 = vpack.c.bf16 %v3780, %v3779
        %v3798 = vpack.c.bf16 %v3782, %v3781
        %v3799 = vpack.c.bf16 %v3784, %v3783
        %v3800 = vpack.c.bf16 %v3785, %v3785
        %v3809 = vunpack.c.l.b16 %v3786
        %v3810 = vunpack.c.l.b16 %v3787
        %v3811 = vunpack.c.l.b16 %v3788
        %v3812 = vunpack.c.l.b16 %v3789
        %v3813 = vunpack.c.l.b16 %v3790
        %v3814 = vunpack.c.l.b16 %v3791
        %v3815 = vunpack.c.l.b16 %v3792
        %v3816 = vunpack.c.l.b16 %v3793
        %v3817 = vpack.c.b16 %v3810, %v3809
        %v3818 = vpack.c.b16 %v3812, %v3811
        %v3819 = vpack.c.b16 %v3814, %v3813
        %v3820 = vpack.c.b16 %v3816, %v3815
        %v3826 = vsel %vm2637, %v3794, 0
        %v3829 = vsel %vm2637, %v3795, 0
        %v3832 = vsel %vm2637, %v3796, 0
        %v3835 = vsel %vm2637, %v3797, 0
        %v3838 = vsel %vm2637, %v3798, 0
        %v3841 = vsel %vm2637, %v3799, 0
        %v3844 = vsel %vm2637, %v3800, 0
        %3846 = vmatprep.subr.bf16.mxu0 0
        %3847 = vmatpush1.bf16.msra.mxu0 %v3817
        %3848 = vmatprep.subr.bf16.mxu0 0
        %3849 = vmatpush1.bf16.msra.mxu0 %v3818
        %3850 = vmatprep.subr.bf16.mxu0 0
        %3851 = vmatpush1.bf16.msra.mxu0 %v3819
        %3852 = vmatprep.subr.bf16.mxu0 0
        %3853 = vmatpush1.bf16.msra.mxu0 %v3820
        %3854 = vmatprep.subr.bf16.mxu0 0
        %3855 = vmatpush1.bf16.msra.mxu0 0
        %3856 = vmatprep.subr.bf16.mxu0 0
        %3857 = vmatpush1.bf16.msra.mxu0 0
        %3858 = vmatprep.subr.bf16.mxu0 0
        %3859 = vmatpush1.bf16.msra.mxu0 0
        %3860 = vmatprep.subr.bf16.mxu0 0
        %3861 = vmatpush1.bf16.msra.mxu0 0
        %3862 = vmatprep.subr.bf16.mxu0 0
        %3863 = vmatpush1.bf16.msra.mxu0 0
        %3864 = vmatprep.subr.bf16.mxu0 0
        %3865 = vmatpush1.bf16.msra.mxu0 0
        %3866 = vmatprep.subr.bf16.mxu0 0
        %3867 = vmatpush1.bf16.msra.mxu0 0
        %3868 = vmatprep.subr.bf16.mxu0 0
        %3869 = vmatpush1.bf16.msra.mxu0 0
        %3870 = vmatprep.subr.bf16.mxu0 0
        %3871 = vmatpush1.bf16.msra.mxu0 0
        %3872 = vmatprep.subr.bf16.mxu0 0
        %3873 = vmatpush1.bf16.msra.mxu0 0
        %3874 = vmatprep.subr.bf16.mxu0 0
        %3875 = vmatpush1.bf16.msra.mxu0 0
        %3876 = vmatprep.subr.bf16.mxu0 0
        %3877 = vmatpush1.bf16.msra.mxu0 0
        %3878 = vmatprep.mubr.bf16.mxu0 0
        %3879 = vmatmul.mubr.bf16.gmra.mrb[0].mxu0 %v3826
        %v3880 = vpop.f32.mrb[0].mxu0
        %v3881 = vadd.f32 0.0, %v3880
        %v3882 = vpop.f32.mrb[0].mxu0
        %v3883 = vpop.f32.mrb[0].mxu0
        %v3884 = vadd.f32 0.0, %v3883
        %v3885 = vpop.f32.mrb[0].mxu0
        %3886 = vmatprep.mubr.bf16.mxu0 0
        %3887 = vmatmul.mubr.bf16.gmra.mrb[0].mxu0 %v3829
        %v3888 = vpop.f32.mrb[0].mxu0
        %v3889 = vadd.f32 0.0, %v3888
        %v3890 = vpop.f32.mrb[0].mxu0
        %v3891 = vpop.f32.mrb[0].mxu0
        %v3892 = vadd.f32 0.0, %v3891
        %v3893 = vpop.f32.mrb[0].mxu0
        %3894 = vmatprep.mubr.bf16.mxu0 0
        %3895 = vmatmul.mubr.bf16.gmra.mrb[0].mxu0 %v3832
        %v3896 = vpop.f32.mrb[0].mxu0
        %v3897 = vadd.f32 0.0, %v3896
        %v3898 = vpop.f32.mrb[0].mxu0
        %v3899 = vpop.f32.mrb[0].mxu0
        %v3900 = vadd.f32 0.0, %v3899
        %v3901 = vpop.f32.mrb[0].mxu0
        %3902 = vmatprep.mubr.bf16.mxu0 0
        %3903 = vmatmul.mubr.bf16.gmra.mrb[0].mxu0 %v3835
        %v3904 = vpop.f32.mrb[0].mxu0
        %v3905 = vadd.f32 0.0, %v3904
        %v3906 = vpop.f32.mrb[0].mxu0
        %v3907 = vpop.f32.mrb[0].mxu0
        %v3908 = vadd.f32 0.0, %v3907
        %v3909 = vpop.f32.mrb[0].mxu0
        %3910 = vmatprep.mubr.bf16.mxu0 0
        %3911 = vmatmul.mubr.bf16.gmra.mrb[0].mxu0 %v3838
        %v3912 = vpop.f32.mrb[0].mxu0
        %v3913 = vadd.f32 0.0, %v3912
        %v3914 = vpop.f32.mrb[0].mxu0
        %v3915 = vpop.f32.mrb[0].mxu0
        %v3916 = vadd.f32 0.0, %v3915
        %v3917 = vpop.f32.mrb[0].mxu0
        %3918 = vmatprep.mubr.bf16.mxu0 0
        %3919 = vmatmul.mubr.bf16.gmra.mrb[0].mxu0 %v3841
        %v3920 = vpop.f32.mrb[0].mxu0
        %v3921 = vadd.f32 0.0, %v3920
        %v3922 = vpop.f32.mrb[0].mxu0
        %v3923 = vpop.f32.mrb[0].mxu0
        %v3924 = vadd.f32 0.0, %v3923
        %v3925 = vpop.f32.mrb[0].mxu0
        %3926 = vmatprep.mubr.bf16.mxu0 0
        %3927 = vmatmul.mubr.bf16.gmra.mrb[0].mxu0 %v3844
        %v3928 = vpop.f32.mrb[0].mxu0
        %v3929 = vadd.f32 0.0, %v3928
        %v3930 = vpop.f32.mrb[0].mxu0
        %v3931 = vpop.f32.mrb[0].mxu0
        %v3932 = vpop.f32.mrb[0].mxu0
        %3933 = vdwg.mxu0
        %v3934 = vadd.f32 %v3758, %v3881
        %v3935 = vadd.f32 %v3759, %v3884
        %v3936 = vadd.f32 %v3760, %v3889
        %v3937 = vadd.f32 %v3761, %v3892
        %v3938 = vadd.f32 %v3762, %v3897
        %v3939 = vadd.f32 %v3763, %v3900
        %v3940 = vadd.f32 %v3764, %v3905
        %v3941 = vadd.f32 %v3765, %v3908
        %v3942 = vadd.f32 %v3766, %v3913
        %v3943 = vadd.f32 %v3767, %v3916
        %v3944 = vadd.f32 %v3768, %v3921
        %v3945 = vadd.f32 %v3769, %v3924
        %v3946 = vadd.f32 %v3770, %v3929
        %s3947 = sadd.s32 0, 33
        %s3948 = scalar_lea.vmem [#allocation5], %s3947
        %v3949 = vld [vmem:[%s3948] sm:$0xff]
        %v3950 = vld [vmem:[%s3948 + $0x8] sm:$0xff]
        %v3951 = vld [vmem:[%s3948 + $0x10] sm:$0xff]
        %v3952 = vld [vmem:[%s3948 + $0x18] sm:$0xff]
        %v3953 = vld [vmem:[%s3948 + $0x20] sm:$0xff]
        %v3954 = vld [vmem:[%s3948 + $0x28] sm:$0xff]
        %v3955 = vld [vmem:[%s3948 + $0x30] sm:$0xff]
        %v3956 = vld [vmem:[%s3948 + $0x38] sm:$0xff]
        %v3957 = vld [vmem:[%s3948 + $0x40] sm:$0xff]
        %v3958 = vld [vmem:[%s3948 + $0x48] sm:$0xff]
        %v3959 = vld [vmem:[%s3948 + $0x50] sm:$0xff]
        %v3960 = vld [vmem:[%s3948 + $0x58] sm:$0xff]
        %v3961 = vld [vmem:[%s3948 + $0x60] sm:$0xff]
        %v3962 = vld [vmem:[%s7 + $0xe0] sm:$0xf]
        %v3963 = vld [vmem:[%s7 + $0xe4] sm:$0xf]
        %v3964 = vld [vmem:[%s7 + $0xe8] sm:$0xf]
        %v3965 = vld [vmem:[%s7 + $0xec] sm:$0xf]
        %v3966 = vld [vmem:[%s7 + $0xf0] sm:$0xf]
        %v3967 = vld [vmem:[%s7 + $0xf4] sm:$0xf]
        %v3968 = vld [vmem:[%s7 + $0xf8] sm:$0xf]
        %v3969 = vld [vmem:[%s7 + $0xfc] sm:$0xf]
        %v3970 = vpack.c.bf16 %v3950, %v3949
        %v3971 = vpack.c.bf16 %v3952, %v3951
        %v3972 = vpack.c.bf16 %v3954, %v3953
        %v3973 = vpack.c.bf16 %v3956, %v3955
        %v3974 = vpack.c.bf16 %v3958, %v3957
        %v3975 = vpack.c.bf16 %v3960, %v3959
        %v3976 = vpack.c.bf16 %v3961, %v3961
        %v3985 = vunpack.c.l.b16 %v3962
        %v3986 = vunpack.c.l.b16 %v3963
        %v3987 = vunpack.c.l.b16 %v3964
        %v3988 = vunpack.c.l.b16 %v3965
        %v3989 = vunpack.c.l.b16 %v3966
        %v3990 = vunpack.c.l.b16 %v3967
        %v3991 = vunpack.c.l.b16 %v3968
        %v3992 = vunpack.c.l.b16 %v3969
        %v3993 = vpack.c.b16 %v3986, %v3985
        %v3994 = vpack.c.b16 %v3988, %v3987
        %v3995 = vpack.c.b16 %v3990, %v3989
        %v3996 = vpack.c.b16 %v3992, %v3991
        %v4002 = vsel %vm2637, %v3970, 0
        %v4005 = vsel %vm2637, %v3971, 0
        %v4008 = vsel %vm2637, %v3972, 0
        %v4011 = vsel %vm2637, %v3973, 0
        %v4014 = vsel %vm2637, %v3974, 0
        %v4017 = vsel %vm2637, %v3975, 0
        %v4020 = vsel %vm2637, %v3976, 0
        %4022 = vmatprep.subr.bf16.mxu0 0
        %4023 = vmatpush1.bf16.msra.mxu0 %v3993
        %4024 = vmatprep.subr.bf16.mxu0 0
        %4025 = vmatpush1.bf16.msra.mxu0 %v3994
        %4026 = vmatprep.subr.bf16.mxu0 0
        %4027 = vmatpush1.bf16.msra.mxu0 %v3995
        %4028 = vmatprep.subr.bf16.mxu0 0
        %4029 = vmatpush1.bf16.msra.mxu0 %v3996
        %4030 = vmatprep.subr.bf16.mxu0 0
        %4031 = vmatpush1.bf16.msra.mxu0 0
        %4032 = vmatprep.subr.bf16.mxu0 0
        %4033 = vmatpush1.bf16.msra.mxu0 0
        %4034 = vmatprep.subr.bf16.mxu0 0
        %4035 = vmatpush1.bf16.msra.mxu0 0
        %4036 = vmatprep.subr.bf16.mxu0 0
        %4037 = vmatpush1.bf16.msra.mxu0 0
        %4038 = vmatprep.subr.bf16.mxu0 0
        %4039 = vmatpush1.bf16.msra.mxu0 0
        %4040 = vmatprep.subr.bf16.mxu0 0
        %4041 = vmatpush1.bf16.msra.mxu0 0
        %4042 = vmatprep.subr.bf16.mxu0 0
        %4043 = vmatpush1.bf16.msra.mxu0 0
        %4044 = vmatprep.subr.bf16.mxu0 0
        %4045 = vmatpush1.bf16.msra.mxu0 0
        %4046 = vmatprep.subr.bf16.mxu0 0
        %4047 = vmatpush1.bf16.msra.mxu0 0
        %4048 = vmatprep.subr.bf16.mxu0 0
        %4049 = vmatpush1.bf16.msra.mxu0 0
        %4050 = vmatprep.subr.bf16.mxu0 0
        %4051 = vmatpush1.bf16.msra.mxu0 0
        %4052 = vmatprep.subr.bf16.mxu0 0
        %4053 = vmatpush1.bf16.msra.mxu0 0
        %4054 = vmatprep.mubr.bf16.mxu0 0
        %4055 = vmatmul.mubr.bf16.gmra.mrb[0].mxu0 %v4002
        %v4056 = vpop.f32.mrb[0].mxu0
        %v4057 = vadd.f32 0.0, %v4056
        %v4058 = vpop.f32.mrb[0].mxu0
        %v4059 = vpop.f32.mrb[0].mxu0
        %v4060 = vadd.f32 0.0, %v4059
        %v4061 = vpop.f32.mrb[0].mxu0
        %4062 = vmatprep.mubr.bf16.mxu0 0
        %4063 = vmatmul.mubr.bf16.gmra.mrb[0].mxu0 %v4005
        %v4064 = vpop.f32.mrb[0].mxu0
        %v4065 = vadd.f32 0.0, %v4064
        %v4066 = vpop.f32.mrb[0].mxu0
        %v4067 = vpop.f32.mrb[0].mxu0
        %v4068 = vadd.f32 0.0, %v4067
        %v4069 = vpop.f32.mrb[0].mxu0
        %4070 = vmatprep.mubr.bf16.mxu0 0
        %4071 = vmatmul.mubr.bf16.gmra.mrb[0].mxu0 %v4008
        %v4072 = vpop.f32.mrb[0].mxu0
        %v4073 = vadd.f32 0.0, %v4072
        %v4074 = vpop.f32.mrb[0].mxu0
        %v4075 = vpop.f32.mrb[0].mxu0
        %v4076 = vadd.f32 0.0, %v4075
        %v4077 = vpop.f32.mrb[0].mxu0
        %4078 = vmatprep.mubr.bf16.mxu0 0
        %4079 = vmatmul.mubr.bf16.gmra.mrb[0].mxu0 %v4011
        %v4080 = vpop.f32.mrb[0].mxu0
        %v4081 = vadd.f32 0.0, %v4080
        %v4082 = vpop.f32.mrb[0].mxu0
        %v4083 = vpop.f32.mrb[0].mxu0
        %v4084 = vadd.f32 0.0, %v4083
        %v4085 = vpop.f32.mrb[0].mxu0
        %4086 = vmatprep.mubr.bf16.mxu0 0
        %4087 = vmatmul.mubr.bf16.gmra.mrb[0].mxu0 %v4014
        %v4088 = vpop.f32.mrb[0].mxu0
        %v4089 = vadd.f32 0.0, %v4088
        %v4090 = vpop.f32.mrb[0].mxu0
        %v4091 = vpop.f32.mrb[0].mxu0
        %v4092 = vadd.f32 0.0, %v4091
        %v4093 = vpop.f32.mrb[0].mxu0
        %4094 = vmatprep.mubr.bf16.mxu0 0
        %4095 = vmatmul.mubr.bf16.gmra.mrb[0].mxu0 %v4017
        %v4096 = vpop.f32.mrb[0].mxu0
        %v4097 = vadd.f32 0.0, %v4096
        %v4098 = vpop.f32.mrb[0].mxu0
        %v4099 = vpop.f32.mrb[0].mxu0
        %v4100 = vadd.f32 0.0, %v4099
        %v4101 = vpop.f32.mrb[0].mxu0
        %4102 = vmatprep.mubr.bf16.mxu0 0
        %4103 = vmatmul.mubr.bf16.gmra.mrb[0].mxu0 %v4020
        %v4104 = vpop.f32.mrb[0].mxu0
        %v4105 = vadd.f32 0.0, %v4104
        %v4106 = vpop.f32.mrb[0].mxu0
        %v4107 = vpop.f32.mrb[0].mxu0
        %v4108 = vpop.f32.mrb[0].mxu0
        %4109 = vdwg.mxu0
        %v4110 = vadd.f32 %v3934, %v4057
        %v4111 = vadd.f32 %v3935, %v4060
        %v4112 = vadd.f32 %v3936, %v4065
        %v4113 = vadd.f32 %v3937, %v4068
        %v4114 = vadd.f32 %v3938, %v4073
        %v4115 = vadd.f32 %v3939, %v4076
        %v4116 = vadd.f32 %v3940, %v4081
        %v4117 = vadd.f32 %v3941, %v4084
        %v4118 = vadd.f32 %v3942, %v4089
        %v4119 = vadd.f32 %v3943, %v4092
        %v4120 = vadd.f32 %v3944, %v4097
        %v4121 = vadd.f32 %v3945, %v4100
        %v4122 = vadd.f32 %v3946, %v4105
        %s4123 = sadd.s32 0, 34
        %s4124 = scalar_lea.vmem [#allocation5], %s4123
        %v4125 = vld [vmem:[%s4124] sm:$0xff]
        %v4126 = vld [vmem:[%s4124 + $0x8] sm:$0xff]
        %v4127 = vld [vmem:[%s4124 + $0x10] sm:$0xff]
        %v4128 = vld [vmem:[%s4124 + $0x18] sm:$0xff]
        %v4129 = vld [vmem:[%s4124 + $0x20] sm:$0xff]
        %v4130 = vld [vmem:[%s4124 + $0x28] sm:$0xff]
        %v4131 = vld [vmem:[%s4124 + $0x30] sm:$0xff]
        %v4132 = vld [vmem:[%s4124 + $0x38] sm:$0xff]
        %v4133 = vld [vmem:[%s4124 + $0x40] sm:$0xff]
        %v4134 = vld [vmem:[%s4124 + $0x48] sm:$0xff]
        %v4135 = vld [vmem:[%s4124 + $0x50] sm:$0xff]
        %v4136 = vld [vmem:[%s4124 + $0x58] sm:$0xff]
        %v4137 = vld [vmem:[%s4124 + $0x60] sm:$0xff]
        %v4138 = vld [vmem:[%s7 + $0x100] sm:$0xf]
        %v4139 = vld [vmem:[%s7 + $0x104] sm:$0xf]
        %v4140 = vld [vmem:[%s7 + $0x108] sm:$0xf]
        %v4141 = vld [vmem:[%s7 + $0x10c] sm:$0xf]
        %v4142 = vld [vmem:[%s7 + $0x110] sm:$0xf]
        %v4143 = vld [vmem:[%s7 + $0x114] sm:$0xf]
        %v4144 = vld [vmem:[%s7 + $0x118] sm:$0xf]
        %v4145 = vld [vmem:[%s7 + $0x11c] sm:$0xf]
        %v4146 = vpack.c.bf16 %v4126, %v4125
        %v4147 = vpack.c.bf16 %v4128, %v4127
        %v4148 = vpack.c.bf16 %v4130, %v4129
        %v4149 = vpack.c.bf16 %v4132, %v4131
        %v4150 = vpack.c.bf16 %v4134, %v4133
        %v4151 = vpack.c.bf16 %v4136, %v4135
        %v4152 = vpack.c.bf16 %v4137, %v4137
        %v4161 = vunpack.c.l.b16 %v4138
        %v4162 = vunpack.c.l.b16 %v4139
        %v4163 = vunpack.c.l.b16 %v4140
        %v4164 = vunpack.c.l.b16 %v4141
        %v4165 = vunpack.c.l.b16 %v4142
        %v4166 = vunpack.c.l.b16 %v4143
        %v4167 = vunpack.c.l.b16 %v4144
        %v4168 = vunpack.c.l.b16 %v4145
        %v4169 = vpack.c.b16 %v4162, %v4161
        %v4170 = vpack.c.b16 %v4164, %v4163
        %v4171 = vpack.c.b16 %v4166, %v4165
        %v4172 = vpack.c.b16 %v4168, %v4167
        %v4178 = vsel %vm2637, %v4146, 0
        %v4181 = vsel %vm2637, %v4147, 0
        %v4184 = vsel %vm2637, %v4148, 0
        %v4187 = vsel %vm2637, %v4149, 0
        %v4190 = vsel %vm2637, %v4150, 0
        %v4193 = vsel %vm2637, %v4151, 0
        %v4196 = vsel %vm2637, %v4152, 0
        %4198 = vmatprep.subr.bf16.mxu0 0
        %4199 = vmatpush1.bf16.msra.mxu0 %v4169
        %4200 = vmatprep.subr.bf16.mxu0 0
        %4201 = vmatpush1.bf16.msra.mxu0 %v4170
        %4202 = vmatprep.subr.bf16.mxu0 0
        %4203 = vmatpush1.bf16.msra.mxu0 %v4171
        %4204 = vmatprep.subr.bf16.mxu0 0
        %4205 = vmatpush1.bf16.msra.mxu0 %v4172
        %4206 = vmatprep.subr.bf16.mxu0 0
        %4207 = vmatpush1.bf16.msra.mxu0 0
        %4208 = vmatprep.subr.bf16.mxu0 0
        %4209 = vmatpush1.bf16.msra.mxu0 0
        %4210 = vmatprep.subr.bf16.mxu0 0
        %4211 = vmatpush1.bf16.msra.mxu0 0
        %4212 = vmatprep.subr.bf16.mxu0 0
        %4213 = vmatpush1.bf16.msra.mxu0 0
        %4214 = vmatprep.subr.bf16.mxu0 0
        %4215 = vmatpush1.bf16.msra.mxu0 0
        %4216 = vmatprep.subr.bf16.mxu0 0
        %4217 = vmatpush1.bf16.msra.mxu0 0
        %4218 = vmatprep.subr.bf16.mxu0 0
        %4219 = vmatpush1.bf16.msra.mxu0 0
        %4220 = vmatprep.subr.bf16.mxu0 0
        %4221 = vmatpush1.bf16.msra.mxu0 0
        %4222 = vmatprep.subr.bf16.mxu0 0
        %4223 = vmatpush1.bf16.msra.mxu0 0
        %4224 = vmatprep.subr.bf16.mxu0 0
        %4225 = vmatpush1.bf16.msra.mxu0 0
        %4226 = vmatprep.subr.bf16.mxu0 0
        %4227 = vmatpush1.bf16.msra.mxu0 0
        %4228 = vmatprep.subr.bf16.mxu0 0
        %4229 = vmatpush1.bf16.msra.mxu0 0
        %4230 = vmatprep.mubr.bf16.mxu0 0
        %4231 = vmatmul.mubr.bf16.gmra.mrb[0].mxu0 %v4178
        %v4232 = vpop.f32.mrb[0].mxu0
        %v4233 = vadd.f32 0.0, %v4232
        %v4234 = vpop.f32.mrb[0].mxu0
        %v4235 = vpop.f32.mrb[0].mxu0
        %v4236 = vadd.f32 0.0, %v4235
        %v4237 = vpop.f32.mrb[0].mxu0
        %4238 = vmatprep.mubr.bf16.mxu0 0
        %4239 = vmatmul.mubr.bf16.gmra.mrb[0].mxu0 %v4181
        %v4240 = vpop.f32.mrb[0].mxu0
        %v4241 = vadd.f32 0.0, %v4240
        %v4242 = vpop.f32.mrb[0].mxu0
        %v4243 = vpop.f32.mrb[0].mxu0
        %v4244 = vadd.f32 0.0, %v4243
        %v4245 = vpop.f32.mrb[0].mxu0
        %4246 = vmatprep.mubr.bf16.mxu0 0
        %4247 = vmatmul.mubr.bf16.gmra.mrb[0].mxu0 %v4184
        %v4248 = vpop.f32.mrb[0].mxu0
        %v4249 = vadd.f32 0.0, %v4248
        %v4250 = vpop.f32.mrb[0].mxu0
        %v4251 = vpop.f32.mrb[0].mxu0
        %v4252 = vadd.f32 0.0, %v4251
        %v4253 = vpop.f32.mrb[0].mxu0
        %4254 = vmatprep.mubr.bf16.mxu0 0
        %4255 = vmatmul.mubr.bf16.gmra.mrb[0].mxu0 %v4187
        %v4256 = vpop.f32.mrb[0].mxu0
        %v4257 = vadd.f32 0.0, %v4256
        %v4258 = vpop.f32.mrb[0].mxu0
        %v4259 = vpop.f32.mrb[0].mxu0
        %v4260 = vadd.f32 0.0, %v4259
        %v4261 = vpop.f32.mrb[0].mxu0
        %4262 = vmatprep.mubr.bf16.mxu0 0
        %4263 = vmatmul.mubr.bf16.gmra.mrb[0].mxu0 %v4190
        %v4264 = vpop.f32.mrb[0].mxu0
        %v4265 = vadd.f32 0.0, %v4264
        %v4266 = vpop.f32.mrb[0].mxu0
        %v4267 = vpop.f32.mrb[0].mxu0
        %v4268 = vadd.f32 0.0, %v4267
        %v4269 = vpop.f32.mrb[0].mxu0
        %4270 = vmatprep.mubr.bf16.mxu0 0
        %4271 = vmatmul.mubr.bf16.gmra.mrb[0].mxu0 %v4193
        %v4272 = vpop.f32.mrb[0].mxu0
        %v4273 = vadd.f32 0.0, %v4272
        %v4274 = vpop.f32.mrb[0].mxu0
        %v4275 = vpop.f32.mrb[0].mxu0
        %v4276 = vadd.f32 0.0, %v4275
        %v4277 = vpop.f32.mrb[0].mxu0
        %4278 = vmatprep.mubr.bf16.mxu0 0
        %4279 = vmatmul.mubr.bf16.gmra.mrb[0].mxu0 %v4196
        %v4280 = vpop.f32.mrb[0].mxu0
        %v4281 = vadd.f32 0.0, %v4280
        %v4282 = vpop.f32.mrb[0].mxu0
        %v4283 = vpop.f32.mrb[0].mxu0
        %v4284 = vpop.f32.mrb[0].mxu0
        %4285 = vdwg.mxu0
        %v4286 = vadd.f32 %v4110, %v4233
        %v4287 = vadd.f32 %v4111, %v4236
        %v4288 = vadd.f32 %v4112, %v4241
        %v4289 = vadd.f32 %v4113, %v4244
        %v4290 = vadd.f32 %v4114, %v4249
        %v4291 = vadd.f32 %v4115, %v4252
        %v4292 = vadd.f32 %v4116, %v4257
        %v4293 = vadd.f32 %v4117, %v4260
        %v4294 = vadd.f32 %v4118, %v4265
        %v4295 = vadd.f32 %v4119, %v4268
        %v4296 = vadd.f32 %v4120, %v4273
        %v4297 = vadd.f32 %v4121, %v4276
        %v4298 = vadd.f32 %v4122, %v4281
        %v4300 = vlaneseq
        %v4301 = vshrl.u32 %v4300, 7
        %v4302 = vsub.s32 0, %v4301
        %v4303 = vrot.slane %v2741, %v4302
        %v4305 = vmul.f32 %v4286, %v4303
        %v4306 = vmul.f32 %v4287, %v4303
        %v4307 = vmul.f32 %v4288, %v4303
        %v4308 = vmul.f32 %v4289, %v4303
        %v4309 = vmul.f32 %v4290, %v4303
        %v4310 = vmul.f32 %v4291, %v4303
        %v4311 = vmul.f32 %v4292, %v4303
        %v4312 = vmul.f32 %v4293, %v4303
        %v4313 = vmul.f32 %v4294, %v4303
        %v4314 = vmul.f32 %v4295, %v4303
        %v4315 = vmul.f32 %v4296, %v4303
        %v4316 = vmul.f32 %v4297, %v4303
        %v4317 = vmul.f32 %v4298, %v4303
        %v4319 = vlaneseq
        %v4320 = vshrl.u32 %v4319, 7
        %v4321 = vsub.s32 0, %v4320
        %v4322 = vrot.slane %v2742, %v4321
        %v4324 = vadd.f32 %v4305, %v4322
        %v4325 = vadd.f32 %v4306, %v4322
        %v4326 = vadd.f32 %v4307, %v4322
        %v4327 = vadd.f32 %v4308, %v4322
        %v4328 = vadd.f32 %v4309, %v4322
        %v4329 = vadd.f32 %v4310, %v4322
        %v4330 = vadd.f32 %v4311, %v4322
        %v4331 = vadd.f32 %v4312, %v4322
        %v4332 = vadd.f32 %v4313, %v4322
        %v4333 = vadd.f32 %v4314, %v4322
        %v4334 = vadd.f32 %v4315, %v4322
        %v4335 = vadd.f32 %v4316, %v4322
        %v4336 = vadd.f32 %v4317, %v4322
        %v4337 = vmax.f32 %v4324, 0.0
        %v4338 = vmax.f32 %v4325, 0.0
        %v4339 = vmax.f32 %v4326, 0.0
        %v4340 = vmax.f32 %v4327, 0.0
        %v4341 = vmax.f32 %v4328, 0.0
        %v4342 = vmax.f32 %v4329, 0.0
        %v4343 = vmax.f32 %v4330, 0.0
        %v4344 = vmax.f32 %v4331, 0.0
        %v4345 = vmax.f32 %v4332, 0.0
        %v4346 = vmax.f32 %v4333, 0.0
        %v4347 = vmax.f32 %v4334, 0.0
        %v4348 = vmax.f32 %v4335, 0.0
        %v4349 = vmax.f32 %v4336, 0.0
        %4350 = vst [vmem:[#allocation6] sm:$0xff] %v4337
        %4351 = vst [vmem:[#allocation6 + $0x8] sm:$0xff] %v4338
        %4352 = vst [vmem:[#allocation6 + $0x10] sm:$0xff] %v4339
        %4353 = vst [vmem:[#allocation6 + $0x18] sm:$0xff] %v4340
        %4354 = vst [vmem:[#allocation6 + $0x20] sm:$0xff] %v4341
        %4355 = vst [vmem:[#allocation6 + $0x28] sm:$0xff] %v4342
        %4356 = vst [vmem:[#allocation6 + $0x30] sm:$0xff] %v4343
        %4357 = vst [vmem:[#allocation6 + $0x38] sm:$0xff] %v4344
        %4358 = vst [vmem:[#allocation6 + $0x40] sm:$0xff] %v4345
        %4359 = vst [vmem:[#allocation6 + $0x48] sm:$0xff] %v4346
        %4360 = vst [vmem:[#allocation6 + $0x50] sm:$0xff] %v4347
        %4361 = vst [vmem:[#allocation6 + $0x58] sm:$0xff] %v4348
        %4362 = vst [vmem:[#allocation6 + $0x60] sm:$0xff] %v4349
        %v4363 = vld [vmem:[#allocation6] sm:$0x1]
        %v4364 = vld [vmem:[#allocation6 + $0x1] sm:$0x1]
        %v4365 = vld [vmem:[#allocation6 + $0x10] sm:$0x1]
        %v4366 = vld [vmem:[#allocation6 + $0x11] sm:$0x1]
        %v4367 = vmax.f32 %v4363, %v4364
        %v4368 = vmax.f32 %v4365, %v4366
        %v4369 = vmax.f32 %v4367, %v4368
        %v4370 = vld [vmem:[%s10] sm:$0xff]
        %v4371 = vld [vmem:[%s10 + $0x8] sm:$0xff]
        %v4372 = vld [vmem:[%s10 + $0x10] sm:$0xff]
        %v4373 = vld [vmem:[%s10 + $0x18] sm:$0xff]
        %v4374 = vld [vmem:[%s10 + $0x20] sm:$0xff]
        %v4375 = vld [vmem:[%s10 + $0x28] sm:$0xff]
        %v4376 = vld [vmem:[%s10 + $0x30] sm:$0xff]
        %v4377 = vld [vmem:[%s10 + $0x38] sm:$0xff]
        %v4378 = vld [vmem:[%s10 + $0x40] sm:$0xff]
        %v4379 = vld [vmem:[%s10 + $0x48] sm:$0xff]
        %v4380 = vld [vmem:[%s10 + $0x50] sm:$0xff]
        %v4381 = vld [vmem:[%s10 + $0x58] sm:$0xff]
        %v4382 = vld [vmem:[%s10 + $0x60] sm:$0xff]
        %v4383 = vld [vmem:[%s10 + $0x68] sm:$0xff]
        %v4384 = vld [vmem:[%s10 + $0x70] sm:$0xff]
        %v4385 = vld [vmem:[%s10 + $0x78] sm:$0xff]
        %v4386 = vpack.c.bf16 %v4369, %v4369
        %v4387 = vld [vmem:[#allocation6 + $0x2] sm:$0x1]
        %v4388 = vld [vmem:[#allocation6 + $0x3] sm:$0x1]
        %v4389 = vld [vmem:[#allocation6 + $0x12] sm:$0x1]
        %v4390 = vld [vmem:[#allocation6 + $0x13] sm:$0x1]
        %v4391 = vmax.f32 %v4387, %v4388
        %v4392 = vmax.f32 %v4389, %v4390
        %v4393 = vmax.f32 %v4391, %v4392
        %v4394 = vld [vmem:[%s10 + $0x80] sm:$0xff]
        %v4395 = vld [vmem:[%s10 + $0x88] sm:$0xff]
        %v4396 = vld [vmem:[%s10 + $0x90] sm:$0xff]
        %v4397 = vld [vmem:[%s10 + $0x98] sm:$0xff]
        %v4398 = vld [vmem:[%s10 + $0xa0] sm:$0xff]
        %v4399 = vld [vmem:[%s10 + $0xa8] sm:$0xff]
        %v4400 = vld [vmem:[%s10 + $0xb0] sm:$0xff]
        %v4401 = vld [vmem:[%s10 + $0xb8] sm:$0xff]
        %v4402 = vld [vmem:[%s10 + $0xc0] sm:$0xff]
        %v4403 = vld [vmem:[%s10 + $0xc8] sm:$0xff]
        %v4404 = vld [vmem:[%s10 + $0xd0] sm:$0xff]
        %v4405 = vld [vmem:[%s10 + $0xd8] sm:$0xff]
        %v4406 = vld [vmem:[%s10 + $0xe0] sm:$0xff]
        %v4407 = vld [vmem:[%s10 + $0xe8] sm:$0xff]
        %v4408 = vld [vmem:[%s10 + $0xf0] sm:$0xff]
        %v4409 = vld [vmem:[%s10 + $0xf8] sm:$0xff]
        %v4410 = vpack.c.bf16 %v4393, %v4393
        %v4427 = vunpack.c.l.b16 %v4394
        %v4428 = vunpack.c.h.b16 %v4394
        %v4429 = vunpack.c.l.b16 %v4395
        %v4430 = vunpack.c.h.b16 %v4395
        %v4431 = vunpack.c.l.b16 %v4396
        %v4432 = vunpack.c.h.b16 %v4396
        %v4433 = vunpack.c.l.b16 %v4397
        %v4434 = vunpack.c.h.b16 %v4397
        %v4435 = vunpack.c.l.b16 %v4398
        %v4436 = vunpack.c.h.b16 %v4398
        %v4437 = vunpack.c.l.b16 %v4399
        %v4438 = vunpack.c.h.b16 %v4399
        %v4439 = vunpack.c.l.b16 %v4400
        %v4440 = vunpack.c.h.b16 %v4400
        %v4441 = vunpack.c.l.b16 %v4401
        %v4442 = vunpack.c.h.b16 %v4401
        %v4443 = vunpack.c.l.b16 %v4402
        %v4444 = vunpack.c.h.b16 %v4402
        %v4445 = vunpack.c.l.b16 %v4403
        %v4446 = vunpack.c.h.b16 %v4403
        %v4447 = vunpack.c.l.b16 %v4404
        %v4448 = vunpack.c.h.b16 %v4404
        %v4449 = vunpack.c.l.b16 %v4405
        %v4450 = vunpack.c.h.b16 %v4405
        %v4451 = vunpack.c.l.b16 %v4406
        %v4452 = vunpack.c.h.b16 %v4406
        %v4453 = vunpack.c.l.b16 %v4407
        %v4454 = vunpack.c.h.b16 %v4407
        %v4455 = vunpack.c.l.b16 %v4408
        %v4456 = vunpack.c.h.b16 %v4408
        %v4457 = vunpack.c.l.b16 %v4409
        %v4458 = vunpack.c.h.b16 %v4409
        %v4459 = vpack.c.b16 %v4429, %v4427
        %v4460 = vpack.c.b16 %v4430, %v4428
        %v4461 = vpack.c.b16 %v4433, %v4431
        %v4462 = vpack.c.b16 %v4434, %v4432
        %v4463 = vpack.c.b16 %v4437, %v4435
        %v4464 = vpack.c.b16 %v4438, %v4436
        %v4465 = vpack.c.b16 %v4441, %v4439
        %v4466 = vpack.c.b16 %v4442, %v4440
        %v4467 = vpack.c.b16 %v4445, %v4443
        %v4468 = vpack.c.b16 %v4446, %v4444
        %v4469 = vpack.c.b16 %v4449, %v4447
        %v4470 = vpack.c.b16 %v4450, %v4448
        %v4471 = vpack.c.b16 %v4453, %v4451
        %v4472 = vpack.c.b16 %v4454, %v4452
        %v4473 = vpack.c.b16 %v4457, %v4455
        %v4474 = vpack.c.b16 %v4458, %v4456
        %4491 = vmatprep.subr.bf16.mxu0 %v4460
        %4492 = vmatpush1.bf16.msra.mxu0 %v4459
        %4493 = vmatprep.subr.bf16.mxu0 %v4462
        %4494 = vmatpush1.bf16.msra.mxu0 %v4461
        %4495 = vmatprep.subr.bf16.mxu0 %v4464
        %4496 = vmatpush1.bf16.msra.mxu0 %v4463
        %4497 = vmatprep.subr.bf16.mxu0 %v4466
        %4498 = vmatpush1.bf16.msra.mxu0 %v4465
        %4499 = vmatprep.subr.bf16.mxu0 %v4468
        %4500 = vmatpush1.bf16.msra.mxu0 %v4467
        %4501 = vmatprep.subr.bf16.mxu0 %v4470
        %4502 = vmatpush1.bf16.msra.mxu0 %v4469
        %4503 = vmatprep.subr.bf16.mxu0 %v4472
        %4504 = vmatpush1.bf16.msra.mxu0 %v4471
        %4505 = vmatprep.subr.bf16.mxu0 %v4474
        %4506 = vmatpush1.bf16.msra.mxu0 %v4473
        %4507 = vmatprep.subr.bf16.mxu0 0
        %4508 = vmatpush1.bf16.msra.mxu0 0
        %4509 = vmatprep.subr.bf16.mxu0 0
        %4510 = vmatpush1.bf16.msra.mxu0 0
        %4511 = vmatprep.subr.bf16.mxu0 0
        %4512 = vmatpush1.bf16.msra.mxu0 0
        %4513 = vmatprep.subr.bf16.mxu0 0
        %4514 = vmatpush1.bf16.msra.mxu0 0
        %4515 = vmatprep.subr.bf16.mxu0 0
        %4516 = vmatpush1.bf16.msra.mxu0 0
        %4517 = vmatprep.subr.bf16.mxu0 0
        %4518 = vmatpush1.bf16.msra.mxu0 0
        %4519 = vmatprep.subr.bf16.mxu0 0
        %4520 = vmatpush1.bf16.msra.mxu0 0
        %4521 = vmatprep.subr.bf16.mxu0 0
        %4522 = vmatpush1.bf16.msra.mxu0 0
        %4523 = vmatprep.mubr.bf16.mxu0 0
        %4524 = vmatmul.mubr.bf16.gmra.mrb[0].mxu0 %v4410
        %v4525 = vpop.f32.mrb[0].mxu0
        %v4526 = vadd.f32 0.0, %v4525
        %v4527 = vpop.f32.mrb[0].mxu0
        %v4528 = vadd.f32 0.0, %v4527
        %v4529 = vpop.f32.mrb[0].mxu0
        %v4530 = vpop.f32.mrb[0].mxu0
        %4531 = vdwg.mxu0
        %v4548 = vunpack.c.l.b16 %v4370
        %v4549 = vunpack.c.h.b16 %v4370
        %v4550 = vunpack.c.l.b16 %v4371
        %v4551 = vunpack.c.h.b16 %v4371
        %v4552 = vunpack.c.l.b16 %v4372
        %v4553 = vunpack.c.h.b16 %v4372
        %v4554 = vunpack.c.l.b16 %v4373
        %v4555 = vunpack.c.h.b16 %v4373
        %v4556 = vunpack.c.l.b16 %v4374
        %v4557 = vunpack.c.h.b16 %v4374
        %v4558 = vunpack.c.l.b16 %v4375
        %v4559 = vunpack.c.h.b16 %v4375
        %v4560 = vunpack.c.l.b16 %v4376
        %v4561 = vunpack.c.h.b16 %v4376
        %v4562 = vunpack.c.l.b16 %v4377
        %v4563 = vunpack.c.h.b16 %v4377
        %v4564 = vunpack.c.l.b16 %v4378
        %v4565 = vunpack.c.h.b16 %v4378
        %v4566 = vunpack.c.l.b16 %v4379
        %v4567 = vunpack.c.h.b16 %v4379
        %v4568 = vunpack.c.l.b16 %v4380
        %v4569 = vunpack.c.h.b16 %v4380
        %v4570 = vunpack.c.l.b16 %v4381
        %v4571 = vunpack.c.h.b16 %v4381
        %v4572 = vunpack.c.l.b16 %v4382
        %v4573 = vunpack.c.h.b16 %v4382
        %v4574 = vunpack.c.l.b16 %v4383
        %v4575 = vunpack.c.h.b16 %v4383
        %v4576 = vunpack.c.l.b16 %v4384
        %v4577 = vunpack.c.h.b16 %v4384
        %v4578 = vunpack.c.l.b16 %v4385
        %v4579 = vunpack.c.h.b16 %v4385
        %v4580 = vpack.c.b16 %v4550, %v4548
        %v4581 = vpack.c.b16 %v4551, %v4549
        %v4582 = vpack.c.b16 %v4554, %v4552
        %v4583 = vpack.c.b16 %v4555, %v4553
        %v4584 = vpack.c.b16 %v4558, %v4556
        %v4585 = vpack.c.b16 %v4559, %v4557
        %v4586 = vpack.c.b16 %v4562, %v4560
        %v4587 = vpack.c.b16 %v4563, %v4561
        %v4588 = vpack.c.b16 %v4566, %v4564
        %v4589 = vpack.c.b16 %v4567, %v4565
        %v4590 = vpack.c.b16 %v4570, %v4568
        %v4591 = vpack.c.b16 %v4571, %v4569
        %v4592 = vpack.c.b16 %v4574, %v4572
        %v4593 = vpack.c.b16 %v4575, %v4573
        %v4594 = vpack.c.b16 %v4578, %v4576
        %v4595 = vpack.c.b16 %v4579, %v4577
        %4612 = vmatprep.subr.bf16.mxu0 %v4581
        %4613 = vmatpush1.bf16.msra.mxu0 %v4580
        %4614 = vmatprep.subr.bf16.mxu0 %v4583
        %4615 = vmatpush1.bf16.msra.mxu0 %v4582
        %4616 = vmatprep.subr.bf16.mxu0 %v4585
        %4617 = vmatpush1.bf16.msra.mxu0 %v4584
        %4618 = vmatprep.subr.bf16.mxu0 %v4587
        %4619 = vmatpush1.bf16.msra.mxu0 %v4586
        %4620 = vmatprep.subr.bf16.mxu0 %v4589
        %4621 = vmatpush1.bf16.msra.mxu0 %v4588
        %4622 = vmatprep.subr.bf16.mxu0 %v4591
        %4623 = vmatpush1.bf16.msra.mxu0 %v4590
        %4624 = vmatprep.subr.bf16.mxu0 %v4593
        %4625 = vmatpush1.bf16.msra.mxu0 %v4592
        %4626 = vmatprep.subr.bf16.mxu0 %v4595
        %4627 = vmatpush1.bf16.msra.mxu0 %v4594
        %4628 = vmatprep.subr.bf16.mxu0 0
        %4629 = vmatpush1.bf16.msra.mxu0 0
        %4630 = vmatprep.subr.bf16.mxu0 0
        %4631 = vmatpush1.bf16.msra.mxu0 0
        %4632 = vmatprep.subr.bf16.mxu0 0
        %4633 = vmatpush1.bf16.msra.mxu0 0
        %4634 = vmatprep.subr.bf16.mxu0 0
        %4635 = vmatpush1.bf16.msra.mxu0 0
        %4636 = vmatprep.subr.bf16.mxu0 0
        %4637 = vmatpush1.bf16.msra.mxu0 0
        %4638 = vmatprep.subr.bf16.mxu0 0
        %4639 = vmatpush1.bf16.msra.mxu0 0
        %4640 = vmatprep.subr.bf16.mxu0 0
        %4641 = vmatpush1.bf16.msra.mxu0 0
        %4642 = vmatprep.subr.bf16.mxu0 0
        %4643 = vmatpush1.bf16.msra.mxu0 0
        %4644 = vmatprep.mubr.bf16.mxu0 0
        %4645 = vmatmul.mubr.bf16.gmra.mrb[0].mxu0 %v4386
        %v4646 = vpop.f32.mrb[0].mxu0
        %v4647 = vadd.f32 %v4526, %v4646
        %v4648 = vpop.f32.mrb[0].mxu0
        %v4649 = vadd.f32 %v4528, %v4648
        %v4650 = vpop.f32.mrb[0].mxu0
        %v4651 = vpop.f32.mrb[0].mxu0
        %4652 = vdwg.mxu0
        %v4653 = vld [vmem:[#allocation6 + $0x4] sm:$0x1]
        %v4654 = vld [vmem:[#allocation6 + $0x5] sm:$0x1]
        %v4655 = vld [vmem:[#allocation6 + $0x14] sm:$0x1]
        %v4656 = vld [vmem:[#allocation6 + $0x15] sm:$0x1]
        %v4657 = vmax.f32 %v4653, %v4654
        %v4658 = vmax.f32 %v4655, %v4656
        %v4659 = vmax.f32 %v4657, %v4658
        %v4660 = vld [vmem:[%s10 + $0x100] sm:$0xff]
        %v4661 = vld [vmem:[%s10 + $0x108] sm:$0xff]
        %v4662 = vld [vmem:[%s10 + $0x110] sm:$0xff]
        %v4663 = vld [vmem:[%s10 + $0x118] sm:$0xff]
        %v4664 = vld [vmem:[%s10 + $0x120] sm:$0xff]
        %v4665 = vld [vmem:[%s10 + $0x128] sm:$0xff]
        %v4666 = vld [vmem:[%s10 + $0x130] sm:$0xff]
        %v4667 = vld [vmem:[%s10 + $0x138] sm:$0xff]
        %v4668 = vld [vmem:[%s10 + $0x140] sm:$0xff]
        %v4669 = vld [vmem:[%s10 + $0x148] sm:$0xff]
        %v4670 = vld [vmem:[%s10 + $0x150] sm:$0xff]
        %v4671 = vld [vmem:[%s10 + $0x158] sm:$0xff]
        %v4672 = vld [vmem:[%s10 + $0x160] sm:$0xff]
        %v4673 = vld [vmem:[%s10 + $0x168] sm:$0xff]
        %v4674 = vld [vmem:[%s10 + $0x170] sm:$0xff]
        %v4675 = vld [vmem:[%s10 + $0x178] sm:$0xff]
        %v4676 = vpack.c.bf16 %v4659, %v4659
        %v4693 = vunpack.c.l.b16 %v4660
        %v4694 = vunpack.c.h.b16 %v4660
        %v4695 = vunpack.c.l.b16 %v4661
        %v4696 = vunpack.c.h.b16 %v4661
        %v4697 = vunpack.c.l.b16 %v4662
        %v4698 = vunpack.c.h.b16 %v4662
        %v4699 = vunpack.c.l.b16 %v4663
        %v4700 = vunpack.c.h.b16 %v4663
        %v4701 = vunpack.c.l.b16 %v4664
        %v4702 = vunpack.c.h.b16 %v4664
        %v4703 = vunpack.c.l.b16 %v4665
        %v4704 = vunpack.c.h.b16 %v4665
        %v4705 = vunpack.c.l.b16 %v4666
        %v4706 = vunpack.c.h.b16 %v4666
        %v4707 = vunpack.c.l.b16 %v4667
        %v4708 = vunpack.c.h.b16 %v4667
        %v4709 = vunpack.c.l.b16 %v4668
        %v4710 = vunpack.c.h.b16 %v4668
        %v4711 = vunpack.c.l.b16 %v4669
        %v4712 = vunpack.c.h.b16 %v4669
        %v4713 = vunpack.c.l.b16 %v4670
        %v4714 = vunpack.c.h.b16 %v4670
        %v4715 = vunpack.c.l.b16 %v4671
        %v4716 = vunpack.c.h.b16 %v4671
        %v4717 = vunpack.c.l.b16 %v4672
        %v4718 = vunpack.c.h.b16 %v4672
        %v4719 = vunpack.c.l.b16 %v4673
        %v4720 = vunpack.c.h.b16 %v4673
        %v4721 = vunpack.c.l.b16 %v4674
        %v4722 = vunpack.c.h.b16 %v4674
        %v4723 = vunpack.c.l.b16 %v4675
        %v4724 = vunpack.c.h.b16 %v4675
        %v4725 = vpack.c.b16 %v4695, %v4693
        %v4726 = vpack.c.b16 %v4696, %v4694
        %v4727 = vpack.c.b16 %v4699, %v4697
        %v4728 = vpack.c.b16 %v4700, %v4698
        %v4729 = vpack.c.b16 %v4703, %v4701
        %v4730 = vpack.c.b16 %v4704, %v4702
        %v4731 = vpack.c.b16 %v4707, %v4705
        %v4732 = vpack.c.b16 %v4708, %v4706
        %v4733 = vpack.c.b16 %v4711, %v4709
        %v4734 = vpack.c.b16 %v4712, %v4710
        %v4735 = vpack.c.b16 %v4715, %v4713
        %v4736 = vpack.c.b16 %v4716, %v4714
        %v4737 = vpack.c.b16 %v4719, %v4717
        %v4738 = vpack.c.b16 %v4720, %v4718
        %v4739 = vpack.c.b16 %v4723, %v4721
        %v4740 = vpack.c.b16 %v4724, %v4722
        %4757 = vmatprep.subr.bf16.mxu0 %v4726
        %4758 = vmatpush1.bf16.msra.mxu0 %v4725
        %4759 = vmatprep.subr.bf16.mxu0 %v4728
        %4760 = vmatpush1.bf16.msra.mxu0 %v4727
        %4761 = vmatprep.subr.bf16.mxu0 %v4730
        %4762 = vmatpush1.bf16.msra.mxu0 %v4729
        %4763 = vmatprep.subr.bf16.mxu0 %v4732
        %4764 = vmatpush1.bf16.msra.mxu0 %v4731
        %4765 = vmatprep.subr.bf16.mxu0 %v4734
        %4766 = vmatpush1.bf16.msra.mxu0 %v4733
        %4767 = vmatprep.subr.bf16.mxu0 %v4736
        %4768 = vmatpush1.bf16.msra.mxu0 %v4735
        %4769 = vmatprep.subr.bf16.mxu0 %v4738
        %4770 = vmatpush1.bf16.msra.mxu0 %v4737
        %4771 = vmatprep.subr.bf16.mxu0 %v4740
        %4772 = vmatpush1.bf16.msra.mxu0 %v4739
        %4773 = vmatprep.subr.bf16.mxu0 0
        %4774 = vmatpush1.bf16.msra.mxu0 0
        %4775 = vmatprep.subr.bf16.mxu0 0
        %4776 = vmatpush1.bf16.msra.mxu0 0
        %4777 = vmatprep.subr.bf16.mxu0 0
        %4778 = vmatpush1.bf16.msra.mxu0 0
        %4779 = vmatprep.subr.bf16.mxu0 0
        %4780 = vmatpush1.bf16.msra.mxu0 0
        %4781 = vmatprep.subr.bf16.mxu0 0
        %4782 = vmatpush1.bf16.msra.mxu0 0
        %4783 = vmatprep.subr.bf16.mxu0 0
        %4784 = vmatpush1.bf16.msra.mxu0 0
        %4785 = vmatprep.subr.bf16.mxu0 0
        %4786 = vmatpush1.bf16.msra.mxu0 0
        %4787 = vmatprep.subr.bf16.mxu0 0
        %4788 = vmatpush1.bf16.msra.mxu0 0
        %4789 = vmatprep.mubr.bf16.mxu0 0
        %4790 = vmatmul.mubr.bf16.gmra.mrb[0].mxu0 %v4676
        %v4791 = vpop.f32.mrb[0].mxu0
        %v4792 = vadd.f32 0.0, %v4791
        %v4793 = vpop.f32.mrb[0].mxu0
        %v4794 = vadd.f32 0.0, %v4793
        %v4795 = vpop.f32.mrb[0].mxu0
        %v4796 = vpop.f32.mrb[0].mxu0
        %4797 = vdwg.mxu0
        %v4798 = vadd.f32 %v4647, %v4792
        %v4799 = vadd.f32 %v4649, %v4794
        %v4800 = vld [vmem:[#allocation6 + $0x20] sm:$0x1]
        %v4801 = vld [vmem:[#allocation6 + $0x21] sm:$0x1]
        %v4802 = vld [vmem:[#allocation6 + $0x30] sm:$0x1]
        %v4803 = vld [vmem:[#allocation6 + $0x31] sm:$0x1]
        %v4804 = vmax.f32 %v4800, %v4801
        %v4805 = vmax.f32 %v4802, %v4803
        %v4806 = vmax.f32 %v4804, %v4805
        %v4807 = vld [vmem:[%s10 + $0x180] sm:$0xff]
        %v4808 = vld [vmem:[%s10 + $0x188] sm:$0xff]
        %v4809 = vld [vmem:[%s10 + $0x190] sm:$0xff]
        %v4810 = vld [vmem:[%s10 + $0x198] sm:$0xff]
        %v4811 = vld [vmem:[%s10 + $0x1a0] sm:$0xff]
        %v4812 = vld [vmem:[%s10 + $0x1a8] sm:$0xff]
        %v4813 = vld [vmem:[%s10 + $0x1b0] sm:$0xff]
        %v4814 = vld [vmem:[%s10 + $0x1b8] sm:$0xff]
        %v4815 = vld [vmem:[%s10 + $0x1c0] sm:$0xff]
        %v4816 = vld [vmem:[%s10 + $0x1c8] sm:$0xff]
        %v4817 = vld [vmem:[%s10 + $0x1d0] sm:$0xff]
        %v4818 = vld [vmem:[%s10 + $0x1d8] sm:$0xff]
        %v4819 = vld [vmem:[%s10 + $0x1e0] sm:$0xff]
        %v4820 = vld [vmem:[%s10 + $0x1e8] sm:$0xff]
        %v4821 = vld [vmem:[%s10 + $0x1f0] sm:$0xff]
        %v4822 = vld [vmem:[%s10 + $0x1f8] sm:$0xff]
        %v4823 = vpack.c.bf16 %v4806, %v4806
        %v4840 = vunpack.c.l.b16 %v4807
        %v4841 = vunpack.c.h.b16 %v4807
        %v4842 = vunpack.c.l.b16 %v4808
        %v4843 = vunpack.c.h.b16 %v4808
        %v4844 = vunpack.c.l.b16 %v4809
        %v4845 = vunpack.c.h.b16 %v4809
        %v4846 = vunpack.c.l.b16 %v4810
        %v4847 = vunpack.c.h.b16 %v4810
        %v4848 = vunpack.c.l.b16 %v4811
        %v4849 = vunpack.c.h.b16 %v4811
        %v4850 = vunpack.c.l.b16 %v4812
        %v4851 = vunpack.c.h.b16 %v4812
        %v4852 = vunpack.c.l.b16 %v4813
        %v4853 = vunpack.c.h.b16 %v4813
        %v4854 = vunpack.c.l.b16 %v4814
        %v4855 = vunpack.c.h.b16 %v4814
        %v4856 = vunpack.c.l.b16 %v4815
        %v4857 = vunpack.c.h.b16 %v4815
        %v4858 = vunpack.c.l.b16 %v4816
        %v4859 = vunpack.c.h.b16 %v4816
        %v4860 = vunpack.c.l.b16 %v4817
        %v4861 = vunpack.c.h.b16 %v4817
        %v4862 = vunpack.c.l.b16 %v4818
        %v4863 = vunpack.c.h.b16 %v4818
        %v4864 = vunpack.c.l.b16 %v4819
        %v4865 = vunpack.c.h.b16 %v4819
        %v4866 = vunpack.c.l.b16 %v4820
        %v4867 = vunpack.c.h.b16 %v4820
        %v4868 = vunpack.c.l.b16 %v4821
        %v4869 = vunpack.c.h.b16 %v4821
        %v4870 = vunpack.c.l.b16 %v4822
        %v4871 = vunpack.c.h.b16 %v4822
        %v4872 = vpack.c.b16 %v4842, %v4840
        %v4873 = vpack.c.b16 %v4843, %v4841
        %v4874 = vpack.c.b16 %v4846, %v4844
        %v4875 = vpack.c.b16 %v4847, %v4845
        %v4876 = vpack.c.b16 %v4850, %v4848
        %v4877 = vpack.c.b16 %v4851, %v4849
        %v4878 = vpack.c.b16 %v4854, %v4852
        %v4879 = vpack.c.b16 %v4855, %v4853
        %v4880 = vpack.c.b16 %v4858, %v4856
        %v4881 = vpack.c.b16 %v4859, %v4857
        %v4882 = vpack.c.b16 %v4862, %v4860
        %v4883 = vpack.c.b16 %v4863, %v4861
        %v4884 = vpack.c.b16 %v4866, %v4864
        %v4885 = vpack.c.b16 %v4867, %v4865
        %v4886 = vpack.c.b16 %v4870, %v4868
        %v4887 = vpack.c.b16 %v4871, %v4869
        %4904 = vmatprep.subr.bf16.mxu0 %v4873
        %4905 = vmatpush1.bf16.msra.mxu0 %v4872
        %4906 = vmatprep.subr.bf16.mxu0 %v4875
        %4907 = vmatpush1.bf16.msra.mxu0 %v4874
        %4908 = vmatprep.subr.bf16.mxu0 %v4877
        %4909 = vmatpush1.bf16.msra.mxu0 %v4876
        %4910 = vmatprep.subr.bf16.mxu0 %v4879
        %4911 = vmatpush1.bf16.msra.mxu0 %v4878
        %4912 = vmatprep.subr.bf16.mxu0 %v4881
        %4913 = vmatpush1.bf16.msra.mxu0 %v4880
        %4914 = vmatprep.subr.bf16.mxu0 %v4883
        %4915 = vmatpush1.bf16.msra.mxu0 %v4882
        %4916 = vmatprep.subr.bf16.mxu0 %v4885
        %4917 = vmatpush1.bf16.msra.mxu0 %v4884
        %4918 = vmatprep.subr.bf16.mxu0 %v4887
        %4919 = vmatpush1.bf16.msra.mxu0 %v4886
        %4920 = vmatprep.subr.bf16.mxu0 0
        %4921 = vmatpush1.bf16.msra.mxu0 0
        %4922 = vmatprep.subr.bf16.mxu0 0
        %4923 = vmatpush1.bf16.msra.mxu0 0
        %4924 = vmatprep.subr.bf16.mxu0 0
        %4925 = vmatpush1.bf16.msra.mxu0 0
        %4926 = vmatprep.subr.bf16.mxu0 0
        %4927 = vmatpush1.bf16.msra.mxu0 0
        %4928 = vmatprep.subr.bf16.mxu0 0
        %4929 = vmatpush1.bf16.msra.mxu0 0
        %4930 = vmatprep.subr.bf16.mxu0 0
        %4931 = vmatpush1.bf16.msra.mxu0 0
        %4932 = vmatprep.subr.bf16.mxu0 0
        %4933 = vmatpush1.bf16.msra.mxu0 0
        %4934 = vmatprep.subr.bf16.mxu0 0
        %4935 = vmatpush1.bf16.msra.mxu0 0
        %4936 = vmatprep.mubr.bf16.mxu0 0
        %4937 = vmatmul.mubr.bf16.gmra.mrb[0].mxu0 %v4823
        %v4938 = vpop.f32.mrb[0].mxu0
        %v4939 = vadd.f32 0.0, %v4938
        %v4940 = vpop.f32.mrb[0].mxu0
        %v4941 = vadd.f32 0.0, %v4940
        %v4942 = vpop.f32.mrb[0].mxu0
        %v4943 = vpop.f32.mrb[0].mxu0
        %4944 = vdwg.mxu0
        %v4945 = vadd.f32 %v4798, %v4939
        %v4946 = vadd.f32 %v4799, %v4941
        %v4947 = vld [vmem:[#allocation6 + $0x22] sm:$0x1]
        %v4948 = vld [vmem:[#allocation6 + $0x23] sm:$0x1]
        %v4949 = vld [vmem:[#allocation6 + $0x32] sm:$0x1]
        %v4950 = vld [vmem:[#allocation6 + $0x33] sm:$0x1]
        %v4951 = vmax.f32 %v4947, %v4948
        %v4952 = vmax.f32 %v4949, %v4950
        %v4953 = vmax.f32 %v4951, %v4952
        %v4954 = vld [vmem:[%s10 + $0x200] sm:$0xff]
        %v4955 = vld [vmem:[%s10 + $0x208] sm:$0xff]
        %v4956 = vld [vmem:[%s10 + $0x210] sm:$0xff]
        %v4957 = vld [vmem:[%s10 + $0x218] sm:$0xff]
        %v4958 = vld [vmem:[%s10 + $0x220] sm:$0xff]
        %v4959 = vld [vmem:[%s10 + $0x228] sm:$0xff]
        %v4960 = vld [vmem:[%s10 + $0x230] sm:$0xff]
        %v4961 = vld [vmem:[%s10 + $0x238] sm:$0xff]
        %v4962 = vld [vmem:[%s10 + $0x240] sm:$0xff]
        %v4963 = vld [vmem:[%s10 + $0x248] sm:$0xff]
        %v4964 = vld [vmem:[%s10 + $0x250] sm:$0xff]
        %v4965 = vld [vmem:[%s10 + $0x258] sm:$0xff]
        %v4966 = vld [vmem:[%s10 + $0x260] sm:$0xff]
        %v4967 = vld [vmem:[%s10 + $0x268] sm:$0xff]
        %v4968 = vld [vmem:[%s10 + $0x270] sm:$0xff]
        %v4969 = vld [vmem:[%s10 + $0x278] sm:$0xff]
        %v4970 = vpack.c.bf16 %v4953, %v4953
        %v4987 = vunpack.c.l.b16 %v4954
        %v4988 = vunpack.c.h.b16 %v4954
        %v4989 = vunpack.c.l.b16 %v4955
        %v4990 = vunpack.c.h.b16 %v4955
        %v4991 = vunpack.c.l.b16 %v4956
        %v4992 = vunpack.c.h.b16 %v4956
        %v4993 = vunpack.c.l.b16 %v4957
        %v4994 = vunpack.c.h.b16 %v4957
        %v4995 = vunpack.c.l.b16 %v4958
        %v4996 = vunpack.c.h.b16 %v4958
        %v4997 = vunpack.c.l.b16 %v4959
        %v4998 = vunpack.c.h.b16 %v4959
        %v4999 = vunpack.c.l.b16 %v4960
        %v5000 = vunpack.c.h.b16 %v4960
        %v5001 = vunpack.c.l.b16 %v4961
        %v5002 = vunpack.c.h.b16 %v4961
        %v5003 = vunpack.c.l.b16 %v4962
        %v5004 = vunpack.c.h.b16 %v4962
        %v5005 = vunpack.c.l.b16 %v4963
        %v5006 = vunpack.c.h.b16 %v4963
        %v5007 = vunpack.c.l.b16 %v4964
        %v5008 = vunpack.c.h.b16 %v4964
        %v5009 = vunpack.c.l.b16 %v4965
        %v5010 = vunpack.c.h.b16 %v4965
        %v5011 = vunpack.c.l.b16 %v4966
        %v5012 = vunpack.c.h.b16 %v4966
        %v5013 = vunpack.c.l.b16 %v4967
        %v5014 = vunpack.c.h.b16 %v4967
        %v5015 = vunpack.c.l.b16 %v4968
        %v5016 = vunpack.c.h.b16 %v4968
        %v5017 = vunpack.c.l.b16 %v4969
        %v5018 = vunpack.c.h.b16 %v4969
        %v5019 = vpack.c.b16 %v4989, %v4987
        %v5020 = vpack.c.b16 %v4990, %v4988
        %v5021 = vpack.c.b16 %v4993, %v4991
        %v5022 = vpack.c.b16 %v4994, %v4992
        %v5023 = vpack.c.b16 %v4997, %v4995
        %v5024 = vpack.c.b16 %v4998, %v4996
        %v5025 = vpack.c.b16 %v5001, %v4999
        %v5026 = vpack.c.b16 %v5002, %v5000
        %v5027 = vpack.c.b16 %v5005, %v5003
        %v5028 = vpack.c.b16 %v5006, %v5004
        %v5029 = vpack.c.b16 %v5009, %v5007
        %v5030 = vpack.c.b16 %v5010, %v5008
        %v5031 = vpack.c.b16 %v5013, %v5011
        %v5032 = vpack.c.b16 %v5014, %v5012
        %v5033 = vpack.c.b16 %v5017, %v5015
        %v5034 = vpack.c.b16 %v5018, %v5016
        %5051 = vmatprep.subr.bf16.mxu0 %v5020
        %5052 = vmatpush1.bf16.msra.mxu0 %v5019
        %5053 = vmatprep.subr.bf16.mxu0 %v5022
        %5054 = vmatpush1.bf16.msra.mxu0 %v5021
        %5055 = vmatprep.subr.bf16.mxu0 %v5024
        %5056 = vmatpush1.bf16.msra.mxu0 %v5023
        %5057 = vmatprep.subr.bf16.mxu0 %v5026
        %5058 = vmatpush1.bf16.msra.mxu0 %v5025
        %5059 = vmatprep.subr.bf16.mxu0 %v5028
        %5060 = vmatpush1.bf16.msra.mxu0 %v5027
        %5061 = vmatprep.subr.bf16.mxu0 %v5030
        %5062 = vmatpush1.bf16.msra.mxu0 %v5029
        %5063 = vmatprep.subr.bf16.mxu0 %v5032
        %5064 = vmatpush1.bf16.msra.mxu0 %v5031
        %5065 = vmatprep.subr.bf16.mxu0 %v5034
        %5066 = vmatpush1.bf16.msra.mxu0 %v5033
        %5067 = vmatprep.subr.bf16.mxu0 0
        %5068 = vmatpush1.bf16.msra.mxu0 0
        %5069 = vmatprep.subr.bf16.mxu0 0
        %5070 = vmatpush1.bf16.msra.mxu0 0
        %5071 = vmatprep.subr.bf16.mxu0 0
        %5072 = vmatpush1.bf16.msra.mxu0 0
        %5073 = vmatprep.subr.bf16.mxu0 0
        %5074 = vmatpush1.bf16.msra.mxu0 0
        %5075 = vmatprep.subr.bf16.mxu0 0
        %5076 = vmatpush1.bf16.msra.mxu0 0
        %5077 = vmatprep.subr.bf16.mxu0 0
        %5078 = vmatpush1.bf16.msra.mxu0 0
        %5079 = vmatprep.subr.bf16.mxu0 0
        %5080 = vmatpush1.bf16.msra.mxu0 0
        %5081 = vmatprep.subr.bf16.mxu0 0
        %5082 = vmatpush1.bf16.msra.mxu0 0
        %5083 = vmatprep.mubr.bf16.mxu0 0
        %5084 = vmatmul.mubr.bf16.gmra.mrb[0].mxu0 %v4970
        %v5085 = vpop.f32.mrb[0].mxu0
        %v5086 = vadd.f32 0.0, %v5085
        %v5087 = vpop.f32.mrb[0].mxu0
        %v5088 = vadd.f32 0.0, %v5087
        %v5089 = vpop.f32.mrb[0].mxu0
        %v5090 = vpop.f32.mrb[0].mxu0
        %5091 = vdwg.mxu0
        %v5092 = vadd.f32 %v4945, %v5086
        %v5093 = vadd.f32 %v4946, %v5088
        %v5094 = vld [vmem:[#allocation6 + $0x24] sm:$0x1]
        %v5095 = vld [vmem:[#allocation6 + $0x25] sm:$0x1]
        %v5096 = vld [vmem:[#allocation6 + $0x34] sm:$0x1]
        %v5097 = vld [vmem:[#allocation6 + $0x35] sm:$0x1]
        %v5098 = vmax.f32 %v5094, %v5095
        %v5099 = vmax.f32 %v5096, %v5097
        %v5100 = vmax.f32 %v5098, %v5099
        %v5101 = vld [vmem:[%s10 + $0x280] sm:$0xff]
        %v5102 = vld [vmem:[%s10 + $0x288] sm:$0xff]
        %v5103 = vld [vmem:[%s10 + $0x290] sm:$0xff]
        %v5104 = vld [vmem:[%s10 + $0x298] sm:$0xff]
        %v5105 = vld [vmem:[%s10 + $0x2a0] sm:$0xff]
        %v5106 = vld [vmem:[%s10 + $0x2a8] sm:$0xff]
        %v5107 = vld [vmem:[%s10 + $0x2b0] sm:$0xff]
        %v5108 = vld [vmem:[%s10 + $0x2b8] sm:$0xff]
        %v5109 = vld [vmem:[%s10 + $0x2c0] sm:$0xff]
        %v5110 = vld [vmem:[%s10 + $0x2c8] sm:$0xff]
        %v5111 = vld [vmem:[%s10 + $0x2d0] sm:$0xff]
        %v5112 = vld [vmem:[%s10 + $0x2d8] sm:$0xff]
        %v5113 = vld [vmem:[%s10 + $0x2e0] sm:$0xff]
        %v5114 = vld [vmem:[%s10 + $0x2e8] sm:$0xff]
        %v5115 = vld [vmem:[%s10 + $0x2f0] sm:$0xff]
        %v5116 = vld [vmem:[%s10 + $0x2f8] sm:$0xff]
        %v5117 = vpack.c.bf16 %v5100, %v5100
        %v5134 = vunpack.c.l.b16 %v5101
        %v5135 = vunpack.c.h.b16 %v5101
        %v5136 = vunpack.c.l.b16 %v5102
        %v5137 = vunpack.c.h.b16 %v5102
        %v5138 = vunpack.c.l.b16 %v5103
        %v5139 = vunpack.c.h.b16 %v5103
        %v5140 = vunpack.c.l.b16 %v5104
        %v5141 = vunpack.c.h.b16 %v5104
        %v5142 = vunpack.c.l.b16 %v5105
        %v5143 = vunpack.c.h.b16 %v5105
        %v5144 = vunpack.c.l.b16 %v5106
        %v5145 = vunpack.c.h.b16 %v5106
        %v5146 = vunpack.c.l.b16 %v5107
        %v5147 = vunpack.c.h.b16 %v5107
        %v5148 = vunpack.c.l.b16 %v5108
        %v5149 = vunpack.c.h.b16 %v5108
        %v5150 = vunpack.c.l.b16 %v5109
        %v5151 = vunpack.c.h.b16 %v5109
        %v5152 = vunpack.c.l.b16 %v5110
        %v5153 = vunpack.c.h.b16 %v5110
        %v5154 = vunpack.c.l.b16 %v5111
        %v5155 = vunpack.c.h.b16 %v5111
        %v5156 = vunpack.c.l.b16 %v5112
        %v5157 = vunpack.c.h.b16 %v5112
        %v5158 = vunpack.c.l.b16 %v5113
        %v5159 = vunpack.c.h.b16 %v5113
        %v5160 = vunpack.c.l.b16 %v5114
        %v5161 = vunpack.c.h.b16 %v5114
        %v5162 = vunpack.c.l.b16 %v5115
        %v5163 = vunpack.c.h.b16 %v5115
        %v5164 = vunpack.c.l.b16 %v5116
        %v5165 = vunpack.c.h.b16 %v5116
        %v5166 = vpack.c.b16 %v5136, %v5134
        %v5167 = vpack.c.b16 %v5137, %v5135
        %v5168 = vpack.c.b16 %v5140, %v5138
        %v5169 = vpack.c.b16 %v5141, %v5139
        %v5170 = vpack.c.b16 %v5144, %v5142
        %v5171 = vpack.c.b16 %v5145, %v5143
        %v5172 = vpack.c.b16 %v5148, %v5146
        %v5173 = vpack.c.b16 %v5149, %v5147
        %v5174 = vpack.c.b16 %v5152, %v5150
        %v5175 = vpack.c.b16 %v5153, %v5151
        %v5176 = vpack.c.b16 %v5156, %v5154
        %v5177 = vpack.c.b16 %v5157, %v5155
        %v5178 = vpack.c.b16 %v5160, %v5158
        %v5179 = vpack.c.b16 %v5161, %v5159
        %v5180 = vpack.c.b16 %v5164, %v5162
        %v5181 = vpack.c.b16 %v5165, %v5163
        %5198 = vmatprep.subr.bf16.mxu0 %v5167
        %5199 = vmatpush1.bf16.msra.mxu0 %v5166
        %5200 = vmatprep.subr.bf16.mxu0 %v5169
        %5201 = vmatpush1.bf16.msra.mxu0 %v5168
        %5202 = vmatprep.subr.bf16.mxu0 %v5171
        %5203 = vmatpush1.bf16.msra.mxu0 %v5170
        %5204 = vmatprep.subr.bf16.mxu0 %v5173
        %5205 = vmatpush1.bf16.msra.mxu0 %v5172
        %5206 = vmatprep.subr.bf16.mxu0 %v5175
        %5207 = vmatpush1.bf16.msra.mxu0 %v5174
        %5208 = vmatprep.subr.bf16.mxu0 %v5177
        %5209 = vmatpush1.bf16.msra.mxu0 %v5176
        %5210 = vmatprep.subr.bf16.mxu0 %v5179
        %5211 = vmatpush1.bf16.msra.mxu0 %v5178
        %5212 = vmatprep.subr.bf16.mxu0 %v5181
        %5213 = vmatpush1.bf16.msra.mxu0 %v5180
        %5214 = vmatprep.subr.bf16.mxu0 0
        %5215 = vmatpush1.bf16.msra.mxu0 0
        %5216 = vmatprep.subr.bf16.mxu0 0
        %5217 = vmatpush1.bf16.msra.mxu0 0
        %5218 = vmatprep.subr.bf16.mxu0 0
        %5219 = vmatpush1.bf16.msra.mxu0 0
        %5220 = vmatprep.subr.bf16.mxu0 0
        %5221 = vmatpush1.bf16.msra.mxu0 0
        %5222 = vmatprep.subr.bf16.mxu0 0
        %5223 = vmatpush1.bf16.msra.mxu0 0
        %5224 = vmatprep.subr.bf16.mxu0 0
        %5225 = vmatpush1.bf16.msra.mxu0 0
        %5226 = vmatprep.subr.bf16.mxu0 0
        %5227 = vmatpush1.bf16.msra.mxu0 0
        %5228 = vmatprep.subr.bf16.mxu0 0
        %5229 = vmatpush1.bf16.msra.mxu0 0
        %5230 = vmatprep.mubr.bf16.mxu0 0
        %5231 = vmatmul.mubr.bf16.gmra.mrb[0].mxu0 %v5117
        %v5232 = vpop.f32.mrb[0].mxu0
        %v5233 = vadd.f32 0.0, %v5232
        %v5234 = vpop.f32.mrb[0].mxu0
        %v5235 = vadd.f32 0.0, %v5234
        %v5236 = vpop.f32.mrb[0].mxu0
        %v5237 = vpop.f32.mrb[0].mxu0
        %5238 = vdwg.mxu0
        %v5239 = vadd.f32 %v5092, %v5233
        %v5240 = vadd.f32 %v5093, %v5235
        %v5241 = vld [vmem:[#allocation6 + $0x40] sm:$0x1]
        %v5242 = vld [vmem:[#allocation6 + $0x41] sm:$0x1]
        %v5243 = vld [vmem:[#allocation6 + $0x50] sm:$0x1]
        %v5244 = vld [vmem:[#allocation6 + $0x51] sm:$0x1]
        %v5245 = vmax.f32 %v5241, %v5242
        %v5246 = vmax.f32 %v5243, %v5244
        %v5247 = vmax.f32 %v5245, %v5246
        %v5248 = vld [vmem:[%s10 + $0x300] sm:$0xff]
        %v5249 = vld [vmem:[%s10 + $0x308] sm:$0xff]
        %v5250 = vld [vmem:[%s10 + $0x310] sm:$0xff]
        %v5251 = vld [vmem:[%s10 + $0x318] sm:$0xff]
        %v5252 = vld [vmem:[%s10 + $0x320] sm:$0xff]
        %v5253 = vld [vmem:[%s10 + $0x328] sm:$0xff]
        %v5254 = vld [vmem:[%s10 + $0x330] sm:$0xff]
        %v5255 = vld [vmem:[%s10 + $0x338] sm:$0xff]
        %v5256 = vld [vmem:[%s10 + $0x340] sm:$0xff]
        %v5257 = vld [vmem:[%s10 + $0x348] sm:$0xff]
        %v5258 = vld [vmem:[%s10 + $0x350] sm:$0xff]
        %v5259 = vld [vmem:[%s10 + $0x358] sm:$0xff]
        %v5260 = vld [vmem:[%s10 + $0x360] sm:$0xff]
        %v5261 = vld [vmem:[%s10 + $0x368] sm:$0xff]
        %v5262 = vld [vmem:[%s10 + $0x370] sm:$0xff]
        %v5263 = vld [vmem:[%s10 + $0x378] sm:$0xff]
        %v5264 = vpack.c.bf16 %v5247, %v5247
        %v5281 = vunpack.c.l.b16 %v5248
        %v5282 = vunpack.c.h.b16 %v5248
        %v5283 = vunpack.c.l.b16 %v5249
        %v5284 = vunpack.c.h.b16 %v5249
        %v5285 = vunpack.c.l.b16 %v5250
        %v5286 = vunpack.c.h.b16 %v5250
        %v5287 = vunpack.c.l.b16 %v5251
        %v5288 = vunpack.c.h.b16 %v5251
        %v5289 = vunpack.c.l.b16 %v5252
        %v5290 = vunpack.c.h.b16 %v5252
        %v5291 = vunpack.c.l.b16 %v5253
        %v5292 = vunpack.c.h.b16 %v5253
        %v5293 = vunpack.c.l.b16 %v5254
        %v5294 = vunpack.c.h.b16 %v5254
        %v5295 = vunpack.c.l.b16 %v5255
        %v5296 = vunpack.c.h.b16 %v5255
        %v5297 = vunpack.c.l.b16 %v5256
        %v5298 = vunpack.c.h.b16 %v5256
        %v5299 = vunpack.c.l.b16 %v5257
        %v5300 = vunpack.c.h.b16 %v5257
        %v5301 = vunpack.c.l.b16 %v5258
        %v5302 = vunpack.c.h.b16 %v5258
        %v5303 = vunpack.c.l.b16 %v5259
        %v5304 = vunpack.c.h.b16 %v5259
        %v5305 = vunpack.c.l.b16 %v5260
        %v5306 = vunpack.c.h.b16 %v5260
        %v5307 = vunpack.c.l.b16 %v5261
        %v5308 = vunpack.c.h.b16 %v5261
        %v5309 = vunpack.c.l.b16 %v5262
        %v5310 = vunpack.c.h.b16 %v5262
        %v5311 = vunpack.c.l.b16 %v5263
        %v5312 = vunpack.c.h.b16 %v5263
        %v5313 = vpack.c.b16 %v5283, %v5281
        %v5314 = vpack.c.b16 %v5284, %v5282
        %v5315 = vpack.c.b16 %v5287, %v5285
        %v5316 = vpack.c.b16 %v5288, %v5286
        %v5317 = vpack.c.b16 %v5291, %v5289
        %v5318 = vpack.c.b16 %v5292, %v5290
        %v5319 = vpack.c.b16 %v5295, %v5293
        %v5320 = vpack.c.b16 %v5296, %v5294
        %v5321 = vpack.c.b16 %v5299, %v5297
        %v5322 = vpack.c.b16 %v5300, %v5298
        %v5323 = vpack.c.b16 %v5303, %v5301
        %v5324 = vpack.c.b16 %v5304, %v5302
        %v5325 = vpack.c.b16 %v5307, %v5305
        %v5326 = vpack.c.b16 %v5308, %v5306
        %v5327 = vpack.c.b16 %v5311, %v5309
        %v5328 = vpack.c.b16 %v5312, %v5310
        %5345 = vmatprep.subr.bf16.mxu0 %v5314
        %5346 = vmatpush1.bf16.msra.mxu0 %v5313
        %5347 = vmatprep.subr.bf16.mxu0 %v5316
        %5348 = vmatpush1.bf16.msra.mxu0 %v5315
        %5349 = vmatprep.subr.bf16.mxu0 %v5318
        %5350 = vmatpush1.bf16.msra.mxu0 %v5317
        %5351 = vmatprep.subr.bf16.mxu0 %v5320
        %5352 = vmatpush1.bf16.msra.mxu0 %v5319
        %5353 = vmatprep.subr.bf16.mxu0 %v5322
        %5354 = vmatpush1.bf16.msra.mxu0 %v5321
        %5355 = vmatprep.subr.bf16.mxu0 %v5324
        %5356 = vmatpush1.bf16.msra.mxu0 %v5323
        %5357 = vmatprep.subr.bf16.mxu0 %v5326
        %5358 = vmatpush1.bf16.msra.mxu0 %v5325
        %5359 = vmatprep.subr.bf16.mxu0 %v5328
        %5360 = vmatpush1.bf16.msra.mxu0 %v5327
        %5361 = vmatprep.subr.bf16.mxu0 0
        %5362 = vmatpush1.bf16.msra.mxu0 0
        %5363 = vmatprep.subr.bf16.mxu0 0
        %5364 = vmatpush1.bf16.msra.mxu0 0
        %5365 = vmatprep.subr.bf16.mxu0 0
        %5366 = vmatpush1.bf16.msra.mxu0 0
        %5367 = vmatprep.subr.bf16.mxu0 0
        %5368 = vmatpush1.bf16.msra.mxu0 0
        %5369 = vmatprep.subr.bf16.mxu0 0
        %5370 = vmatpush1.bf16.msra.mxu0 0
        %5371 = vmatprep.subr.bf16.mxu0 0
        %5372 = vmatpush1.bf16.msra.mxu0 0
        %5373 = vmatprep.subr.bf16.mxu0 0
        %5374 = vmatpush1.bf16.msra.mxu0 0
        %5375 = vmatprep.subr.bf16.mxu0 0
        %5376 = vmatpush1.bf16.msra.mxu0 0
        %5377 = vmatprep.mubr.bf16.mxu0 0
        %5378 = vmatmul.mubr.bf16.gmra.mrb[0].mxu0 %v5264
        %v5379 = vpop.f32.mrb[0].mxu0
        %v5380 = vadd.f32 0.0, %v5379
        %v5381 = vpop.f32.mrb[0].mxu0
        %v5382 = vadd.f32 0.0, %v5381
        %v5383 = vpop.f32.mrb[0].mxu0
        %v5384 = vpop.f32.mrb[0].mxu0
        %5385 = vdwg.mxu0
        %v5386 = vadd.f32 %v5239, %v5380
        %v5387 = vadd.f32 %v5240, %v5382
        %v5388 = vld [vmem:[#allocation6 + $0x42] sm:$0x1]
        %v5389 = vld [vmem:[#allocation6 + $0x43] sm:$0x1]
        %v5390 = vld [vmem:[#allocation6 + $0x52] sm:$0x1]
        %v5391 = vld [vmem:[#allocation6 + $0x53] sm:$0x1]
        %v5392 = vmax.f32 %v5388, %v5389
        %v5393 = vmax.f32 %v5390, %v5391
        %v5394 = vmax.f32 %v5392, %v5393
        %v5395 = vld [vmem:[%s10 + $0x380] sm:$0xff]
        %v5396 = vld [vmem:[%s10 + $0x388] sm:$0xff]
        %v5397 = vld [vmem:[%s10 + $0x390] sm:$0xff]
        %v5398 = vld [vmem:[%s10 + $0x398] sm:$0xff]
        %v5399 = vld [vmem:[%s10 + $0x3a0] sm:$0xff]
        %v5400 = vld [vmem:[%s10 + $0x3a8] sm:$0xff]
        %v5401 = vld [vmem:[%s10 + $0x3b0] sm:$0xff]
        %v5402 = vld [vmem:[%s10 + $0x3b8] sm:$0xff]
        %v5403 = vld [vmem:[%s10 + $0x3c0] sm:$0xff]
        %v5404 = vld [vmem:[%s10 + $0x3c8] sm:$0xff]
        %v5405 = vld [vmem:[%s10 + $0x3d0] sm:$0xff]
        %v5406 = vld [vmem:[%s10 + $0x3d8] sm:$0xff]
        %v5407 = vld [vmem:[%s10 + $0x3e0] sm:$0xff]
        %v5408 = vld [vmem:[%s10 + $0x3e8] sm:$0xff]
        %v5409 = vld [vmem:[%s10 + $0x3f0] sm:$0xff]
        %v5410 = vld [vmem:[%s10 + $0x3f8] sm:$0xff]
        %v5411 = vpack.c.bf16 %v5394, %v5394
        %v5428 = vunpack.c.l.b16 %v5395
        %v5429 = vunpack.c.h.b16 %v5395
        %v5430 = vunpack.c.l.b16 %v5396
        %v5431 = vunpack.c.h.b16 %v5396
        %v5432 = vunpack.c.l.b16 %v5397
        %v5433 = vunpack.c.h.b16 %v5397
        %v5434 = vunpack.c.l.b16 %v5398
        %v5435 = vunpack.c.h.b16 %v5398
        %v5436 = vunpack.c.l.b16 %v5399
        %v5437 = vunpack.c.h.b16 %v5399
        %v5438 = vunpack.c.l.b16 %v5400
        %v5439 = vunpack.c.h.b16 %v5400
        %v5440 = vunpack.c.l.b16 %v5401
        %v5441 = vunpack.c.h.b16 %v5401
        %v5442 = vunpack.c.l.b16 %v5402
        %v5443 = vunpack.c.h.b16 %v5402
        %v5444 = vunpack.c.l.b16 %v5403
        %v5445 = vunpack.c.h.b16 %v5403
        %v5446 = vunpack.c.l.b16 %v5404
        %v5447 = vunpack.c.h.b16 %v5404
        %v5448 = vunpack.c.l.b16 %v5405
        %v5449 = vunpack.c.h.b16 %v5405
        %v5450 = vunpack.c.l.b16 %v5406
        %v5451 = vunpack.c.h.b16 %v5406
        %v5452 = vunpack.c.l.b16 %v5407
        %v5453 = vunpack.c.h.b16 %v5407
        %v5454 = vunpack.c.l.b16 %v5408
        %v5455 = vunpack.c.h.b16 %v5408
        %v5456 = vunpack.c.l.b16 %v5409
        %v5457 = vunpack.c.h.b16 %v5409
        %v5458 = vunpack.c.l.b16 %v5410
        %v5459 = vunpack.c.h.b16 %v5410
        %v5460 = vpack.c.b16 %v5430, %v5428
        %v5461 = vpack.c.b16 %v5431, %v5429
        %v5462 = vpack.c.b16 %v5434, %v5432
        %v5463 = vpack.c.b16 %v5435, %v5433
        %v5464 = vpack.c.b16 %v5438, %v5436
        %v5465 = vpack.c.b16 %v5439, %v5437
        %v5466 = vpack.c.b16 %v5442, %v5440
        %v5467 = vpack.c.b16 %v5443, %v5441
        %v5468 = vpack.c.b16 %v5446, %v5444
        %v5469 = vpack.c.b16 %v5447, %v5445
        %v5470 = vpack.c.b16 %v5450, %v5448
        %v5471 = vpack.c.b16 %v5451, %v5449
        %v5472 = vpack.c.b16 %v5454, %v5452
        %v5473 = vpack.c.b16 %v5455, %v5453
        %v5474 = vpack.c.b16 %v5458, %v5456
        %v5475 = vpack.c.b16 %v5459, %v5457
        %5492 = vmatprep.subr.bf16.mxu0 %v5461
        %5493 = vmatpush1.bf16.msra.mxu0 %v5460
        %5494 = vmatprep.subr.bf16.mxu0 %v5463
        %5495 = vmatpush1.bf16.msra.mxu0 %v5462
        %5496 = vmatprep.subr.bf16.mxu0 %v5465
        %5497 = vmatpush1.bf16.msra.mxu0 %v5464
        %5498 = vmatprep.subr.bf16.mxu0 %v5467
        %5499 = vmatpush1.bf16.msra.mxu0 %v5466
        %5500 = vmatprep.subr.bf16.mxu0 %v5469
        %5501 = vmatpush1.bf16.msra.mxu0 %v5468
        %5502 = vmatprep.subr.bf16.mxu0 %v5471
        %5503 = vmatpush1.bf16.msra.mxu0 %v5470
        %5504 = vmatprep.subr.bf16.mxu0 %v5473
        %5505 = vmatpush1.bf16.msra.mxu0 %v5472
        %5506 = vmatprep.subr.bf16.mxu0 %v5475
        %5507 = vmatpush1.bf16.msra.mxu0 %v5474
        %5508 = vmatprep.subr.bf16.mxu0 0
        %5509 = vmatpush1.bf16.msra.mxu0 0
        %5510 = vmatprep.subr.bf16.mxu0 0
        %5511 = vmatpush1.bf16.msra.mxu0 0
        %5512 = vmatprep.subr.bf16.mxu0 0
        %5513 = vmatpush1.bf16.msra.mxu0 0
        %5514 = vmatprep.subr.bf16.mxu0 0
        %5515 = vmatpush1.bf16.msra.mxu0 0
        %5516 = vmatprep.subr.bf16.mxu0 0
        %5517 = vmatpush1.bf16.msra.mxu0 0
        %5518 = vmatprep.subr.bf16.mxu0 0
        %5519 = vmatpush1.bf16.msra.mxu0 0
        %5520 = vmatprep.subr.bf16.mxu0 0
        %5521 = vmatpush1.bf16.msra.mxu0 0
        %5522 = vmatprep.subr.bf16.mxu0 0
        %5523 = vmatpush1.bf16.msra.mxu0 0
        %5524 = vmatprep.mubr.bf16.mxu0 0
        %5525 = vmatmul.mubr.bf16.gmra.mrb[0].mxu0 %v5411
        %v5526 = vpop.f32.mrb[0].mxu0
        %v5527 = vadd.f32 0.0, %v5526
        %v5528 = vpop.f32.mrb[0].mxu0
        %v5529 = vadd.f32 0.0, %v5528
        %v5530 = vpop.f32.mrb[0].mxu0
        %v5531 = vpop.f32.mrb[0].mxu0
        %5532 = vdwg.mxu0
        %v5533 = vadd.f32 %v5386, %v5527
        %v5534 = vadd.f32 %v5387, %v5529
        %v5535 = vld [vmem:[#allocation6 + $0x44] sm:$0x1]
        %v5536 = vld [vmem:[#allocation6 + $0x45] sm:$0x1]
        %v5537 = vld [vmem:[#allocation6 + $0x54] sm:$0x1]
        %v5538 = vld [vmem:[#allocation6 + $0x55] sm:$0x1]
        %v5539 = vmax.f32 %v5535, %v5536
        %v5540 = vmax.f32 %v5537, %v5538
        %v5541 = vmax.f32 %v5539, %v5540
        %v5542 = vld [vmem:[%s10 + $0x400] sm:$0xff]
        %v5543 = vld [vmem:[%s10 + $0x408] sm:$0xff]
        %v5544 = vld [vmem:[%s10 + $0x410] sm:$0xff]
        %v5545 = vld [vmem:[%s10 + $0x418] sm:$0xff]
        %v5546 = vld [vmem:[%s10 + $0x420] sm:$0xff]
        %v5547 = vld [vmem:[%s10 + $0x428] sm:$0xff]
        %v5548 = vld [vmem:[%s10 + $0x430] sm:$0xff]
        %v5549 = vld [vmem:[%s10 + $0x438] sm:$0xff]
        %v5550 = vld [vmem:[%s10 + $0x440] sm:$0xff]
        %v5551 = vld [vmem:[%s10 + $0x448] sm:$0xff]
        %v5552 = vld [vmem:[%s10 + $0x450] sm:$0xff]
        %v5553 = vld [vmem:[%s10 + $0x458] sm:$0xff]
        %v5554 = vld [vmem:[%s10 + $0x460] sm:$0xff]
        %v5555 = vld [vmem:[%s10 + $0x468] sm:$0xff]
        %v5556 = vld [vmem:[%s10 + $0x470] sm:$0xff]
        %v5557 = vld [vmem:[%s10 + $0x478] sm:$0xff]
        %v5558 = vpack.c.bf16 %v5541, %v5541
        %v5575 = vunpack.c.l.b16 %v5542
        %v5576 = vunpack.c.h.b16 %v5542
        %v5577 = vunpack.c.l.b16 %v5543
        %v5578 = vunpack.c.h.b16 %v5543
        %v5579 = vunpack.c.l.b16 %v5544
        %v5580 = vunpack.c.h.b16 %v5544
        %v5581 = vunpack.c.l.b16 %v5545
        %v5582 = vunpack.c.h.b16 %v5545
        %v5583 = vunpack.c.l.b16 %v5546
        %v5584 = vunpack.c.h.b16 %v5546
        %v5585 = vunpack.c.l.b16 %v5547
        %v5586 = vunpack.c.h.b16 %v5547
        %v5587 = vunpack.c.l.b16 %v5548
        %v5588 = vunpack.c.h.b16 %v5548
        %v5589 = vunpack.c.l.b16 %v5549
        %v5590 = vunpack.c.h.b16 %v5549
        %v5591 = vunpack.c.l.b16 %v5550
        %v5592 = vunpack.c.h.b16 %v5550
        %v5593 = vunpack.c.l.b16 %v5551
        %v5594 = vunpack.c.h.b16 %v5551
        %v5595 = vunpack.c.l.b16 %v5552
        %v5596 = vunpack.c.h.b16 %v5552
        %v5597 = vunpack.c.l.b16 %v5553
        %v5598 = vunpack.c.h.b16 %v5553
        %v5599 = vunpack.c.l.b16 %v5554
        %v5600 = vunpack.c.h.b16 %v5554
        %v5601 = vunpack.c.l.b16 %v5555
        %v5602 = vunpack.c.h.b16 %v5555
        %v5603 = vunpack.c.l.b16 %v5556
        %v5604 = vunpack.c.h.b16 %v5556
        %v5605 = vunpack.c.l.b16 %v5557
        %v5606 = vunpack.c.h.b16 %v5557
        %v5607 = vpack.c.b16 %v5577, %v5575
        %v5608 = vpack.c.b16 %v5578, %v5576
        %v5609 = vpack.c.b16 %v5581, %v5579
        %v5610 = vpack.c.b16 %v5582, %v5580
        %v5611 = vpack.c.b16 %v5585, %v5583
        %v5612 = vpack.c.b16 %v5586, %v5584
        %v5613 = vpack.c.b16 %v5589, %v5587
        %v5614 = vpack.c.b16 %v5590, %v5588
        %v5615 = vpack.c.b16 %v5593, %v5591
        %v5616 = vpack.c.b16 %v5594, %v5592
        %v5617 = vpack.c.b16 %v5597, %v5595
        %v5618 = vpack.c.b16 %v5598, %v5596
        %v5619 = vpack.c.b16 %v5601, %v5599
        %v5620 = vpack.c.b16 %v5602, %v5600
        %v5621 = vpack.c.b16 %v5605, %v5603
        %v5622 = vpack.c.b16 %v5606, %v5604
        %5639 = vmatprep.subr.bf16.mxu0 %v5608
        %5640 = vmatpush1.bf16.msra.mxu0 %v5607
        %5641 = vmatprep.subr.bf16.mxu0 %v5610
        %5642 = vmatpush1.bf16.msra.mxu0 %v5609
        %5643 = vmatprep.subr.bf16.mxu0 %v5612
        %5644 = vmatpush1.bf16.msra.mxu0 %v5611
        %5645 = vmatprep.subr.bf16.mxu0 %v5614
        %5646 = vmatpush1.bf16.msra.mxu0 %v5613
        %5647 = vmatprep.subr.bf16.mxu0 %v5616
        %5648 = vmatpush1.bf16.msra.mxu0 %v5615
        %5649 = vmatprep.subr.bf16.mxu0 %v5618
        %5650 = vmatpush1.bf16.msra.mxu0 %v5617
        %5651 = vmatprep.subr.bf16.mxu0 %v5620
        %5652 = vmatpush1.bf16.msra.mxu0 %v5619
        %5653 = vmatprep.subr.bf16.mxu0 %v5622
        %5654 = vmatpush1.bf16.msra.mxu0 %v5621
        %5655 = vmatprep.subr.bf16.mxu0 0
        %5656 = vmatpush1.bf16.msra.mxu0 0
        %5657 = vmatprep.subr.bf16.mxu0 0
        %5658 = vmatpush1.bf16.msra.mxu0 0
        %5659 = vmatprep.subr.bf16.mxu0 0
        %5660 = vmatpush1.bf16.msra.mxu0 0
        %5661 = vmatprep.subr.bf16.mxu0 0
        %5662 = vmatpush1.bf16.msra.mxu0 0
        %5663 = vmatprep.subr.bf16.mxu0 0
        %5664 = vmatpush1.bf16.msra.mxu0 0
        %5665 = vmatprep.subr.bf16.mxu0 0
        %5666 = vmatpush1.bf16.msra.mxu0 0
        %5667 = vmatprep.subr.bf16.mxu0 0
        %5668 = vmatpush1.bf16.msra.mxu0 0
        %5669 = vmatprep.subr.bf16.mxu0 0
        %5670 = vmatpush1.bf16.msra.mxu0 0
        %5671 = vmatprep.mubr.bf16.mxu0 0
        %5672 = vmatmul.mubr.bf16.gmra.mrb[0].mxu0 %v5558
        %v5673 = vpop.f32.mrb[0].mxu0
        %v5674 = vadd.f32 0.0, %v5673
        %v5675 = vpop.f32.mrb[0].mxu0
        %v5676 = vadd.f32 0.0, %v5675
        %v5677 = vpop.f32.mrb[0].mxu0
        %v5678 = vpop.f32.mrb[0].mxu0
        %5679 = vdwg.mxu0
        %v5680 = vadd.f32 %v5533, %v5674
        %v5681 = vadd.f32 %v5534, %v5676
        %v5682 = vld [vmem:[%s11] sm:$0x3]
        %v5684 = vlaneseq
        %v5685 = vshrl.u32 %v5684, 7
        %v5686 = vsub.s32 0, %v5685
        %v5687 = vrot.slane %v5682, %v5686
        %v5688 = vlaneseq
        %v5689 = vshrl.u32 %v5688, 7
        %v5690 = vsub.s32 1, %v5689
        %v5691 = vrot.slane %v5682, %v5690
        %v5694 = vadd.f32 %v5680, %v5687
        %v5695 = vadd.f32 %v5681, %v5691
        %v5696 = vmax.f32 %v5694, 0.0
        %v5697 = vmax.f32 %v5695, 0.0
        %v5698 = vpack.c.bf16 %v5696, %v5696
        %v5699 = vpack.c.bf16 %v5697, %v5697
        %v5700 = vld [vmem:[%s12] sm:$0xf]
        %v5701 = vld [vmem:[%s12 + $0x4] sm:$0xf]
        %v5702 = vld [vmem:[%s12 + $0x8] sm:$0xf]
        %v5703 = vld [vmem:[%s12 + $0xc] sm:$0xf]
        %v5704 = vld [vmem:[%s12 + $0x10] sm:$0xf]
        %v5705 = vld [vmem:[%s12 + $0x14] sm:$0xf]
        %v5706 = vld [vmem:[%s12 + $0x18] sm:$0xf]
        %v5707 = vld [vmem:[%s12 + $0x1c] sm:$0xf]
        %v5708 = vld [vmem:[%s12 + $0x20] sm:$0xf]
        %v5709 = vld [vmem:[%s12 + $0x24] sm:$0xf]
        %v5710 = vld [vmem:[%s12 + $0x28] sm:$0xf]
        %v5711 = vld [vmem:[%s12 + $0x2c] sm:$0xf]
        %v5712 = vld [vmem:[%s12 + $0x30] sm:$0xf]
        %v5713 = vld [vmem:[%s12 + $0x34] sm:$0xf]
        %v5714 = vld [vmem:[%s12 + $0x38] sm:$0xf]
        %v5715 = vld [vmem:[%s12 + $0x3c] sm:$0xf]
        %v5716 = vld [vmem:[%s12 + $0x40] sm:$0xf]
        %v5717 = vld [vmem:[%s12 + $0x44] sm:$0xf]
        %v5718 = vld [vmem:[%s12 + $0x48] sm:$0xf]
        %v5719 = vld [vmem:[%s12 + $0x4c] sm:$0xf]
        %v5720 = vld [vmem:[%s12 + $0x50] sm:$0xf]
        %v5721 = vld [vmem:[%s12 + $0x54] sm:$0xf]
        %v5722 = vld [vmem:[%s12 + $0x58] sm:$0xf]
        %v5723 = vld [vmem:[%s12 + $0x5c] sm:$0xf]
        %v5724 = vld [vmem:[%s12 + $0x60] sm:$0xf]
        %v5725 = vld [vmem:[%s12 + $0x64] sm:$0xf]
        %v5726 = vld [vmem:[%s12 + $0x68] sm:$0xf]
        %v5727 = vld [vmem:[%s12 + $0x6c] sm:$0xf]
        %v5728 = vld [vmem:[%s12 + $0x70] sm:$0xf]
        %v5729 = vld [vmem:[%s12 + $0x74] sm:$0xf]
        %v5730 = vld [vmem:[%s12 + $0x78] sm:$0xf]
        %v5731 = vld [vmem:[%s12 + $0x7c] sm:$0xf]
        %v5732 = vld [vmem:[%s13] sm:$0x1]
        %v5765 = vunpack.c.l.b16 %v5700
        %v5766 = vunpack.c.l.b16 %v5701
        %v5767 = vunpack.c.l.b16 %v5702
        %v5768 = vunpack.c.l.b16 %v5703
        %v5769 = vunpack.c.l.b16 %v5704
        %v5770 = vunpack.c.l.b16 %v5705
        %v5771 = vunpack.c.l.b16 %v5706
        %v5772 = vunpack.c.l.b16 %v5707
        %v5773 = vunpack.c.l.b16 %v5708
        %v5774 = vunpack.c.l.b16 %v5709
        %v5775 = vunpack.c.l.b16 %v5710
        %v5776 = vunpack.c.l.b16 %v5711
        %v5777 = vunpack.c.l.b16 %v5712
        %v5778 = vunpack.c.l.b16 %v5713
        %v5779 = vunpack.c.l.b16 %v5714
        %v5780 = vunpack.c.l.b16 %v5715
        %v5781 = vunpack.c.l.b16 %v5716
        %v5782 = vunpack.c.l.b16 %v5717
        %v5783 = vunpack.c.l.b16 %v5718
        %v5784 = vunpack.c.l.b16 %v5719
        %v5785 = vunpack.c.l.b16 %v5720
        %v5786 = vunpack.c.l.b16 %v5721
        %v5787 = vunpack.c.l.b16 %v5722
        %v5788 = vunpack.c.l.b16 %v5723
        %v5789 = vunpack.c.l.b16 %v5724
        %v5790 = vunpack.c.l.b16 %v5725
        %v5791 = vunpack.c.l.b16 %v5726
        %v5792 = vunpack.c.l.b16 %v5727
        %v5793 = vunpack.c.l.b16 %v5728
        %v5794 = vunpack.c.l.b16 %v5729
        %v5795 = vunpack.c.l.b16 %v5730
        %v5796 = vunpack.c.l.b16 %v5731
        %v5797 = vpack.c.b16 %v5766, %v5765
        %v5798 = vpack.c.b16 %v5768, %v5767
        %v5799 = vpack.c.b16 %v5770, %v5769
        %v5800 = vpack.c.b16 %v5772, %v5771
        %v5801 = vpack.c.b16 %v5774, %v5773
        %v5802 = vpack.c.b16 %v5776, %v5775
        %v5803 = vpack.c.b16 %v5778, %v5777
        %v5804 = vpack.c.b16 %v5780, %v5779
        %v5805 = vpack.c.b16 %v5782, %v5781
        %v5806 = vpack.c.b16 %v5784, %v5783
        %v5807 = vpack.c.b16 %v5786, %v5785
        %v5808 = vpack.c.b16 %v5788, %v5787
        %v5809 = vpack.c.b16 %v5790, %v5789
        %v5810 = vpack.c.b16 %v5792, %v5791
        %v5811 = vpack.c.b16 %v5794, %v5793
        %v5812 = vpack.c.b16 %v5796, %v5795
        %5829 = vmatprep.subr.bf16.mxu0 0
        %5830 = vmatpush1.bf16.msra.mxu0 %v5797
        %5831 = vmatprep.subr.bf16.mxu0 0
        %5832 = vmatpush1.bf16.msra.mxu0 %v5798
        %5833 = vmatprep.subr.bf16.mxu0 0
        %5834 = vmatpush1.bf16.msra.mxu0 %v5799
        %5835 = vmatprep.subr.bf16.mxu0 0
        %5836 = vmatpush1.bf16.msra.mxu0 %v5800
        %5837 = vmatprep.subr.bf16.mxu0 0
        %5838 = vmatpush1.bf16.msra.mxu0 %v5801
        %5839 = vmatprep.subr.bf16.mxu0 0
        %5840 = vmatpush1.bf16.msra.mxu0 %v5802
        %5841 = vmatprep.subr.bf16.mxu0 0
        %5842 = vmatpush1.bf16.msra.mxu0 %v5803
        %5843 = vmatprep.subr.bf16.mxu0 0
        %5844 = vmatpush1.bf16.msra.mxu0 %v5804
        %5845 = vmatprep.subr.bf16.mxu0 0
        %5846 = vmatpush1.bf16.msra.mxu0 %v5805
        %5847 = vmatprep.subr.bf16.mxu0 0
        %5848 = vmatpush1.bf16.msra.mxu0 %v5806
        %5849 = vmatprep.subr.bf16.mxu0 0
        %5850 = vmatpush1.bf16.msra.mxu0 %v5807
        %5851 = vmatprep.subr.bf16.mxu0 0
        %5852 = vmatpush1.bf16.msra.mxu0 %v5808
        %5853 = vmatprep.subr.bf16.mxu0 0
        %5854 = vmatpush1.bf16.msra.mxu0 %v5809
        %5855 = vmatprep.subr.bf16.mxu0 0
        %5856 = vmatpush1.bf16.msra.mxu0 %v5810
        %5857 = vmatprep.subr.bf16.mxu0 0
        %5858 = vmatpush1.bf16.msra.mxu0 %v5811
        %5859 = vmatprep.subr.bf16.mxu0 0
        %5860 = vmatpush1.bf16.msra.mxu0 %v5812
        %5861 = vmatprep.mubr.bf16.mxu0 %v5699
        %5862 = vmatmul.mubr.bf16.gmra.mrb[0].mxu0 %v5698
        %v5863 = vpop.f32.mrb[0].mxu0
        %v5864 = vadd.f32 %v5732, %v5863
        %v5865 = vpop.f32.mrb[0].mxu0
        %v5866 = vpop.f32.mrb[0].mxu0
        %v5867 = vpop.f32.mrb[0].mxu0
        %5868 = vdwg.mxu0
        %vm5869 = vcmask 73728
        %5870 = vst.msk [vmem:[%s459] sm:$0x1] %vm5869, %v5864
        %s5871 = sand.u32 %s335, 1
        %s5872 = scalar_lea.sflag [#allocation8], %s5871
        %s5873 = sand.u32 %s335, 1
        %s5874 = scalar_lea.vmem [#allocation7], %s5873
        // Predicated region
        $region91: #{_forward.1} parent=75 // pred_check
          %p5875 = pneg %p345
        $region92: #{_forward.1} parent=75 // pred_check_branch
          %5877 = sbr.rel (%p5875) target = $region94
        $region93: #{_forward.1} parent=75 // pred_region
          %s5879 = ssub.s32 16, 16
          %5880 = vsyncadd %s5872, %s5879
          %s5881 = smul.addr %s28, 16
          %s5882 = scalar_lea.hbm %s14, %s5881
          %s5884 = sshll.u32 %s5874, 4
          %s5885 = int_to_ptr.vmem [resolvable:$true] %s5884
          %5887 = dma.vmem_to_hbm [thread:$0]  %s5885, 16, %s5882, %s5872
        $region94: #{_forward.1} parent=75 // pred_fallthru
          _
      $region76: #{_forward.1} parent=5 // pred_fallthru
        _
      %p5888 = scmp.le.s32.totalorder 2, %s23
      // Predicated region
      $region95: #{_forward.1} parent=5 // pred_check
        %p5889 = pneg %p5888
      $region96: #{_forward.1} parent=5 // pred_check_branch
        %5891 = sbr.rel (%p5889) target = $region98
      $region97: #{_forward.1} parent=5 // pred_region
        %s5892 = ssub.s32 %s23, 2
        // Predicated region
        $region99: #{_forward.1} parent=97 // pred_check
          %p5893 = pneg %p351
        $region100: #{_forward.1} parent=97 // pred_check_branch
          %5895 = sbr.rel (%p5893) target = $region102
        $region101: #{_forward.1} parent=97 // pred_region
          %s5896 = sand.u32 %s336, 1
          %s5897 = scalar_lea.sflag [#allocation8], %s5896
          %s5898 = sand.u32 %s336, 1
          %s5899 = scalar_lea.vmem [#allocation7], %s5898
          %5900 = dma.done %s5897, 16
        $region102: #{_forward.1} parent=97 // pred_fallthru
          _
      $region98: #{_forward.1} parent=5 // pred_fallthru
        _
    $region6: #{_forward.1} parent=1 // loop_footer
      %s27 = sadd.s32 1, %s23
    $region7: #{_forward.1} parent=1 // loop_footer_branch
      %22 = sbr.rel target = $region3
    $region8: #{_forward.1} parent=1 // loop_exit
      _
    %5901 = vsyncpa [#allocation8], 1
    %s5902 = scalar_lea.sflag [#allocation8], 1
    %5903 = vsyncpa %s5902, 1

</llo_original>
